<compile_context>
chip_gen: v6e
topology: v6e:2x2x1
jax: 0.10.0
libtpu: 0.0.40
codegen_flags: <defaults>
</compile_context>

<pallas_src>
import functools

import jax
import jax.numpy as jnp
from jax.experimental import pallas as pl
from jax.experimental.pallas import tpu as pltpu


def _round_up(x, m):
    return (x + m - 1) // m * m


def _device_flags():
    """(no bf16 EUP/VPU, two TensorCores per chip) from the local device kind."""
    try:
        kind = jax.devices()[0].device_kind.lower()
    except Exception:  # pragma: no cover - defensive default
        kind = ""
    old_gen = any(t in kind for t in ("v2", "v3", "v4", "v5"))   # no bf16 EUP/VPU
    two_core = "v7" in kind                                      # v7x: 2 TCs share the grid
    return old_gen, two_core


def lstm_conv_kernel(xseq_ref, wih_ref, whh_ref, b_ref, wout_ref, bout_ref,
                     out_ref, gx_scr, *, gate_w, act_dtype):
    """One tile of nodes: hoisted input projection + lane-packed LSTM recurrence +
    fused output linear.  h/c live as register-resident loop carries."""
    S, TN, D = xseq_ref.shape
    G = gate_w
    G4 = 4 * G

    # ---- Hoisted input projection: one big MXU matmul; bias folded; bf16 scratch. ----
    x_flat = xseq_ref[...].reshape(S * TN, D)                    # contiguous leading merge
    gx = jnp.dot(x_flat, wih_ref[...],
                 preferred_element_type=jnp.float32) + b_ref[...]
    gx_scr[...] = gx.reshape(S, TN, G4).astype(gx_scr.dtype)     # bf16 store (half traffic)

    whh = whh_ref[...]                                           # (G, 4G) bf16, hoisted
    packed = G4 <= 128                                           # all 4 gates in one lane block

    # ---- Serial recurrence: only the h-dependent matmul + gate math inside the loop. ----
    def step(t, carry):
        h, c = carry                                             # h:(TN,G) bf16, c:(TN,G) f32
        gates = gx_scr[t].astype(jnp.float32) + jnp.dot(
            h, whh, preferred_element_type=jnp.float32)          # (TN, 4G) f32
        z = gates.astype(act_dtype)                              # bf16 on v6e/v7x, f32 on v5e
        if packed:
            # One sigmoid + one tanh over the whole 128-lane packed gate block,
            # then lane-slice the per-gate pieces (padded gate lanes stay exactly 0-state).
            sig = jax.nn.sigmoid(z)
            tah = jnp.tanh(z)
            i_g = sig[:, 0 * G:1 * G]
            f_g = sig[:, 1 * G:2 * G]
            g_g = tah[:, 2 * G:3 * G]
            o_g = sig[:, 3 * G:4 * G]
        else:
            # Wide-hidden fallback: per-gate activations on (lane-aligned) slices.
            i_g = jax.nn.sigmoid(z[:, 0 * G:1 * G])
            f_g = jax.nn.sigmoid(z[:, 1 * G:2 * G])
            g_g = jnp.tanh(z[:, 2 * G:3 * G])
            o_g = jax.nn.sigmoid(z[:, 3 * G:4 * G])
        c_new = f_g.astype(jnp.float32) * c + (i_g * g_g).astype(jnp.float32)
        h_new = (o_g * jnp.tanh(c_new.astype(act_dtype))).astype(jnp.bfloat16)
        return h_new, c_new

    h0 = jnp.zeros((TN, G), jnp.bfloat16)
    c0 = jnp.zeros((TN, G), jnp.float32)
    h_fin, _ = jax.lax.fori_loop(0, S, step, (h0, c0), unroll=True)

    # ---- Fused (W_fc then W_combine) output projection; lane-dense (Dout_p) store. ----
    out = jnp.dot(h_fin, wout_ref[...], preferred_element_type=jnp.float32) + bout_ref[...]
    out_ref[...] = out.astype(out_ref.dtype)


def prepare_params(w_ih, w_hh, b_ih, b_hh, w_fc, b_fc, w_c, b_c, *, lane=128,
                   self_concat=False, activation=None, normalize=False):
    """Host-side parameter prep: per-gate pad lstm_dim H -> G (multiple of 32, so 4G is a
    multiple of 128), pad output_dim to a lane multiple, fuse the two trailing Linears,
    pre-transpose, and cast matmul operands to bf16 (biases stay f32)."""
    # Guard: the W_fc/W_c fusion below is valid ONLY for the default eval config.
    if self_concat or activation is not None or normalize:
        raise ValueError("fused output projection requires self_concat=False, "
                         "activation=None, normalize=False")

    four_h, _ = w_ih.shape
    h = four_h // 4
    d_out = w_c.shape[0]
    g = _round_up(h, 32)                 # per-gate lane width; 4*g is a multiple of 128
    d_out_p = _round_up(d_out, lane)

    # Pad each gate's columns H -> G.  Padded gate lanes get zero pre-activation
    # (zero W columns + zero bias), so i=f=o=0.5, g=tanh(0)=0 and the padded c/h lanes
    # stay exactly zero; zero rows of W_hh^T / W_out keep them inert anyway.
    def pack_cols(m):                    # (K, 4H) -> (K, 4G)
        k = m.shape[0]
        mg = m.reshape(k, 4, h)
        return jnp.pad(mg, ((0, 0), (0, 0), (0, g - h))).reshape(k, 4 * g)

    wih_t = pack_cols(w_ih.T)                                      # (D, 4G)
    whh_t = jnp.pad(pack_cols(w_hh.T), ((0, g - h), (0, 0)))       # (G, 4G), rows >= H zero
    b = pack_cols((b_ih + b_hh).reshape(1, 4 * h))                 # (1, 4G)

    # Fused output linear: out = (h @ W_fc^T + b_fc) @ W_c^T + b_c = h @ W_out + b_out.
    w_out = w_fc.T @ w_c.T                                         # (H, D_out)
    b_out = b_fc @ w_c.T + b_c                                     # (D_out,)
    w_out = jnp.pad(w_out, ((0, g - h), (0, d_out_p - d_out)))     # (G, Dout_p)
    b_out = jnp.pad(b_out, (0, d_out_p - d_out))                   # (Dout_p,)

    return dict(
        wih_t=wih_t.astype(jnp.bfloat16),                          # (D, 4G)
        whh_t=whh_t.astype(jnp.bfloat16),                          # (G, 4G)
        b=b.astype(jnp.float32),                                   # (1, 4G)
        wout=w_out.astype(jnp.bfloat16),                           # (G, Dout_p)
        bout=b_out.reshape(1, d_out_p).astype(jnp.float32),        # (1, Dout_p)
        gate_w=int(g), h_dim=int(h), d_out=int(d_out), d_out_p=int(d_out_p),
    )


def lstm_conv(feat_table, neigh_idx, params, *, tile_n=None, act_dtype=None):
    """feat_table: (V, D) f32 node features; neigh_idx: (N, S) int32 neighbour indices
    (slot 0 = self loop).  Returns (N, output_dim) f32 node embeddings."""
    N, S = neigh_idx.shape
    D = feat_table.shape[1]
    G = params["gate_w"]
    G4 = 4 * G
    d_out, d_out_p = params["d_out"], params["d_out_p"]

    old_gen, two_core = _device_flags()
    if act_dtype is None:
        act_dtype = jnp.float32 if old_gen else jnp.bfloat16   # bf16 EUP only on v6e/v7x

    # Per-generation tile selection (review): 256 fills the 256-wide MXU on v6e/v7x,
    # 128 on v5e; on v7x only use 256 when >= 2 tiles remain, and keep the tile count
    # even so both TensorCores get work on the 'parallel' grid axis.
    if tile_n is None:
        if old_gen:
            tile_n = 128
        elif two_core and pl.cdiv(N, 256) < 2:
            tile_n = 128
        else:
            tile_n = 256
    n_tiles = pl.cdiv(N, tile_n)
    if two_core and n_tiles > 1 and n_tiles % 2:
        n_tiles += 1
    n_pad = n_tiles * tile_n

    # Host glue: gather directly time-major in bf16 (no transpose / extra f32 pass).
    # TODO(synk): fold this gather into the kernel (PrefetchScalarGridSpec with neigh_idx
    #             as scalar prefetch + per-row DMA from feat_table in pl.ANY) to drop the
    #             S-times-duplicated (S,N,D) HBM tensor entirely.
    x_tm = feat_table.astype(jnp.bfloat16)[neigh_idx.T]            # (S, N, D) bf16
    x_tm = jnp.pad(x_tm, ((0, 0), (0, n_pad - N), (0, 0)))

    # Per-tile VMEM footprint: 2x x block (bf16) + gx scratch (bf16) + 2x out block (f32)
    # + 2x weights.  Only raise the scoped limit when the default 32 MiB would not fit
    # (matters on v7x's 64 MiB physical VMEM once lstm_dim / tile_n scale up).
    vmem_est = (2 * S * tile_n * D * 2
                + S * tile_n * G4 * 2
                + 2 * tile_n * d_out_p * 4
                + 2 * (D * G4 + G * G4 + G * d_out_p) * 2
                + 2 * (G4 + d_out_p) * 4)
    vmem_limit = int(2 * vmem_est) if 2 * vmem_est > (32 << 20) else None

    kernel = functools.partial(lstm_conv_kernel, gate_w=G, act_dtype=act_dtype)
    full = lambda shape: pl.BlockSpec(shape, lambda i: tuple(0 for _ in shape))

    out = pl.pallas_call(
        kernel,
        out_shape=jax.ShapeDtypeStruct((n_pad, d_out_p), jnp.float32),
        grid=(n_tiles,),
        in_specs=[
            pl.BlockSpec((S, tile_n, D), lambda i: (0, i, 0)),   # x_seq, time-major
            full((D, G4)),                                       # W_ih^T (bf16)
            full((G, G4)),                                       # W_hh^T (bf16)
            full((1, G4)),                                       # b_ih + b_hh (f32)
            full((G, d_out_p)),                                  # fused W_out (bf16)
            full((1, d_out_p)),                                  # fused b_out (f32)
        ],
        out_specs=pl.BlockSpec((tile_n, d_out_p), lambda i: (i, 0)),
        scratch_shapes=[
            pltpu.VMEM((S, tile_n, G4), jnp.bfloat16),           # hoisted input gates (bf16)
        ],
        compiler_params=pltpu.CompilerParams(
            dimension_semantics=("parallel",),
            vmem_limit_bytes=vmem_limit),
    )(x_tm, params["wih_t"], params["whh_t"], params["b"],
      params["wout"], params["bout"])

    return out[:N, :d_out]


def reference(x_seq, raw_params):
    """Pure-JAX f32 reference of the original module math (unfused, unpadded)."""
    w_ih, w_hh, b_ih, b_hh, w_fc, b_fc, w_c, b_c = raw_params
    N, S, D = x_seq.shape
    H = w_hh.shape[1]
    h = jnp.zeros((N, H), jnp.float32)
    c = jnp.zeros((N, H), jnp.float32)
    for t in range(S):
        gates = x_seq[:, t, :] @ w_ih.T + h @ w_hh.T + b_ih + b_hh
        i_g = jax.nn.sigmoid(gates[:, 0 * H:1 * H])
        f_g = jax.nn.sigmoid(gates[:, 1 * H:2 * H])
        g_g = jnp.tanh(gates[:, 2 * H:3 * H])
        o_g = jax.nn.sigmoid(gates[:, 3 * H:4 * H])
        c = f_g * c + i_g * g_g
        h = o_g * jnp.tanh(c)
    agg = h @ w_fc.T + b_fc
    return agg @ w_c.T + b_c


def reference_prepared(feat_table, neigh_idx, params, act_dtype):
    """Pure-JAX replica of exactly the kernel math (packed/fused/bf16 operands)."""
    wih, whh, b = params["wih_t"], params["whh_t"], params["b"]
    wout, bout = params["wout"], params["bout"]
    G = params["gate_w"]
    G4 = 4 * G
    x = feat_table.astype(jnp.bfloat16)[neigh_idx]                 # (N, S, D) bf16
    N, S, D = x.shape
    h = jnp.zeros((N, G), jnp.bfloat16)
    c = jnp.zeros((N, G), jnp.float32)
    for t in range(S):
        gx = (jnp.dot(x[:, t, :], wih, preferred_element_type=jnp.float32)
              + b).astype(jnp.bfloat16)
        gates = gx.astype(jnp.float32) + jnp.dot(h, whh, preferred_element_type=jnp.float32)
        z = gates.astype(act_dtype)
        if G4 <= 128:
            sig = jax.nn.sigmoid(z)
            tah = jnp.tanh(z)
            i_g, f_g = sig[:, :G], sig[:, G:2 * G]
            g_g, o_g = tah[:, 2 * G:3 * G], sig[:, 3 * G:]
        else:
            i_g = jax.nn.sigmoid(z[:, :G])
            f_g = jax.nn.sigmoid(z[:, G:2 * G])
            g_g = jnp.tanh(z[:, 2 * G:3 * G])
            o_g = jax.nn.sigmoid(z[:, 3 * G:])
        c = f_g.astype(jnp.float32) * c + (i_g * g_g).astype(jnp.float32)
        h = (o_g * jnp.tanh(c.astype(act_dtype))).astype(jnp.bfloat16)
    out = jnp.dot(h, wout, preferred_element_type=jnp.float32) + bout
    return out[:, :params["d_out"]]


if __name__ == "__main__":
    # Small deterministic problem sizes.
    V = 256         # nodes in the knowledge graph (feature table rows)
    D_in = 16       # input_dim
    D_out = 16      # output_dim
    H = 32          # lstm_dim (4H = 128 -> lane-packed gates)
    S = 8           # sampled neighbours per node (slot 0 = self loop)
    N = 240         # query nodes

    key = jax.random.PRNGKey(0)
    ks = jax.random.split(key, 10)

    # Node feature table and neighbour indices (graph "sampling" done host-side).
    feat_table = jax.random.normal(ks[0], (V, D_in), jnp.float32)
    node_idx = jnp.arange(N, dtype=jnp.int32)
    neigh_idx = jax.random.randint(ks[1], (N, S), 0, V, dtype=jnp.int32)
    neigh_idx = neigh_idx.at[:, 0].set(node_idx)                   # self loop

    # Deterministic parameter init (PyTorch shapes).
    sc = 0.1
    w_ih = sc * jax.random.normal(ks[2], (4 * H, D_in), jnp.float32)   # nn.LSTM.weight_ih_l0
    w_hh = sc * jax.random.normal(ks[3], (4 * H, H), jnp.float32)      # nn.LSTM.weight_hh_l0
    b_ih = sc * jax.random.normal(ks[4], (4 * H,), jnp.float32)
    b_hh = sc * jax.random.normal(ks[5], (4 * H,), jnp.float32)
    w_fc = sc * jax.random.normal(ks[6], (D_in, H), jnp.float32)       # agg Linear(lstm_dim, input_dim)
    b_fc = sc * jax.random.normal(ks[7], (D_in,), jnp.float32)
    w_c = sc * jax.random.normal(ks[8], (D_out, D_in), jnp.float32)    # Combine Linear(input_dim, output_dim)
    b_c = sc * jax.random.normal(ks[9], (D_out,), jnp.float32)

    params = prepare_params(w_ih, w_hh, b_ih, b_hh, w_fc, b_fc, w_c, b_c)

    old_gen, _ = _device_flags()
    act_dtype = jnp.float32 if old_gen else jnp.bfloat16   # f32 gate math on v5e/older

    out = lstm_conv(feat_table, neigh_idx, params, act_dtype=act_dtype)
    out = jax.block_until_ready(out)
    assert out.shape == (N, D_out)

    # Tight check: kernel vs. a pure-JAX replica of its own (packed / bf16-operand) math.
    ref_match = reference_prepared(feat_table, neigh_idx, params, act_dtype)
    assert jnp.allclose(out, ref_match, rtol=1e-2, atol=1e-2), \
        "mismatch vs. matched (packed/bf16) JAX reference"

    # Semantics check: kernel vs. full-f32 original-module math (bf16 operand rounding).
    x_seq = feat_table[neigh_idx]                                  # (N, S, D) f32
    ref_f32 = reference(x_seq, (w_ih, w_hh, b_ih, b_hh, w_fc, b_fc, w_c, b_c))
    assert jnp.allclose(out, ref_f32, rtol=3e-2, atol=3e-2), \
        "mismatch vs. f32 JAX reference"

    print("KERNEL_OK")
</pallas_src>

<mosaic_0001>
module attributes {stable_mosaic.version = 11 : i64} {
  func.func @lstm_conv_kernel(%arg0: i32, %arg1: memref<8x256x16xbf16, #tpu.memory_space<vmem>>, %arg2: memref<16x128xbf16, #tpu.memory_space<vmem>>, %arg3: memref<32x128xbf16, #tpu.memory_space<vmem>>, %arg4: memref<1x128xf32, #tpu.memory_space<vmem>>, %arg5: memref<32x128xbf16, #tpu.memory_space<vmem>>, %arg6: memref<1x128xf32, #tpu.memory_space<vmem>>, %arg7: memref<256x128xf32, #tpu.memory_space<vmem>>, %arg8: memref<8x256x128xbf16, #tpu.memory_space<vmem>>) attributes {dimension_semantics = [#tpu.dimension_semantics<parallel>], iteration_bounds = array<i64: 1>, scalar_prefetch = 0 : i64, scratch_operands = 1 : i64, tpu.core_type = #tpu.core_type<tc>, window_params = [{transform_indices = @transform_0, window_bounds = array<i64: 8, 256, 16>}, {pipeline_mode = #tpu.pipeline_mode<synchronous>, transform_indices = @transform_1, window_bounds = array<i64: 16, 128>}, {pipeline_mode = #tpu.pipeline_mode<synchronous>, transform_indices = @transform_2, window_bounds = array<i64: 32, 128>}, {pipeline_mode = #tpu.pipeline_mode<synchronous>, transform_indices = @transform_3, window_bounds = array<i64: 1, 128>}, {pipeline_mode = #tpu.pipeline_mode<synchronous>, transform_indices = @transform_4, window_bounds = array<i64: 32, 128>}, {pipeline_mode = #tpu.pipeline_mode<synchronous>, transform_indices = @transform_5, window_bounds = array<i64: 1, 128>}, {transform_indices = @transform_6, window_bounds = array<i64: 256, 128>}]} {
    %c0 = arith.constant 0 : index
    %c0_0 = arith.constant 0 : index
    %c0_1 = arith.constant 0 : index
    %0 = vector.load %arg1[%c0, %c0_0, %c0_1] : memref<8x256x16xbf16, #tpu.memory_space<vmem>>, vector<8x256x16xbf16>
    %1 = vector.shape_cast %0 : vector<8x256x16xbf16> to vector<2048x16xbf16>
    %c0_2 = arith.constant 0 : index
    %c0_3 = arith.constant 0 : index
    %2 = vector.load %arg2[%c0_2, %c0_3] : memref<16x128xbf16, #tpu.memory_space<vmem>>, vector<16x128xbf16>
    %cst = arith.constant dense<0.000000e+00> : vector<2048x128xf32>
    %3 = tpu.matmul %1, %2, %cst {dimension_numbers = #tpu.dot_dimension_numbers<[1], [0], [0], [1], [0, 0, 1, 1], [], []>} : vector<2048x16xbf16>, vector<16x128xbf16>, vector<2048x128xf32> -> vector<2048x128xf32>
    %c0_4 = arith.constant 0 : index
    %c0_5 = arith.constant 0 : index
    %4 = vector.load %arg4[%c0_4, %c0_5] : memref<1x128xf32, #tpu.memory_space<vmem>>, vector<1x128xf32>
    %5 = vector.broadcast %4 : vector<1x128xf32> to vector<2048x128xf32>
    %6 = arith.addf %3, %5 : vector<2048x128xf32>
    %7 = vector.shape_cast %6 : vector<2048x128xf32> to vector<8x256x128xf32>
    %8 = arith.truncf %7 : vector<8x256x128xf32> to vector<8x256x128xbf16>
    %c0_6 = arith.constant 0 : index
    %c0_7 = arith.constant 0 : index
    %c0_8 = arith.constant 0 : index
    %9 = vector.load %arg8[%c0_6, %c0_7, %c0_8] : memref<8x256x128xbf16, #tpu.memory_space<vmem>>, vector<8x256x128xbf16>
    tpu.vector_store %arg8[%c0_6, %c0_7, %c0_8], %8 {strides = array<i32>} : memref<8x256x128xbf16, #tpu.memory_space<vmem>>, vector<8x256x128xbf16>,
    %c0_9 = arith.constant 0 : index
    %c0_10 = arith.constant 0 : index
    %10 = vector.load %arg3[%c0_9, %c0_10] : memref<32x128xbf16, #tpu.memory_space<vmem>>, vector<32x128xbf16>
    %cst_11 = arith.constant 0.000000e+00 : bf16
    %11 = vector.broadcast %cst_11 : bf16 to vector<256x32xbf16>
    %cst_12 = arith.constant 0.000000e+00 : f32
    %12 = vector.broadcast %cst_12 : f32 to vector<256x32xf32>
    %c0_i32 = arith.constant 0 : i32
    %13 = arith.index_cast %c0_i32 : i32 to index
    %c0_13 = arith.constant 0 : index
    %c0_14 = arith.constant 0 : index
    %14 = vector.load %arg8[%13, %c0_13, %c0_14] : memref<8x256x128xbf16, #tpu.memory_space<vmem>>, vector<1x256x128xbf16>
    %15 = vector.shape_cast %14 : vector<1x256x128xbf16> to vector<256x128xbf16>
    %16 = arith.extf %15 : vector<256x128xbf16> to vector<256x128xf32>
    %cst_15 = arith.constant dense<0.000000e+00> : vector<256x128xf32>
    %17 = tpu.matmul %11, %10, %cst_15 {dimension_numbers = #tpu.dot_dimension_numbers<[1], [0], [0], [1], [0, 0, 1, 1], [], []>} : vector<256x32xbf16>, vector<32x128xbf16>, vector<256x128xf32> -> vector<256x128xf32>
    %18 = arith.addf %16, %17 : vector<256x128xf32>
    %19 = arith.truncf %18 : vector<256x128xf32> to vector<256x128xbf16>
    %20 = arith.negf %19 : vector<256x128xbf16>
    %21 = math.exp %20 : vector<256x128xbf16>
    %cst_16 = arith.constant 1.000000e+00 : bf16
    %22 = vector.broadcast %cst_16 : bf16 to vector<256x128xbf16>
    %23 = arith.addf %22, %21 : vector<256x128xbf16>
    %24 = arith.divf %22, %23 : vector<256x128xbf16>
    %25 = math.tanh %19 : vector<256x128xbf16>
    %26 = vector.extract_strided_slice %24 {offsets = [0, 0], sizes = [256, 32], strides = [1, 1]} : vector<256x128xbf16> to vector<256x32xbf16>
    %27 = vector.extract_strided_slice %24 {offsets = [0, 32], sizes = [256, 32], strides = [1, 1]} : vector<256x128xbf16> to vector<256x32xbf16>
    %28 = vector.extract_strided_slice %25 {offsets = [0, 64], sizes = [256, 32], strides = [1, 1]} : vector<256x128xbf16> to vector<256x32xbf16>
    %29 = vector.extract_strided_slice %24 {offsets = [0, 96], sizes = [256, 32], strides = [1, 1]} : vector<256x128xbf16> to vector<256x32xbf16>
    %30 = arith.extf %27 : vector<256x32xbf16> to vector<256x32xf32>
    %31 = arith.mulf %30, %12 : vector<256x32xf32>
    %32 = arith.mulf %26, %28 : vector<256x32xbf16>
    %33 = arith.extf %32 : vector<256x32xbf16> to vector<256x32xf32>
    %34 = arith.addf %31, %33 : vector<256x32xf32>
    %35 = arith.truncf %34 : vector<256x32xf32> to vector<256x32xbf16>
    %36 = math.tanh %35 : vector<256x32xbf16>
    %37 = arith.mulf %29, %36 : vector<256x32xbf16>
    %c1_i32 = arith.constant 1 : i32
    %38 = arith.index_cast %c1_i32 : i32 to index
    %c0_17 = arith.constant 0 : index
    %c0_18 = arith.constant 0 : index
    %39 = vector.load %arg8[%38, %c0_17, %c0_18] : memref<8x256x128xbf16, #tpu.memory_space<vmem>>, vector<1x256x128xbf16>
    %40 = vector.shape_cast %39 : vector<1x256x128xbf16> to vector<256x128xbf16>
    %41 = arith.extf %40 : vector<256x128xbf16> to vector<256x128xf32>
    %cst_19 = arith.constant dense<0.000000e+00> : vector<256x128xf32>
    %42 = tpu.matmul %37, %10, %cst_19 {dimension_numbers = #tpu.dot_dimension_numbers<[1], [0], [0], [1], [0, 0, 1, 1], [], []>} : vector<256x32xbf16>, vector<32x128xbf16>, vector<256x128xf32> -> vector<256x128xf32>
    %43 = arith.addf %41, %42 : vector<256x128xf32>
    %44 = arith.truncf %43 : vector<256x128xf32> to vector<256x128xbf16>
    %45 = arith.negf %44 : vector<256x128xbf16>
    %46 = math.exp %45 : vector<256x128xbf16>
    %cst_20 = arith.constant 1.000000e+00 : bf16
    %47 = vector.broadcast %cst_20 : bf16 to vector<256x128xbf16>
    %48 = arith.addf %47, %46 : vector<256x128xbf16>
    %49 = arith.divf %47, %48 : vector<256x128xbf16>
    %50 = math.tanh %44 : vector<256x128xbf16>
    %51 = vector.extract_strided_slice %49 {offsets = [0, 0], sizes = [256, 32], strides = [1, 1]} : vector<256x128xbf16> to vector<256x32xbf16>
    %52 = vector.extract_strided_slice %49 {offsets = [0, 32], sizes = [256, 32], strides = [1, 1]} : vector<256x128xbf16> to vector<256x32xbf16>
    %53 = vector.extract_strided_slice %50 {offsets = [0, 64], sizes = [256, 32], strides = [1, 1]} : vector<256x128xbf16> to vector<256x32xbf16>
    %54 = vector.extract_strided_slice %49 {offsets = [0, 96], sizes = [256, 32], strides = [1, 1]} : vector<256x128xbf16> to vector<256x32xbf16>
    %55 = arith.extf %52 : vector<256x32xbf16> to vector<256x32xf32>
    %56 = arith.mulf %55, %34 : vector<256x32xf32>
    %57 = arith.mulf %51, %53 : vector<256x32xbf16>
    %58 = arith.extf %57 : vector<256x32xbf16> to vector<256x32xf32>
    %59 = arith.addf %56, %58 : vector<256x32xf32>
    %60 = arith.truncf %59 : vector<256x32xf32> to vector<256x32xbf16>
    %61 = math.tanh %60 : vector<256x32xbf16>
    %62 = arith.mulf %54, %61 : vector<256x32xbf16>
    %c2_i32 = arith.constant 2 : i32
    %63 = arith.index_cast %c2_i32 : i32 to index
    %c0_21 = arith.constant 0 : index
    %c0_22 = arith.constant 0 : index
    %64 = vector.load %arg8[%63, %c0_21, %c0_22] : memref<8x256x128xbf16, #tpu.memory_space<vmem>>, vector<1x256x128xbf16>
    %65 = vector.shape_cast %64 : vector<1x256x128xbf16> to vector<256x128xbf16>
    %66 = arith.extf %65 : vector<256x128xbf16> to vector<256x128xf32>
    %cst_23 = arith.constant dense<0.000000e+00> : vector<256x128xf32>
    %67 = tpu.matmul %62, %10, %cst_23 {dimension_numbers = #tpu.dot_dimension_numbers<[1], [0], [0], [1], [0, 0, 1, 1], [], []>} : vector<256x32xbf16>, vector<32x128xbf16>, vector<256x128xf32> -> vector<256x128xf32>
    %68 = arith.addf %66, %67 : vector<256x128xf32>
    %69 = arith.truncf %68 : vector<256x128xf32> to vector<256x128xbf16>
    %70 = arith.negf %69 : vector<256x128xbf16>
    %71 = math.exp %70 : vector<256x128xbf16>
    %cst_24 = arith.constant 1.000000e+00 : bf16
    %72 = vector.broadcast %cst_24 : bf16 to vector<256x128xbf16>
    %73 = arith.addf %72, %71 : vector<256x128xbf16>
    %74 = arith.divf %72, %73 : vector<256x128xbf16>
    %75 = math.tanh %69 : vector<256x128xbf16>
    %76 = vector.extract_strided_slice %74 {offsets = [0, 0], sizes = [256, 32], strides = [1, 1]} : vector<256x128xbf16> to vector<256x32xbf16>
    %77 = vector.extract_strided_slice %74 {offsets = [0, 32], sizes = [256, 32], strides = [1, 1]} : vector<256x128xbf16> to vector<256x32xbf16>
    %78 = vector.extract_strided_slice %75 {offsets = [0, 64], sizes = [256, 32], strides = [1, 1]} : vector<256x128xbf16> to vector<256x32xbf16>
    %79 = vector.extract_strided_slice %74 {offsets = [0, 96], sizes = [256, 32], strides = [1, 1]} : vector<256x128xbf16> to vector<256x32xbf16>
    %80 = arith.extf %77 : vector<256x32xbf16> to vector<256x32xf32>
    %81 = arith.mulf %80, %59 : vector<256x32xf32>
    %82 = arith.mulf %76, %78 : vector<256x32xbf16>
    %83 = arith.extf %82 : vector<256x32xbf16> to vector<256x32xf32>
    %84 = arith.addf %81, %83 : vector<256x32xf32>
    %85 = arith.truncf %84 : vector<256x32xf32> to vector<256x32xbf16>
    %86 = math.tanh %85 : vector<256x32xbf16>
    %87 = arith.mulf %79, %86 : vector<256x32xbf16>
    %c3_i32 = arith.constant 3 : i32
    %88 = arith.index_cast %c3_i32 : i32 to index
    %c0_25 = arith.constant 0 : index
    %c0_26 = arith.constant 0 : index
    %89 = vector.load %arg8[%88, %c0_25, %c0_26] : memref<8x256x128xbf16, #tpu.memory_space<vmem>>, vector<1x256x128xbf16>
    %90 = vector.shape_cast %89 : vector<1x256x128xbf16> to vector<256x128xbf16>
    %91 = arith.extf %90 : vector<256x128xbf16> to vector<256x128xf32>
    %cst_27 = arith.constant dense<0.000000e+00> : vector<256x128xf32>
    %92 = tpu.matmul %87, %10, %cst_27 {dimension_numbers = #tpu.dot_dimension_numbers<[1], [0], [0], [1], [0, 0, 1, 1], [], []>} : vector<256x32xbf16>, vector<32x128xbf16>, vector<256x128xf32> -> vector<256x128xf32>
    %93 = arith.addf %91, %92 : vector<256x128xf32>
    %94 = arith.truncf %93 : vector<256x128xf32> to vector<256x128xbf16>
    %95 = arith.negf %94 : vector<256x128xbf16>
    %96 = math.exp %95 : vector<256x128xbf16>
    %cst_28 = arith.constant 1.000000e+00 : bf16
    %97 = vector.broadcast %cst_28 : bf16 to vector<256x128xbf16>
    %98 = arith.addf %97, %96 : vector<256x128xbf16>
    %99 = arith.divf %97, %98 : vector<256x128xbf16>
    %100 = math.tanh %94 : vector<256x128xbf16>
    %101 = vector.extract_strided_slice %99 {offsets = [0, 0], sizes = [256, 32], strides = [1, 1]} : vector<256x128xbf16> to vector<256x32xbf16>
    %102 = vector.extract_strided_slice %99 {offsets = [0, 32], sizes = [256, 32], strides = [1, 1]} : vector<256x128xbf16> to vector<256x32xbf16>
    %103 = vector.extract_strided_slice %100 {offsets = [0, 64], sizes = [256, 32], strides = [1, 1]} : vector<256x128xbf16> to vector<256x32xbf16>
    %104 = vector.extract_strided_slice %99 {offsets = [0, 96], sizes = [256, 32], strides = [1, 1]} : vector<256x128xbf16> to vector<256x32xbf16>
    %105 = arith.extf %102 : vector<256x32xbf16> to vector<256x32xf32>
    %106 = arith.mulf %105, %84 : vector<256x32xf32>
    %107 = arith.mulf %101, %103 : vector<256x32xbf16>
    %108 = arith.extf %107 : vector<256x32xbf16> to vector<256x32xf32>
    %109 = arith.addf %106, %108 : vector<256x32xf32>
    %110 = arith.truncf %109 : vector<256x32xf32> to vector<256x32xbf16>
    %111 = math.tanh %110 : vector<256x32xbf16>
    %112 = arith.mulf %104, %111 : vector<256x32xbf16>
    %c4_i32 = arith.constant 4 : i32
    %113 = arith.index_cast %c4_i32 : i32 to index
    %c0_29 = arith.constant 0 : index
    %c0_30 = arith.constant 0 : index
    %114 = vector.load %arg8[%113, %c0_29, %c0_30] : memref<8x256x128xbf16, #tpu.memory_space<vmem>>, vector<1x256x128xbf16>
    %115 = vector.shape_cast %114 : vector<1x256x128xbf16> to vector<256x128xbf16>
    %116 = arith.extf %115 : vector<256x128xbf16> to vector<256x128xf32>
    %cst_31 = arith.constant dense<0.000000e+00> : vector<256x128xf32>
    %117 = tpu.matmul %112, %10, %cst_31 {dimension_numbers = #tpu.dot_dimension_numbers<[1], [0], [0], [1], [0, 0, 1, 1], [], []>} : vector<256x32xbf16>, vector<32x128xbf16>, vector<256x128xf32> -> vector<256x128xf32>
    %118 = arith.addf %116, %117 : vector<256x128xf32>
    %119 = arith.truncf %118 : vector<256x128xf32> to vector<256x128xbf16>
    %120 = arith.negf %119 : vector<256x128xbf16>
    %121 = math.exp %120 : vector<256x128xbf16>
    %cst_32 = arith.constant 1.000000e+00 : bf16
    %122 = vector.broadcast %cst_32 : bf16 to vector<256x128xbf16>
    %123 = arith.addf %122, %121 : vector<256x128xbf16>
    %124 = arith.divf %122, %123 : vector<256x128xbf16>
    %125 = math.tanh %119 : vector<256x128xbf16>
    %126 = vector.extract_strided_slice %124 {offsets = [0, 0], sizes = [256, 32], strides = [1, 1]} : vector<256x128xbf16> to vector<256x32xbf16>
    %127 = vector.extract_strided_slice %124 {offsets = [0, 32], sizes = [256, 32], strides = [1, 1]} : vector<256x128xbf16> to vector<256x32xbf16>
    %128 = vector.extract_strided_slice %125 {offsets = [0, 64], sizes = [256, 32], strides = [1, 1]} : vector<256x128xbf16> to vector<256x32xbf16>
    %129 = vector.extract_strided_slice %124 {offsets = [0, 96], sizes = [256, 32], strides = [1, 1]} : vector<256x128xbf16> to vector<256x32xbf16>
    %130 = arith.extf %127 : vector<256x32xbf16> to vector<256x32xf32>
    %131 = arith.mulf %130, %109 : vector<256x32xf32>
    %132 = arith.mulf %126, %128 : vector<256x32xbf16>
    %133 = arith.extf %132 : vector<256x32xbf16> to vector<256x32xf32>
    %134 = arith.addf %131, %133 : vector<256x32xf32>
    %135 = arith.truncf %134 : vector<256x32xf32> to vector<256x32xbf16>
    %136 = math.tanh %135 : vector<256x32xbf16>
    %137 = arith.mulf %129, %136 : vector<256x32xbf16>
    %c5_i32 = arith.constant 5 : i32
    %138 = arith.index_cast %c5_i32 : i32 to index
    %c0_33 = arith.constant 0 : index
    %c0_34 = arith.constant 0 : index
    %139 = vector.load %arg8[%138, %c0_33, %c0_34] : memref<8x256x128xbf16, #tpu.memory_space<vmem>>, vector<1x256x128xbf16>
    %140 = vector.shape_cast %139 : vector<1x256x128xbf16> to vector<256x128xbf16>
    %141 = arith.extf %140 : vector<256x128xbf16> to vector<256x128xf32>
    %cst_35 = arith.constant dense<0.000000e+00> : vector<256x128xf32>
    %142 = tpu.matmul %137, %10, %cst_35 {dimension_numbers = #tpu.dot_dimension_numbers<[1], [0], [0], [1], [0, 0, 1, 1], [], []>} : vector<256x32xbf16>, vector<32x128xbf16>, vector<256x128xf32> -> vector<256x128xf32>
    %143 = arith.addf %141, %142 : vector<256x128xf32>
    %144 = arith.truncf %143 : vector<256x128xf32> to vector<256x128xbf16>
    %145 = arith.negf %144 : vector<256x128xbf16>
    %146 = math.exp %145 : vector<256x128xbf16>
    %cst_36 = arith.constant 1.000000e+00 : bf16
    %147 = vector.broadcast %cst_36 : bf16 to vector<256x128xbf16>
    %148 = arith.addf %147, %146 : vector<256x128xbf16>
    %149 = arith.divf %147, %148 : vector<256x128xbf16>
    %150 = math.tanh %144 : vector<256x128xbf16>
    %151 = vector.extract_strided_slice %149 {offsets = [0, 0], sizes = [256, 32], strides = [1, 1]} : vector<256x128xbf16> to vector<256x32xbf16>
    %152 = vector.extract_strided_slice %149 {offsets = [0, 32], sizes = [256, 32], strides = [1, 1]} : vector<256x128xbf16> to vector<256x32xbf16>
    %153 = vector.extract_strided_slice %150 {offsets = [0, 64], sizes = [256, 32], strides = [1, 1]} : vector<256x128xbf16> to vector<256x32xbf16>
    %154 = vector.extract_strided_slice %149 {offsets = [0, 96], sizes = [256, 32], strides = [1, 1]} : vector<256x128xbf16> to vector<256x32xbf16>
    %155 = arith.extf %152 : vector<256x32xbf16> to vector<256x32xf32>
    %156 = arith.mulf %155, %134 : vector<256x32xf32>
    %157 = arith.mulf %151, %153 : vector<256x32xbf16>
    %158 = arith.extf %157 : vector<256x32xbf16> to vector<256x32xf32>
    %159 = arith.addf %156, %158 : vector<256x32xf32>
    %160 = arith.truncf %159 : vector<256x32xf32> to vector<256x32xbf16>
    %161 = math.tanh %160 : vector<256x32xbf16>
    %162 = arith.mulf %154, %161 : vector<256x32xbf16>
    %c6_i32 = arith.constant 6 : i32
    %163 = arith.index_cast %c6_i32 : i32 to index
    %c0_37 = arith.constant 0 : index
    %c0_38 = arith.constant 0 : index
    %164 = vector.load %arg8[%163, %c0_37, %c0_38] : memref<8x256x128xbf16, #tpu.memory_space<vmem>>, vector<1x256x128xbf16>
    %165 = vector.shape_cast %164 : vector<1x256x128xbf16> to vector<256x128xbf16>
    %166 = arith.extf %165 : vector<256x128xbf16> to vector<256x128xf32>
    %cst_39 = arith.constant dense<0.000000e+00> : vector<256x128xf32>
    %167 = tpu.matmul %162, %10, %cst_39 {dimension_numbers = #tpu.dot_dimension_numbers<[1], [0], [0], [1], [0, 0, 1, 1], [], []>} : vector<256x32xbf16>, vector<32x128xbf16>, vector<256x128xf32> -> vector<256x128xf32>
    %168 = arith.addf %166, %167 : vector<256x128xf32>
    %169 = arith.truncf %168 : vector<256x128xf32> to vector<256x128xbf16>
    %170 = arith.negf %169 : vector<256x128xbf16>
    %171 = math.exp %170 : vector<256x128xbf16>
    %cst_40 = arith.constant 1.000000e+00 : bf16
    %172 = vector.broadcast %cst_40 : bf16 to vector<256x128xbf16>
    %173 = arith.addf %172, %171 : vector<256x128xbf16>
    %174 = arith.divf %172, %173 : vector<256x128xbf16>
    %175 = math.tanh %169 : vector<256x128xbf16>
    %176 = vector.extract_strided_slice %174 {offsets = [0, 0], sizes = [256, 32], strides = [1, 1]} : vector<256x128xbf16> to vector<256x32xbf16>
    %177 = vector.extract_strided_slice %174 {offsets = [0, 32], sizes = [256, 32], strides = [1, 1]} : vector<256x128xbf16> to vector<256x32xbf16>
    %178 = vector.extract_strided_slice %175 {offsets = [0, 64], sizes = [256, 32], strides = [1, 1]} : vector<256x128xbf16> to vector<256x32xbf16>
    %179 = vector.extract_strided_slice %174 {offsets = [0, 96], sizes = [256, 32], strides = [1, 1]} : vector<256x128xbf16> to vector<256x32xbf16>
    %180 = arith.extf %177 : vector<256x32xbf16> to vector<256x32xf32>
    %181 = arith.mulf %180, %159 : vector<256x32xf32>
    %182 = arith.mulf %176, %178 : vector<256x32xbf16>
    %183 = arith.extf %182 : vector<256x32xbf16> to vector<256x32xf32>
    %184 = arith.addf %181, %183 : vector<256x32xf32>
    %185 = arith.truncf %184 : vector<256x32xf32> to vector<256x32xbf16>
    %186 = math.tanh %185 : vector<256x32xbf16>
    %187 = arith.mulf %179, %186 : vector<256x32xbf16>
    %c7_i32 = arith.constant 7 : i32
    %188 = arith.index_cast %c7_i32 : i32 to index
    %c0_41 = arith.constant 0 : index
    %c0_42 = arith.constant 0 : index
    %189 = vector.load %arg8[%188, %c0_41, %c0_42] : memref<8x256x128xbf16, #tpu.memory_space<vmem>>, vector<1x256x128xbf16>
    %190 = vector.shape_cast %189 : vector<1x256x128xbf16> to vector<256x128xbf16>
    %191 = arith.extf %190 : vector<256x128xbf16> to vector<256x128xf32>
    %cst_43 = arith.constant dense<0.000000e+00> : vector<256x128xf32>
    %192 = tpu.matmul %187, %10, %cst_43 {dimension_numbers = #tpu.dot_dimension_numbers<[1], [0], [0], [1], [0, 0, 1, 1], [], []>} : vector<256x32xbf16>, vector<32x128xbf16>, vector<256x128xf32> -> vector<256x128xf32>
    %193 = arith.addf %191, %192 : vector<256x128xf32>
    %194 = arith.truncf %193 : vector<256x128xf32> to vector<256x128xbf16>
    %195 = arith.negf %194 : vector<256x128xbf16>
    %196 = math.exp %195 : vector<256x128xbf16>
    %cst_44 = arith.constant 1.000000e+00 : bf16
    %197 = vector.broadcast %cst_44 : bf16 to vector<256x128xbf16>
    %198 = arith.addf %197, %196 : vector<256x128xbf16>
    %199 = arith.divf %197, %198 : vector<256x128xbf16>
    %200 = math.tanh %194 : vector<256x128xbf16>
    %201 = vector.extract_strided_slice %199 {offsets = [0, 0], sizes = [256, 32], strides = [1, 1]} : vector<256x128xbf16> to vector<256x32xbf16>
    %202 = vector.extract_strided_slice %199 {offsets = [0, 32], sizes = [256, 32], strides = [1, 1]} : vector<256x128xbf16> to vector<256x32xbf16>
    %203 = vector.extract_strided_slice %200 {offsets = [0, 64], sizes = [256, 32], strides = [1, 1]} : vector<256x128xbf16> to vector<256x32xbf16>
    %204 = vector.extract_strided_slice %199 {offsets = [0, 96], sizes = [256, 32], strides = [1, 1]} : vector<256x128xbf16> to vector<256x32xbf16>
    %205 = arith.extf %202 : vector<256x32xbf16> to vector<256x32xf32>
    %206 = arith.mulf %205, %184 : vector<256x32xf32>
    %207 = arith.mulf %201, %203 : vector<256x32xbf16>
    %208 = arith.extf %207 : vector<256x32xbf16> to vector<256x32xf32>
    %209 = arith.addf %206, %208 : vector<256x32xf32>
    %210 = arith.truncf %209 : vector<256x32xf32> to vector<256x32xbf16>
    %211 = math.tanh %210 : vector<256x32xbf16>
    %212 = arith.mulf %204, %211 : vector<256x32xbf16>
    %c8_i32 = arith.constant 8 : i32
    %c0_45 = arith.constant 0 : index
    %c0_46 = arith.constant 0 : index
    %213 = vector.load %arg5[%c0_45, %c0_46] : memref<32x128xbf16, #tpu.memory_space<vmem>>, vector<32x128xbf16>
    %cst_47 = arith.constant dense<0.000000e+00> : vector<256x128xf32>
    %214 = tpu.matmul %212, %213, %cst_47 {dimension_numbers = #tpu.dot_dimension_numbers<[1], [0], [0], [1], [0, 0, 1, 1], [], []>} : vector<256x32xbf16>, vector<32x128xbf16>, vector<256x128xf32> -> vector<256x128xf32>
    %c0_48 = arith.constant 0 : index
    %c0_49 = arith.constant 0 : index
    %215 = vector.load %arg6[%c0_48, %c0_49] : memref<1x128xf32, #tpu.memory_space<vmem>>, vector<1x128xf32>
    %216 = vector.broadcast %215 : vector<1x128xf32> to vector<256x128xf32>
    %217 = arith.addf %214, %216 : vector<256x128xf32>
    %c0_50 = arith.constant 0 : index
    %c0_51 = arith.constant 0 : index
    %218 = vector.load %arg7[%c0_50, %c0_51] : memref<256x128xf32, #tpu.memory_space<vmem>>, vector<256x128xf32>
    tpu.vector_store %arg7[%c0_50, %c0_51], %217 {strides = array<i32>} : memref<256x128xf32, #tpu.memory_space<vmem>>, vector<256x128xf32>,
    return
  }
  func.func @transform_0(%arg0: i32) -> (i32, i32, i32) {
    %c0_i32 = arith.constant 0 : i32
    %c0_i32_0 = arith.constant 0 : i32
    %c0_i32_1 = arith.constant 0 : i32
    return %c0_i32, %arg0, %c0_i32_0 : i32, i32, i32
  }
  func.func @transform_1(%arg0: i32) -> (i32, i32) {
    %c0_i32 = arith.constant 0 : i32
    %c0_i32_0 = arith.constant 0 : i32
    %c0_i32_1 = arith.constant 0 : i32
    return %c0_i32, %c0_i32_0 : i32, i32
  }
  func.func @transform_2(%arg0: i32) -> (i32, i32) {
    %c0_i32 = arith.constant 0 : i32
    %c0_i32_0 = arith.constant 0 : i32
    %c0_i32_1 = arith.constant 0 : i32
    return %c0_i32, %c0_i32_0 : i32, i32
  }
  func.func @transform_3(%arg0: i32) -> (i32, i32) {
    %c0_i32 = arith.constant 0 : i32
    %c0_i32_0 = arith.constant 0 : i32
    %c0_i32_1 = arith.constant 0 : i32
    return %c0_i32, %c0_i32_0 : i32, i32
  }
  func.func @transform_4(%arg0: i32) -> (i32, i32) {
    %c0_i32 = arith.constant 0 : i32
    %c0_i32_0 = arith.constant 0 : i32
    %c0_i32_1 = arith.constant 0 : i32
    return %c0_i32, %c0_i32_0 : i32, i32
  }
  func.func @transform_5(%arg0: i32) -> (i32, i32) {
    %c0_i32 = arith.constant 0 : i32
    %c0_i32_0 = arith.constant 0 : i32
    %c0_i32_1 = arith.constant 0 : i32
    return %c0_i32, %c0_i32_0 : i32, i32
  }
  func.func @transform_6(%arg0: i32) -> (i32, i32) {
    %c0_i32 = arith.constant 0 : i32
    %c0_i32_0 = arith.constant 0 : i32
    return %arg0, %c0_i32 : i32, i32
  }
}

</mosaic_0001>

<llo_original>
// kernel: tpu_custom_call.1
$region0: #{tpu_custom_call.1}
  #allocation0 [shape = 'u32[]', space=smem, size = 0x4, offset = 0x4, fixed_abs, tag = 'smem constant byte address 0x4 - core index']
  #allocation1 [shape = 'u32[144,128]{1,0:T(1,128)}', space=vmem, size = 0x12000, scoped, tag = 'internal scratch']
  #allocation2 [shape = 'bf16[8,256,128]{2,1,0:T(8,128)(2,1)}', space=vmem, size = 0x80000, scoped, tag = 'scratch operand']
  %s0 = inlined_call_operand.vmem [shape: bf16[8,256,16], index: 0, kind: input, shape index: {}]
  %s1 = inlined_call_operand.vmem [shape: bf16[16,128], index: 1, kind: input, shape index: {}]
  %s2 = inlined_call_operand.vmem [shape: bf16[32,128], index: 2, kind: input, shape index: {}]
  %s3 = inlined_call_operand.vmem [shape: f32[1,128], index: 3, kind: input, shape index: {}]
  %s4 = inlined_call_operand.vmem [shape: bf16[32,128], index: 4, kind: input, shape index: {}]
  %s5 = inlined_call_operand.vmem [shape: f32[1,128], index: 5, kind: input, shape index: {}]
  %s6 = inlined_call_operand.hbm [shape: f32[256,128], index: 6, kind: output, shape index: {}]
  %s7 = sld [smem:[#allocation0]]
  $region34: #{tpu_custom_call.1} parent=0
    _
  %s9 = ssub.s32 1, %s7
  %s10 = scalar_select 0, %s9, %s7
  $region1: #{tpu_custom_call.1} parent=0
    #allocation3 [shape = 'u8[131072]{0}', space=vmem, size = 0x20000, scoped, tag = 'output window, operand 0, single buffered']
    #allocation4 [shape = 's32[1]{0}', space=sflag, size = 0x4, scoped, tag = 'scoped memory for tpu_custom_call.1']
    %11 = vsyncpa [#allocation4], 0
    // Predicated region
    $region2: #{tpu_custom_call.1} parent=1 // pred_check
      _
    $region3: #{tpu_custom_call.1} parent=1 // pred_check_branch
      %13 = sbr.rel (0) target = $region5
    $region4: #{tpu_custom_call.1} parent=1 // pred_region
      _
    $region5: #{tpu_custom_call.1} parent=1 // pred_fallthru
      _
    // Predicated region
    $region6: #{tpu_custom_call.1} parent=1 // pred_check
      _
    $region7: #{tpu_custom_call.1} parent=1 // pred_check_branch
      %15 = sbr.rel (0) target = $region9
    $region8: #{tpu_custom_call.1} parent=1 // pred_region
      _
    $region9: #{tpu_custom_call.1} parent=1 // pred_fallthru
      _
    // Predicated region
    $region10: #{tpu_custom_call.1} parent=1 // pred_check
      _
    $region11: #{tpu_custom_call.1} parent=1 // pred_check_branch
      %17 = sbr.rel (0) target = $region13
    $region12: #{tpu_custom_call.1} parent=1 // pred_region
      _
    $region13: #{tpu_custom_call.1} parent=1 // pred_fallthru
      _
    // Predicated region
    $region14: #{tpu_custom_call.1} parent=1 // pred_check
      _
    $region15: #{tpu_custom_call.1} parent=1 // pred_check_branch
      %19 = sbr.rel (0) target = $region17
    $region16: #{tpu_custom_call.1} parent=1 // pred_region
      _
    $region17: #{tpu_custom_call.1} parent=1 // pred_fallthru
      _
    // Predicated region
    $region18: #{tpu_custom_call.1} parent=1 // pred_check
      _
    $region19: #{tpu_custom_call.1} parent=1 // pred_check_branch
      %21 = sbr.rel (0) target = $region21
    $region20: #{tpu_custom_call.1} parent=1 // pred_region
      _
    $region21: #{tpu_custom_call.1} parent=1 // pred_fallthru
      _
    // Predicated region
    $region22: #{tpu_custom_call.1} parent=1 // pred_check
      _
    $region23: #{tpu_custom_call.1} parent=1 // pred_check_branch
      %23 = sbr.rel (0) target = $region25
    $region24: #{tpu_custom_call.1} parent=1 // pred_region
      _
    $region25: #{tpu_custom_call.1} parent=1 // pred_fallthru
      _
    %v26 = vld [vmem:[%s0] sm:$0xf]
    %v27 = vld [vmem:[%s0 + $0x4] sm:$0xf]
    %v28 = vld [vmem:[%s0 + $0x8] sm:$0xf]
    %v29 = vld [vmem:[%s0 + $0xc] sm:$0xf]
    %v30 = vld [vmem:[%s0 + $0x10] sm:$0xf]
    %v31 = vld [vmem:[%s0 + $0x14] sm:$0xf]
    %v32 = vld [vmem:[%s0 + $0x18] sm:$0xf]
    %v33 = vld [vmem:[%s0 + $0x1c] sm:$0xf]
    %v34 = vld [vmem:[%s0 + $0x20] sm:$0xf]
    %v35 = vld [vmem:[%s0 + $0x24] sm:$0xf]
    %v36 = vld [vmem:[%s0 + $0x28] sm:$0xf]
    %v37 = vld [vmem:[%s0 + $0x2c] sm:$0xf]
    %v38 = vld [vmem:[%s0 + $0x30] sm:$0xf]
    %v39 = vld [vmem:[%s0 + $0x34] sm:$0xf]
    %v40 = vld [vmem:[%s0 + $0x38] sm:$0xf]
    %v41 = vld [vmem:[%s0 + $0x3c] sm:$0xf]
    %v42 = vld [vmem:[%s0 + $0x40] sm:$0xf]
    %v43 = vld [vmem:[%s0 + $0x44] sm:$0xf]
    %v44 = vld [vmem:[%s0 + $0x48] sm:$0xf]
    %v45 = vld [vmem:[%s0 + $0x4c] sm:$0xf]
    %v46 = vld [vmem:[%s0 + $0x50] sm:$0xf]
    %v47 = vld [vmem:[%s0 + $0x54] sm:$0xf]
    %v48 = vld [vmem:[%s0 + $0x58] sm:$0xf]
    %v49 = vld [vmem:[%s0 + $0x5c] sm:$0xf]
    %v50 = vld [vmem:[%s0 + $0x60] sm:$0xf]
    %v51 = vld [vmem:[%s0 + $0x64] sm:$0xf]
    %v52 = vld [vmem:[%s0 + $0x68] sm:$0xf]
    %v53 = vld [vmem:[%s0 + $0x6c] sm:$0xf]
    %v54 = vld [vmem:[%s0 + $0x70] sm:$0xf]
    %v55 = vld [vmem:[%s0 + $0x74] sm:$0xf]
    %v56 = vld [vmem:[%s0 + $0x78] sm:$0xf]
    %v57 = vld [vmem:[%s0 + $0x7c] sm:$0xf]
    %v58 = vld [vmem:[%s0 + $0x80] sm:$0xf]
    %v59 = vld [vmem:[%s0 + $0x84] sm:$0xf]
    %v60 = vld [vmem:[%s0 + $0x88] sm:$0xf]
    %v61 = vld [vmem:[%s0 + $0x8c] sm:$0xf]
    %v62 = vld [vmem:[%s0 + $0x90] sm:$0xf]
    %v63 = vld [vmem:[%s0 + $0x94] sm:$0xf]
    %v64 = vld [vmem:[%s0 + $0x98] sm:$0xf]
    %v65 = vld [vmem:[%s0 + $0x9c] sm:$0xf]
    %v66 = vld [vmem:[%s0 + $0xa0] sm:$0xf]
    %v67 = vld [vmem:[%s0 + $0xa4] sm:$0xf]
    %v68 = vld [vmem:[%s0 + $0xa8] sm:$0xf]
    %v69 = vld [vmem:[%s0 + $0xac] sm:$0xf]
    %v70 = vld [vmem:[%s0 + $0xb0] sm:$0xf]
    %v71 = vld [vmem:[%s0 + $0xb4] sm:$0xf]
    %v72 = vld [vmem:[%s0 + $0xb8] sm:$0xf]
    %v73 = vld [vmem:[%s0 + $0xbc] sm:$0xf]
    %v74 = vld [vmem:[%s0 + $0xc0] sm:$0xf]
    %v75 = vld [vmem:[%s0 + $0xc4] sm:$0xf]
    %v76 = vld [vmem:[%s0 + $0xc8] sm:$0xf]
    %v77 = vld [vmem:[%s0 + $0xcc] sm:$0xf]
    %v78 = vld [vmem:[%s0 + $0xd0] sm:$0xf]
    %v79 = vld [vmem:[%s0 + $0xd4] sm:$0xf]
    %v80 = vld [vmem:[%s0 + $0xd8] sm:$0xf]
    %v81 = vld [vmem:[%s0 + $0xdc] sm:$0xf]
    %v82 = vld [vmem:[%s0 + $0xe0] sm:$0xf]
    %v83 = vld [vmem:[%s0 + $0xe4] sm:$0xf]
    %v84 = vld [vmem:[%s0 + $0xe8] sm:$0xf]
    %v85 = vld [vmem:[%s0 + $0xec] sm:$0xf]
    %v86 = vld [vmem:[%s0 + $0xf0] sm:$0xf]
    %v87 = vld [vmem:[%s0 + $0xf4] sm:$0xf]
    %v88 = vld [vmem:[%s0 + $0xf8] sm:$0xf]
    %v89 = vld [vmem:[%s0 + $0xfc] sm:$0xf]
    %v90 = vld [vmem:[%s0 + $0x100] sm:$0xf]
    %v91 = vld [vmem:[%s0 + $0x104] sm:$0xf]
    %v92 = vld [vmem:[%s0 + $0x108] sm:$0xf]
    %v93 = vld [vmem:[%s0 + $0x10c] sm:$0xf]
    %v94 = vld [vmem:[%s0 + $0x110] sm:$0xf]
    %v95 = vld [vmem:[%s0 + $0x114] sm:$0xf]
    %v96 = vld [vmem:[%s0 + $0x118] sm:$0xf]
    %v97 = vld [vmem:[%s0 + $0x11c] sm:$0xf]
    %v98 = vld [vmem:[%s0 + $0x120] sm:$0xf]
    %v99 = vld [vmem:[%s0 + $0x124] sm:$0xf]
    %v100 = vld [vmem:[%s0 + $0x128] sm:$0xf]
    %v101 = vld [vmem:[%s0 + $0x12c] sm:$0xf]
    %v102 = vld [vmem:[%s0 + $0x130] sm:$0xf]
    %v103 = vld [vmem:[%s0 + $0x134] sm:$0xf]
    %v104 = vld [vmem:[%s0 + $0x138] sm:$0xf]
    %v105 = vld [vmem:[%s0 + $0x13c] sm:$0xf]
    %v106 = vld [vmem:[%s0 + $0x140] sm:$0xf]
    %v107 = vld [vmem:[%s0 + $0x144] sm:$0xf]
    %v108 = vld [vmem:[%s0 + $0x148] sm:$0xf]
    %v109 = vld [vmem:[%s0 + $0x14c] sm:$0xf]
    %v110 = vld [vmem:[%s0 + $0x150] sm:$0xf]
    %v111 = vld [vmem:[%s0 + $0x154] sm:$0xf]
    %v112 = vld [vmem:[%s0 + $0x158] sm:$0xf]
    %v113 = vld [vmem:[%s0 + $0x15c] sm:$0xf]
    %v114 = vld [vmem:[%s0 + $0x160] sm:$0xf]
    %v115 = vld [vmem:[%s0 + $0x164] sm:$0xf]
    %v116 = vld [vmem:[%s0 + $0x168] sm:$0xf]
    %v117 = vld [vmem:[%s0 + $0x16c] sm:$0xf]
    %v118 = vld [vmem:[%s0 + $0x170] sm:$0xf]
    %v119 = vld [vmem:[%s0 + $0x174] sm:$0xf]
    %v120 = vld [vmem:[%s0 + $0x178] sm:$0xf]
    %v121 = vld [vmem:[%s0 + $0x17c] sm:$0xf]
    %v122 = vld [vmem:[%s0 + $0x180] sm:$0xf]
    %v123 = vld [vmem:[%s0 + $0x184] sm:$0xf]
    %v124 = vld [vmem:[%s0 + $0x188] sm:$0xf]
    %v125 = vld [vmem:[%s0 + $0x18c] sm:$0xf]
    %v126 = vld [vmem:[%s0 + $0x190] sm:$0xf]
    %v127 = vld [vmem:[%s0 + $0x194] sm:$0xf]
    %v128 = vld [vmem:[%s0 + $0x198] sm:$0xf]
    %v129 = vld [vmem:[%s0 + $0x19c] sm:$0xf]
    %v130 = vld [vmem:[%s0 + $0x1a0] sm:$0xf]
    %v131 = vld [vmem:[%s0 + $0x1a4] sm:$0xf]
    %v132 = vld [vmem:[%s0 + $0x1a8] sm:$0xf]
    %v133 = vld [vmem:[%s0 + $0x1ac] sm:$0xf]
    %v134 = vld [vmem:[%s0 + $0x1b0] sm:$0xf]
    %v135 = vld [vmem:[%s0 + $0x1b4] sm:$0xf]
    %v136 = vld [vmem:[%s0 + $0x1b8] sm:$0xf]
    %v137 = vld [vmem:[%s0 + $0x1bc] sm:$0xf]
    %v138 = vld [vmem:[%s0 + $0x1c0] sm:$0xf]
    %v139 = vld [vmem:[%s0 + $0x1c4] sm:$0xf]
    %v140 = vld [vmem:[%s0 + $0x1c8] sm:$0xf]
    %v141 = vld [vmem:[%s0 + $0x1cc] sm:$0xf]
    %v142 = vld [vmem:[%s0 + $0x1d0] sm:$0xf]
    %v143 = vld [vmem:[%s0 + $0x1d4] sm:$0xf]
    %v144 = vld [vmem:[%s0 + $0x1d8] sm:$0xf]
    %v145 = vld [vmem:[%s0 + $0x1dc] sm:$0xf]
    %v146 = vld [vmem:[%s0 + $0x1e0] sm:$0xf]
    %v147 = vld [vmem:[%s0 + $0x1e4] sm:$0xf]
    %v148 = vld [vmem:[%s0 + $0x1e8] sm:$0xf]
    %v149 = vld [vmem:[%s0 + $0x1ec] sm:$0xf]
    %v150 = vld [vmem:[%s0 + $0x1f0] sm:$0xf]
    %v151 = vld [vmem:[%s0 + $0x1f4] sm:$0xf]
    %v152 = vld [vmem:[%s0 + $0x1f8] sm:$0xf]
    %v153 = vld [vmem:[%s0 + $0x1fc] sm:$0xf]
    %v154 = vld [vmem:[%s0 + $0x200] sm:$0xf]
    %v155 = vld [vmem:[%s0 + $0x204] sm:$0xf]
    %v156 = vld [vmem:[%s0 + $0x208] sm:$0xf]
    %v157 = vld [vmem:[%s0 + $0x20c] sm:$0xf]
    %v158 = vld [vmem:[%s0 + $0x210] sm:$0xf]
    %v159 = vld [vmem:[%s0 + $0x214] sm:$0xf]
    %v160 = vld [vmem:[%s0 + $0x218] sm:$0xf]
    %v161 = vld [vmem:[%s0 + $0x21c] sm:$0xf]
    %v162 = vld [vmem:[%s0 + $0x220] sm:$0xf]
    %v163 = vld [vmem:[%s0 + $0x224] sm:$0xf]
    %v164 = vld [vmem:[%s0 + $0x228] sm:$0xf]
    %v165 = vld [vmem:[%s0 + $0x22c] sm:$0xf]
    %v166 = vld [vmem:[%s0 + $0x230] sm:$0xf]
    %v167 = vld [vmem:[%s0 + $0x234] sm:$0xf]
    %v168 = vld [vmem:[%s0 + $0x238] sm:$0xf]
    %v169 = vld [vmem:[%s0 + $0x23c] sm:$0xf]
    %v170 = vld [vmem:[%s0 + $0x240] sm:$0xf]
    %v171 = vld [vmem:[%s0 + $0x244] sm:$0xf]
    %v172 = vld [vmem:[%s0 + $0x248] sm:$0xf]
    %v173 = vld [vmem:[%s0 + $0x24c] sm:$0xf]
    %v174 = vld [vmem:[%s0 + $0x250] sm:$0xf]
    %v175 = vld [vmem:[%s0 + $0x254] sm:$0xf]
    %v176 = vld [vmem:[%s0 + $0x258] sm:$0xf]
    %v177 = vld [vmem:[%s0 + $0x25c] sm:$0xf]
    %v178 = vld [vmem:[%s0 + $0x260] sm:$0xf]
    %v179 = vld [vmem:[%s0 + $0x264] sm:$0xf]
    %v180 = vld [vmem:[%s0 + $0x268] sm:$0xf]
    %v181 = vld [vmem:[%s0 + $0x26c] sm:$0xf]
    %v182 = vld [vmem:[%s0 + $0x270] sm:$0xf]
    %v183 = vld [vmem:[%s0 + $0x274] sm:$0xf]
    %v184 = vld [vmem:[%s0 + $0x278] sm:$0xf]
    %v185 = vld [vmem:[%s0 + $0x27c] sm:$0xf]
    %v186 = vld [vmem:[%s0 + $0x280] sm:$0xf]
    %v187 = vld [vmem:[%s0 + $0x284] sm:$0xf]
    %v188 = vld [vmem:[%s0 + $0x288] sm:$0xf]
    %v189 = vld [vmem:[%s0 + $0x28c] sm:$0xf]
    %v190 = vld [vmem:[%s0 + $0x290] sm:$0xf]
    %v191 = vld [vmem:[%s0 + $0x294] sm:$0xf]
    %v192 = vld [vmem:[%s0 + $0x298] sm:$0xf]
    %v193 = vld [vmem:[%s0 + $0x29c] sm:$0xf]
    %v194 = vld [vmem:[%s0 + $0x2a0] sm:$0xf]
    %v195 = vld [vmem:[%s0 + $0x2a4] sm:$0xf]
    %v196 = vld [vmem:[%s0 + $0x2a8] sm:$0xf]
    %v197 = vld [vmem:[%s0 + $0x2ac] sm:$0xf]
    %v198 = vld [vmem:[%s0 + $0x2b0] sm:$0xf]
    %v199 = vld [vmem:[%s0 + $0x2b4] sm:$0xf]
    %v200 = vld [vmem:[%s0 + $0x2b8] sm:$0xf]
    %v201 = vld [vmem:[%s0 + $0x2bc] sm:$0xf]
    %v202 = vld [vmem:[%s0 + $0x2c0] sm:$0xf]
    %v203 = vld [vmem:[%s0 + $0x2c4] sm:$0xf]
    %v204 = vld [vmem:[%s0 + $0x2c8] sm:$0xf]
    %v205 = vld [vmem:[%s0 + $0x2cc] sm:$0xf]
    %v206 = vld [vmem:[%s0 + $0x2d0] sm:$0xf]
    %v207 = vld [vmem:[%s0 + $0x2d4] sm:$0xf]
    %v208 = vld [vmem:[%s0 + $0x2d8] sm:$0xf]
    %v209 = vld [vmem:[%s0 + $0x2dc] sm:$0xf]
    %v210 = vld [vmem:[%s0 + $0x2e0] sm:$0xf]
    %v211 = vld [vmem:[%s0 + $0x2e4] sm:$0xf]
    %v212 = vld [vmem:[%s0 + $0x2e8] sm:$0xf]
    %v213 = vld [vmem:[%s0 + $0x2ec] sm:$0xf]
    %v214 = vld [vmem:[%s0 + $0x2f0] sm:$0xf]
    %v215 = vld [vmem:[%s0 + $0x2f4] sm:$0xf]
    %v216 = vld [vmem:[%s0 + $0x2f8] sm:$0xf]
    %v217 = vld [vmem:[%s0 + $0x2fc] sm:$0xf]
    %v218 = vld [vmem:[%s0 + $0x300] sm:$0xf]
    %v219 = vld [vmem:[%s0 + $0x304] sm:$0xf]
    %v220 = vld [vmem:[%s0 + $0x308] sm:$0xf]
    %v221 = vld [vmem:[%s0 + $0x30c] sm:$0xf]
    %v222 = vld [vmem:[%s0 + $0x310] sm:$0xf]
    %v223 = vld [vmem:[%s0 + $0x314] sm:$0xf]
    %v224 = vld [vmem:[%s0 + $0x318] sm:$0xf]
    %v225 = vld [vmem:[%s0 + $0x31c] sm:$0xf]
    %v226 = vld [vmem:[%s0 + $0x320] sm:$0xf]
    %v227 = vld [vmem:[%s0 + $0x324] sm:$0xf]
    %v228 = vld [vmem:[%s0 + $0x328] sm:$0xf]
    %v229 = vld [vmem:[%s0 + $0x32c] sm:$0xf]
    %v230 = vld [vmem:[%s0 + $0x330] sm:$0xf]
    %v231 = vld [vmem:[%s0 + $0x334] sm:$0xf]
    %v232 = vld [vmem:[%s0 + $0x338] sm:$0xf]
    %v233 = vld [vmem:[%s0 + $0x33c] sm:$0xf]
    %v234 = vld [vmem:[%s0 + $0x340] sm:$0xf]
    %v235 = vld [vmem:[%s0 + $0x344] sm:$0xf]
    %v236 = vld [vmem:[%s0 + $0x348] sm:$0xf]
    %v237 = vld [vmem:[%s0 + $0x34c] sm:$0xf]
    %v238 = vld [vmem:[%s0 + $0x350] sm:$0xf]
    %v239 = vld [vmem:[%s0 + $0x354] sm:$0xf]
    %v240 = vld [vmem:[%s0 + $0x358] sm:$0xf]
    %v241 = vld [vmem:[%s0 + $0x35c] sm:$0xf]
    %v242 = vld [vmem:[%s0 + $0x360] sm:$0xf]
    %v243 = vld [vmem:[%s0 + $0x364] sm:$0xf]
    %v244 = vld [vmem:[%s0 + $0x368] sm:$0xf]
    %v245 = vld [vmem:[%s0 + $0x36c] sm:$0xf]
    %v246 = vld [vmem:[%s0 + $0x370] sm:$0xf]
    %v247 = vld [vmem:[%s0 + $0x374] sm:$0xf]
    %v248 = vld [vmem:[%s0 + $0x378] sm:$0xf]
    %v249 = vld [vmem:[%s0 + $0x37c] sm:$0xf]
    %v250 = vld [vmem:[%s0 + $0x380] sm:$0xf]
    %v251 = vld [vmem:[%s0 + $0x384] sm:$0xf]
    %v252 = vld [vmem:[%s0 + $0x388] sm:$0xf]
    %v253 = vld [vmem:[%s0 + $0x38c] sm:$0xf]
    %v254 = vld [vmem:[%s0 + $0x390] sm:$0xf]
    %v255 = vld [vmem:[%s0 + $0x394] sm:$0xf]
    %v256 = vld [vmem:[%s0 + $0x398] sm:$0xf]
    %v257 = vld [vmem:[%s0 + $0x39c] sm:$0xf]
    %v258 = vld [vmem:[%s0 + $0x3a0] sm:$0xf]
    %v259 = vld [vmem:[%s0 + $0x3a4] sm:$0xf]
    %v260 = vld [vmem:[%s0 + $0x3a8] sm:$0xf]
    %v261 = vld [vmem:[%s0 + $0x3ac] sm:$0xf]
    %v262 = vld [vmem:[%s0 + $0x3b0] sm:$0xf]
    %v263 = vld [vmem:[%s0 + $0x3b4] sm:$0xf]
    %v264 = vld [vmem:[%s0 + $0x3b8] sm:$0xf]
    %v265 = vld [vmem:[%s0 + $0x3bc] sm:$0xf]
    %v266 = vld [vmem:[%s0 + $0x3c0] sm:$0xf]
    %v267 = vld [vmem:[%s0 + $0x3c4] sm:$0xf]
    %v268 = vld [vmem:[%s0 + $0x3c8] sm:$0xf]
    %v269 = vld [vmem:[%s0 + $0x3cc] sm:$0xf]
    %v270 = vld [vmem:[%s0 + $0x3d0] sm:$0xf]
    %v271 = vld [vmem:[%s0 + $0x3d4] sm:$0xf]
    %v272 = vld [vmem:[%s0 + $0x3d8] sm:$0xf]
    %v273 = vld [vmem:[%s0 + $0x3dc] sm:$0xf]
    %v274 = vld [vmem:[%s0 + $0x3e0] sm:$0xf]
    %v275 = vld [vmem:[%s0 + $0x3e4] sm:$0xf]
    %v276 = vld [vmem:[%s0 + $0x3e8] sm:$0xf]
    %v277 = vld [vmem:[%s0 + $0x3ec] sm:$0xf]
    %v278 = vld [vmem:[%s0 + $0x3f0] sm:$0xf]
    %v279 = vld [vmem:[%s0 + $0x3f4] sm:$0xf]
    %v280 = vld [vmem:[%s0 + $0x3f8] sm:$0xf]
    %v281 = vld [vmem:[%s0 + $0x3fc] sm:$0xf]
    %v282 = vld [vmem:[%s1] sm:$0xf]
    %v283 = vld [vmem:[%s1 + $0x4] sm:$0xf]
    %v284 = vld [vmem:[%s3] sm:$0x1]
    %v286 = vlaneseq
    %v287 = vshrl.u32 %v286, 7
    %v288 = vsub.s32 0, %v287
    %v289 = vrot.slane %v284, %v288
    %v547 = vunpack.c.l.b16 %v26
    %v548 = vunpack.c.l.b16 %v27
    %v549 = vunpack.c.l.b16 %v28
    %v550 = vunpack.c.l.b16 %v29
    %v551 = vunpack.c.l.b16 %v30
    %v552 = vunpack.c.l.b16 %v31
    %v553 = vunpack.c.l.b16 %v32
    %v554 = vunpack.c.l.b16 %v33
    %v555 = vunpack.c.l.b16 %v34
    %v556 = vunpack.c.l.b16 %v35
    %v557 = vunpack.c.l.b16 %v36
    %v558 = vunpack.c.l.b16 %v37
    %v559 = vunpack.c.l.b16 %v38
    %v560 = vunpack.c.l.b16 %v39
    %v561 = vunpack.c.l.b16 %v40
    %v562 = vunpack.c.l.b16 %v41
    %v563 = vunpack.c.l.b16 %v42
    %v564 = vunpack.c.l.b16 %v43
    %v565 = vunpack.c.l.b16 %v44
    %v566 = vunpack.c.l.b16 %v45
    %v567 = vunpack.c.l.b16 %v46
    %v568 = vunpack.c.l.b16 %v47
    %v569 = vunpack.c.l.b16 %v48
    %v570 = vunpack.c.l.b16 %v49
    %v571 = vunpack.c.l.b16 %v50
    %v572 = vunpack.c.l.b16 %v51
    %v573 = vunpack.c.l.b16 %v52
    %v574 = vunpack.c.l.b16 %v53
    %v575 = vunpack.c.l.b16 %v54
    %v576 = vunpack.c.l.b16 %v55
    %v577 = vunpack.c.l.b16 %v56
    %v578 = vunpack.c.l.b16 %v57
    %v579 = vunpack.c.l.b16 %v58
    %v580 = vunpack.c.l.b16 %v59
    %v581 = vunpack.c.l.b16 %v60
    %v582 = vunpack.c.l.b16 %v61
    %v583 = vunpack.c.l.b16 %v62
    %v584 = vunpack.c.l.b16 %v63
    %v585 = vunpack.c.l.b16 %v64
    %v586 = vunpack.c.l.b16 %v65
    %v587 = vunpack.c.l.b16 %v66
    %v588 = vunpack.c.l.b16 %v67
    %v589 = vunpack.c.l.b16 %v68
    %v590 = vunpack.c.l.b16 %v69
    %v591 = vunpack.c.l.b16 %v70
    %v592 = vunpack.c.l.b16 %v71
    %v593 = vunpack.c.l.b16 %v72
    %v594 = vunpack.c.l.b16 %v73
    %v595 = vunpack.c.l.b16 %v74
    %v596 = vunpack.c.l.b16 %v75
    %v597 = vunpack.c.l.b16 %v76
    %v598 = vunpack.c.l.b16 %v77
    %v599 = vunpack.c.l.b16 %v78
    %v600 = vunpack.c.l.b16 %v79
    %v601 = vunpack.c.l.b16 %v80
    %v602 = vunpack.c.l.b16 %v81
    %v603 = vunpack.c.l.b16 %v82
    %v604 = vunpack.c.l.b16 %v83
    %v605 = vunpack.c.l.b16 %v84
    %v606 = vunpack.c.l.b16 %v85
    %v607 = vunpack.c.l.b16 %v86
    %v608 = vunpack.c.l.b16 %v87
    %v609 = vunpack.c.l.b16 %v88
    %v610 = vunpack.c.l.b16 %v89
    %v611 = vunpack.c.l.b16 %v90
    %v612 = vunpack.c.l.b16 %v91
    %v613 = vunpack.c.l.b16 %v92
    %v614 = vunpack.c.l.b16 %v93
    %v615 = vunpack.c.l.b16 %v94
    %v616 = vunpack.c.l.b16 %v95
    %v617 = vunpack.c.l.b16 %v96
    %v618 = vunpack.c.l.b16 %v97
    %v619 = vunpack.c.l.b16 %v98
    %v620 = vunpack.c.l.b16 %v99
    %v621 = vunpack.c.l.b16 %v100
    %v622 = vunpack.c.l.b16 %v101
    %v623 = vunpack.c.l.b16 %v102
    %v624 = vunpack.c.l.b16 %v103
    %v625 = vunpack.c.l.b16 %v104
    %v626 = vunpack.c.l.b16 %v105
    %v627 = vunpack.c.l.b16 %v106
    %v628 = vunpack.c.l.b16 %v107
    %v629 = vunpack.c.l.b16 %v108
    %v630 = vunpack.c.l.b16 %v109
    %v631 = vunpack.c.l.b16 %v110
    %v632 = vunpack.c.l.b16 %v111
    %v633 = vunpack.c.l.b16 %v112
    %v634 = vunpack.c.l.b16 %v113
    %v635 = vunpack.c.l.b16 %v114
    %v636 = vunpack.c.l.b16 %v115
    %v637 = vunpack.c.l.b16 %v116
    %v638 = vunpack.c.l.b16 %v117
    %v639 = vunpack.c.l.b16 %v118
    %v640 = vunpack.c.l.b16 %v119
    %v641 = vunpack.c.l.b16 %v120
    %v642 = vunpack.c.l.b16 %v121
    %v643 = vunpack.c.l.b16 %v122
    %v644 = vunpack.c.l.b16 %v123
    %v645 = vunpack.c.l.b16 %v124
    %v646 = vunpack.c.l.b16 %v125
    %v647 = vunpack.c.l.b16 %v126
    %v648 = vunpack.c.l.b16 %v127
    %v649 = vunpack.c.l.b16 %v128
    %v650 = vunpack.c.l.b16 %v129
    %v651 = vunpack.c.l.b16 %v130
    %v652 = vunpack.c.l.b16 %v131
    %v653 = vunpack.c.l.b16 %v132
    %v654 = vunpack.c.l.b16 %v133
    %v655 = vunpack.c.l.b16 %v134
    %v656 = vunpack.c.l.b16 %v135
    %v657 = vunpack.c.l.b16 %v136
    %v658 = vunpack.c.l.b16 %v137
    %v659 = vunpack.c.l.b16 %v138
    %v660 = vunpack.c.l.b16 %v139
    %v661 = vunpack.c.l.b16 %v140
    %v662 = vunpack.c.l.b16 %v141
    %v663 = vunpack.c.l.b16 %v142
    %v664 = vunpack.c.l.b16 %v143
    %v665 = vunpack.c.l.b16 %v144
    %v666 = vunpack.c.l.b16 %v145
    %v667 = vunpack.c.l.b16 %v146
    %v668 = vunpack.c.l.b16 %v147
    %v669 = vunpack.c.l.b16 %v148
    %v670 = vunpack.c.l.b16 %v149
    %v671 = vunpack.c.l.b16 %v150
    %v672 = vunpack.c.l.b16 %v151
    %v673 = vunpack.c.l.b16 %v152
    %v674 = vunpack.c.l.b16 %v153
    %v675 = vunpack.c.l.b16 %v154
    %v676 = vunpack.c.l.b16 %v155
    %v677 = vunpack.c.l.b16 %v156
    %v678 = vunpack.c.l.b16 %v157
    %v679 = vunpack.c.l.b16 %v158
    %v680 = vunpack.c.l.b16 %v159
    %v681 = vunpack.c.l.b16 %v160
    %v682 = vunpack.c.l.b16 %v161
    %v683 = vunpack.c.l.b16 %v162
    %v684 = vunpack.c.l.b16 %v163
    %v685 = vunpack.c.l.b16 %v164
    %v686 = vunpack.c.l.b16 %v165
    %v687 = vunpack.c.l.b16 %v166
    %v688 = vunpack.c.l.b16 %v167
    %v689 = vunpack.c.l.b16 %v168
    %v690 = vunpack.c.l.b16 %v169
    %v691 = vunpack.c.l.b16 %v170
    %v692 = vunpack.c.l.b16 %v171
    %v693 = vunpack.c.l.b16 %v172
    %v694 = vunpack.c.l.b16 %v173
    %v695 = vunpack.c.l.b16 %v174
    %v696 = vunpack.c.l.b16 %v175
    %v697 = vunpack.c.l.b16 %v176
    %v698 = vunpack.c.l.b16 %v177
    %v699 = vunpack.c.l.b16 %v178
    %v700 = vunpack.c.l.b16 %v179
    %v701 = vunpack.c.l.b16 %v180
    %v702 = vunpack.c.l.b16 %v181
    %v703 = vunpack.c.l.b16 %v182
    %v704 = vunpack.c.l.b16 %v183
    %v705 = vunpack.c.l.b16 %v184
    %v706 = vunpack.c.l.b16 %v185
    %v707 = vunpack.c.l.b16 %v186
    %v708 = vunpack.c.l.b16 %v187
    %v709 = vunpack.c.l.b16 %v188
    %v710 = vunpack.c.l.b16 %v189
    %v711 = vunpack.c.l.b16 %v190
    %v712 = vunpack.c.l.b16 %v191
    %v713 = vunpack.c.l.b16 %v192
    %v714 = vunpack.c.l.b16 %v193
    %v715 = vunpack.c.l.b16 %v194
    %v716 = vunpack.c.l.b16 %v195
    %v717 = vunpack.c.l.b16 %v196
    %v718 = vunpack.c.l.b16 %v197
    %v719 = vunpack.c.l.b16 %v198
    %v720 = vunpack.c.l.b16 %v199
    %v721 = vunpack.c.l.b16 %v200
    %v722 = vunpack.c.l.b16 %v201
    %v723 = vunpack.c.l.b16 %v202
    %v724 = vunpack.c.l.b16 %v203
    %v725 = vunpack.c.l.b16 %v204
    %v726 = vunpack.c.l.b16 %v205
    %v727 = vunpack.c.l.b16 %v206
    %v728 = vunpack.c.l.b16 %v207
    %v729 = vunpack.c.l.b16 %v208
    %v730 = vunpack.c.l.b16 %v209
    %v731 = vunpack.c.l.b16 %v210
    %v732 = vunpack.c.l.b16 %v211
    %v733 = vunpack.c.l.b16 %v212
    %v734 = vunpack.c.l.b16 %v213
    %v735 = vunpack.c.l.b16 %v214
    %v736 = vunpack.c.l.b16 %v215
    %v737 = vunpack.c.l.b16 %v216
    %v738 = vunpack.c.l.b16 %v217
    %v739 = vunpack.c.l.b16 %v218
    %v740 = vunpack.c.l.b16 %v219
    %v741 = vunpack.c.l.b16 %v220
    %v742 = vunpack.c.l.b16 %v221
    %v743 = vunpack.c.l.b16 %v222
    %v744 = vunpack.c.l.b16 %v223
    %v745 = vunpack.c.l.b16 %v224
    %v746 = vunpack.c.l.b16 %v225
    %v747 = vunpack.c.l.b16 %v226
    %v748 = vunpack.c.l.b16 %v227
    %v749 = vunpack.c.l.b16 %v228
    %v750 = vunpack.c.l.b16 %v229
    %v751 = vunpack.c.l.b16 %v230
    %v752 = vunpack.c.l.b16 %v231
    %v753 = vunpack.c.l.b16 %v232
    %v754 = vunpack.c.l.b16 %v233
    %v755 = vunpack.c.l.b16 %v234
    %v756 = vunpack.c.l.b16 %v235
    %v757 = vunpack.c.l.b16 %v236
    %v758 = vunpack.c.l.b16 %v237
    %v759 = vunpack.c.l.b16 %v238
    %v760 = vunpack.c.l.b16 %v239
    %v761 = vunpack.c.l.b16 %v240
    %v762 = vunpack.c.l.b16 %v241
    %v763 = vunpack.c.l.b16 %v242
    %v764 = vunpack.c.l.b16 %v243
    %v765 = vunpack.c.l.b16 %v244
    %v766 = vunpack.c.l.b16 %v245
    %v767 = vunpack.c.l.b16 %v246
    %v768 = vunpack.c.l.b16 %v247
    %v769 = vunpack.c.l.b16 %v248
    %v770 = vunpack.c.l.b16 %v249
    %v771 = vunpack.c.l.b16 %v250
    %v772 = vunpack.c.l.b16 %v251
    %v773 = vunpack.c.l.b16 %v252
    %v774 = vunpack.c.l.b16 %v253
    %v775 = vunpack.c.l.b16 %v254
    %v776 = vunpack.c.l.b16 %v255
    %v777 = vunpack.c.l.b16 %v256
    %v778 = vunpack.c.l.b16 %v257
    %v779 = vunpack.c.l.b16 %v258
    %v780 = vunpack.c.l.b16 %v259
    %v781 = vunpack.c.l.b16 %v260
    %v782 = vunpack.c.l.b16 %v261
    %v783 = vunpack.c.l.b16 %v262
    %v784 = vunpack.c.l.b16 %v263
    %v785 = vunpack.c.l.b16 %v264
    %v786 = vunpack.c.l.b16 %v265
    %v787 = vunpack.c.l.b16 %v266
    %v788 = vunpack.c.l.b16 %v267
    %v789 = vunpack.c.l.b16 %v268
    %v790 = vunpack.c.l.b16 %v269
    %v791 = vunpack.c.l.b16 %v270
    %v792 = vunpack.c.l.b16 %v271
    %v793 = vunpack.c.l.b16 %v272
    %v794 = vunpack.c.l.b16 %v273
    %v795 = vunpack.c.l.b16 %v274
    %v796 = vunpack.c.l.b16 %v275
    %v797 = vunpack.c.l.b16 %v276
    %v798 = vunpack.c.l.b16 %v277
    %v799 = vunpack.c.l.b16 %v278
    %v800 = vunpack.c.l.b16 %v279
    %v801 = vunpack.c.l.b16 %v280
    %v802 = vunpack.c.l.b16 %v281
    %v803 = vpack.c.b16 %v548, %v547
    %v804 = vpack.c.b16 %v550, %v549
    %v805 = vpack.c.b16 %v552, %v551
    %v806 = vpack.c.b16 %v554, %v553
    %v807 = vpack.c.b16 %v556, %v555
    %v808 = vpack.c.b16 %v558, %v557
    %v809 = vpack.c.b16 %v560, %v559
    %v810 = vpack.c.b16 %v562, %v561
    %v811 = vpack.c.b16 %v564, %v563
    %v812 = vpack.c.b16 %v566, %v565
    %v813 = vpack.c.b16 %v568, %v567
    %v814 = vpack.c.b16 %v570, %v569
    %v815 = vpack.c.b16 %v572, %v571
    %v816 = vpack.c.b16 %v574, %v573
    %v817 = vpack.c.b16 %v576, %v575
    %v818 = vpack.c.b16 %v578, %v577
    %v819 = vpack.c.b16 %v580, %v579
    %v820 = vpack.c.b16 %v582, %v581
    %v821 = vpack.c.b16 %v584, %v583
    %v822 = vpack.c.b16 %v586, %v585
    %v823 = vpack.c.b16 %v588, %v587
    %v824 = vpack.c.b16 %v590, %v589
    %v825 = vpack.c.b16 %v592, %v591
    %v826 = vpack.c.b16 %v594, %v593
    %v827 = vpack.c.b16 %v596, %v595
    %v828 = vpack.c.b16 %v598, %v597
    %v829 = vpack.c.b16 %v600, %v599
    %v830 = vpack.c.b16 %v602, %v601
    %v831 = vpack.c.b16 %v604, %v603
    %v832 = vpack.c.b16 %v606, %v605
    %v833 = vpack.c.b16 %v608, %v607
    %v834 = vpack.c.b16 %v610, %v609
    %v835 = vpack.c.b16 %v612, %v611
    %v836 = vpack.c.b16 %v614, %v613
    %v837 = vpack.c.b16 %v616, %v615
    %v838 = vpack.c.b16 %v618, %v617
    %v839 = vpack.c.b16 %v620, %v619
    %v840 = vpack.c.b16 %v622, %v621
    %v841 = vpack.c.b16 %v624, %v623
    %v842 = vpack.c.b16 %v626, %v625
    %v843 = vpack.c.b16 %v628, %v627
    %v844 = vpack.c.b16 %v630, %v629
    %v845 = vpack.c.b16 %v632, %v631
    %v846 = vpack.c.b16 %v634, %v633
    %v847 = vpack.c.b16 %v636, %v635
    %v848 = vpack.c.b16 %v638, %v637
    %v849 = vpack.c.b16 %v640, %v639
    %v850 = vpack.c.b16 %v642, %v641
    %v851 = vpack.c.b16 %v644, %v643
    %v852 = vpack.c.b16 %v646, %v645
    %v853 = vpack.c.b16 %v648, %v647
    %v854 = vpack.c.b16 %v650, %v649
    %v855 = vpack.c.b16 %v652, %v651
    %v856 = vpack.c.b16 %v654, %v653
    %v857 = vpack.c.b16 %v656, %v655
    %v858 = vpack.c.b16 %v658, %v657
    %v859 = vpack.c.b16 %v660, %v659
    %v860 = vpack.c.b16 %v662, %v661
    %v861 = vpack.c.b16 %v664, %v663
    %v862 = vpack.c.b16 %v666, %v665
    %v863 = vpack.c.b16 %v668, %v667
    %v864 = vpack.c.b16 %v670, %v669
    %v865 = vpack.c.b16 %v672, %v671
    %v866 = vpack.c.b16 %v674, %v673
    %v867 = vpack.c.b16 %v676, %v675
    %v868 = vpack.c.b16 %v678, %v677
    %v869 = vpack.c.b16 %v680, %v679
    %v870 = vpack.c.b16 %v682, %v681
    %v871 = vpack.c.b16 %v684, %v683
    %v872 = vpack.c.b16 %v686, %v685
    %v873 = vpack.c.b16 %v688, %v687
    %v874 = vpack.c.b16 %v690, %v689
    %v875 = vpack.c.b16 %v692, %v691
    %v876 = vpack.c.b16 %v694, %v693
    %v877 = vpack.c.b16 %v696, %v695
    %v878 = vpack.c.b16 %v698, %v697
    %v879 = vpack.c.b16 %v700, %v699
    %v880 = vpack.c.b16 %v702, %v701
    %v881 = vpack.c.b16 %v704, %v703
    %v882 = vpack.c.b16 %v706, %v705
    %v883 = vpack.c.b16 %v708, %v707
    %v884 = vpack.c.b16 %v710, %v709
    %v885 = vpack.c.b16 %v712, %v711
    %v886 = vpack.c.b16 %v714, %v713
    %v887 = vpack.c.b16 %v716, %v715
    %v888 = vpack.c.b16 %v718, %v717
    %v889 = vpack.c.b16 %v720, %v719
    %v890 = vpack.c.b16 %v722, %v721
    %v891 = vpack.c.b16 %v724, %v723
    %v892 = vpack.c.b16 %v726, %v725
    %v893 = vpack.c.b16 %v728, %v727
    %v894 = vpack.c.b16 %v730, %v729
    %v895 = vpack.c.b16 %v732, %v731
    %v896 = vpack.c.b16 %v734, %v733
    %v897 = vpack.c.b16 %v736, %v735
    %v898 = vpack.c.b16 %v738, %v737
    %v899 = vpack.c.b16 %v740, %v739
    %v900 = vpack.c.b16 %v742, %v741
    %v901 = vpack.c.b16 %v744, %v743
    %v902 = vpack.c.b16 %v746, %v745
    %v903 = vpack.c.b16 %v748, %v747
    %v904 = vpack.c.b16 %v750, %v749
    %v905 = vpack.c.b16 %v752, %v751
    %v906 = vpack.c.b16 %v754, %v753
    %v907 = vpack.c.b16 %v756, %v755
    %v908 = vpack.c.b16 %v758, %v757
    %v909 = vpack.c.b16 %v760, %v759
    %v910 = vpack.c.b16 %v762, %v761
    %v911 = vpack.c.b16 %v764, %v763
    %v912 = vpack.c.b16 %v766, %v765
    %v913 = vpack.c.b16 %v768, %v767
    %v914 = vpack.c.b16 %v770, %v769
    %v915 = vpack.c.b16 %v772, %v771
    %v916 = vpack.c.b16 %v774, %v773
    %v917 = vpack.c.b16 %v776, %v775
    %v918 = vpack.c.b16 %v778, %v777
    %v919 = vpack.c.b16 %v780, %v779
    %v920 = vpack.c.b16 %v782, %v781
    %v921 = vpack.c.b16 %v784, %v783
    %v922 = vpack.c.b16 %v786, %v785
    %v923 = vpack.c.b16 %v788, %v787
    %v924 = vpack.c.b16 %v790, %v789
    %v925 = vpack.c.b16 %v792, %v791
    %v926 = vpack.c.b16 %v794, %v793
    %v927 = vpack.c.b16 %v796, %v795
    %v928 = vpack.c.b16 %v798, %v797
    %v929 = vpack.c.b16 %v800, %v799
    %v930 = vpack.c.b16 %v802, %v801
    %v933 = vunpack.c.l.b16 %v282
    %v934 = vunpack.c.l.b16 %v283
    %v935 = vpack.c.b16 %v934, %v933
    %vm937 = vcmask 130048
    %v939 = vsel %vm937, %v803, 0
    %v942 = vsel %vm937, %v804, 0
    %v945 = vsel %vm937, %v805, 0
    %v948 = vsel %vm937, %v806, 0
    %v951 = vsel %vm937, %v807, 0
    %v954 = vsel %vm937, %v808, 0
    %v957 = vsel %vm937, %v809, 0
    %v960 = vsel %vm937, %v810, 0
    %v963 = vsel %vm937, %v811, 0
    %v966 = vsel %vm937, %v812, 0
    %v969 = vsel %vm937, %v813, 0
    %v972 = vsel %vm937, %v814, 0
    %v975 = vsel %vm937, %v815, 0
    %v978 = vsel %vm937, %v816, 0
    %v981 = vsel %vm937, %v817, 0
    %v984 = vsel %vm937, %v818, 0
    %v987 = vsel %vm937, %v819, 0
    %v990 = vsel %vm937, %v820, 0
    %v993 = vsel %vm937, %v821, 0
    %v996 = vsel %vm937, %v822, 0
    %v999 = vsel %vm937, %v823, 0
    %v1002 = vsel %vm937, %v824, 0
    %v1005 = vsel %vm937, %v825, 0
    %v1008 = vsel %vm937, %v826, 0
    %v1011 = vsel %vm937, %v827, 0
    %v1014 = vsel %vm937, %v828, 0
    %v1017 = vsel %vm937, %v829, 0
    %v1020 = vsel %vm937, %v830, 0
    %v1023 = vsel %vm937, %v831, 0
    %v1026 = vsel %vm937, %v832, 0
    %v1029 = vsel %vm937, %v833, 0
    %v1032 = vsel %vm937, %v834, 0
    %v1035 = vsel %vm937, %v835, 0
    %v1038 = vsel %vm937, %v836, 0
    %v1041 = vsel %vm937, %v837, 0
    %v1044 = vsel %vm937, %v838, 0
    %v1047 = vsel %vm937, %v839, 0
    %v1050 = vsel %vm937, %v840, 0
    %v1053 = vsel %vm937, %v841, 0
    %v1056 = vsel %vm937, %v842, 0
    %v1059 = vsel %vm937, %v843, 0
    %v1062 = vsel %vm937, %v844, 0
    %v1065 = vsel %vm937, %v845, 0
    %v1068 = vsel %vm937, %v846, 0
    %v1071 = vsel %vm937, %v847, 0
    %v1074 = vsel %vm937, %v848, 0
    %v1077 = vsel %vm937, %v849, 0
    %v1080 = vsel %vm937, %v850, 0
    %v1083 = vsel %vm937, %v851, 0
    %v1086 = vsel %vm937, %v852, 0
    %v1089 = vsel %vm937, %v853, 0
    %v1092 = vsel %vm937, %v854, 0
    %v1095 = vsel %vm937, %v855, 0
    %v1098 = vsel %vm937, %v856, 0
    %v1101 = vsel %vm937, %v857, 0
    %v1104 = vsel %vm937, %v858, 0
    %v1107 = vsel %vm937, %v859, 0
    %v1110 = vsel %vm937, %v860, 0
    %v1113 = vsel %vm937, %v861, 0
    %v1116 = vsel %vm937, %v862, 0
    %v1119 = vsel %vm937, %v863, 0
    %v1122 = vsel %vm937, %v864, 0
    %v1125 = vsel %vm937, %v865, 0
    %v1128 = vsel %vm937, %v866, 0
    %v1131 = vsel %vm937, %v867, 0
    %v1134 = vsel %vm937, %v868, 0
    %v1137 = vsel %vm937, %v869, 0
    %v1140 = vsel %vm937, %v870, 0
    %v1143 = vsel %vm937, %v871, 0
    %v1146 = vsel %vm937, %v872, 0
    %v1149 = vsel %vm937, %v873, 0
    %v1152 = vsel %vm937, %v874, 0
    %v1155 = vsel %vm937, %v875, 0
    %v1158 = vsel %vm937, %v876, 0
    %v1161 = vsel %vm937, %v877, 0
    %v1164 = vsel %vm937, %v878, 0
    %v1167 = vsel %vm937, %v879, 0
    %v1170 = vsel %vm937, %v880, 0
    %v1173 = vsel %vm937, %v881, 0
    %v1176 = vsel %vm937, %v882, 0
    %v1179 = vsel %vm937, %v883, 0
    %v1182 = vsel %vm937, %v884, 0
    %v1185 = vsel %vm937, %v885, 0
    %v1188 = vsel %vm937, %v886, 0
    %v1191 = vsel %vm937, %v887, 0
    %v1194 = vsel %vm937, %v888, 0
    %v1197 = vsel %vm937, %v889, 0
    %v1200 = vsel %vm937, %v890, 0
    %v1203 = vsel %vm937, %v891, 0
    %v1206 = vsel %vm937, %v892, 0
    %v1209 = vsel %vm937, %v893, 0
    %v1212 = vsel %vm937, %v894, 0
    %v1215 = vsel %vm937, %v895, 0
    %v1218 = vsel %vm937, %v896, 0
    %v1221 = vsel %vm937, %v897, 0
    %v1224 = vsel %vm937, %v898, 0
    %v1227 = vsel %vm937, %v899, 0
    %v1230 = vsel %vm937, %v900, 0
    %v1233 = vsel %vm937, %v901, 0
    %v1236 = vsel %vm937, %v902, 0
    %v1239 = vsel %vm937, %v903, 0
    %v1242 = vsel %vm937, %v904, 0
    %v1245 = vsel %vm937, %v905, 0
    %v1248 = vsel %vm937, %v906, 0
    %v1251 = vsel %vm937, %v907, 0
    %v1254 = vsel %vm937, %v908, 0
    %v1257 = vsel %vm937, %v909, 0
    %v1260 = vsel %vm937, %v910, 0
    %v1263 = vsel %vm937, %v911, 0
    %v1266 = vsel %vm937, %v912, 0
    %v1269 = vsel %vm937, %v913, 0
    %v1272 = vsel %vm937, %v914, 0
    %v1275 = vsel %vm937, %v915, 0
    %v1278 = vsel %vm937, %v916, 0
    %v1281 = vsel %vm937, %v917, 0
    %v1284 = vsel %vm937, %v918, 0
    %v1287 = vsel %vm937, %v919, 0
    %v1290 = vsel %vm937, %v920, 0
    %v1293 = vsel %vm937, %v921, 0
    %v1296 = vsel %vm937, %v922, 0
    %v1299 = vsel %vm937, %v923, 0
    %v1302 = vsel %vm937, %v924, 0
    %v1305 = vsel %vm937, %v925, 0
    %v1308 = vsel %vm937, %v926, 0
    %v1311 = vsel %vm937, %v927, 0
    %v1314 = vsel %vm937, %v928, 0
    %v1317 = vsel %vm937, %v929, 0
    %v1320 = vsel %vm937, %v930, 0
    %1322 = vmatprep.subr.bf16.mxu0 0
    %1323 = vmatpush1.bf16.msra.mxu0 0
    %1324 = vmatprep.subr.bf16.mxu0 0
    %1325 = vmatpush1.bf16.msra.mxu0 0
    %1326 = vmatprep.subr.bf16.mxu0 0
    %1327 = vmatpush1.bf16.msra.mxu0 0
    %1328 = vmatprep.subr.bf16.mxu0 0
    %1329 = vmatpush1.bf16.msra.mxu0 0
    %1330 = vmatprep.subr.bf16.mxu0 0
    %1331 = vmatpush1.bf16.msra.mxu0 0
    %1332 = vmatprep.subr.bf16.mxu0 0
    %1333 = vmatpush1.bf16.msra.mxu0 0
    %1334 = vmatprep.subr.bf16.mxu0 0
    %1335 = vmatpush1.bf16.msra.mxu0 0
    %1336 = vmatprep.subr.bf16.mxu0 0
    %1337 = vmatpush1.bf16.msra.mxu0 %v935
    %1338 = vmatprep.subr.bf16.mxu0 0
    %1339 = vmatpush2.bf16.msra.mxu0 0
    %1340 = vmatprep.subr.bf16.mxu0 0
    %1341 = vmatpush2.bf16.msra.mxu0 0
    %1342 = vmatprep.subr.bf16.mxu0 0
    %1343 = vmatpush2.bf16.msra.mxu0 0
    %1344 = vmatprep.subr.bf16.mxu0 0
    %1345 = vmatpush2.bf16.msra.mxu0 0
    %1346 = vmatprep.subr.bf16.mxu0 0
    %1347 = vmatpush2.bf16.msra.mxu0 0
    %1348 = vmatprep.subr.bf16.mxu0 0
    %1349 = vmatpush2.bf16.msra.mxu0 0
    %1350 = vmatprep.subr.bf16.mxu0 0
    %1351 = vmatpush2.bf16.msra.mxu0 0
    %1352 = vmatprep.subr.bf16.mxu0 0
    %1353 = vmatpush2.bf16.msra.mxu0 0
    %1354 = vmatprep.mubr.bf16.mxu0 0
    %1355 = vmatmul.mubr.bf16.gmra.mxu0 %v939
    %v1356 = vpop.f32.mrf.mxu0
    %v1357 = vadd.f32 %v289, %v1356
    %v1358 = vpop.f32.mrf.mxu0
    %v1359 = vpop.f32.mrf.mxu0
    %v1360 = vadd.f32 %v289, %v1359
    %v1361 = vpop.f32.mrf.mxu0
    %1362 = vmatprep.mubr.bf16.mxu0 0
    %1363 = vmatmul.mubr.bf16.gmra.mxu0 %v942
    %v1364 = vpop.f32.mrf.mxu0
    %v1365 = vadd.f32 %v289, %v1364
    %v1366 = vpop.f32.mrf.mxu0
    %v1367 = vpop.f32.mrf.mxu0
    %v1368 = vadd.f32 %v289, %v1367
    %v1369 = vpop.f32.mrf.mxu0
    %1370 = vmatprep.mubr.bf16.mxu0 0
    %1371 = vmatmul.mubr.bf16.gmra.mxu0 %v945
    %v1372 = vpop.f32.mrf.mxu0
    %v1373 = vadd.f32 %v289, %v1372
    %v1374 = vpop.f32.mrf.mxu0
    %v1375 = vpop.f32.mrf.mxu0
    %v1376 = vadd.f32 %v289, %v1375
    %v1377 = vpop.f32.mrf.mxu0
    %1378 = vmatprep.mubr.bf16.mxu0 0
    %1379 = vmatmul.mubr.bf16.gmra.mxu0 %v948
    %v1380 = vpop.f32.mrf.mxu0
    %v1381 = vadd.f32 %v289, %v1380
    %v1382 = vpop.f32.mrf.mxu0
    %v1383 = vpop.f32.mrf.mxu0
    %v1384 = vadd.f32 %v289, %v1383
    %v1385 = vpop.f32.mrf.mxu0
    %1386 = vmatprep.mubr.bf16.mxu0 0
    %1387 = vmatmul.mubr.bf16.gmra.mxu0 %v951
    %v1388 = vpop.f32.mrf.mxu0
    %v1389 = vadd.f32 %v289, %v1388
    %v1390 = vpop.f32.mrf.mxu0
    %v1391 = vpop.f32.mrf.mxu0
    %v1392 = vadd.f32 %v289, %v1391
    %v1393 = vpop.f32.mrf.mxu0
    %1394 = vmatprep.mubr.bf16.mxu0 0
    %1395 = vmatmul.mubr.bf16.gmra.mxu0 %v954
    %v1396 = vpop.f32.mrf.mxu0
    %v1397 = vadd.f32 %v289, %v1396
    %v1398 = vpop.f32.mrf.mxu0
    %v1399 = vpop.f32.mrf.mxu0
    %v1400 = vadd.f32 %v289, %v1399
    %v1401 = vpop.f32.mrf.mxu0
    %1402 = vmatprep.mubr.bf16.mxu0 0
    %1403 = vmatmul.mubr.bf16.gmra.mxu0 %v957
    %v1404 = vpop.f32.mrf.mxu0
    %v1405 = vadd.f32 %v289, %v1404
    %v1406 = vpop.f32.mrf.mxu0
    %v1407 = vpop.f32.mrf.mxu0
    %v1408 = vadd.f32 %v289, %v1407
    %v1409 = vpop.f32.mrf.mxu0
    %1410 = vmatprep.mubr.bf16.mxu0 0
    %1411 = vmatmul.mubr.bf16.gmra.mxu0 %v960
    %v1412 = vpop.f32.mrf.mxu0
    %v1413 = vadd.f32 %v289, %v1412
    %v1414 = vpop.f32.mrf.mxu0
    %v1415 = vpop.f32.mrf.mxu0
    %v1416 = vadd.f32 %v289, %v1415
    %v1417 = vpop.f32.mrf.mxu0
    %1418 = vmatprep.mubr.bf16.mxu0 0
    %1419 = vmatmul.mubr.bf16.gmra.mxu0 %v963
    %v1420 = vpop.f32.mrf.mxu0
    %v1421 = vadd.f32 %v289, %v1420
    %v1422 = vpop.f32.mrf.mxu0
    %v1423 = vpop.f32.mrf.mxu0
    %v1424 = vadd.f32 %v289, %v1423
    %v1425 = vpop.f32.mrf.mxu0
    %1426 = vmatprep.mubr.bf16.mxu0 0
    %1427 = vmatmul.mubr.bf16.gmra.mxu0 %v966
    %v1428 = vpop.f32.mrf.mxu0
    %v1429 = vadd.f32 %v289, %v1428
    %v1430 = vpop.f32.mrf.mxu0
    %v1431 = vpop.f32.mrf.mxu0
    %v1432 = vadd.f32 %v289, %v1431
    %v1433 = vpop.f32.mrf.mxu0
    %1434 = vmatprep.mubr.bf16.mxu0 0
    %1435 = vmatmul.mubr.bf16.gmra.mxu0 %v969
    %v1436 = vpop.f32.mrf.mxu0
    %v1437 = vadd.f32 %v289, %v1436
    %v1438 = vpop.f32.mrf.mxu0
    %v1439 = vpop.f32.mrf.mxu0
    %v1440 = vadd.f32 %v289, %v1439
    %v1441 = vpop.f32.mrf.mxu0
    %1442 = vmatprep.mubr.bf16.mxu0 0
    %1443 = vmatmul.mubr.bf16.gmra.mxu0 %v972
    %v1444 = vpop.f32.mrf.mxu0
    %v1445 = vadd.f32 %v289, %v1444
    %v1446 = vpop.f32.mrf.mxu0
    %v1447 = vpop.f32.mrf.mxu0
    %v1448 = vadd.f32 %v289, %v1447
    %v1449 = vpop.f32.mrf.mxu0
    %1450 = vmatprep.mubr.bf16.mxu0 0
    %1451 = vmatmul.mubr.bf16.gmra.mxu0 %v975
    %v1452 = vpop.f32.mrf.mxu0
    %v1453 = vadd.f32 %v289, %v1452
    %v1454 = vpop.f32.mrf.mxu0
    %v1455 = vpop.f32.mrf.mxu0
    %v1456 = vadd.f32 %v289, %v1455
    %v1457 = vpop.f32.mrf.mxu0
    %1458 = vmatprep.mubr.bf16.mxu0 0
    %1459 = vmatmul.mubr.bf16.gmra.mxu0 %v978
    %v1460 = vpop.f32.mrf.mxu0
    %v1461 = vadd.f32 %v289, %v1460
    %v1462 = vpop.f32.mrf.mxu0
    %v1463 = vpop.f32.mrf.mxu0
    %v1464 = vadd.f32 %v289, %v1463
    %v1465 = vpop.f32.mrf.mxu0
    %1466 = vmatprep.mubr.bf16.mxu0 0
    %1467 = vmatmul.mubr.bf16.gmra.mxu0 %v981
    %v1468 = vpop.f32.mrf.mxu0
    %v1469 = vadd.f32 %v289, %v1468
    %v1470 = vpop.f32.mrf.mxu0
    %v1471 = vpop.f32.mrf.mxu0
    %v1472 = vadd.f32 %v289, %v1471
    %v1473 = vpop.f32.mrf.mxu0
    %1474 = vmatprep.mubr.bf16.mxu0 0
    %1475 = vmatmul.mubr.bf16.gmra.mxu0 %v984
    %v1476 = vpop.f32.mrf.mxu0
    %v1477 = vadd.f32 %v289, %v1476
    %v1478 = vpop.f32.mrf.mxu0
    %v1479 = vpop.f32.mrf.mxu0
    %v1480 = vadd.f32 %v289, %v1479
    %v1481 = vpop.f32.mrf.mxu0
    %1482 = vmatprep.mubr.bf16.mxu0 0
    %1483 = vmatmul.mubr.bf16.gmra.mxu0 %v987
    %v1484 = vpop.f32.mrf.mxu0
    %v1485 = vadd.f32 %v289, %v1484
    %v1486 = vpop.f32.mrf.mxu0
    %v1487 = vpop.f32.mrf.mxu0
    %v1488 = vadd.f32 %v289, %v1487
    %v1489 = vpop.f32.mrf.mxu0
    %1490 = vmatprep.mubr.bf16.mxu0 0
    %1491 = vmatmul.mubr.bf16.gmra.mxu0 %v990
    %v1492 = vpop.f32.mrf.mxu0
    %v1493 = vadd.f32 %v289, %v1492
    %v1494 = vpop.f32.mrf.mxu0
    %v1495 = vpop.f32.mrf.mxu0
    %v1496 = vadd.f32 %v289, %v1495
    %v1497 = vpop.f32.mrf.mxu0
    %1498 = vmatprep.mubr.bf16.mxu0 0
    %1499 = vmatmul.mubr.bf16.gmra.mxu0 %v993
    %v1500 = vpop.f32.mrf.mxu0
    %v1501 = vadd.f32 %v289, %v1500
    %v1502 = vpop.f32.mrf.mxu0
    %v1503 = vpop.f32.mrf.mxu0
    %v1504 = vadd.f32 %v289, %v1503
    %v1505 = vpop.f32.mrf.mxu0
    %1506 = vmatprep.mubr.bf16.mxu0 0
    %1507 = vmatmul.mubr.bf16.gmra.mxu0 %v996
    %v1508 = vpop.f32.mrf.mxu0
    %v1509 = vadd.f32 %v289, %v1508
    %v1510 = vpop.f32.mrf.mxu0
    %v1511 = vpop.f32.mrf.mxu0
    %v1512 = vadd.f32 %v289, %v1511
    %v1513 = vpop.f32.mrf.mxu0
    %1514 = vmatprep.mubr.bf16.mxu0 0
    %1515 = vmatmul.mubr.bf16.gmra.mxu0 %v999
    %v1516 = vpop.f32.mrf.mxu0
    %v1517 = vadd.f32 %v289, %v1516
    %v1518 = vpop.f32.mrf.mxu0
    %v1519 = vpop.f32.mrf.mxu0
    %v1520 = vadd.f32 %v289, %v1519
    %v1521 = vpop.f32.mrf.mxu0
    %1522 = vmatprep.mubr.bf16.mxu0 0
    %1523 = vmatmul.mubr.bf16.gmra.mxu0 %v1002
    %v1524 = vpop.f32.mrf.mxu0
    %v1525 = vadd.f32 %v289, %v1524
    %v1526 = vpop.f32.mrf.mxu0
    %v1527 = vpop.f32.mrf.mxu0
    %v1528 = vadd.f32 %v289, %v1527
    %v1529 = vpop.f32.mrf.mxu0
    %1530 = vmatprep.mubr.bf16.mxu0 0
    %1531 = vmatmul.mubr.bf16.gmra.mxu0 %v1005
    %v1532 = vpop.f32.mrf.mxu0
    %v1533 = vadd.f32 %v289, %v1532
    %v1534 = vpop.f32.mrf.mxu0
    %v1535 = vpop.f32.mrf.mxu0
    %v1536 = vadd.f32 %v289, %v1535
    %v1537 = vpop.f32.mrf.mxu0
    %1538 = vmatprep.mubr.bf16.mxu0 0
    %1539 = vmatmul.mubr.bf16.gmra.mxu0 %v1008
    %v1540 = vpop.f32.mrf.mxu0
    %v1541 = vadd.f32 %v289, %v1540
    %v1542 = vpop.f32.mrf.mxu0
    %v1543 = vpop.f32.mrf.mxu0
    %v1544 = vadd.f32 %v289, %v1543
    %v1545 = vpop.f32.mrf.mxu0
    %1546 = vmatprep.mubr.bf16.mxu0 0
    %1547 = vmatmul.mubr.bf16.gmra.mxu0 %v1011
    %v1548 = vpop.f32.mrf.mxu0
    %v1549 = vadd.f32 %v289, %v1548
    %v1550 = vpop.f32.mrf.mxu0
    %v1551 = vpop.f32.mrf.mxu0
    %v1552 = vadd.f32 %v289, %v1551
    %v1553 = vpop.f32.mrf.mxu0
    %1554 = vmatprep.mubr.bf16.mxu0 0
    %1555 = vmatmul.mubr.bf16.gmra.mxu0 %v1014
    %v1556 = vpop.f32.mrf.mxu0
    %v1557 = vadd.f32 %v289, %v1556
    %v1558 = vpop.f32.mrf.mxu0
    %v1559 = vpop.f32.mrf.mxu0
    %v1560 = vadd.f32 %v289, %v1559
    %v1561 = vpop.f32.mrf.mxu0
    %1562 = vmatprep.mubr.bf16.mxu0 0
    %1563 = vmatmul.mubr.bf16.gmra.mxu0 %v1017
    %v1564 = vpop.f32.mrf.mxu0
    %v1565 = vadd.f32 %v289, %v1564
    %v1566 = vpop.f32.mrf.mxu0
    %v1567 = vpop.f32.mrf.mxu0
    %v1568 = vadd.f32 %v289, %v1567
    %v1569 = vpop.f32.mrf.mxu0
    %1570 = vmatprep.mubr.bf16.mxu0 0
    %1571 = vmatmul.mubr.bf16.gmra.mxu0 %v1020
    %v1572 = vpop.f32.mrf.mxu0
    %v1573 = vadd.f32 %v289, %v1572
    %v1574 = vpop.f32.mrf.mxu0
    %v1575 = vpop.f32.mrf.mxu0
    %v1576 = vadd.f32 %v289, %v1575
    %v1577 = vpop.f32.mrf.mxu0
    %1578 = vmatprep.mubr.bf16.mxu0 0
    %1579 = vmatmul.mubr.bf16.gmra.mxu0 %v1023
    %v1580 = vpop.f32.mrf.mxu0
    %v1581 = vadd.f32 %v289, %v1580
    %v1582 = vpop.f32.mrf.mxu0
    %v1583 = vpop.f32.mrf.mxu0
    %v1584 = vadd.f32 %v289, %v1583
    %v1585 = vpop.f32.mrf.mxu0
    %1586 = vmatprep.mubr.bf16.mxu0 0
    %1587 = vmatmul.mubr.bf16.gmra.mxu0 %v1026
    %v1588 = vpop.f32.mrf.mxu0
    %v1589 = vadd.f32 %v289, %v1588
    %v1590 = vpop.f32.mrf.mxu0
    %v1591 = vpop.f32.mrf.mxu0
    %v1592 = vadd.f32 %v289, %v1591
    %v1593 = vpop.f32.mrf.mxu0
    %1594 = vmatprep.mubr.bf16.mxu0 0
    %1595 = vmatmul.mubr.bf16.gmra.mxu0 %v1029
    %v1596 = vpop.f32.mrf.mxu0
    %v1597 = vadd.f32 %v289, %v1596
    %v1598 = vpop.f32.mrf.mxu0
    %v1599 = vpop.f32.mrf.mxu0
    %v1600 = vadd.f32 %v289, %v1599
    %v1601 = vpop.f32.mrf.mxu0
    %1602 = vmatprep.mubr.bf16.mxu0 0
    %1603 = vmatmul.mubr.bf16.gmra.mxu0 %v1032
    %v1604 = vpop.f32.mrf.mxu0
    %v1605 = vadd.f32 %v289, %v1604
    %v1606 = vpop.f32.mrf.mxu0
    %v1607 = vpop.f32.mrf.mxu0
    %v1608 = vadd.f32 %v289, %v1607
    %v1609 = vpop.f32.mrf.mxu0
    %1610 = vmatprep.mubr.bf16.mxu0 0
    %1611 = vmatmul.mubr.bf16.gmra.mxu0 %v1035
    %v1612 = vpop.f32.mrf.mxu0
    %v1613 = vadd.f32 %v289, %v1612
    %v1614 = vpop.f32.mrf.mxu0
    %v1615 = vpop.f32.mrf.mxu0
    %v1616 = vadd.f32 %v289, %v1615
    %v1617 = vpop.f32.mrf.mxu0
    %1618 = vmatprep.mubr.bf16.mxu0 0
    %1619 = vmatmul.mubr.bf16.gmra.mxu0 %v1038
    %v1620 = vpop.f32.mrf.mxu0
    %v1621 = vadd.f32 %v289, %v1620
    %v1622 = vpop.f32.mrf.mxu0
    %v1623 = vpop.f32.mrf.mxu0
    %v1624 = vadd.f32 %v289, %v1623
    %v1625 = vpop.f32.mrf.mxu0
    %1626 = vmatprep.mubr.bf16.mxu0 0
    %1627 = vmatmul.mubr.bf16.gmra.mxu0 %v1041
    %v1628 = vpop.f32.mrf.mxu0
    %v1629 = vadd.f32 %v289, %v1628
    %v1630 = vpop.f32.mrf.mxu0
    %v1631 = vpop.f32.mrf.mxu0
    %v1632 = vadd.f32 %v289, %v1631
    %v1633 = vpop.f32.mrf.mxu0
    %1634 = vmatprep.mubr.bf16.mxu0 0
    %1635 = vmatmul.mubr.bf16.gmra.mxu0 %v1044
    %v1636 = vpop.f32.mrf.mxu0
    %v1637 = vadd.f32 %v289, %v1636
    %v1638 = vpop.f32.mrf.mxu0
    %v1639 = vpop.f32.mrf.mxu0
    %v1640 = vadd.f32 %v289, %v1639
    %v1641 = vpop.f32.mrf.mxu0
    %1642 = vmatprep.mubr.bf16.mxu0 0
    %1643 = vmatmul.mubr.bf16.gmra.mxu0 %v1047
    %v1644 = vpop.f32.mrf.mxu0
    %v1645 = vadd.f32 %v289, %v1644
    %v1646 = vpop.f32.mrf.mxu0
    %v1647 = vpop.f32.mrf.mxu0
    %v1648 = vadd.f32 %v289, %v1647
    %v1649 = vpop.f32.mrf.mxu0
    %1650 = vmatprep.mubr.bf16.mxu0 0
    %1651 = vmatmul.mubr.bf16.gmra.mxu0 %v1050
    %v1652 = vpop.f32.mrf.mxu0
    %v1653 = vadd.f32 %v289, %v1652
    %v1654 = vpop.f32.mrf.mxu0
    %v1655 = vpop.f32.mrf.mxu0
    %v1656 = vadd.f32 %v289, %v1655
    %v1657 = vpop.f32.mrf.mxu0
    %1658 = vmatprep.mubr.bf16.mxu0 0
    %1659 = vmatmul.mubr.bf16.gmra.mxu0 %v1053
    %v1660 = vpop.f32.mrf.mxu0
    %v1661 = vadd.f32 %v289, %v1660
    %v1662 = vpop.f32.mrf.mxu0
    %v1663 = vpop.f32.mrf.mxu0
    %v1664 = vadd.f32 %v289, %v1663
    %v1665 = vpop.f32.mrf.mxu0
    %1666 = vmatprep.mubr.bf16.mxu0 0
    %1667 = vmatmul.mubr.bf16.gmra.mxu0 %v1056
    %v1668 = vpop.f32.mrf.mxu0
    %v1669 = vadd.f32 %v289, %v1668
    %v1670 = vpop.f32.mrf.mxu0
    %v1671 = vpop.f32.mrf.mxu0
    %v1672 = vadd.f32 %v289, %v1671
    %v1673 = vpop.f32.mrf.mxu0
    %1674 = vmatprep.mubr.bf16.mxu0 0
    %1675 = vmatmul.mubr.bf16.gmra.mxu0 %v1059
    %v1676 = vpop.f32.mrf.mxu0
    %v1677 = vadd.f32 %v289, %v1676
    %v1678 = vpop.f32.mrf.mxu0
    %v1679 = vpop.f32.mrf.mxu0
    %v1680 = vadd.f32 %v289, %v1679
    %v1681 = vpop.f32.mrf.mxu0
    %1682 = vmatprep.mubr.bf16.mxu0 0
    %1683 = vmatmul.mubr.bf16.gmra.mxu0 %v1062
    %v1684 = vpop.f32.mrf.mxu0
    %v1685 = vadd.f32 %v289, %v1684
    %v1686 = vpop.f32.mrf.mxu0
    %v1687 = vpop.f32.mrf.mxu0
    %v1688 = vadd.f32 %v289, %v1687
    %v1689 = vpop.f32.mrf.mxu0
    %1690 = vmatprep.mubr.bf16.mxu0 0
    %1691 = vmatmul.mubr.bf16.gmra.mxu0 %v1065
    %v1692 = vpop.f32.mrf.mxu0
    %v1693 = vadd.f32 %v289, %v1692
    %v1694 = vpop.f32.mrf.mxu0
    %v1695 = vpop.f32.mrf.mxu0
    %v1696 = vadd.f32 %v289, %v1695
    %v1697 = vpop.f32.mrf.mxu0
    %1698 = vmatprep.mubr.bf16.mxu0 0
    %1699 = vmatmul.mubr.bf16.gmra.mxu0 %v1068
    %v1700 = vpop.f32.mrf.mxu0
    %v1701 = vadd.f32 %v289, %v1700
    %v1702 = vpop.f32.mrf.mxu0
    %v1703 = vpop.f32.mrf.mxu0
    %v1704 = vadd.f32 %v289, %v1703
    %v1705 = vpop.f32.mrf.mxu0
    %1706 = vmatprep.mubr.bf16.mxu0 0
    %1707 = vmatmul.mubr.bf16.gmra.mxu0 %v1071
    %v1708 = vpop.f32.mrf.mxu0
    %v1709 = vadd.f32 %v289, %v1708
    %v1710 = vpop.f32.mrf.mxu0
    %v1711 = vpop.f32.mrf.mxu0
    %v1712 = vadd.f32 %v289, %v1711
    %v1713 = vpop.f32.mrf.mxu0
    %1714 = vmatprep.mubr.bf16.mxu0 0
    %1715 = vmatmul.mubr.bf16.gmra.mxu0 %v1074
    %v1716 = vpop.f32.mrf.mxu0
    %v1717 = vadd.f32 %v289, %v1716
    %v1718 = vpop.f32.mrf.mxu0
    %v1719 = vpop.f32.mrf.mxu0
    %v1720 = vadd.f32 %v289, %v1719
    %v1721 = vpop.f32.mrf.mxu0
    %1722 = vmatprep.mubr.bf16.mxu0 0
    %1723 = vmatmul.mubr.bf16.gmra.mxu0 %v1077
    %v1724 = vpop.f32.mrf.mxu0
    %v1725 = vadd.f32 %v289, %v1724
    %v1726 = vpop.f32.mrf.mxu0
    %v1727 = vpop.f32.mrf.mxu0
    %v1728 = vadd.f32 %v289, %v1727
    %v1729 = vpop.f32.mrf.mxu0
    %1730 = vmatprep.mubr.bf16.mxu0 0
    %1731 = vmatmul.mubr.bf16.gmra.mxu0 %v1080
    %v1732 = vpop.f32.mrf.mxu0
    %v1733 = vadd.f32 %v289, %v1732
    %v1734 = vpop.f32.mrf.mxu0
    %v1735 = vpop.f32.mrf.mxu0
    %v1736 = vadd.f32 %v289, %v1735
    %v1737 = vpop.f32.mrf.mxu0
    %1738 = vmatprep.mubr.bf16.mxu0 0
    %1739 = vmatmul.mubr.bf16.gmra.mxu0 %v1083
    %v1740 = vpop.f32.mrf.mxu0
    %v1741 = vadd.f32 %v289, %v1740
    %v1742 = vpop.f32.mrf.mxu0
    %v1743 = vpop.f32.mrf.mxu0
    %v1744 = vadd.f32 %v289, %v1743
    %v1745 = vpop.f32.mrf.mxu0
    %1746 = vmatprep.mubr.bf16.mxu0 0
    %1747 = vmatmul.mubr.bf16.gmra.mxu0 %v1086
    %v1748 = vpop.f32.mrf.mxu0
    %v1749 = vadd.f32 %v289, %v1748
    %v1750 = vpop.f32.mrf.mxu0
    %v1751 = vpop.f32.mrf.mxu0
    %v1752 = vadd.f32 %v289, %v1751
    %v1753 = vpop.f32.mrf.mxu0
    %1754 = vmatprep.mubr.bf16.mxu0 0
    %1755 = vmatmul.mubr.bf16.gmra.mxu0 %v1089
    %v1756 = vpop.f32.mrf.mxu0
    %v1757 = vadd.f32 %v289, %v1756
    %v1758 = vpop.f32.mrf.mxu0
    %v1759 = vpop.f32.mrf.mxu0
    %v1760 = vadd.f32 %v289, %v1759
    %v1761 = vpop.f32.mrf.mxu0
    %1762 = vmatprep.mubr.bf16.mxu0 0
    %1763 = vmatmul.mubr.bf16.gmra.mxu0 %v1092
    %v1764 = vpop.f32.mrf.mxu0
    %v1765 = vadd.f32 %v289, %v1764
    %v1766 = vpop.f32.mrf.mxu0
    %v1767 = vpop.f32.mrf.mxu0
    %v1768 = vadd.f32 %v289, %v1767
    %v1769 = vpop.f32.mrf.mxu0
    %1770 = vmatprep.mubr.bf16.mxu0 0
    %1771 = vmatmul.mubr.bf16.gmra.mxu0 %v1095
    %v1772 = vpop.f32.mrf.mxu0
    %v1773 = vadd.f32 %v289, %v1772
    %v1774 = vpop.f32.mrf.mxu0
    %v1775 = vpop.f32.mrf.mxu0
    %v1776 = vadd.f32 %v289, %v1775
    %v1777 = vpop.f32.mrf.mxu0
    %1778 = vmatprep.mubr.bf16.mxu0 0
    %1779 = vmatmul.mubr.bf16.gmra.mxu0 %v1098
    %v1780 = vpop.f32.mrf.mxu0
    %v1781 = vadd.f32 %v289, %v1780
    %v1782 = vpop.f32.mrf.mxu0
    %v1783 = vpop.f32.mrf.mxu0
    %v1784 = vadd.f32 %v289, %v1783
    %v1785 = vpop.f32.mrf.mxu0
    %1786 = vmatprep.mubr.bf16.mxu0 0
    %1787 = vmatmul.mubr.bf16.gmra.mxu0 %v1101
    %v1788 = vpop.f32.mrf.mxu0
    %v1789 = vadd.f32 %v289, %v1788
    %v1790 = vpop.f32.mrf.mxu0
    %v1791 = vpop.f32.mrf.mxu0
    %v1792 = vadd.f32 %v289, %v1791
    %v1793 = vpop.f32.mrf.mxu0
    %1794 = vmatprep.mubr.bf16.mxu0 0
    %1795 = vmatmul.mubr.bf16.gmra.mxu0 %v1104
    %v1796 = vpop.f32.mrf.mxu0
    %v1797 = vadd.f32 %v289, %v1796
    %v1798 = vpop.f32.mrf.mxu0
    %v1799 = vpop.f32.mrf.mxu0
    %v1800 = vadd.f32 %v289, %v1799
    %v1801 = vpop.f32.mrf.mxu0
    %1802 = vmatprep.mubr.bf16.mxu0 0
    %1803 = vmatmul.mubr.bf16.gmra.mxu0 %v1107
    %v1804 = vpop.f32.mrf.mxu0
    %v1805 = vadd.f32 %v289, %v1804
    %v1806 = vpop.f32.mrf.mxu0
    %v1807 = vpop.f32.mrf.mxu0
    %v1808 = vadd.f32 %v289, %v1807
    %v1809 = vpop.f32.mrf.mxu0
    %1810 = vmatprep.mubr.bf16.mxu0 0
    %1811 = vmatmul.mubr.bf16.gmra.mxu0 %v1110
    %v1812 = vpop.f32.mrf.mxu0
    %v1813 = vadd.f32 %v289, %v1812
    %v1814 = vpop.f32.mrf.mxu0
    %v1815 = vpop.f32.mrf.mxu0
    %v1816 = vadd.f32 %v289, %v1815
    %v1817 = vpop.f32.mrf.mxu0
    %1818 = vmatprep.mubr.bf16.mxu0 0
    %1819 = vmatmul.mubr.bf16.gmra.mxu0 %v1113
    %v1820 = vpop.f32.mrf.mxu0
    %v1821 = vadd.f32 %v289, %v1820
    %v1822 = vpop.f32.mrf.mxu0
    %v1823 = vpop.f32.mrf.mxu0
    %v1824 = vadd.f32 %v289, %v1823
    %v1825 = vpop.f32.mrf.mxu0
    %1826 = vmatprep.mubr.bf16.mxu0 0
    %1827 = vmatmul.mubr.bf16.gmra.mxu0 %v1116
    %v1828 = vpop.f32.mrf.mxu0
    %v1829 = vadd.f32 %v289, %v1828
    %v1830 = vpop.f32.mrf.mxu0
    %v1831 = vpop.f32.mrf.mxu0
    %v1832 = vadd.f32 %v289, %v1831
    %v1833 = vpop.f32.mrf.mxu0
    %1834 = vmatprep.mubr.bf16.mxu0 0
    %1835 = vmatmul.mubr.bf16.gmra.mxu0 %v1119
    %v1836 = vpop.f32.mrf.mxu0
    %v1837 = vadd.f32 %v289, %v1836
    %v1838 = vpop.f32.mrf.mxu0
    %v1839 = vpop.f32.mrf.mxu0
    %v1840 = vadd.f32 %v289, %v1839
    %v1841 = vpop.f32.mrf.mxu0
    %1842 = vmatprep.mubr.bf16.mxu0 0
    %1843 = vmatmul.mubr.bf16.gmra.mxu0 %v1122
    %v1844 = vpop.f32.mrf.mxu0
    %v1845 = vadd.f32 %v289, %v1844
    %v1846 = vpop.f32.mrf.mxu0
    %v1847 = vpop.f32.mrf.mxu0
    %v1848 = vadd.f32 %v289, %v1847
    %v1849 = vpop.f32.mrf.mxu0
    %1850 = vmatprep.mubr.bf16.mxu0 0
    %1851 = vmatmul.mubr.bf16.gmra.mxu0 %v1125
    %v1852 = vpop.f32.mrf.mxu0
    %v1853 = vadd.f32 %v289, %v1852
    %v1854 = vpop.f32.mrf.mxu0
    %v1855 = vpop.f32.mrf.mxu0
    %v1856 = vadd.f32 %v289, %v1855
    %v1857 = vpop.f32.mrf.mxu0
    %1858 = vmatprep.mubr.bf16.mxu0 0
    %1859 = vmatmul.mubr.bf16.gmra.mxu0 %v1128
    %v1860 = vpop.f32.mrf.mxu0
    %v1861 = vadd.f32 %v289, %v1860
    %v1862 = vpop.f32.mrf.mxu0
    %v1863 = vpop.f32.mrf.mxu0
    %v1864 = vadd.f32 %v289, %v1863
    %v1865 = vpop.f32.mrf.mxu0
    %1866 = vmatprep.mubr.bf16.mxu0 0
    %1867 = vmatmul.mubr.bf16.gmra.mxu0 %v1131
    %v1868 = vpop.f32.mrf.mxu0
    %v1869 = vadd.f32 %v289, %v1868
    %v1870 = vpop.f32.mrf.mxu0
    %v1871 = vpop.f32.mrf.mxu0
    %v1872 = vadd.f32 %v289, %v1871
    %v1873 = vpop.f32.mrf.mxu0
    %1874 = vmatprep.mubr.bf16.mxu0 0
    %1875 = vmatmul.mubr.bf16.gmra.mxu0 %v1134
    %v1876 = vpop.f32.mrf.mxu0
    %v1877 = vadd.f32 %v289, %v1876
    %v1878 = vpop.f32.mrf.mxu0
    %v1879 = vpop.f32.mrf.mxu0
    %v1880 = vadd.f32 %v289, %v1879
    %v1881 = vpop.f32.mrf.mxu0
    %1882 = vmatprep.mubr.bf16.mxu0 0
    %1883 = vmatmul.mubr.bf16.gmra.mxu0 %v1137
    %v1884 = vpop.f32.mrf.mxu0
    %v1885 = vadd.f32 %v289, %v1884
    %v1886 = vpop.f32.mrf.mxu0
    %v1887 = vpop.f32.mrf.mxu0
    %v1888 = vadd.f32 %v289, %v1887
    %v1889 = vpop.f32.mrf.mxu0
    %1890 = vmatprep.mubr.bf16.mxu0 0
    %1891 = vmatmul.mubr.bf16.gmra.mxu0 %v1140
    %v1892 = vpop.f32.mrf.mxu0
    %v1893 = vadd.f32 %v289, %v1892
    %v1894 = vpop.f32.mrf.mxu0
    %v1895 = vpop.f32.mrf.mxu0
    %v1896 = vadd.f32 %v289, %v1895
    %v1897 = vpop.f32.mrf.mxu0
    %1898 = vmatprep.mubr.bf16.mxu0 0
    %1899 = vmatmul.mubr.bf16.gmra.mxu0 %v1143
    %v1900 = vpop.f32.mrf.mxu0
    %v1901 = vadd.f32 %v289, %v1900
    %v1902 = vpop.f32.mrf.mxu0
    %v1903 = vpop.f32.mrf.mxu0
    %v1904 = vadd.f32 %v289, %v1903
    %v1905 = vpop.f32.mrf.mxu0
    %1906 = vmatprep.mubr.bf16.mxu0 0
    %1907 = vmatmul.mubr.bf16.gmra.mxu0 %v1146
    %v1908 = vpop.f32.mrf.mxu0
    %v1909 = vadd.f32 %v289, %v1908
    %v1910 = vpop.f32.mrf.mxu0
    %v1911 = vpop.f32.mrf.mxu0
    %v1912 = vadd.f32 %v289, %v1911
    %v1913 = vpop.f32.mrf.mxu0
    %1914 = vmatprep.mubr.bf16.mxu0 0
    %1915 = vmatmul.mubr.bf16.gmra.mxu0 %v1149
    %v1916 = vpop.f32.mrf.mxu0
    %v1917 = vadd.f32 %v289, %v1916
    %v1918 = vpop.f32.mrf.mxu0
    %v1919 = vpop.f32.mrf.mxu0
    %v1920 = vadd.f32 %v289, %v1919
    %v1921 = vpop.f32.mrf.mxu0
    %1922 = vmatprep.mubr.bf16.mxu0 0
    %1923 = vmatmul.mubr.bf16.gmra.mxu0 %v1152
    %v1924 = vpop.f32.mrf.mxu0
    %v1925 = vadd.f32 %v289, %v1924
    %v1926 = vpop.f32.mrf.mxu0
    %v1927 = vpop.f32.mrf.mxu0
    %v1928 = vadd.f32 %v289, %v1927
    %v1929 = vpop.f32.mrf.mxu0
    %1930 = vmatprep.mubr.bf16.mxu0 0
    %1931 = vmatmul.mubr.bf16.gmra.mxu0 %v1155
    %v1932 = vpop.f32.mrf.mxu0
    %v1933 = vadd.f32 %v289, %v1932
    %v1934 = vpop.f32.mrf.mxu0
    %v1935 = vpop.f32.mrf.mxu0
    %v1936 = vadd.f32 %v289, %v1935
    %v1937 = vpop.f32.mrf.mxu0
    %1938 = vmatprep.mubr.bf16.mxu0 0
    %1939 = vmatmul.mubr.bf16.gmra.mxu0 %v1158
    %v1940 = vpop.f32.mrf.mxu0
    %v1941 = vadd.f32 %v289, %v1940
    %v1942 = vpop.f32.mrf.mxu0
    %v1943 = vpop.f32.mrf.mxu0
    %v1944 = vadd.f32 %v289, %v1943
    %v1945 = vpop.f32.mrf.mxu0
    %1946 = vmatprep.mubr.bf16.mxu0 0
    %1947 = vmatmul.mubr.bf16.gmra.mxu0 %v1161
    %v1948 = vpop.f32.mrf.mxu0
    %v1949 = vadd.f32 %v289, %v1948
    %v1950 = vpop.f32.mrf.mxu0
    %v1951 = vpop.f32.mrf.mxu0
    %v1952 = vadd.f32 %v289, %v1951
    %v1953 = vpop.f32.mrf.mxu0
    %1954 = vmatprep.mubr.bf16.mxu0 0
    %1955 = vmatmul.mubr.bf16.gmra.mxu0 %v1164
    %v1956 = vpop.f32.mrf.mxu0
    %v1957 = vadd.f32 %v289, %v1956
    %v1958 = vpop.f32.mrf.mxu0
    %v1959 = vpop.f32.mrf.mxu0
    %v1960 = vadd.f32 %v289, %v1959
    %v1961 = vpop.f32.mrf.mxu0
    %1962 = vmatprep.mubr.bf16.mxu0 0
    %1963 = vmatmul.mubr.bf16.gmra.mxu0 %v1167
    %v1964 = vpop.f32.mrf.mxu0
    %v1965 = vadd.f32 %v289, %v1964
    %v1966 = vpop.f32.mrf.mxu0
    %v1967 = vpop.f32.mrf.mxu0
    %v1968 = vadd.f32 %v289, %v1967
    %v1969 = vpop.f32.mrf.mxu0
    %1970 = vmatprep.mubr.bf16.mxu0 0
    %1971 = vmatmul.mubr.bf16.gmra.mxu0 %v1170
    %v1972 = vpop.f32.mrf.mxu0
    %v1973 = vadd.f32 %v289, %v1972
    %v1974 = vpop.f32.mrf.mxu0
    %v1975 = vpop.f32.mrf.mxu0
    %v1976 = vadd.f32 %v289, %v1975
    %v1977 = vpop.f32.mrf.mxu0
    %1978 = vmatprep.mubr.bf16.mxu0 0
    %1979 = vmatmul.mubr.bf16.gmra.mxu0 %v1173
    %v1980 = vpop.f32.mrf.mxu0
    %v1981 = vadd.f32 %v289, %v1980
    %v1982 = vpop.f32.mrf.mxu0
    %v1983 = vpop.f32.mrf.mxu0
    %v1984 = vadd.f32 %v289, %v1983
    %v1985 = vpop.f32.mrf.mxu0
    %1986 = vmatprep.mubr.bf16.mxu0 0
    %1987 = vmatmul.mubr.bf16.gmra.mxu0 %v1176
    %v1988 = vpop.f32.mrf.mxu0
    %v1989 = vadd.f32 %v289, %v1988
    %v1990 = vpop.f32.mrf.mxu0
    %v1991 = vpop.f32.mrf.mxu0
    %v1992 = vadd.f32 %v289, %v1991
    %v1993 = vpop.f32.mrf.mxu0
    %1994 = vmatprep.mubr.bf16.mxu0 0
    %1995 = vmatmul.mubr.bf16.gmra.mxu0 %v1179
    %v1996 = vpop.f32.mrf.mxu0
    %v1997 = vadd.f32 %v289, %v1996
    %v1998 = vpop.f32.mrf.mxu0
    %v1999 = vpop.f32.mrf.mxu0
    %v2000 = vadd.f32 %v289, %v1999
    %v2001 = vpop.f32.mrf.mxu0
    %2002 = vmatprep.mubr.bf16.mxu0 0
    %2003 = vmatmul.mubr.bf16.gmra.mxu0 %v1182
    %v2004 = vpop.f32.mrf.mxu0
    %v2005 = vadd.f32 %v289, %v2004
    %v2006 = vpop.f32.mrf.mxu0
    %v2007 = vpop.f32.mrf.mxu0
    %v2008 = vadd.f32 %v289, %v2007
    %v2009 = vpop.f32.mrf.mxu0
    %2010 = vmatprep.mubr.bf16.mxu0 0
    %2011 = vmatmul.mubr.bf16.gmra.mxu0 %v1185
    %v2012 = vpop.f32.mrf.mxu0
    %v2013 = vadd.f32 %v289, %v2012
    %v2014 = vpop.f32.mrf.mxu0
    %v2015 = vpop.f32.mrf.mxu0
    %v2016 = vadd.f32 %v289, %v2015
    %v2017 = vpop.f32.mrf.mxu0
    %2018 = vmatprep.mubr.bf16.mxu0 0
    %2019 = vmatmul.mubr.bf16.gmra.mxu0 %v1188
    %v2020 = vpop.f32.mrf.mxu0
    %v2021 = vadd.f32 %v289, %v2020
    %v2022 = vpop.f32.mrf.mxu0
    %v2023 = vpop.f32.mrf.mxu0
    %v2024 = vadd.f32 %v289, %v2023
    %v2025 = vpop.f32.mrf.mxu0
    %2026 = vmatprep.mubr.bf16.mxu0 0
    %2027 = vmatmul.mubr.bf16.gmra.mxu0 %v1191
    %v2028 = vpop.f32.mrf.mxu0
    %v2029 = vadd.f32 %v289, %v2028
    %v2030 = vpop.f32.mrf.mxu0
    %v2031 = vpop.f32.mrf.mxu0
    %v2032 = vadd.f32 %v289, %v2031
    %v2033 = vpop.f32.mrf.mxu0
    %2034 = vmatprep.mubr.bf16.mxu0 0
    %2035 = vmatmul.mubr.bf16.gmra.mxu0 %v1194
    %v2036 = vpop.f32.mrf.mxu0
    %v2037 = vadd.f32 %v289, %v2036
    %v2038 = vpop.f32.mrf.mxu0
    %v2039 = vpop.f32.mrf.mxu0
    %v2040 = vadd.f32 %v289, %v2039
    %v2041 = vpop.f32.mrf.mxu0
    %2042 = vmatprep.mubr.bf16.mxu0 0
    %2043 = vmatmul.mubr.bf16.gmra.mxu0 %v1197
    %v2044 = vpop.f32.mrf.mxu0
    %v2045 = vadd.f32 %v289, %v2044
    %v2046 = vpop.f32.mrf.mxu0
    %v2047 = vpop.f32.mrf.mxu0
    %v2048 = vadd.f32 %v289, %v2047
    %v2049 = vpop.f32.mrf.mxu0
    %2050 = vmatprep.mubr.bf16.mxu0 0
    %2051 = vmatmul.mubr.bf16.gmra.mxu0 %v1200
    %v2052 = vpop.f32.mrf.mxu0
    %v2053 = vadd.f32 %v289, %v2052
    %v2054 = vpop.f32.mrf.mxu0
    %v2055 = vpop.f32.mrf.mxu0
    %v2056 = vadd.f32 %v289, %v2055
    %v2057 = vpop.f32.mrf.mxu0
    %2058 = vmatprep.mubr.bf16.mxu0 0
    %2059 = vmatmul.mubr.bf16.gmra.mxu0 %v1203
    %v2060 = vpop.f32.mrf.mxu0
    %v2061 = vadd.f32 %v289, %v2060
    %v2062 = vpop.f32.mrf.mxu0
    %v2063 = vpop.f32.mrf.mxu0
    %v2064 = vadd.f32 %v289, %v2063
    %v2065 = vpop.f32.mrf.mxu0
    %2066 = vmatprep.mubr.bf16.mxu0 0
    %2067 = vmatmul.mubr.bf16.gmra.mxu0 %v1206
    %v2068 = vpop.f32.mrf.mxu0
    %v2069 = vadd.f32 %v289, %v2068
    %v2070 = vpop.f32.mrf.mxu0
    %v2071 = vpop.f32.mrf.mxu0
    %v2072 = vadd.f32 %v289, %v2071
    %v2073 = vpop.f32.mrf.mxu0
    %2074 = vmatprep.mubr.bf16.mxu0 0
    %2075 = vmatmul.mubr.bf16.gmra.mxu0 %v1209
    %v2076 = vpop.f32.mrf.mxu0
    %v2077 = vadd.f32 %v289, %v2076
    %v2078 = vpop.f32.mrf.mxu0
    %v2079 = vpop.f32.mrf.mxu0
    %v2080 = vadd.f32 %v289, %v2079
    %v2081 = vpop.f32.mrf.mxu0
    %2082 = vmatprep.mubr.bf16.mxu0 0
    %2083 = vmatmul.mubr.bf16.gmra.mxu0 %v1212
    %v2084 = vpop.f32.mrf.mxu0
    %v2085 = vadd.f32 %v289, %v2084
    %v2086 = vpop.f32.mrf.mxu0
    %v2087 = vpop.f32.mrf.mxu0
    %v2088 = vadd.f32 %v289, %v2087
    %v2089 = vpop.f32.mrf.mxu0
    %2090 = vmatprep.mubr.bf16.mxu0 0
    %2091 = vmatmul.mubr.bf16.gmra.mxu0 %v1215
    %v2092 = vpop.f32.mrf.mxu0
    %v2093 = vadd.f32 %v289, %v2092
    %v2094 = vpop.f32.mrf.mxu0
    %v2095 = vpop.f32.mrf.mxu0
    %v2096 = vadd.f32 %v289, %v2095
    %v2097 = vpop.f32.mrf.mxu0
    %2098 = vmatprep.mubr.bf16.mxu0 0
    %2099 = vmatmul.mubr.bf16.gmra.mxu0 %v1218
    %v2100 = vpop.f32.mrf.mxu0
    %v2101 = vadd.f32 %v289, %v2100
    %v2102 = vpop.f32.mrf.mxu0
    %v2103 = vpop.f32.mrf.mxu0
    %v2104 = vadd.f32 %v289, %v2103
    %v2105 = vpop.f32.mrf.mxu0
    %2106 = vmatprep.mubr.bf16.mxu0 0
    %2107 = vmatmul.mubr.bf16.gmra.mxu0 %v1221
    %v2108 = vpop.f32.mrf.mxu0
    %v2109 = vadd.f32 %v289, %v2108
    %v2110 = vpop.f32.mrf.mxu0
    %v2111 = vpop.f32.mrf.mxu0
    %v2112 = vadd.f32 %v289, %v2111
    %v2113 = vpop.f32.mrf.mxu0
    %2114 = vmatprep.mubr.bf16.mxu0 0
    %2115 = vmatmul.mubr.bf16.gmra.mxu0 %v1224
    %v2116 = vpop.f32.mrf.mxu0
    %v2117 = vadd.f32 %v289, %v2116
    %v2118 = vpop.f32.mrf.mxu0
    %v2119 = vpop.f32.mrf.mxu0
    %v2120 = vadd.f32 %v289, %v2119
    %v2121 = vpop.f32.mrf.mxu0
    %2122 = vmatprep.mubr.bf16.mxu0 0
    %2123 = vmatmul.mubr.bf16.gmra.mxu0 %v1227
    %v2124 = vpop.f32.mrf.mxu0
    %v2125 = vadd.f32 %v289, %v2124
    %v2126 = vpop.f32.mrf.mxu0
    %v2127 = vpop.f32.mrf.mxu0
    %v2128 = vadd.f32 %v289, %v2127
    %v2129 = vpop.f32.mrf.mxu0
    %2130 = vmatprep.mubr.bf16.mxu0 0
    %2131 = vmatmul.mubr.bf16.gmra.mxu0 %v1230
    %v2132 = vpop.f32.mrf.mxu0
    %v2133 = vadd.f32 %v289, %v2132
    %v2134 = vpop.f32.mrf.mxu0
    %v2135 = vpop.f32.mrf.mxu0
    %v2136 = vadd.f32 %v289, %v2135
    %v2137 = vpop.f32.mrf.mxu0
    %2138 = vmatprep.mubr.bf16.mxu0 0
    %2139 = vmatmul.mubr.bf16.gmra.mxu0 %v1233
    %v2140 = vpop.f32.mrf.mxu0
    %v2141 = vadd.f32 %v289, %v2140
    %v2142 = vpop.f32.mrf.mxu0
    %v2143 = vpop.f32.mrf.mxu0
    %v2144 = vadd.f32 %v289, %v2143
    %v2145 = vpop.f32.mrf.mxu0
    %2146 = vmatprep.mubr.bf16.mxu0 0
    %2147 = vmatmul.mubr.bf16.gmra.mxu0 %v1236
    %v2148 = vpop.f32.mrf.mxu0
    %v2149 = vadd.f32 %v289, %v2148
    %v2150 = vpop.f32.mrf.mxu0
    %v2151 = vpop.f32.mrf.mxu0
    %v2152 = vadd.f32 %v289, %v2151
    %v2153 = vpop.f32.mrf.mxu0
    %2154 = vmatprep.mubr.bf16.mxu0 0
    %2155 = vmatmul.mubr.bf16.gmra.mxu0 %v1239
    %v2156 = vpop.f32.mrf.mxu0
    %v2157 = vadd.f32 %v289, %v2156
    %v2158 = vpop.f32.mrf.mxu0
    %v2159 = vpop.f32.mrf.mxu0
    %v2160 = vadd.f32 %v289, %v2159
    %v2161 = vpop.f32.mrf.mxu0
    %2162 = vmatprep.mubr.bf16.mxu0 0
    %2163 = vmatmul.mubr.bf16.gmra.mxu0 %v1242
    %v2164 = vpop.f32.mrf.mxu0
    %v2165 = vadd.f32 %v289, %v2164
    %v2166 = vpop.f32.mrf.mxu0
    %v2167 = vpop.f32.mrf.mxu0
    %v2168 = vadd.f32 %v289, %v2167
    %v2169 = vpop.f32.mrf.mxu0
    %2170 = vmatprep.mubr.bf16.mxu0 0
    %2171 = vmatmul.mubr.bf16.gmra.mxu0 %v1245
    %v2172 = vpop.f32.mrf.mxu0
    %v2173 = vadd.f32 %v289, %v2172
    %v2174 = vpop.f32.mrf.mxu0
    %v2175 = vpop.f32.mrf.mxu0
    %v2176 = vadd.f32 %v289, %v2175
    %v2177 = vpop.f32.mrf.mxu0
    %2178 = vmatprep.mubr.bf16.mxu0 0
    %2179 = vmatmul.mubr.bf16.gmra.mxu0 %v1248
    %v2180 = vpop.f32.mrf.mxu0
    %v2181 = vadd.f32 %v289, %v2180
    %v2182 = vpop.f32.mrf.mxu0
    %v2183 = vpop.f32.mrf.mxu0
    %v2184 = vadd.f32 %v289, %v2183
    %v2185 = vpop.f32.mrf.mxu0
    %2186 = vmatprep.mubr.bf16.mxu0 0
    %2187 = vmatmul.mubr.bf16.gmra.mxu0 %v1251
    %v2188 = vpop.f32.mrf.mxu0
    %v2189 = vadd.f32 %v289, %v2188
    %v2190 = vpop.f32.mrf.mxu0
    %v2191 = vpop.f32.mrf.mxu0
    %v2192 = vadd.f32 %v289, %v2191
    %v2193 = vpop.f32.mrf.mxu0
    %2194 = vmatprep.mubr.bf16.mxu0 0
    %2195 = vmatmul.mubr.bf16.gmra.mxu0 %v1254
    %v2196 = vpop.f32.mrf.mxu0
    %v2197 = vadd.f32 %v289, %v2196
    %v2198 = vpop.f32.mrf.mxu0
    %v2199 = vpop.f32.mrf.mxu0
    %v2200 = vadd.f32 %v289, %v2199
    %v2201 = vpop.f32.mrf.mxu0
    %2202 = vmatprep.mubr.bf16.mxu0 0
    %2203 = vmatmul.mubr.bf16.gmra.mxu0 %v1257
    %v2204 = vpop.f32.mrf.mxu0
    %v2205 = vadd.f32 %v289, %v2204
    %v2206 = vpop.f32.mrf.mxu0
    %v2207 = vpop.f32.mrf.mxu0
    %v2208 = vadd.f32 %v289, %v2207
    %v2209 = vpop.f32.mrf.mxu0
    %2210 = vmatprep.mubr.bf16.mxu0 0
    %2211 = vmatmul.mubr.bf16.gmra.mxu0 %v1260
    %v2212 = vpop.f32.mrf.mxu0
    %v2213 = vadd.f32 %v289, %v2212
    %v2214 = vpop.f32.mrf.mxu0
    %v2215 = vpop.f32.mrf.mxu0
    %v2216 = vadd.f32 %v289, %v2215
    %v2217 = vpop.f32.mrf.mxu0
    %2218 = vmatprep.mubr.bf16.mxu0 0
    %2219 = vmatmul.mubr.bf16.gmra.mxu0 %v1263
    %v2220 = vpop.f32.mrf.mxu0
    %v2221 = vadd.f32 %v289, %v2220
    %v2222 = vpop.f32.mrf.mxu0
    %v2223 = vpop.f32.mrf.mxu0
    %v2224 = vadd.f32 %v289, %v2223
    %v2225 = vpop.f32.mrf.mxu0
    %2226 = vmatprep.mubr.bf16.mxu0 0
    %2227 = vmatmul.mubr.bf16.gmra.mxu0 %v1266
    %v2228 = vpop.f32.mrf.mxu0
    %v2229 = vadd.f32 %v289, %v2228
    %v2230 = vpop.f32.mrf.mxu0
    %v2231 = vpop.f32.mrf.mxu0
    %v2232 = vadd.f32 %v289, %v2231
    %v2233 = vpop.f32.mrf.mxu0
    %2234 = vmatprep.mubr.bf16.mxu0 0
    %2235 = vmatmul.mubr.bf16.gmra.mxu0 %v1269
    %v2236 = vpop.f32.mrf.mxu0
    %v2237 = vadd.f32 %v289, %v2236
    %v2238 = vpop.f32.mrf.mxu0
    %v2239 = vpop.f32.mrf.mxu0
    %v2240 = vadd.f32 %v289, %v2239
    %v2241 = vpop.f32.mrf.mxu0
    %2242 = vmatprep.mubr.bf16.mxu0 0
    %2243 = vmatmul.mubr.bf16.gmra.mxu0 %v1272
    %v2244 = vpop.f32.mrf.mxu0
    %v2245 = vadd.f32 %v289, %v2244
    %v2246 = vpop.f32.mrf.mxu0
    %v2247 = vpop.f32.mrf.mxu0
    %v2248 = vadd.f32 %v289, %v2247
    %v2249 = vpop.f32.mrf.mxu0
    %2250 = vmatprep.mubr.bf16.mxu0 0
    %2251 = vmatmul.mubr.bf16.gmra.mxu0 %v1275
    %v2252 = vpop.f32.mrf.mxu0
    %v2253 = vadd.f32 %v289, %v2252
    %v2254 = vpop.f32.mrf.mxu0
    %v2255 = vpop.f32.mrf.mxu0
    %v2256 = vadd.f32 %v289, %v2255
    %v2257 = vpop.f32.mrf.mxu0
    %2258 = vmatprep.mubr.bf16.mxu0 0
    %2259 = vmatmul.mubr.bf16.gmra.mxu0 %v1278
    %v2260 = vpop.f32.mrf.mxu0
    %v2261 = vadd.f32 %v289, %v2260
    %v2262 = vpop.f32.mrf.mxu0
    %v2263 = vpop.f32.mrf.mxu0
    %v2264 = vadd.f32 %v289, %v2263
    %v2265 = vpop.f32.mrf.mxu0
    %2266 = vmatprep.mubr.bf16.mxu0 0
    %2267 = vmatmul.mubr.bf16.gmra.mxu0 %v1281
    %v2268 = vpop.f32.mrf.mxu0
    %v2269 = vadd.f32 %v289, %v2268
    %v2270 = vpop.f32.mrf.mxu0
    %v2271 = vpop.f32.mrf.mxu0
    %v2272 = vadd.f32 %v289, %v2271
    %v2273 = vpop.f32.mrf.mxu0
    %2274 = vmatprep.mubr.bf16.mxu0 0
    %2275 = vmatmul.mubr.bf16.gmra.mxu0 %v1284
    %v2276 = vpop.f32.mrf.mxu0
    %v2277 = vadd.f32 %v289, %v2276
    %v2278 = vpop.f32.mrf.mxu0
    %v2279 = vpop.f32.mrf.mxu0
    %v2280 = vadd.f32 %v289, %v2279
    %v2281 = vpop.f32.mrf.mxu0
    %2282 = vmatprep.mubr.bf16.mxu0 0
    %2283 = vmatmul.mubr.bf16.gmra.mxu0 %v1287
    %v2284 = vpop.f32.mrf.mxu0
    %v2285 = vadd.f32 %v289, %v2284
    %v2286 = vpop.f32.mrf.mxu0
    %v2287 = vpop.f32.mrf.mxu0
    %v2288 = vadd.f32 %v289, %v2287
    %v2289 = vpop.f32.mrf.mxu0
    %2290 = vmatprep.mubr.bf16.mxu0 0
    %2291 = vmatmul.mubr.bf16.gmra.mxu0 %v1290
    %v2292 = vpop.f32.mrf.mxu0
    %v2293 = vadd.f32 %v289, %v2292
    %v2294 = vpop.f32.mrf.mxu0
    %v2295 = vpop.f32.mrf.mxu0
    %v2296 = vadd.f32 %v289, %v2295
    %v2297 = vpop.f32.mrf.mxu0
    %2298 = vmatprep.mubr.bf16.mxu0 0
    %2299 = vmatmul.mubr.bf16.gmra.mxu0 %v1293
    %v2300 = vpop.f32.mrf.mxu0
    %v2301 = vadd.f32 %v289, %v2300
    %v2302 = vpop.f32.mrf.mxu0
    %v2303 = vpop.f32.mrf.mxu0
    %v2304 = vadd.f32 %v289, %v2303
    %v2305 = vpop.f32.mrf.mxu0
    %2306 = vmatprep.mubr.bf16.mxu0 0
    %2307 = vmatmul.mubr.bf16.gmra.mxu0 %v1296
    %v2308 = vpop.f32.mrf.mxu0
    %v2309 = vadd.f32 %v289, %v2308
    %v2310 = vpop.f32.mrf.mxu0
    %v2311 = vpop.f32.mrf.mxu0
    %v2312 = vadd.f32 %v289, %v2311
    %v2313 = vpop.f32.mrf.mxu0
    %2314 = vmatprep.mubr.bf16.mxu0 0
    %2315 = vmatmul.mubr.bf16.gmra.mxu0 %v1299
    %v2316 = vpop.f32.mrf.mxu0
    %v2317 = vadd.f32 %v289, %v2316
    %v2318 = vpop.f32.mrf.mxu0
    %v2319 = vpop.f32.mrf.mxu0
    %v2320 = vadd.f32 %v289, %v2319
    %v2321 = vpop.f32.mrf.mxu0
    %2322 = vmatprep.mubr.bf16.mxu0 0
    %2323 = vmatmul.mubr.bf16.gmra.mxu0 %v1302
    %v2324 = vpop.f32.mrf.mxu0
    %v2325 = vadd.f32 %v289, %v2324
    %v2326 = vpop.f32.mrf.mxu0
    %v2327 = vpop.f32.mrf.mxu0
    %v2328 = vadd.f32 %v289, %v2327
    %v2329 = vpop.f32.mrf.mxu0
    %2330 = vmatprep.mubr.bf16.mxu0 0
    %2331 = vmatmul.mubr.bf16.gmra.mxu0 %v1305
    %v2332 = vpop.f32.mrf.mxu0
    %v2333 = vadd.f32 %v289, %v2332
    %v2334 = vpop.f32.mrf.mxu0
    %v2335 = vpop.f32.mrf.mxu0
    %v2336 = vadd.f32 %v289, %v2335
    %v2337 = vpop.f32.mrf.mxu0
    %2338 = vmatprep.mubr.bf16.mxu0 0
    %2339 = vmatmul.mubr.bf16.gmra.mxu0 %v1308
    %v2340 = vpop.f32.mrf.mxu0
    %v2341 = vadd.f32 %v289, %v2340
    %v2342 = vpop.f32.mrf.mxu0
    %v2343 = vpop.f32.mrf.mxu0
    %v2344 = vadd.f32 %v289, %v2343
    %v2345 = vpop.f32.mrf.mxu0
    %2346 = vmatprep.mubr.bf16.mxu0 0
    %2347 = vmatmul.mubr.bf16.gmra.mxu0 %v1311
    %v2348 = vpop.f32.mrf.mxu0
    %v2349 = vadd.f32 %v289, %v2348
    %v2350 = vpop.f32.mrf.mxu0
    %v2351 = vpop.f32.mrf.mxu0
    %v2352 = vadd.f32 %v289, %v2351
    %v2353 = vpop.f32.mrf.mxu0
    %2354 = vmatprep.mubr.bf16.mxu0 0
    %2355 = vmatmul.mubr.bf16.gmra.mxu0 %v1314
    %v2356 = vpop.f32.mrf.mxu0
    %v2357 = vadd.f32 %v289, %v2356
    %v2358 = vpop.f32.mrf.mxu0
    %v2359 = vpop.f32.mrf.mxu0
    %v2360 = vadd.f32 %v289, %v2359
    %v2361 = vpop.f32.mrf.mxu0
    %2362 = vmatprep.mubr.bf16.mxu0 0
    %2363 = vmatmul.mubr.bf16.gmra.mxu0 %v1317
    %v2364 = vpop.f32.mrf.mxu0
    %v2365 = vadd.f32 %v289, %v2364
    %v2366 = vpop.f32.mrf.mxu0
    %v2367 = vpop.f32.mrf.mxu0
    %v2368 = vadd.f32 %v289, %v2367
    %v2369 = vpop.f32.mrf.mxu0
    %2370 = vmatprep.mubr.bf16.mxu0 0
    %2371 = vmatmul.mubr.bf16.gmra.mxu0 %v1320
    %v2372 = vpop.f32.mrf.mxu0
    %v2373 = vadd.f32 %v289, %v2372
    %v2374 = vpop.f32.mrf.mxu0
    %v2375 = vpop.f32.mrf.mxu0
    %v2376 = vadd.f32 %v289, %v2375
    %v2377 = vpop.f32.mrf.mxu0
    %2378 = vdwg.mxu0
    %v2379 = vpack.c.bf16 %v1360, %v1357
    %v2380 = vpack.c.bf16 %v1368, %v1365
    %v2381 = vpack.c.bf16 %v1376, %v1373
    %v2382 = vpack.c.bf16 %v1384, %v1381
    %v2383 = vpack.c.bf16 %v1392, %v1389
    %v2384 = vpack.c.bf16 %v1400, %v1397
    %v2385 = vpack.c.bf16 %v1408, %v1405
    %v2386 = vpack.c.bf16 %v1416, %v1413
    %v2387 = vpack.c.bf16 %v1424, %v1421
    %v2388 = vpack.c.bf16 %v1432, %v1429
    %v2389 = vpack.c.bf16 %v1440, %v1437
    %v2390 = vpack.c.bf16 %v1448, %v1445
    %v2391 = vpack.c.bf16 %v1456, %v1453
    %v2392 = vpack.c.bf16 %v1464, %v1461
    %v2393 = vpack.c.bf16 %v1472, %v1469
    %v2394 = vpack.c.bf16 %v1480, %v1477
    %v2395 = vpack.c.bf16 %v1488, %v1485
    %v2396 = vpack.c.bf16 %v1496, %v1493
    %v2397 = vpack.c.bf16 %v1504, %v1501
    %v2398 = vpack.c.bf16 %v1512, %v1509
    %v2399 = vpack.c.bf16 %v1520, %v1517
    %v2400 = vpack.c.bf16 %v1528, %v1525
    %v2401 = vpack.c.bf16 %v1536, %v1533
    %v2402 = vpack.c.bf16 %v1544, %v1541
    %v2403 = vpack.c.bf16 %v1552, %v1549
    %v2404 = vpack.c.bf16 %v1560, %v1557
    %v2405 = vpack.c.bf16 %v1568, %v1565
    %v2406 = vpack.c.bf16 %v1576, %v1573
    %v2407 = vpack.c.bf16 %v1584, %v1581
    %v2408 = vpack.c.bf16 %v1592, %v1589
    %v2409 = vpack.c.bf16 %v1600, %v1597
    %v2410 = vpack.c.bf16 %v1608, %v1605
    %v2411 = vpack.c.bf16 %v1616, %v1613
    %v2412 = vpack.c.bf16 %v1624, %v1621
    %v2413 = vpack.c.bf16 %v1632, %v1629
    %v2414 = vpack.c.bf16 %v1640, %v1637
    %v2415 = vpack.c.bf16 %v1648, %v1645
    %v2416 = vpack.c.bf16 %v1656, %v1653
    %v2417 = vpack.c.bf16 %v1664, %v1661
    %v2418 = vpack.c.bf16 %v1672, %v1669
    %v2419 = vpack.c.bf16 %v1680, %v1677
    %v2420 = vpack.c.bf16 %v1688, %v1685
    %v2421 = vpack.c.bf16 %v1696, %v1693
    %v2422 = vpack.c.bf16 %v1704, %v1701
    %v2423 = vpack.c.bf16 %v1712, %v1709
    %v2424 = vpack.c.bf16 %v1720, %v1717
    %v2425 = vpack.c.bf16 %v1728, %v1725
    %v2426 = vpack.c.bf16 %v1736, %v1733
    %v2427 = vpack.c.bf16 %v1744, %v1741
    %v2428 = vpack.c.bf16 %v1752, %v1749
    %v2429 = vpack.c.bf16 %v1760, %v1757
    %v2430 = vpack.c.bf16 %v1768, %v1765
    %v2431 = vpack.c.bf16 %v1776, %v1773
    %v2432 = vpack.c.bf16 %v1784, %v1781
    %v2433 = vpack.c.bf16 %v1792, %v1789
    %v2434 = vpack.c.bf16 %v1800, %v1797
    %v2435 = vpack.c.bf16 %v1808, %v1805
    %v2436 = vpack.c.bf16 %v1816, %v1813
    %v2437 = vpack.c.bf16 %v1824, %v1821
    %v2438 = vpack.c.bf16 %v1832, %v1829
    %v2439 = vpack.c.bf16 %v1840, %v1837
    %v2440 = vpack.c.bf16 %v1848, %v1845
    %v2441 = vpack.c.bf16 %v1856, %v1853
    %v2442 = vpack.c.bf16 %v1864, %v1861
    %v2443 = vpack.c.bf16 %v1872, %v1869
    %v2444 = vpack.c.bf16 %v1880, %v1877
    %v2445 = vpack.c.bf16 %v1888, %v1885
    %v2446 = vpack.c.bf16 %v1896, %v1893
    %v2447 = vpack.c.bf16 %v1904, %v1901
    %v2448 = vpack.c.bf16 %v1912, %v1909
    %v2449 = vpack.c.bf16 %v1920, %v1917
    %v2450 = vpack.c.bf16 %v1928, %v1925
    %v2451 = vpack.c.bf16 %v1936, %v1933
    %v2452 = vpack.c.bf16 %v1944, %v1941
    %v2453 = vpack.c.bf16 %v1952, %v1949
    %v2454 = vpack.c.bf16 %v1960, %v1957
    %v2455 = vpack.c.bf16 %v1968, %v1965
    %v2456 = vpack.c.bf16 %v1976, %v1973
    %v2457 = vpack.c.bf16 %v1984, %v1981
    %v2458 = vpack.c.bf16 %v1992, %v1989
    %v2459 = vpack.c.bf16 %v2000, %v1997
    %v2460 = vpack.c.bf16 %v2008, %v2005
    %v2461 = vpack.c.bf16 %v2016, %v2013
    %v2462 = vpack.c.bf16 %v2024, %v2021
    %v2463 = vpack.c.bf16 %v2032, %v2029
    %v2464 = vpack.c.bf16 %v2040, %v2037
    %v2465 = vpack.c.bf16 %v2048, %v2045
    %v2466 = vpack.c.bf16 %v2056, %v2053
    %v2467 = vpack.c.bf16 %v2064, %v2061
    %v2468 = vpack.c.bf16 %v2072, %v2069
    %v2469 = vpack.c.bf16 %v2080, %v2077
    %v2470 = vpack.c.bf16 %v2088, %v2085
    %v2471 = vpack.c.bf16 %v2096, %v2093
    %v2472 = vpack.c.bf16 %v2104, %v2101
    %v2473 = vpack.c.bf16 %v2112, %v2109
    %v2474 = vpack.c.bf16 %v2120, %v2117
    %v2475 = vpack.c.bf16 %v2128, %v2125
    %v2476 = vpack.c.bf16 %v2136, %v2133
    %v2477 = vpack.c.bf16 %v2144, %v2141
    %v2478 = vpack.c.bf16 %v2152, %v2149
    %v2479 = vpack.c.bf16 %v2160, %v2157
    %v2480 = vpack.c.bf16 %v2168, %v2165
    %v2481 = vpack.c.bf16 %v2176, %v2173
    %v2482 = vpack.c.bf16 %v2184, %v2181
    %v2483 = vpack.c.bf16 %v2192, %v2189
    %v2484 = vpack.c.bf16 %v2200, %v2197
    %v2485 = vpack.c.bf16 %v2208, %v2205
    %v2486 = vpack.c.bf16 %v2216, %v2213
    %v2487 = vpack.c.bf16 %v2224, %v2221
    %v2488 = vpack.c.bf16 %v2232, %v2229
    %v2489 = vpack.c.bf16 %v2240, %v2237
    %v2490 = vpack.c.bf16 %v2248, %v2245
    %v2491 = vpack.c.bf16 %v2256, %v2253
    %v2492 = vpack.c.bf16 %v2264, %v2261
    %v2493 = vpack.c.bf16 %v2272, %v2269
    %v2494 = vpack.c.bf16 %v2280, %v2277
    %v2495 = vpack.c.bf16 %v2288, %v2285
    %v2496 = vpack.c.bf16 %v2296, %v2293
    %v2497 = vpack.c.bf16 %v2304, %v2301
    %v2498 = vpack.c.bf16 %v2312, %v2309
    %v2499 = vpack.c.bf16 %v2320, %v2317
    %v2500 = vpack.c.bf16 %v2328, %v2325
    %v2501 = vpack.c.bf16 %v2336, %v2333
    %v2502 = vpack.c.bf16 %v2344, %v2341
    %v2503 = vpack.c.bf16 %v2352, %v2349
    %v2504 = vpack.c.bf16 %v2360, %v2357
    %v2505 = vpack.c.bf16 %v2368, %v2365
    %v2506 = vpack.c.bf16 %v2376, %v2373
    %v2635 = vunpack.c.l.b16 %v2379
    %v2636 = vunpack.c.h.b16 %v2379
    %v2637 = vunpack.c.l.b16 %v2380
    %v2638 = vunpack.c.h.b16 %v2380
    %v2639 = vunpack.c.l.b16 %v2381
    %v2640 = vunpack.c.h.b16 %v2381
    %v2641 = vunpack.c.l.b16 %v2382
    %v2642 = vunpack.c.h.b16 %v2382
    %v2643 = vunpack.c.l.b16 %v2383
    %v2644 = vunpack.c.h.b16 %v2383
    %v2645 = vunpack.c.l.b16 %v2384
    %v2646 = vunpack.c.h.b16 %v2384
    %v2647 = vunpack.c.l.b16 %v2385
    %v2648 = vunpack.c.h.b16 %v2385
    %v2649 = vunpack.c.l.b16 %v2386
    %v2650 = vunpack.c.h.b16 %v2386
    %v2651 = vunpack.c.l.b16 %v2387
    %v2652 = vunpack.c.h.b16 %v2387
    %v2653 = vunpack.c.l.b16 %v2388
    %v2654 = vunpack.c.h.b16 %v2388
    %v2655 = vunpack.c.l.b16 %v2389
    %v2656 = vunpack.c.h.b16 %v2389
    %v2657 = vunpack.c.l.b16 %v2390
    %v2658 = vunpack.c.h.b16 %v2390
    %v2659 = vunpack.c.l.b16 %v2391
    %v2660 = vunpack.c.h.b16 %v2391
    %v2661 = vunpack.c.l.b16 %v2392
    %v2662 = vunpack.c.h.b16 %v2392
    %v2663 = vunpack.c.l.b16 %v2393
    %v2664 = vunpack.c.h.b16 %v2393
    %v2665 = vunpack.c.l.b16 %v2394
    %v2666 = vunpack.c.h.b16 %v2394
    %v2667 = vunpack.c.l.b16 %v2395
    %v2668 = vunpack.c.h.b16 %v2395
    %v2669 = vunpack.c.l.b16 %v2396
    %v2670 = vunpack.c.h.b16 %v2396
    %v2671 = vunpack.c.l.b16 %v2397
    %v2672 = vunpack.c.h.b16 %v2397
    %v2673 = vunpack.c.l.b16 %v2398
    %v2674 = vunpack.c.h.b16 %v2398
    %v2675 = vunpack.c.l.b16 %v2399
    %v2676 = vunpack.c.h.b16 %v2399
    %v2677 = vunpack.c.l.b16 %v2400
    %v2678 = vunpack.c.h.b16 %v2400
    %v2679 = vunpack.c.l.b16 %v2401
    %v2680 = vunpack.c.h.b16 %v2401
    %v2681 = vunpack.c.l.b16 %v2402
    %v2682 = vunpack.c.h.b16 %v2402
    %v2683 = vunpack.c.l.b16 %v2403
    %v2684 = vunpack.c.h.b16 %v2403
    %v2685 = vunpack.c.l.b16 %v2404
    %v2686 = vunpack.c.h.b16 %v2404
    %v2687 = vunpack.c.l.b16 %v2405
    %v2688 = vunpack.c.h.b16 %v2405
    %v2689 = vunpack.c.l.b16 %v2406
    %v2690 = vunpack.c.h.b16 %v2406
    %v2691 = vunpack.c.l.b16 %v2407
    %v2692 = vunpack.c.h.b16 %v2407
    %v2693 = vunpack.c.l.b16 %v2408
    %v2694 = vunpack.c.h.b16 %v2408
    %v2695 = vunpack.c.l.b16 %v2409
    %v2696 = vunpack.c.h.b16 %v2409
    %v2697 = vunpack.c.l.b16 %v2410
    %v2698 = vunpack.c.h.b16 %v2410
    %v2699 = vunpack.c.l.b16 %v2411
    %v2700 = vunpack.c.h.b16 %v2411
    %v2701 = vunpack.c.l.b16 %v2412
    %v2702 = vunpack.c.h.b16 %v2412
    %v2703 = vunpack.c.l.b16 %v2413
    %v2704 = vunpack.c.h.b16 %v2413
    %v2705 = vunpack.c.l.b16 %v2414
    %v2706 = vunpack.c.h.b16 %v2414
    %v2707 = vunpack.c.l.b16 %v2415
    %v2708 = vunpack.c.h.b16 %v2415
    %v2709 = vunpack.c.l.b16 %v2416
    %v2710 = vunpack.c.h.b16 %v2416
    %v2711 = vunpack.c.l.b16 %v2417
    %v2712 = vunpack.c.h.b16 %v2417
    %v2713 = vunpack.c.l.b16 %v2418
    %v2714 = vunpack.c.h.b16 %v2418
    %v2715 = vunpack.c.l.b16 %v2419
    %v2716 = vunpack.c.h.b16 %v2419
    %v2717 = vunpack.c.l.b16 %v2420
    %v2718 = vunpack.c.h.b16 %v2420
    %v2719 = vunpack.c.l.b16 %v2421
    %v2720 = vunpack.c.h.b16 %v2421
    %v2721 = vunpack.c.l.b16 %v2422
    %v2722 = vunpack.c.h.b16 %v2422
    %v2723 = vunpack.c.l.b16 %v2423
    %v2724 = vunpack.c.h.b16 %v2423
    %v2725 = vunpack.c.l.b16 %v2424
    %v2726 = vunpack.c.h.b16 %v2424
    %v2727 = vunpack.c.l.b16 %v2425
    %v2728 = vunpack.c.h.b16 %v2425
    %v2729 = vunpack.c.l.b16 %v2426
    %v2730 = vunpack.c.h.b16 %v2426
    %v2731 = vunpack.c.l.b16 %v2427
    %v2732 = vunpack.c.h.b16 %v2427
    %v2733 = vunpack.c.l.b16 %v2428
    %v2734 = vunpack.c.h.b16 %v2428
    %v2735 = vunpack.c.l.b16 %v2429
    %v2736 = vunpack.c.h.b16 %v2429
    %v2737 = vunpack.c.l.b16 %v2430
    %v2738 = vunpack.c.h.b16 %v2430
    %v2739 = vunpack.c.l.b16 %v2431
    %v2740 = vunpack.c.h.b16 %v2431
    %v2741 = vunpack.c.l.b16 %v2432
    %v2742 = vunpack.c.h.b16 %v2432
    %v2743 = vunpack.c.l.b16 %v2433
    %v2744 = vunpack.c.h.b16 %v2433
    %v2745 = vunpack.c.l.b16 %v2434
    %v2746 = vunpack.c.h.b16 %v2434
    %v2747 = vunpack.c.l.b16 %v2435
    %v2748 = vunpack.c.h.b16 %v2435
    %v2749 = vunpack.c.l.b16 %v2436
    %v2750 = vunpack.c.h.b16 %v2436
    %v2751 = vunpack.c.l.b16 %v2437
    %v2752 = vunpack.c.h.b16 %v2437
    %v2753 = vunpack.c.l.b16 %v2438
    %v2754 = vunpack.c.h.b16 %v2438
    %v2755 = vunpack.c.l.b16 %v2439
    %v2756 = vunpack.c.h.b16 %v2439
    %v2757 = vunpack.c.l.b16 %v2440
    %v2758 = vunpack.c.h.b16 %v2440
    %v2759 = vunpack.c.l.b16 %v2441
    %v2760 = vunpack.c.h.b16 %v2441
    %v2761 = vunpack.c.l.b16 %v2442
    %v2762 = vunpack.c.h.b16 %v2442
    %v2763 = vunpack.c.l.b16 %v2443
    %v2764 = vunpack.c.h.b16 %v2443
    %v2765 = vunpack.c.l.b16 %v2444
    %v2766 = vunpack.c.h.b16 %v2444
    %v2767 = vunpack.c.l.b16 %v2445
    %v2768 = vunpack.c.h.b16 %v2445
    %v2769 = vunpack.c.l.b16 %v2446
    %v2770 = vunpack.c.h.b16 %v2446
    %v2771 = vunpack.c.l.b16 %v2447
    %v2772 = vunpack.c.h.b16 %v2447
    %v2773 = vunpack.c.l.b16 %v2448
    %v2774 = vunpack.c.h.b16 %v2448
    %v2775 = vunpack.c.l.b16 %v2449
    %v2776 = vunpack.c.h.b16 %v2449
    %v2777 = vunpack.c.l.b16 %v2450
    %v2778 = vunpack.c.h.b16 %v2450
    %v2779 = vunpack.c.l.b16 %v2451
    %v2780 = vunpack.c.h.b16 %v2451
    %v2781 = vunpack.c.l.b16 %v2452
    %v2782 = vunpack.c.h.b16 %v2452
    %v2783 = vunpack.c.l.b16 %v2453
    %v2784 = vunpack.c.h.b16 %v2453
    %v2785 = vunpack.c.l.b16 %v2454
    %v2786 = vunpack.c.h.b16 %v2454
    %v2787 = vunpack.c.l.b16 %v2455
    %v2788 = vunpack.c.h.b16 %v2455
    %v2789 = vunpack.c.l.b16 %v2456
    %v2790 = vunpack.c.h.b16 %v2456
    %v2791 = vunpack.c.l.b16 %v2457
    %v2792 = vunpack.c.h.b16 %v2457
    %v2793 = vunpack.c.l.b16 %v2458
    %v2794 = vunpack.c.h.b16 %v2458
    %v2795 = vunpack.c.l.b16 %v2459
    %v2796 = vunpack.c.h.b16 %v2459
    %v2797 = vunpack.c.l.b16 %v2460
    %v2798 = vunpack.c.h.b16 %v2460
    %v2799 = vunpack.c.l.b16 %v2461
    %v2800 = vunpack.c.h.b16 %v2461
    %v2801 = vunpack.c.l.b16 %v2462
    %v2802 = vunpack.c.h.b16 %v2462
    %v2803 = vunpack.c.l.b16 %v2463
    %v2804 = vunpack.c.h.b16 %v2463
    %v2805 = vunpack.c.l.b16 %v2464
    %v2806 = vunpack.c.h.b16 %v2464
    %v2807 = vunpack.c.l.b16 %v2465
    %v2808 = vunpack.c.h.b16 %v2465
    %v2809 = vunpack.c.l.b16 %v2466
    %v2810 = vunpack.c.h.b16 %v2466
    %v2811 = vunpack.c.l.b16 %v2467
    %v2812 = vunpack.c.h.b16 %v2467
    %v2813 = vunpack.c.l.b16 %v2468
    %v2814 = vunpack.c.h.b16 %v2468
    %v2815 = vunpack.c.l.b16 %v2469
    %v2816 = vunpack.c.h.b16 %v2469
    %v2817 = vunpack.c.l.b16 %v2470
    %v2818 = vunpack.c.h.b16 %v2470
    %v2819 = vunpack.c.l.b16 %v2471
    %v2820 = vunpack.c.h.b16 %v2471
    %v2821 = vunpack.c.l.b16 %v2472
    %v2822 = vunpack.c.h.b16 %v2472
    %v2823 = vunpack.c.l.b16 %v2473
    %v2824 = vunpack.c.h.b16 %v2473
    %v2825 = vunpack.c.l.b16 %v2474
    %v2826 = vunpack.c.h.b16 %v2474
    %v2827 = vunpack.c.l.b16 %v2475
    %v2828 = vunpack.c.h.b16 %v2475
    %v2829 = vunpack.c.l.b16 %v2476
    %v2830 = vunpack.c.h.b16 %v2476
    %v2831 = vunpack.c.l.b16 %v2477
    %v2832 = vunpack.c.h.b16 %v2477
    %v2833 = vunpack.c.l.b16 %v2478
    %v2834 = vunpack.c.h.b16 %v2478
    %v2835 = vunpack.c.l.b16 %v2479
    %v2836 = vunpack.c.h.b16 %v2479
    %v2837 = vunpack.c.l.b16 %v2480
    %v2838 = vunpack.c.h.b16 %v2480
    %v2839 = vunpack.c.l.b16 %v2481
    %v2840 = vunpack.c.h.b16 %v2481
    %v2841 = vunpack.c.l.b16 %v2482
    %v2842 = vunpack.c.h.b16 %v2482
    %v2843 = vunpack.c.l.b16 %v2483
    %v2844 = vunpack.c.h.b16 %v2483
    %v2845 = vunpack.c.l.b16 %v2484
    %v2846 = vunpack.c.h.b16 %v2484
    %v2847 = vunpack.c.l.b16 %v2485
    %v2848 = vunpack.c.h.b16 %v2485
    %v2849 = vunpack.c.l.b16 %v2486
    %v2850 = vunpack.c.h.b16 %v2486
    %v2851 = vunpack.c.l.b16 %v2487
    %v2852 = vunpack.c.h.b16 %v2487
    %v2853 = vunpack.c.l.b16 %v2488
    %v2854 = vunpack.c.h.b16 %v2488
    %v2855 = vunpack.c.l.b16 %v2489
    %v2856 = vunpack.c.h.b16 %v2489
    %v2857 = vunpack.c.l.b16 %v2490
    %v2858 = vunpack.c.h.b16 %v2490
    %v2859 = vunpack.c.l.b16 %v2491
    %v2860 = vunpack.c.h.b16 %v2491
    %v2861 = vunpack.c.l.b16 %v2492
    %v2862 = vunpack.c.h.b16 %v2492
    %v2863 = vunpack.c.l.b16 %v2493
    %v2864 = vunpack.c.h.b16 %v2493
    %v2865 = vunpack.c.l.b16 %v2494
    %v2866 = vunpack.c.h.b16 %v2494
    %v2867 = vunpack.c.l.b16 %v2495
    %v2868 = vunpack.c.h.b16 %v2495
    %v2869 = vunpack.c.l.b16 %v2496
    %v2870 = vunpack.c.h.b16 %v2496
    %v2871 = vunpack.c.l.b16 %v2497
    %v2872 = vunpack.c.h.b16 %v2497
    %v2873 = vunpack.c.l.b16 %v2498
    %v2874 = vunpack.c.h.b16 %v2498
    %v2875 = vunpack.c.l.b16 %v2499
    %v2876 = vunpack.c.h.b16 %v2499
    %v2877 = vunpack.c.l.b16 %v2500
    %v2878 = vunpack.c.h.b16 %v2500
    %v2879 = vunpack.c.l.b16 %v2501
    %v2880 = vunpack.c.h.b16 %v2501
    %v2881 = vunpack.c.l.b16 %v2502
    %v2882 = vunpack.c.h.b16 %v2502
    %v2883 = vunpack.c.l.b16 %v2503
    %v2884 = vunpack.c.h.b16 %v2503
    %v2885 = vunpack.c.l.b16 %v2504
    %v2886 = vunpack.c.h.b16 %v2504
    %v2887 = vunpack.c.l.b16 %v2505
    %v2888 = vunpack.c.h.b16 %v2505
    %v2889 = vunpack.c.l.b16 %v2506
    %v2890 = vunpack.c.h.b16 %v2506
    %v2891 = vpack.c.b16 %v2635, %v2635
    %v2892 = vpack.c.b16 %v2636, %v2636
    %v2893 = vpack.c.b16 %v2637, %v2637
    %v2894 = vpack.c.b16 %v2638, %v2638
    %v2895 = vpack.c.b16 %v2639, %v2639
    %v2896 = vpack.c.b16 %v2640, %v2640
    %v2897 = vpack.c.b16 %v2641, %v2641
    %v2898 = vpack.c.b16 %v2642, %v2642
    %v2899 = vpack.c.b16 %v2643, %v2643
    %v2900 = vpack.c.b16 %v2644, %v2644
    %v2901 = vpack.c.b16 %v2645, %v2645
    %v2902 = vpack.c.b16 %v2646, %v2646
    %v2903 = vpack.c.b16 %v2647, %v2647
    %v2904 = vpack.c.b16 %v2648, %v2648
    %v2905 = vpack.c.b16 %v2649, %v2649
    %v2906 = vpack.c.b16 %v2650, %v2650
    %v2907 = vpack.c.b16 %v2651, %v2651
    %v2908 = vpack.c.b16 %v2652, %v2652
    %v2909 = vpack.c.b16 %v2653, %v2653
    %v2910 = vpack.c.b16 %v2654, %v2654
    %v2911 = vpack.c.b16 %v2655, %v2655
    %v2912 = vpack.c.b16 %v2656, %v2656
    %v2913 = vpack.c.b16 %v2657, %v2657
    %v2914 = vpack.c.b16 %v2658, %v2658
    %v2915 = vpack.c.b16 %v2659, %v2659
    %v2916 = vpack.c.b16 %v2660, %v2660
    %v2917 = vpack.c.b16 %v2661, %v2661
    %v2918 = vpack.c.b16 %v2662, %v2662
    %v2919 = vpack.c.b16 %v2663, %v2663
    %v2920 = vpack.c.b16 %v2664, %v2664
    %v2921 = vpack.c.b16 %v2665, %v2665
    %v2922 = vpack.c.b16 %v2666, %v2666
    %v2923 = vpack.c.b16 %v2667, %v2667
    %v2924 = vpack.c.b16 %v2668, %v2668
    %v2925 = vpack.c.b16 %v2669, %v2669
    %v2926 = vpack.c.b16 %v2670, %v2670
    %v2927 = vpack.c.b16 %v2671, %v2671
    %v2928 = vpack.c.b16 %v2672, %v2672
    %v2929 = vpack.c.b16 %v2673, %v2673
    %v2930 = vpack.c.b16 %v2674, %v2674
    %v2931 = vpack.c.b16 %v2675, %v2675
    %v2932 = vpack.c.b16 %v2676, %v2676
    %v2933 = vpack.c.b16 %v2677, %v2677
    %v2934 = vpack.c.b16 %v2678, %v2678
    %v2935 = vpack.c.b16 %v2679, %v2679
    %v2936 = vpack.c.b16 %v2680, %v2680
    %v2937 = vpack.c.b16 %v2681, %v2681
    %v2938 = vpack.c.b16 %v2682, %v2682
    %v2939 = vpack.c.b16 %v2683, %v2683
    %v2940 = vpack.c.b16 %v2684, %v2684
    %v2941 = vpack.c.b16 %v2685, %v2685
    %v2942 = vpack.c.b16 %v2686, %v2686
    %v2943 = vpack.c.b16 %v2687, %v2687
    %v2944 = vpack.c.b16 %v2688, %v2688
    %v2945 = vpack.c.b16 %v2689, %v2689
    %v2946 = vpack.c.b16 %v2690, %v2690
    %v2947 = vpack.c.b16 %v2691, %v2691
    %v2948 = vpack.c.b16 %v2692, %v2692
    %v2949 = vpack.c.b16 %v2693, %v2693
    %v2950 = vpack.c.b16 %v2694, %v2694
    %v2951 = vpack.c.b16 %v2695, %v2695
    %v2952 = vpack.c.b16 %v2696, %v2696
    %v2953 = vpack.c.b16 %v2697, %v2697
    %v2954 = vpack.c.b16 %v2698, %v2698
    %v2955 = vpack.c.b16 %v2699, %v2699
    %v2956 = vpack.c.b16 %v2700, %v2700
    %v2957 = vpack.c.b16 %v2701, %v2701
    %v2958 = vpack.c.b16 %v2702, %v2702
    %v2959 = vpack.c.b16 %v2703, %v2703
    %v2960 = vpack.c.b16 %v2704, %v2704
    %v2961 = vpack.c.b16 %v2705, %v2705
    %v2962 = vpack.c.b16 %v2706, %v2706
    %v2963 = vpack.c.b16 %v2707, %v2707
    %v2964 = vpack.c.b16 %v2708, %v2708
    %v2965 = vpack.c.b16 %v2709, %v2709
    %v2966 = vpack.c.b16 %v2710, %v2710
    %v2967 = vpack.c.b16 %v2711, %v2711
    %v2968 = vpack.c.b16 %v2712, %v2712
    %v2969 = vpack.c.b16 %v2713, %v2713
    %v2970 = vpack.c.b16 %v2714, %v2714
    %v2971 = vpack.c.b16 %v2715, %v2715
    %v2972 = vpack.c.b16 %v2716, %v2716
    %v2973 = vpack.c.b16 %v2717, %v2717
    %v2974 = vpack.c.b16 %v2718, %v2718
    %v2975 = vpack.c.b16 %v2719, %v2719
    %v2976 = vpack.c.b16 %v2720, %v2720
    %v2977 = vpack.c.b16 %v2721, %v2721
    %v2978 = vpack.c.b16 %v2722, %v2722
    %v2979 = vpack.c.b16 %v2723, %v2723
    %v2980 = vpack.c.b16 %v2724, %v2724
    %v2981 = vpack.c.b16 %v2725, %v2725
    %v2982 = vpack.c.b16 %v2726, %v2726
    %v2983 = vpack.c.b16 %v2727, %v2727
    %v2984 = vpack.c.b16 %v2728, %v2728
    %v2985 = vpack.c.b16 %v2729, %v2729
    %v2986 = vpack.c.b16 %v2730, %v2730
    %v2987 = vpack.c.b16 %v2731, %v2731
    %v2988 = vpack.c.b16 %v2732, %v2732
    %v2989 = vpack.c.b16 %v2733, %v2733
    %v2990 = vpack.c.b16 %v2734, %v2734
    %v2991 = vpack.c.b16 %v2735, %v2735
    %v2992 = vpack.c.b16 %v2736, %v2736
    %v2993 = vpack.c.b16 %v2737, %v2737
    %v2994 = vpack.c.b16 %v2738, %v2738
    %v2995 = vpack.c.b16 %v2739, %v2739
    %v2996 = vpack.c.b16 %v2740, %v2740
    %v2997 = vpack.c.b16 %v2741, %v2741
    %v2998 = vpack.c.b16 %v2742, %v2742
    %v2999 = vpack.c.b16 %v2743, %v2743
    %v3000 = vpack.c.b16 %v2744, %v2744
    %v3001 = vpack.c.b16 %v2745, %v2745
    %v3002 = vpack.c.b16 %v2746, %v2746
    %v3003 = vpack.c.b16 %v2747, %v2747
    %v3004 = vpack.c.b16 %v2748, %v2748
    %v3005 = vpack.c.b16 %v2749, %v2749
    %v3006 = vpack.c.b16 %v2750, %v2750
    %v3007 = vpack.c.b16 %v2751, %v2751
    %v3008 = vpack.c.b16 %v2752, %v2752
    %v3009 = vpack.c.b16 %v2753, %v2753
    %v3010 = vpack.c.b16 %v2754, %v2754
    %v3011 = vpack.c.b16 %v2755, %v2755
    %v3012 = vpack.c.b16 %v2756, %v2756
    %v3013 = vpack.c.b16 %v2757, %v2757
    %v3014 = vpack.c.b16 %v2758, %v2758
    %v3015 = vpack.c.b16 %v2759, %v2759
    %v3016 = vpack.c.b16 %v2760, %v2760
    %v3017 = vpack.c.b16 %v2761, %v2761
    %v3018 = vpack.c.b16 %v2762, %v2762
    %v3019 = vpack.c.b16 %v2763, %v2763
    %v3020 = vpack.c.b16 %v2764, %v2764
    %v3021 = vpack.c.b16 %v2765, %v2765
    %v3022 = vpack.c.b16 %v2766, %v2766
    %v3023 = vpack.c.b16 %v2767, %v2767
    %v3024 = vpack.c.b16 %v2768, %v2768
    %v3025 = vpack.c.b16 %v2769, %v2769
    %v3026 = vpack.c.b16 %v2770, %v2770
    %v3027 = vpack.c.b16 %v2771, %v2771
    %v3028 = vpack.c.b16 %v2772, %v2772
    %v3029 = vpack.c.b16 %v2773, %v2773
    %v3030 = vpack.c.b16 %v2774, %v2774
    %v3031 = vpack.c.b16 %v2775, %v2775
    %v3032 = vpack.c.b16 %v2776, %v2776
    %v3033 = vpack.c.b16 %v2777, %v2777
    %v3034 = vpack.c.b16 %v2778, %v2778
    %v3035 = vpack.c.b16 %v2779, %v2779
    %v3036 = vpack.c.b16 %v2780, %v2780
    %v3037 = vpack.c.b16 %v2781, %v2781
    %v3038 = vpack.c.b16 %v2782, %v2782
    %v3039 = vpack.c.b16 %v2783, %v2783
    %v3040 = vpack.c.b16 %v2784, %v2784
    %v3041 = vpack.c.b16 %v2785, %v2785
    %v3042 = vpack.c.b16 %v2786, %v2786
    %v3043 = vpack.c.b16 %v2787, %v2787
    %v3044 = vpack.c.b16 %v2788, %v2788
    %v3045 = vpack.c.b16 %v2789, %v2789
    %v3046 = vpack.c.b16 %v2790, %v2790
    %v3047 = vpack.c.b16 %v2791, %v2791
    %v3048 = vpack.c.b16 %v2792, %v2792
    %v3049 = vpack.c.b16 %v2793, %v2793
    %v3050 = vpack.c.b16 %v2794, %v2794
    %v3051 = vpack.c.b16 %v2795, %v2795
    %v3052 = vpack.c.b16 %v2796, %v2796
    %v3053 = vpack.c.b16 %v2797, %v2797
    %v3054 = vpack.c.b16 %v2798, %v2798
    %v3055 = vpack.c.b16 %v2799, %v2799
    %v3056 = vpack.c.b16 %v2800, %v2800
    %v3057 = vpack.c.b16 %v2801, %v2801
    %v3058 = vpack.c.b16 %v2802, %v2802
    %v3059 = vpack.c.b16 %v2803, %v2803
    %v3060 = vpack.c.b16 %v2804, %v2804
    %v3061 = vpack.c.b16 %v2805, %v2805
    %v3062 = vpack.c.b16 %v2806, %v2806
    %v3063 = vpack.c.b16 %v2807, %v2807
    %v3064 = vpack.c.b16 %v2808, %v2808
    %v3065 = vpack.c.b16 %v2809, %v2809
    %v3066 = vpack.c.b16 %v2810, %v2810
    %v3067 = vpack.c.b16 %v2811, %v2811
    %v3068 = vpack.c.b16 %v2812, %v2812
    %v3069 = vpack.c.b16 %v2813, %v2813
    %v3070 = vpack.c.b16 %v2814, %v2814
    %v3071 = vpack.c.b16 %v2815, %v2815
    %v3072 = vpack.c.b16 %v2816, %v2816
    %v3073 = vpack.c.b16 %v2817, %v2817
    %v3074 = vpack.c.b16 %v2818, %v2818
    %v3075 = vpack.c.b16 %v2819, %v2819
    %v3076 = vpack.c.b16 %v2820, %v2820
    %v3077 = vpack.c.b16 %v2821, %v2821
    %v3078 = vpack.c.b16 %v2822, %v2822
    %v3079 = vpack.c.b16 %v2823, %v2823
    %v3080 = vpack.c.b16 %v2824, %v2824
    %v3081 = vpack.c.b16 %v2825, %v2825
    %v3082 = vpack.c.b16 %v2826, %v2826
    %v3083 = vpack.c.b16 %v2827, %v2827
    %v3084 = vpack.c.b16 %v2828, %v2828
    %v3085 = vpack.c.b16 %v2829, %v2829
    %v3086 = vpack.c.b16 %v2830, %v2830
    %v3087 = vpack.c.b16 %v2831, %v2831
    %v3088 = vpack.c.b16 %v2832, %v2832
    %v3089 = vpack.c.b16 %v2833, %v2833
    %v3090 = vpack.c.b16 %v2834, %v2834
    %v3091 = vpack.c.b16 %v2835, %v2835
    %v3092 = vpack.c.b16 %v2836, %v2836
    %v3093 = vpack.c.b16 %v2837, %v2837
    %v3094 = vpack.c.b16 %v2838, %v2838
    %v3095 = vpack.c.b16 %v2839, %v2839
    %v3096 = vpack.c.b16 %v2840, %v2840
    %v3097 = vpack.c.b16 %v2841, %v2841
    %v3098 = vpack.c.b16 %v2842, %v2842
    %v3099 = vpack.c.b16 %v2843, %v2843
    %v3100 = vpack.c.b16 %v2844, %v2844
    %v3101 = vpack.c.b16 %v2845, %v2845
    %v3102 = vpack.c.b16 %v2846, %v2846
    %v3103 = vpack.c.b16 %v2847, %v2847
    %v3104 = vpack.c.b16 %v2848, %v2848
    %v3105 = vpack.c.b16 %v2849, %v2849
    %v3106 = vpack.c.b16 %v2850, %v2850
    %v3107 = vpack.c.b16 %v2851, %v2851
    %v3108 = vpack.c.b16 %v2852, %v2852
    %v3109 = vpack.c.b16 %v2853, %v2853
    %v3110 = vpack.c.b16 %v2854, %v2854
    %v3111 = vpack.c.b16 %v2855, %v2855
    %v3112 = vpack.c.b16 %v2856, %v2856
    %v3113 = vpack.c.b16 %v2857, %v2857
    %v3114 = vpack.c.b16 %v2858, %v2858
    %v3115 = vpack.c.b16 %v2859, %v2859
    %v3116 = vpack.c.b16 %v2860, %v2860
    %v3117 = vpack.c.b16 %v2861, %v2861
    %v3118 = vpack.c.b16 %v2862, %v2862
    %v3119 = vpack.c.b16 %v2863, %v2863
    %v3120 = vpack.c.b16 %v2864, %v2864
    %v3121 = vpack.c.b16 %v2865, %v2865
    %v3122 = vpack.c.b16 %v2866, %v2866
    %v3123 = vpack.c.b16 %v2867, %v2867
    %v3124 = vpack.c.b16 %v2868, %v2868
    %v3125 = vpack.c.b16 %v2869, %v2869
    %v3126 = vpack.c.b16 %v2870, %v2870
    %v3127 = vpack.c.b16 %v2871, %v2871
    %v3128 = vpack.c.b16 %v2872, %v2872
    %v3129 = vpack.c.b16 %v2873, %v2873
    %v3130 = vpack.c.b16 %v2874, %v2874
    %v3131 = vpack.c.b16 %v2875, %v2875
    %v3132 = vpack.c.b16 %v2876, %v2876
    %v3133 = vpack.c.b16 %v2877, %v2877
    %v3134 = vpack.c.b16 %v2878, %v2878
    %v3135 = vpack.c.b16 %v2879, %v2879
    %v3136 = vpack.c.b16 %v2880, %v2880
    %v3137 = vpack.c.b16 %v2881, %v2881
    %v3138 = vpack.c.b16 %v2882, %v2882
    %v3139 = vpack.c.b16 %v2883, %v2883
    %v3140 = vpack.c.b16 %v2884, %v2884
    %v3141 = vpack.c.b16 %v2885, %v2885
    %v3142 = vpack.c.b16 %v2886, %v2886
    %v3143 = vpack.c.b16 %v2887, %v2887
    %v3144 = vpack.c.b16 %v2888, %v2888
    %v3145 = vpack.c.b16 %v2889, %v2889
    %v3146 = vpack.c.b16 %v2890, %v2890
    %3403 = vst [vmem:[#allocation2] sm:$0xf] %v2891
    %3404 = vst [vmem:[#allocation2 + $0x4] sm:$0xf] %v2892
    %3405 = vst [vmem:[#allocation2 + $0x8] sm:$0xf] %v2893
    %3406 = vst [vmem:[#allocation2 + $0xc] sm:$0xf] %v2894
    %3407 = vst [vmem:[#allocation2 + $0x10] sm:$0xf] %v2895
    %3408 = vst [vmem:[#allocation2 + $0x14] sm:$0xf] %v2896
    %3409 = vst [vmem:[#allocation2 + $0x18] sm:$0xf] %v2897
    %3410 = vst [vmem:[#allocation2 + $0x1c] sm:$0xf] %v2898
    %3411 = vst [vmem:[#allocation2 + $0x20] sm:$0xf] %v2899
    %3412 = vst [vmem:[#allocation2 + $0x24] sm:$0xf] %v2900
    %3413 = vst [vmem:[#allocation2 + $0x28] sm:$0xf] %v2901
    %3414 = vst [vmem:[#allocation2 + $0x2c] sm:$0xf] %v2902
    %3415 = vst [vmem:[#allocation2 + $0x30] sm:$0xf] %v2903
    %3416 = vst [vmem:[#allocation2 + $0x34] sm:$0xf] %v2904
    %3417 = vst [vmem:[#allocation2 + $0x38] sm:$0xf] %v2905
    %3418 = vst [vmem:[#allocation2 + $0x3c] sm:$0xf] %v2906
    %3419 = vst [vmem:[#allocation2 + $0x40] sm:$0xf] %v2907
    %3420 = vst [vmem:[#allocation2 + $0x44] sm:$0xf] %v2908
    %3421 = vst [vmem:[#allocation2 + $0x48] sm:$0xf] %v2909
    %3422 = vst [vmem:[#allocation2 + $0x4c] sm:$0xf] %v2910
    %3423 = vst [vmem:[#allocation2 + $0x50] sm:$0xf] %v2911
    %3424 = vst [vmem:[#allocation2 + $0x54] sm:$0xf] %v2912
    %3425 = vst [vmem:[#allocation2 + $0x58] sm:$0xf] %v2913
    %3426 = vst [vmem:[#allocation2 + $0x5c] sm:$0xf] %v2914
    %3427 = vst [vmem:[#allocation2 + $0x60] sm:$0xf] %v2915
    %3428 = vst [vmem:[#allocation2 + $0x64] sm:$0xf] %v2916
    %3429 = vst [vmem:[#allocation2 + $0x68] sm:$0xf] %v2917
    %3430 = vst [vmem:[#allocation2 + $0x6c] sm:$0xf] %v2918
    %3431 = vst [vmem:[#allocation2 + $0x70] sm:$0xf] %v2919
    %3432 = vst [vmem:[#allocation2 + $0x74] sm:$0xf] %v2920
    %3433 = vst [vmem:[#allocation2 + $0x78] sm:$0xf] %v2921
    %3434 = vst [vmem:[#allocation2 + $0x7c] sm:$0xf] %v2922
    %3435 = vst [vmem:[#allocation2 + $0x80] sm:$0xf] %v2923
    %3436 = vst [vmem:[#allocation2 + $0x84] sm:$0xf] %v2924
    %3437 = vst [vmem:[#allocation2 + $0x88] sm:$0xf] %v2925
    %3438 = vst [vmem:[#allocation2 + $0x8c] sm:$0xf] %v2926
    %3439 = vst [vmem:[#allocation2 + $0x90] sm:$0xf] %v2927
    %3440 = vst [vmem:[#allocation2 + $0x94] sm:$0xf] %v2928
    %3441 = vst [vmem:[#allocation2 + $0x98] sm:$0xf] %v2929
    %3442 = vst [vmem:[#allocation2 + $0x9c] sm:$0xf] %v2930
    %3443 = vst [vmem:[#allocation2 + $0xa0] sm:$0xf] %v2931
    %3444 = vst [vmem:[#allocation2 + $0xa4] sm:$0xf] %v2932
    %3445 = vst [vmem:[#allocation2 + $0xa8] sm:$0xf] %v2933
    %3446 = vst [vmem:[#allocation2 + $0xac] sm:$0xf] %v2934
    %3447 = vst [vmem:[#allocation2 + $0xb0] sm:$0xf] %v2935
    %3448 = vst [vmem:[#allocation2 + $0xb4] sm:$0xf] %v2936
    %3449 = vst [vmem:[#allocation2 + $0xb8] sm:$0xf] %v2937
    %3450 = vst [vmem:[#allocation2 + $0xbc] sm:$0xf] %v2938
    %3451 = vst [vmem:[#allocation2 + $0xc0] sm:$0xf] %v2939
    %3452 = vst [vmem:[#allocation2 + $0xc4] sm:$0xf] %v2940
    %3453 = vst [vmem:[#allocation2 + $0xc8] sm:$0xf] %v2941
    %3454 = vst [vmem:[#allocation2 + $0xcc] sm:$0xf] %v2942
    %3455 = vst [vmem:[#allocation2 + $0xd0] sm:$0xf] %v2943
    %3456 = vst [vmem:[#allocation2 + $0xd4] sm:$0xf] %v2944
    %3457 = vst [vmem:[#allocation2 + $0xd8] sm:$0xf] %v2945
    %3458 = vst [vmem:[#allocation2 + $0xdc] sm:$0xf] %v2946
    %3459 = vst [vmem:[#allocation2 + $0xe0] sm:$0xf] %v2947
    %3460 = vst [vmem:[#allocation2 + $0xe4] sm:$0xf] %v2948
    %3461 = vst [vmem:[#allocation2 + $0xe8] sm:$0xf] %v2949
    %3462 = vst [vmem:[#allocation2 + $0xec] sm:$0xf] %v2950
    %3463 = vst [vmem:[#allocation2 + $0xf0] sm:$0xf] %v2951
    %3464 = vst [vmem:[#allocation2 + $0xf4] sm:$0xf] %v2952
    %3465 = vst [vmem:[#allocation2 + $0xf8] sm:$0xf] %v2953
    %3466 = vst [vmem:[#allocation2 + $0xfc] sm:$0xf] %v2954
    %3467 = vst [vmem:[#allocation2 + $0x100] sm:$0xf] %v2955
    %3468 = vst [vmem:[#allocation2 + $0x104] sm:$0xf] %v2956
    %3469 = vst [vmem:[#allocation2 + $0x108] sm:$0xf] %v2957
    %3470 = vst [vmem:[#allocation2 + $0x10c] sm:$0xf] %v2958
    %3471 = vst [vmem:[#allocation2 + $0x110] sm:$0xf] %v2959
    %3472 = vst [vmem:[#allocation2 + $0x114] sm:$0xf] %v2960
    %3473 = vst [vmem:[#allocation2 + $0x118] sm:$0xf] %v2961
    %3474 = vst [vmem:[#allocation2 + $0x11c] sm:$0xf] %v2962
    %3475 = vst [vmem:[#allocation2 + $0x120] sm:$0xf] %v2963
    %3476 = vst [vmem:[#allocation2 + $0x124] sm:$0xf] %v2964
    %3477 = vst [vmem:[#allocation2 + $0x128] sm:$0xf] %v2965
    %3478 = vst [vmem:[#allocation2 + $0x12c] sm:$0xf] %v2966
    %3479 = vst [vmem:[#allocation2 + $0x130] sm:$0xf] %v2967
    %3480 = vst [vmem:[#allocation2 + $0x134] sm:$0xf] %v2968
    %3481 = vst [vmem:[#allocation2 + $0x138] sm:$0xf] %v2969
    %3482 = vst [vmem:[#allocation2 + $0x13c] sm:$0xf] %v2970
    %3483 = vst [vmem:[#allocation2 + $0x140] sm:$0xf] %v2971
    %3484 = vst [vmem:[#allocation2 + $0x144] sm:$0xf] %v2972
    %3485 = vst [vmem:[#allocation2 + $0x148] sm:$0xf] %v2973
    %3486 = vst [vmem:[#allocation2 + $0x14c] sm:$0xf] %v2974
    %3487 = vst [vmem:[#allocation2 + $0x150] sm:$0xf] %v2975
    %3488 = vst [vmem:[#allocation2 + $0x154] sm:$0xf] %v2976
    %3489 = vst [vmem:[#allocation2 + $0x158] sm:$0xf] %v2977
    %3490 = vst [vmem:[#allocation2 + $0x15c] sm:$0xf] %v2978
    %3491 = vst [vmem:[#allocation2 + $0x160] sm:$0xf] %v2979
    %3492 = vst [vmem:[#allocation2 + $0x164] sm:$0xf] %v2980
    %3493 = vst [vmem:[#allocation2 + $0x168] sm:$0xf] %v2981
    %3494 = vst [vmem:[#allocation2 + $0x16c] sm:$0xf] %v2982
    %3495 = vst [vmem:[#allocation2 + $0x170] sm:$0xf] %v2983
    %3496 = vst [vmem:[#allocation2 + $0x174] sm:$0xf] %v2984
    %3497 = vst [vmem:[#allocation2 + $0x178] sm:$0xf] %v2985
    %3498 = vst [vmem:[#allocation2 + $0x17c] sm:$0xf] %v2986
    %3499 = vst [vmem:[#allocation2 + $0x180] sm:$0xf] %v2987
    %3500 = vst [vmem:[#allocation2 + $0x184] sm:$0xf] %v2988
    %3501 = vst [vmem:[#allocation2 + $0x188] sm:$0xf] %v2989
    %3502 = vst [vmem:[#allocation2 + $0x18c] sm:$0xf] %v2990
    %3503 = vst [vmem:[#allocation2 + $0x190] sm:$0xf] %v2991
    %3504 = vst [vmem:[#allocation2 + $0x194] sm:$0xf] %v2992
    %3505 = vst [vmem:[#allocation2 + $0x198] sm:$0xf] %v2993
    %3506 = vst [vmem:[#allocation2 + $0x19c] sm:$0xf] %v2994
    %3507 = vst [vmem:[#allocation2 + $0x1a0] sm:$0xf] %v2995
    %3508 = vst [vmem:[#allocation2 + $0x1a4] sm:$0xf] %v2996
    %3509 = vst [vmem:[#allocation2 + $0x1a8] sm:$0xf] %v2997
    %3510 = vst [vmem:[#allocation2 + $0x1ac] sm:$0xf] %v2998
    %3511 = vst [vmem:[#allocation2 + $0x1b0] sm:$0xf] %v2999
    %3512 = vst [vmem:[#allocation2 + $0x1b4] sm:$0xf] %v3000
    %3513 = vst [vmem:[#allocation2 + $0x1b8] sm:$0xf] %v3001
    %3514 = vst [vmem:[#allocation2 + $0x1bc] sm:$0xf] %v3002
    %3515 = vst [vmem:[#allocation2 + $0x1c0] sm:$0xf] %v3003
    %3516 = vst [vmem:[#allocation2 + $0x1c4] sm:$0xf] %v3004
    %3517 = vst [vmem:[#allocation2 + $0x1c8] sm:$0xf] %v3005
    %3518 = vst [vmem:[#allocation2 + $0x1cc] sm:$0xf] %v3006
    %3519 = vst [vmem:[#allocation2 + $0x1d0] sm:$0xf] %v3007
    %3520 = vst [vmem:[#allocation2 + $0x1d4] sm:$0xf] %v3008
    %3521 = vst [vmem:[#allocation2 + $0x1d8] sm:$0xf] %v3009
    %3522 = vst [vmem:[#allocation2 + $0x1dc] sm:$0xf] %v3010
    %3523 = vst [vmem:[#allocation2 + $0x1e0] sm:$0xf] %v3011
    %3524 = vst [vmem:[#allocation2 + $0x1e4] sm:$0xf] %v3012
    %3525 = vst [vmem:[#allocation2 + $0x1e8] sm:$0xf] %v3013
    %3526 = vst [vmem:[#allocation2 + $0x1ec] sm:$0xf] %v3014
    %3527 = vst [vmem:[#allocation2 + $0x1f0] sm:$0xf] %v3015
    %3528 = vst [vmem:[#allocation2 + $0x1f4] sm:$0xf] %v3016
    %3529 = vst [vmem:[#allocation2 + $0x1f8] sm:$0xf] %v3017
    %3530 = vst [vmem:[#allocation2 + $0x1fc] sm:$0xf] %v3018
    %3531 = vst [vmem:[#allocation2 + $0x200] sm:$0xf] %v3019
    %3532 = vst [vmem:[#allocation2 + $0x204] sm:$0xf] %v3020
    %3533 = vst [vmem:[#allocation2 + $0x208] sm:$0xf] %v3021
    %3534 = vst [vmem:[#allocation2 + $0x20c] sm:$0xf] %v3022
    %3535 = vst [vmem:[#allocation2 + $0x210] sm:$0xf] %v3023
    %3536 = vst [vmem:[#allocation2 + $0x214] sm:$0xf] %v3024
    %3537 = vst [vmem:[#allocation2 + $0x218] sm:$0xf] %v3025
    %3538 = vst [vmem:[#allocation2 + $0x21c] sm:$0xf] %v3026
    %3539 = vst [vmem:[#allocation2 + $0x220] sm:$0xf] %v3027
    %3540 = vst [vmem:[#allocation2 + $0x224] sm:$0xf] %v3028
    %3541 = vst [vmem:[#allocation2 + $0x228] sm:$0xf] %v3029
    %3542 = vst [vmem:[#allocation2 + $0x22c] sm:$0xf] %v3030
    %3543 = vst [vmem:[#allocation2 + $0x230] sm:$0xf] %v3031
    %3544 = vst [vmem:[#allocation2 + $0x234] sm:$0xf] %v3032
    %3545 = vst [vmem:[#allocation2 + $0x238] sm:$0xf] %v3033
    %3546 = vst [vmem:[#allocation2 + $0x23c] sm:$0xf] %v3034
    %3547 = vst [vmem:[#allocation2 + $0x240] sm:$0xf] %v3035
    %3548 = vst [vmem:[#allocation2 + $0x244] sm:$0xf] %v3036
    %3549 = vst [vmem:[#allocation2 + $0x248] sm:$0xf] %v3037
    %3550 = vst [vmem:[#allocation2 + $0x24c] sm:$0xf] %v3038
    %3551 = vst [vmem:[#allocation2 + $0x250] sm:$0xf] %v3039
    %3552 = vst [vmem:[#allocation2 + $0x254] sm:$0xf] %v3040
    %3553 = vst [vmem:[#allocation2 + $0x258] sm:$0xf] %v3041
    %3554 = vst [vmem:[#allocation2 + $0x25c] sm:$0xf] %v3042
    %3555 = vst [vmem:[#allocation2 + $0x260] sm:$0xf] %v3043
    %3556 = vst [vmem:[#allocation2 + $0x264] sm:$0xf] %v3044
    %3557 = vst [vmem:[#allocation2 + $0x268] sm:$0xf] %v3045
    %3558 = vst [vmem:[#allocation2 + $0x26c] sm:$0xf] %v3046
    %3559 = vst [vmem:[#allocation2 + $0x270] sm:$0xf] %v3047
    %3560 = vst [vmem:[#allocation2 + $0x274] sm:$0xf] %v3048
    %3561 = vst [vmem:[#allocation2 + $0x278] sm:$0xf] %v3049
    %3562 = vst [vmem:[#allocation2 + $0x27c] sm:$0xf] %v3050
    %3563 = vst [vmem:[#allocation2 + $0x280] sm:$0xf] %v3051
    %3564 = vst [vmem:[#allocation2 + $0x284] sm:$0xf] %v3052
    %3565 = vst [vmem:[#allocation2 + $0x288] sm:$0xf] %v3053
    %3566 = vst [vmem:[#allocation2 + $0x28c] sm:$0xf] %v3054
    %3567 = vst [vmem:[#allocation2 + $0x290] sm:$0xf] %v3055
    %3568 = vst [vmem:[#allocation2 + $0x294] sm:$0xf] %v3056
    %3569 = vst [vmem:[#allocation2 + $0x298] sm:$0xf] %v3057
    %3570 = vst [vmem:[#allocation2 + $0x29c] sm:$0xf] %v3058
    %3571 = vst [vmem:[#allocation2 + $0x2a0] sm:$0xf] %v3059
    %3572 = vst [vmem:[#allocation2 + $0x2a4] sm:$0xf] %v3060
    %3573 = vst [vmem:[#allocation2 + $0x2a8] sm:$0xf] %v3061
    %3574 = vst [vmem:[#allocation2 + $0x2ac] sm:$0xf] %v3062
    %3575 = vst [vmem:[#allocation2 + $0x2b0] sm:$0xf] %v3063
    %3576 = vst [vmem:[#allocation2 + $0x2b4] sm:$0xf] %v3064
    %3577 = vst [vmem:[#allocation2 + $0x2b8] sm:$0xf] %v3065
    %3578 = vst [vmem:[#allocation2 + $0x2bc] sm:$0xf] %v3066
    %3579 = vst [vmem:[#allocation2 + $0x2c0] sm:$0xf] %v3067
    %3580 = vst [vmem:[#allocation2 + $0x2c4] sm:$0xf] %v3068
    %3581 = vst [vmem:[#allocation2 + $0x2c8] sm:$0xf] %v3069
    %3582 = vst [vmem:[#allocation2 + $0x2cc] sm:$0xf] %v3070
    %3583 = vst [vmem:[#allocation2 + $0x2d0] sm:$0xf] %v3071
    %3584 = vst [vmem:[#allocation2 + $0x2d4] sm:$0xf] %v3072
    %3585 = vst [vmem:[#allocation2 + $0x2d8] sm:$0xf] %v3073
    %3586 = vst [vmem:[#allocation2 + $0x2dc] sm:$0xf] %v3074
    %3587 = vst [vmem:[#allocation2 + $0x2e0] sm:$0xf] %v3075
    %3588 = vst [vmem:[#allocation2 + $0x2e4] sm:$0xf] %v3076
    %3589 = vst [vmem:[#allocation2 + $0x2e8] sm:$0xf] %v3077
    %3590 = vst [vmem:[#allocation2 + $0x2ec] sm:$0xf] %v3078
    %3591 = vst [vmem:[#allocation2 + $0x2f0] sm:$0xf] %v3079
    %3592 = vst [vmem:[#allocation2 + $0x2f4] sm:$0xf] %v3080
    %3593 = vst [vmem:[#allocation2 + $0x2f8] sm:$0xf] %v3081
    %3594 = vst [vmem:[#allocation2 + $0x2fc] sm:$0xf] %v3082
    %3595 = vst [vmem:[#allocation2 + $0x300] sm:$0xf] %v3083
    %3596 = vst [vmem:[#allocation2 + $0x304] sm:$0xf] %v3084
    %3597 = vst [vmem:[#allocation2 + $0x308] sm:$0xf] %v3085
    %3598 = vst [vmem:[#allocation2 + $0x30c] sm:$0xf] %v3086
    %3599 = vst [vmem:[#allocation2 + $0x310] sm:$0xf] %v3087
    %3600 = vst [vmem:[#allocation2 + $0x314] sm:$0xf] %v3088
    %3601 = vst [vmem:[#allocation2 + $0x318] sm:$0xf] %v3089
    %3602 = vst [vmem:[#allocation2 + $0x31c] sm:$0xf] %v3090
    %3603 = vst [vmem:[#allocation2 + $0x320] sm:$0xf] %v3091
    %3604 = vst [vmem:[#allocation2 + $0x324] sm:$0xf] %v3092
    %3605 = vst [vmem:[#allocation2 + $0x328] sm:$0xf] %v3093
    %3606 = vst [vmem:[#allocation2 + $0x32c] sm:$0xf] %v3094
    %3607 = vst [vmem:[#allocation2 + $0x330] sm:$0xf] %v3095
    %3608 = vst [vmem:[#allocation2 + $0x334] sm:$0xf] %v3096
    %3609 = vst [vmem:[#allocation2 + $0x338] sm:$0xf] %v3097
    %3610 = vst [vmem:[#allocation2 + $0x33c] sm:$0xf] %v3098
    %3611 = vst [vmem:[#allocation2 + $0x340] sm:$0xf] %v3099
    %3612 = vst [vmem:[#allocation2 + $0x344] sm:$0xf] %v3100
    %3613 = vst [vmem:[#allocation2 + $0x348] sm:$0xf] %v3101
    %3614 = vst [vmem:[#allocation2 + $0x34c] sm:$0xf] %v3102
    %3615 = vst [vmem:[#allocation2 + $0x350] sm:$0xf] %v3103
    %3616 = vst [vmem:[#allocation2 + $0x354] sm:$0xf] %v3104
    %3617 = vst [vmem:[#allocation2 + $0x358] sm:$0xf] %v3105
    %3618 = vst [vmem:[#allocation2 + $0x35c] sm:$0xf] %v3106
    %3619 = vst [vmem:[#allocation2 + $0x360] sm:$0xf] %v3107
    %3620 = vst [vmem:[#allocation2 + $0x364] sm:$0xf] %v3108
    %3621 = vst [vmem:[#allocation2 + $0x368] sm:$0xf] %v3109
    %3622 = vst [vmem:[#allocation2 + $0x36c] sm:$0xf] %v3110
    %3623 = vst [vmem:[#allocation2 + $0x370] sm:$0xf] %v3111
    %3624 = vst [vmem:[#allocation2 + $0x374] sm:$0xf] %v3112
    %3625 = vst [vmem:[#allocation2 + $0x378] sm:$0xf] %v3113
    %3626 = vst [vmem:[#allocation2 + $0x37c] sm:$0xf] %v3114
    %3627 = vst [vmem:[#allocation2 + $0x380] sm:$0xf] %v3115
    %3628 = vst [vmem:[#allocation2 + $0x384] sm:$0xf] %v3116
    %3629 = vst [vmem:[#allocation2 + $0x388] sm:$0xf] %v3117
    %3630 = vst [vmem:[#allocation2 + $0x38c] sm:$0xf] %v3118
    %3631 = vst [vmem:[#allocation2 + $0x390] sm:$0xf] %v3119
    %3632 = vst [vmem:[#allocation2 + $0x394] sm:$0xf] %v3120
    %3633 = vst [vmem:[#allocation2 + $0x398] sm:$0xf] %v3121
    %3634 = vst [vmem:[#allocation2 + $0x39c] sm:$0xf] %v3122
    %3635 = vst [vmem:[#allocation2 + $0x3a0] sm:$0xf] %v3123
    %3636 = vst [vmem:[#allocation2 + $0x3a4] sm:$0xf] %v3124
    %3637 = vst [vmem:[#allocation2 + $0x3a8] sm:$0xf] %v3125
    %3638 = vst [vmem:[#allocation2 + $0x3ac] sm:$0xf] %v3126
    %3639 = vst [vmem:[#allocation2 + $0x3b0] sm:$0xf] %v3127
    %3640 = vst [vmem:[#allocation2 + $0x3b4] sm:$0xf] %v3128
    %3641 = vst [vmem:[#allocation2 + $0x3b8] sm:$0xf] %v3129
    %3642 = vst [vmem:[#allocation2 + $0x3bc] sm:$0xf] %v3130
    %3643 = vst [vmem:[#allocation2 + $0x3c0] sm:$0xf] %v3131
    %3644 = vst [vmem:[#allocation2 + $0x3c4] sm:$0xf] %v3132
    %3645 = vst [vmem:[#allocation2 + $0x3c8] sm:$0xf] %v3133
    %3646 = vst [vmem:[#allocation2 + $0x3cc] sm:$0xf] %v3134
    %3647 = vst [vmem:[#allocation2 + $0x3d0] sm:$0xf] %v3135
    %3648 = vst [vmem:[#allocation2 + $0x3d4] sm:$0xf] %v3136
    %3649 = vst [vmem:[#allocation2 + $0x3d8] sm:$0xf] %v3137
    %3650 = vst [vmem:[#allocation2 + $0x3dc] sm:$0xf] %v3138
    %3651 = vst [vmem:[#allocation2 + $0x3e0] sm:$0xf] %v3139
    %3652 = vst [vmem:[#allocation2 + $0x3e4] sm:$0xf] %v3140
    %3653 = vst [vmem:[#allocation2 + $0x3e8] sm:$0xf] %v3141
    %3654 = vst [vmem:[#allocation2 + $0x3ec] sm:$0xf] %v3142
    %3655 = vst [vmem:[#allocation2 + $0x3f0] sm:$0xf] %v3143
    %3656 = vst [vmem:[#allocation2 + $0x3f4] sm:$0xf] %v3144
    %3657 = vst [vmem:[#allocation2 + $0x3f8] sm:$0xf] %v3145
    %3658 = vst [vmem:[#allocation2 + $0x3fc] sm:$0xf] %v3146
    %v3659 = vld [vmem:[%s2] sm:$0xf]
    %v3660 = vld [vmem:[%s2 + $0x4] sm:$0xf]
    %v3661 = vld [vmem:[%s2 + $0x8] sm:$0xf]
    %v3662 = vld [vmem:[%s2 + $0xc] sm:$0xf]
    %v3663 = vld [vmem:[#allocation2] sm:$0xf]
    %v3664 = vld [vmem:[#allocation2 + $0x4] sm:$0xf]
    %v3665 = vld [vmem:[#allocation2 + $0x8] sm:$0xf]
    %v3666 = vld [vmem:[#allocation2 + $0xc] sm:$0xf]
    %v3667 = vld [vmem:[#allocation2 + $0x10] sm:$0xf]
    %v3668 = vld [vmem:[#allocation2 + $0x14] sm:$0xf]
    %v3669 = vld [vmem:[#allocation2 + $0x18] sm:$0xf]
    %v3670 = vld [vmem:[#allocation2 + $0x1c] sm:$0xf]
    %v3671 = vld [vmem:[#allocation2 + $0x20] sm:$0xf]
    %v3672 = vld [vmem:[#allocation2 + $0x24] sm:$0xf]
    %v3673 = vld [vmem:[#allocation2 + $0x28] sm:$0xf]
    %v3674 = vld [vmem:[#allocation2 + $0x2c] sm:$0xf]
    %v3675 = vld [vmem:[#allocation2 + $0x30] sm:$0xf]
    %v3676 = vld [vmem:[#allocation2 + $0x34] sm:$0xf]
    %v3677 = vld [vmem:[#allocation2 + $0x38] sm:$0xf]
    %v3678 = vld [vmem:[#allocation2 + $0x3c] sm:$0xf]
    %v3679 = vld [vmem:[#allocation2 + $0x40] sm:$0xf]
    %v3680 = vld [vmem:[#allocation2 + $0x44] sm:$0xf]
    %v3681 = vld [vmem:[#allocation2 + $0x48] sm:$0xf]
    %v3682 = vld [vmem:[#allocation2 + $0x4c] sm:$0xf]
    %v3683 = vld [vmem:[#allocation2 + $0x50] sm:$0xf]
    %v3684 = vld [vmem:[#allocation2 + $0x54] sm:$0xf]
    %v3685 = vld [vmem:[#allocation2 + $0x58] sm:$0xf]
    %v3686 = vld [vmem:[#allocation2 + $0x5c] sm:$0xf]
    %v3687 = vld [vmem:[#allocation2 + $0x60] sm:$0xf]
    %v3688 = vld [vmem:[#allocation2 + $0x64] sm:$0xf]
    %v3689 = vld [vmem:[#allocation2 + $0x68] sm:$0xf]
    %v3690 = vld [vmem:[#allocation2 + $0x6c] sm:$0xf]
    %v3691 = vld [vmem:[#allocation2 + $0x70] sm:$0xf]
    %v3692 = vld [vmem:[#allocation2 + $0x74] sm:$0xf]
    %v3693 = vld [vmem:[#allocation2 + $0x78] sm:$0xf]
    %v3694 = vld [vmem:[#allocation2 + $0x7c] sm:$0xf]
    %v3695 = vunpack.c.l.bf16 %v3663
    %v3696 = vunpack.c.l.bf16 %v3664
    %v3697 = vunpack.c.l.bf16 %v3665
    %v3698 = vunpack.c.l.bf16 %v3666
    %v3699 = vunpack.c.l.bf16 %v3667
    %v3700 = vunpack.c.l.bf16 %v3668
    %v3701 = vunpack.c.l.bf16 %v3669
    %v3702 = vunpack.c.l.bf16 %v3670
    %v3703 = vunpack.c.l.bf16 %v3671
    %v3704 = vunpack.c.l.bf16 %v3672
    %v3705 = vunpack.c.l.bf16 %v3673
    %v3706 = vunpack.c.l.bf16 %v3674
    %v3707 = vunpack.c.l.bf16 %v3675
    %v3708 = vunpack.c.l.bf16 %v3676
    %v3709 = vunpack.c.l.bf16 %v3677
    %v3710 = vunpack.c.l.bf16 %v3678
    %v3711 = vunpack.c.l.bf16 %v3679
    %v3712 = vunpack.c.l.bf16 %v3680
    %v3713 = vunpack.c.l.bf16 %v3681
    %v3714 = vunpack.c.l.bf16 %v3682
    %v3715 = vunpack.c.l.bf16 %v3683
    %v3716 = vunpack.c.l.bf16 %v3684
    %v3717 = vunpack.c.l.bf16 %v3685
    %v3718 = vunpack.c.l.bf16 %v3686
    %v3719 = vunpack.c.l.bf16 %v3687
    %v3720 = vunpack.c.l.bf16 %v3688
    %v3721 = vunpack.c.l.bf16 %v3689
    %v3722 = vunpack.c.l.bf16 %v3690
    %v3723 = vunpack.c.l.bf16 %v3691
    %v3724 = vunpack.c.l.bf16 %v3692
    %v3725 = vunpack.c.l.bf16 %v3693
    %v3726 = vunpack.c.l.bf16 %v3694
    %v3731 = vunpack.c.l.b16 %v3659
    %v3732 = vunpack.c.l.b16 %v3660
    %v3733 = vunpack.c.l.b16 %v3661
    %v3734 = vunpack.c.l.b16 %v3662
    %v3735 = vpack.c.b16 %v3732, %v3731
    %v3736 = vpack.c.b16 %v3734, %v3733
    %vm3739 = vcmask 261120
    %v3741 = vsel %vm3739, 0, 0
    %3743 = vmatprep.subr.bf16.mxu0 0
    %3744 = vmatpush1.bf16.msra.mxu0 0
    %3745 = vmatprep.subr.bf16.mxu0 0
    %3746 = vmatpush1.bf16.msra.mxu0 0
    %3747 = vmatprep.subr.bf16.mxu0 0
    %3748 = vmatpush1.bf16.msra.mxu0 0
    %3749 = vmatprep.subr.bf16.mxu0 0
    %3750 = vmatpush1.bf16.msra.mxu0 0
    %3751 = vmatprep.subr.bf16.mxu0 0
    %3752 = vmatpush1.bf16.msra.mxu0 0
    %3753 = vmatprep.subr.bf16.mxu0 0
    %3754 = vmatpush1.bf16.msra.mxu0 0
    %3755 = vmatprep.subr.bf16.mxu0 0
    %3756 = vmatpush1.bf16.msra.mxu0 %v3736
    %3757 = vmatprep.subr.bf16.mxu0 0
    %3758 = vmatpush1.bf16.msra.mxu0 %v3735
    %3759 = vmatprep.subr.bf16.mxu0 0
    %3760 = vmatpush2.bf16.msra.mxu0 0
    %3761 = vmatprep.subr.bf16.mxu0 0
    %3762 = vmatpush2.bf16.msra.mxu0 0
    %3763 = vmatprep.subr.bf16.mxu0 0
    %3764 = vmatpush2.bf16.msra.mxu0 0
    %3765 = vmatprep.subr.bf16.mxu0 0
    %3766 = vmatpush2.bf16.msra.mxu0 0
    %3767 = vmatprep.subr.bf16.mxu0 0
    %3768 = vmatpush2.bf16.msra.mxu0 0
    %3769 = vmatprep.subr.bf16.mxu0 0
    %3770 = vmatpush2.bf16.msra.mxu0 0
    %3771 = vmatprep.subr.bf16.mxu0 0
    %3772 = vmatpush2.bf16.msra.mxu0 0
    %3773 = vmatprep.subr.bf16.mxu0 0
    %3774 = vmatpush2.bf16.msra.mxu0 0
    %3775 = vmatprep.mubr.bf16.mxu0 0
    %3776 = vmatmul.mubr.bf16.gmra.mxu0 %v3741
    %v3777 = vpop.f32.mrf.mxu0
    %v3778 = vadd.f32 0.0, %v3777
    %v3779 = vpop.f32.mrf.mxu0
    %v3780 = vpop.f32.mrf.mxu0
    %v3781 = vadd.f32 0.0, %v3780
    %v3782 = vpop.f32.mrf.mxu0
    %3783 = vmatprep.mubr.bf16.mxu0 0
    %3784 = vmatmul.mubr.bf16.gmra.mxu0 %v3741
    %v3785 = vpop.f32.mrf.mxu0
    %v3786 = vadd.f32 0.0, %v3785
    %v3787 = vpop.f32.mrf.mxu0
    %v3788 = vpop.f32.mrf.mxu0
    %v3789 = vadd.f32 0.0, %v3788
    %v3790 = vpop.f32.mrf.mxu0
    %3791 = vmatprep.mubr.bf16.mxu0 0
    %3792 = vmatmul.mubr.bf16.gmra.mxu0 %v3741
    %v3793 = vpop.f32.mrf.mxu0
    %v3794 = vadd.f32 0.0, %v3793
    %v3795 = vpop.f32.mrf.mxu0
    %v3796 = vpop.f32.mrf.mxu0
    %v3797 = vadd.f32 0.0, %v3796
    %v3798 = vpop.f32.mrf.mxu0
    %3799 = vmatprep.mubr.bf16.mxu0 0
    %3800 = vmatmul.mubr.bf16.gmra.mxu0 %v3741
    %v3801 = vpop.f32.mrf.mxu0
    %v3802 = vadd.f32 0.0, %v3801
    %v3803 = vpop.f32.mrf.mxu0
    %v3804 = vpop.f32.mrf.mxu0
    %v3805 = vadd.f32 0.0, %v3804
    %v3806 = vpop.f32.mrf.mxu0
    %3807 = vmatprep.mubr.bf16.mxu0 0
    %3808 = vmatmul.mubr.bf16.gmra.mxu0 %v3741
    %v3809 = vpop.f32.mrf.mxu0
    %v3810 = vadd.f32 0.0, %v3809
    %v3811 = vpop.f32.mrf.mxu0
    %v3812 = vpop.f32.mrf.mxu0
    %v3813 = vadd.f32 0.0, %v3812
    %v3814 = vpop.f32.mrf.mxu0
    %3815 = vmatprep.mubr.bf16.mxu0 0
    %3816 = vmatmul.mubr.bf16.gmra.mxu0 %v3741
    %v3817 = vpop.f32.mrf.mxu0
    %v3818 = vadd.f32 0.0, %v3817
    %v3819 = vpop.f32.mrf.mxu0
    %v3820 = vpop.f32.mrf.mxu0
    %v3821 = vadd.f32 0.0, %v3820
    %v3822 = vpop.f32.mrf.mxu0
    %3823 = vmatprep.mubr.bf16.mxu0 0
    %3824 = vmatmul.mubr.bf16.gmra.mxu0 %v3741
    %v3825 = vpop.f32.mrf.mxu0
    %v3826 = vadd.f32 0.0, %v3825
    %v3827 = vpop.f32.mrf.mxu0
    %v3828 = vpop.f32.mrf.mxu0
    %v3829 = vadd.f32 0.0, %v3828
    %v3830 = vpop.f32.mrf.mxu0
    %3831 = vmatprep.mubr.bf16.mxu0 0
    %3832 = vmatmul.mubr.bf16.gmra.mxu0 %v3741
    %v3833 = vpop.f32.mrf.mxu0
    %v3834 = vadd.f32 0.0, %v3833
    %v3835 = vpop.f32.mrf.mxu0
    %v3836 = vpop.f32.mrf.mxu0
    %v3837 = vadd.f32 0.0, %v3836
    %v3838 = vpop.f32.mrf.mxu0
    %3839 = vmatprep.mubr.bf16.mxu0 0
    %3840 = vmatmul.mubr.bf16.gmra.mxu0 %v3741
    %v3841 = vpop.f32.mrf.mxu0
    %v3842 = vadd.f32 0.0, %v3841
    %v3843 = vpop.f32.mrf.mxu0
    %v3844 = vpop.f32.mrf.mxu0
    %v3845 = vadd.f32 0.0, %v3844
    %v3846 = vpop.f32.mrf.mxu0
    %3847 = vmatprep.mubr.bf16.mxu0 0
    %3848 = vmatmul.mubr.bf16.gmra.mxu0 %v3741
    %v3849 = vpop.f32.mrf.mxu0
    %v3850 = vadd.f32 0.0, %v3849
    %v3851 = vpop.f32.mrf.mxu0
    %v3852 = vpop.f32.mrf.mxu0
    %v3853 = vadd.f32 0.0, %v3852
    %v3854 = vpop.f32.mrf.mxu0
    %3855 = vmatprep.mubr.bf16.mxu0 0
    %3856 = vmatmul.mubr.bf16.gmra.mxu0 %v3741
    %v3857 = vpop.f32.mrf.mxu0
    %v3858 = vadd.f32 0.0, %v3857
    %v3859 = vpop.f32.mrf.mxu0
    %v3860 = vpop.f32.mrf.mxu0
    %v3861 = vadd.f32 0.0, %v3860
    %v3862 = vpop.f32.mrf.mxu0
    %3863 = vmatprep.mubr.bf16.mxu0 0
    %3864 = vmatmul.mubr.bf16.gmra.mxu0 %v3741
    %v3865 = vpop.f32.mrf.mxu0
    %v3866 = vadd.f32 0.0, %v3865
    %v3867 = vpop.f32.mrf.mxu0
    %v3868 = vpop.f32.mrf.mxu0
    %v3869 = vadd.f32 0.0, %v3868
    %v3870 = vpop.f32.mrf.mxu0
    %3871 = vmatprep.mubr.bf16.mxu0 0
    %3872 = vmatmul.mubr.bf16.gmra.mxu0 %v3741
    %v3873 = vpop.f32.mrf.mxu0
    %v3874 = vadd.f32 0.0, %v3873
    %v3875 = vpop.f32.mrf.mxu0
    %v3876 = vpop.f32.mrf.mxu0
    %v3877 = vadd.f32 0.0, %v3876
    %v3878 = vpop.f32.mrf.mxu0
    %3879 = vmatprep.mubr.bf16.mxu0 0
    %3880 = vmatmul.mubr.bf16.gmra.mxu0 %v3741
    %v3881 = vpop.f32.mrf.mxu0
    %v3882 = vadd.f32 0.0, %v3881
    %v3883 = vpop.f32.mrf.mxu0
    %v3884 = vpop.f32.mrf.mxu0
    %v3885 = vadd.f32 0.0, %v3884
    %v3886 = vpop.f32.mrf.mxu0
    %3887 = vmatprep.mubr.bf16.mxu0 0
    %3888 = vmatmul.mubr.bf16.gmra.mxu0 %v3741
    %v3889 = vpop.f32.mrf.mxu0
    %v3890 = vadd.f32 0.0, %v3889
    %v3891 = vpop.f32.mrf.mxu0
    %v3892 = vpop.f32.mrf.mxu0
    %v3893 = vadd.f32 0.0, %v3892
    %v3894 = vpop.f32.mrf.mxu0
    %3895 = vmatprep.mubr.bf16.mxu0 0
    %3896 = vmatmul.mubr.bf16.gmra.mxu0 %v3741
    %v3897 = vpop.f32.mrf.mxu0
    %v3898 = vadd.f32 0.0, %v3897
    %v3899 = vpop.f32.mrf.mxu0
    %v3900 = vpop.f32.mrf.mxu0
    %v3901 = vadd.f32 0.0, %v3900
    %v3902 = vpop.f32.mrf.mxu0
    %3903 = vdwg.mxu0
    %v3904 = vadd.f32 %v3695, %v3778
    %v3905 = vadd.f32 %v3696, %v3781
    %v3906 = vadd.f32 %v3697, %v3786
    %v3907 = vadd.f32 %v3698, %v3789
    %v3908 = vadd.f32 %v3699, %v3794
    %v3909 = vadd.f32 %v3700, %v3797
    %v3910 = vadd.f32 %v3701, %v3802
    %v3911 = vadd.f32 %v3702, %v3805
    %v3912 = vadd.f32 %v3703, %v3810
    %v3913 = vadd.f32 %v3704, %v3813
    %v3914 = vadd.f32 %v3705, %v3818
    %v3915 = vadd.f32 %v3706, %v3821
    %v3916 = vadd.f32 %v3707, %v3826
    %v3917 = vadd.f32 %v3708, %v3829
    %v3918 = vadd.f32 %v3709, %v3834
    %v3919 = vadd.f32 %v3710, %v3837
    %v3920 = vadd.f32 %v3711, %v3842
    %v3921 = vadd.f32 %v3712, %v3845
    %v3922 = vadd.f32 %v3713, %v3850
    %v3923 = vadd.f32 %v3714, %v3853
    %v3924 = vadd.f32 %v3715, %v3858
    %v3925 = vadd.f32 %v3716, %v3861
    %v3926 = vadd.f32 %v3717, %v3866
    %v3927 = vadd.f32 %v3718, %v3869
    %v3928 = vadd.f32 %v3719, %v3874
    %v3929 = vadd.f32 %v3720, %v3877
    %v3930 = vadd.f32 %v3721, %v3882
    %v3931 = vadd.f32 %v3722, %v3885
    %v3932 = vadd.f32 %v3723, %v3890
    %v3933 = vadd.f32 %v3724, %v3893
    %v3934 = vadd.f32 %v3725, %v3898
    %v3935 = vadd.f32 %v3726, %v3901
    %v3936 = vpack.c.bf16 %v3905, %v3904
    %v3937 = vpack.c.bf16 %v3907, %v3906
    %v3938 = vpack.c.bf16 %v3909, %v3908
    %v3939 = vpack.c.bf16 %v3911, %v3910
    %v3940 = vpack.c.bf16 %v3913, %v3912
    %v3941 = vpack.c.bf16 %v3915, %v3914
    %v3942 = vpack.c.bf16 %v3917, %v3916
    %v3943 = vpack.c.bf16 %v3919, %v3918
    %v3944 = vpack.c.bf16 %v3921, %v3920
    %v3945 = vpack.c.bf16 %v3923, %v3922
    %v3946 = vpack.c.bf16 %v3925, %v3924
    %v3947 = vpack.c.bf16 %v3927, %v3926
    %v3948 = vpack.c.bf16 %v3929, %v3928
    %v3949 = vpack.c.bf16 %v3931, %v3930
    %v3950 = vpack.c.bf16 %v3933, %v3932
    %v3951 = vpack.c.bf16 %v3935, %v3934
    %v3952 = vxor.u32 %v3936, 2147516416
    %v3953 = vxor.u32 %v3937, 2147516416
    %v3954 = vxor.u32 %v3938, 2147516416
    %v3955 = vxor.u32 %v3939, 2147516416
    %v3956 = vxor.u32 %v3940, 2147516416
    %v3957 = vxor.u32 %v3941, 2147516416
    %v3958 = vxor.u32 %v3942, 2147516416
    %v3959 = vxor.u32 %v3943, 2147516416
    %v3960 = vxor.u32 %v3944, 2147516416
    %v3961 = vxor.u32 %v3945, 2147516416
    %v3962 = vxor.u32 %v3946, 2147516416
    %v3963 = vxor.u32 %v3947, 2147516416
    %v3964 = vxor.u32 %v3948, 2147516416
    %v3965 = vxor.u32 %v3949, 2147516416
    %v3966 = vxor.u32 %v3950, 2147516416
    %v3967 = vxor.u32 %v3951, 2147516416
    %v3969 = vmul.bf16 %v3952, 1069105081
    %v3970 = vpow.bf16.pop %v3969
    %v3972 = vmul.bf16 %v3953, 1069105081
    %v3973 = vpow.bf16.pop %v3972
    %v3975 = vmul.bf16 %v3954, 1069105081
    %v3976 = vpow.bf16.pop %v3975
    %v3978 = vmul.bf16 %v3955, 1069105081
    %v3979 = vpow.bf16.pop %v3978
    %v3981 = vmul.bf16 %v3956, 1069105081
    %v3982 = vpow.bf16.pop %v3981
    %v3984 = vmul.bf16 %v3957, 1069105081
    %v3985 = vpow.bf16.pop %v3984
    %v3987 = vmul.bf16 %v3958, 1069105081
    %v3988 = vpow.bf16.pop %v3987
    %v3990 = vmul.bf16 %v3959, 1069105081
    %v3991 = vpow.bf16.pop %v3990
    %v3993 = vmul.bf16 %v3960, 1069105081
    %v3994 = vpow.bf16.pop %v3993
    %v3996 = vmul.bf16 %v3961, 1069105081
    %v3997 = vpow.bf16.pop %v3996
    %v3999 = vmul.bf16 %v3962, 1069105081
    %v4000 = vpow.bf16.pop %v3999
    %v4002 = vmul.bf16 %v3963, 1069105081
    %v4003 = vpow.bf16.pop %v4002
    %v4005 = vmul.bf16 %v3964, 1069105081
    %v4006 = vpow.bf16.pop %v4005
    %v4008 = vmul.bf16 %v3965, 1069105081
    %v4009 = vpow.bf16.pop %v4008
    %v4011 = vmul.bf16 %v3966, 1069105081
    %v4012 = vpow.bf16.pop %v4011
    %v4014 = vmul.bf16 %v3967, 1069105081
    %v4015 = vpow.bf16.pop %v4014
    %v4016 = vadd.bf16 %v3970, 1065369472
    %v4017 = vadd.bf16 %v3973, 1065369472
    %v4018 = vadd.bf16 %v3976, 1065369472
    %v4019 = vadd.bf16 %v3979, 1065369472
    %v4020 = vadd.bf16 %v3982, 1065369472
    %v4021 = vadd.bf16 %v3985, 1065369472
    %v4022 = vadd.bf16 %v3988, 1065369472
    %v4023 = vadd.bf16 %v3991, 1065369472
    %v4024 = vadd.bf16 %v3994, 1065369472
    %v4025 = vadd.bf16 %v3997, 1065369472
    %v4026 = vadd.bf16 %v4000, 1065369472
    %v4027 = vadd.bf16 %v4003, 1065369472
    %v4028 = vadd.bf16 %v4006, 1065369472
    %v4029 = vadd.bf16 %v4009, 1065369472
    %v4030 = vadd.bf16 %v4012, 1065369472
    %v4031 = vadd.bf16 %v4015, 1065369472
    %v4032 = vrcp.bf16.pop %v4016
    %v4033 = vmul.bf16 1065369472, %v4032
    %v4034 = vrcp.bf16.pop %v4017
    %v4035 = vmul.bf16 1065369472, %v4034
    %v4036 = vrcp.bf16.pop %v4018
    %v4037 = vmul.bf16 1065369472, %v4036
    %v4038 = vrcp.bf16.pop %v4019
    %v4039 = vmul.bf16 1065369472, %v4038
    %v4040 = vrcp.bf16.pop %v4020
    %v4041 = vmul.bf16 1065369472, %v4040
    %v4042 = vrcp.bf16.pop %v4021
    %v4043 = vmul.bf16 1065369472, %v4042
    %v4044 = vrcp.bf16.pop %v4022
    %v4045 = vmul.bf16 1065369472, %v4044
    %v4046 = vrcp.bf16.pop %v4023
    %v4047 = vmul.bf16 1065369472, %v4046
    %v4048 = vrcp.bf16.pop %v4024
    %v4049 = vmul.bf16 1065369472, %v4048
    %v4050 = vrcp.bf16.pop %v4025
    %v4051 = vmul.bf16 1065369472, %v4050
    %v4052 = vrcp.bf16.pop %v4026
    %v4053 = vmul.bf16 1065369472, %v4052
    %v4054 = vrcp.bf16.pop %v4027
    %v4055 = vmul.bf16 1065369472, %v4054
    %v4056 = vrcp.bf16.pop %v4028
    %v4057 = vmul.bf16 1065369472, %v4056
    %v4058 = vrcp.bf16.pop %v4029
    %v4059 = vmul.bf16 1065369472, %v4058
    %v4060 = vrcp.bf16.pop %v4030
    %v4061 = vmul.bf16 1065369472, %v4060
    %v4062 = vrcp.bf16.pop %v4031
    %v4063 = vmul.bf16 1065369472, %v4062
    %v4064 = vtanh.bf16.pop %v3936
    %v4065 = vtanh.bf16.pop %v3937
    %v4066 = vtanh.bf16.pop %v3938
    %v4067 = vtanh.bf16.pop %v3939
    %v4068 = vtanh.bf16.pop %v3940
    %v4069 = vtanh.bf16.pop %v3941
    %v4070 = vtanh.bf16.pop %v3942
    %v4071 = vtanh.bf16.pop %v3943
    %v4072 = vtanh.bf16.pop %v3944
    %v4073 = vtanh.bf16.pop %v3945
    %v4074 = vtanh.bf16.pop %v3946
    %v4075 = vtanh.bf16.pop %v3947
    %v4076 = vtanh.bf16.pop %v3948
    %v4077 = vtanh.bf16.pop %v3949
    %v4078 = vtanh.bf16.pop %v3950
    %v4079 = vtanh.bf16.pop %v3951
    %v4080 = vunpack.c.l.bf16 %v4033
    %v4081 = vunpack.c.h.bf16 %v4033
    %v4082 = vunpack.c.l.bf16 %v4035
    %v4083 = vunpack.c.h.bf16 %v4035
    %v4084 = vunpack.c.l.bf16 %v4037
    %v4085 = vunpack.c.h.bf16 %v4037
    %v4086 = vunpack.c.l.bf16 %v4039
    %v4087 = vunpack.c.h.bf16 %v4039
    %v4088 = vunpack.c.l.bf16 %v4041
    %v4089 = vunpack.c.h.bf16 %v4041
    %v4090 = vunpack.c.l.bf16 %v4043
    %v4091 = vunpack.c.h.bf16 %v4043
    %v4092 = vunpack.c.l.bf16 %v4045
    %v4093 = vunpack.c.h.bf16 %v4045
    %v4094 = vunpack.c.l.bf16 %v4047
    %v4095 = vunpack.c.h.bf16 %v4047
    %v4096 = vunpack.c.l.bf16 %v4049
    %v4097 = vunpack.c.h.bf16 %v4049
    %v4098 = vunpack.c.l.bf16 %v4051
    %v4099 = vunpack.c.h.bf16 %v4051
    %v4100 = vunpack.c.l.bf16 %v4053
    %v4101 = vunpack.c.h.bf16 %v4053
    %v4102 = vunpack.c.l.bf16 %v4055
    %v4103 = vunpack.c.h.bf16 %v4055
    %v4104 = vunpack.c.l.bf16 %v4057
    %v4105 = vunpack.c.h.bf16 %v4057
    %v4106 = vunpack.c.l.bf16 %v4059
    %v4107 = vunpack.c.h.bf16 %v4059
    %v4108 = vunpack.c.l.bf16 %v4061
    %v4109 = vunpack.c.h.bf16 %v4061
    %v4110 = vunpack.c.l.bf16 %v4063
    %v4111 = vunpack.c.h.bf16 %v4063
    %v4112 = vmul.f32 %v4080, 0.0
    %v4113 = vmul.f32 %v4081, 0.0
    %v4114 = vmul.f32 %v4082, 0.0
    %v4115 = vmul.f32 %v4083, 0.0
    %v4116 = vmul.f32 %v4084, 0.0
    %v4117 = vmul.f32 %v4085, 0.0
    %v4118 = vmul.f32 %v4086, 0.0
    %v4119 = vmul.f32 %v4087, 0.0
    %v4120 = vmul.f32 %v4088, 0.0
    %v4121 = vmul.f32 %v4089, 0.0
    %v4122 = vmul.f32 %v4090, 0.0
    %v4123 = vmul.f32 %v4091, 0.0
    %v4124 = vmul.f32 %v4092, 0.0
    %v4125 = vmul.f32 %v4093, 0.0
    %v4126 = vmul.f32 %v4094, 0.0
    %v4127 = vmul.f32 %v4095, 0.0
    %v4128 = vmul.f32 %v4096, 0.0
    %v4129 = vmul.f32 %v4097, 0.0
    %v4130 = vmul.f32 %v4098, 0.0
    %v4131 = vmul.f32 %v4099, 0.0
    %v4132 = vmul.f32 %v4100, 0.0
    %v4133 = vmul.f32 %v4101, 0.0
    %v4134 = vmul.f32 %v4102, 0.0
    %v4135 = vmul.f32 %v4103, 0.0
    %v4136 = vmul.f32 %v4104, 0.0
    %v4137 = vmul.f32 %v4105, 0.0
    %v4138 = vmul.f32 %v4106, 0.0
    %v4139 = vmul.f32 %v4107, 0.0
    %v4140 = vmul.f32 %v4108, 0.0
    %v4141 = vmul.f32 %v4109, 0.0
    %v4142 = vmul.f32 %v4110, 0.0
    %v4143 = vmul.f32 %v4111, 0.0
    %4160 = vrot.lane.b32.xlu0 %v4064, 64
    %v4161 = vpop.permute.xlu0 %4160
    %4162 = vrot.lane.b32.xlu0 %v4065, 64
    %v4163 = vpop.permute.xlu0 %4162
    %4164 = vrot.lane.b32.xlu0 %v4066, 64
    %v4165 = vpop.permute.xlu0 %4164
    %4166 = vrot.lane.b32.xlu0 %v4067, 64
    %v4167 = vpop.permute.xlu0 %4166
    %4168 = vrot.lane.b32.xlu0 %v4068, 64
    %v4169 = vpop.permute.xlu0 %4168
    %4170 = vrot.lane.b32.xlu0 %v4069, 64
    %v4171 = vpop.permute.xlu0 %4170
    %4172 = vrot.lane.b32.xlu0 %v4070, 64
    %v4173 = vpop.permute.xlu0 %4172
    %4174 = vrot.lane.b32.xlu0 %v4071, 64
    %v4175 = vpop.permute.xlu0 %4174
    %4176 = vrot.lane.b32.xlu0 %v4072, 64
    %v4177 = vpop.permute.xlu0 %4176
    %4178 = vrot.lane.b32.xlu0 %v4073, 64
    %v4179 = vpop.permute.xlu0 %4178
    %4180 = vrot.lane.b32.xlu0 %v4074, 64
    %v4181 = vpop.permute.xlu0 %4180
    %4182 = vrot.lane.b32.xlu0 %v4075, 64
    %v4183 = vpop.permute.xlu0 %4182
    %4184 = vrot.lane.b32.xlu0 %v4076, 64
    %v4185 = vpop.permute.xlu0 %4184
    %4186 = vrot.lane.b32.xlu0 %v4077, 64
    %v4187 = vpop.permute.xlu0 %4186
    %4188 = vrot.lane.b32.xlu0 %v4078, 64
    %v4189 = vpop.permute.xlu0 %4188
    %4190 = vrot.lane.b32.xlu0 %v4079, 64
    %v4191 = vpop.permute.xlu0 %4190
    %v4208 = vmul.bf16 %v4033, %v4161
    %v4209 = vmul.bf16 %v4035, %v4163
    %v4210 = vmul.bf16 %v4037, %v4165
    %v4211 = vmul.bf16 %v4039, %v4167
    %v4212 = vmul.bf16 %v4041, %v4169
    %v4213 = vmul.bf16 %v4043, %v4171
    %v4214 = vmul.bf16 %v4045, %v4173
    %v4215 = vmul.bf16 %v4047, %v4175
    %v4216 = vmul.bf16 %v4049, %v4177
    %v4217 = vmul.bf16 %v4051, %v4179
    %v4218 = vmul.bf16 %v4053, %v4181
    %v4219 = vmul.bf16 %v4055, %v4183
    %v4220 = vmul.bf16 %v4057, %v4185
    %v4221 = vmul.bf16 %v4059, %v4187
    %v4222 = vmul.bf16 %v4061, %v4189
    %v4223 = vmul.bf16 %v4063, %v4191
    %v4224 = vunpack.c.l.bf16 %v4208
    %v4225 = vunpack.c.h.bf16 %v4208
    %v4226 = vunpack.c.l.bf16 %v4209
    %v4227 = vunpack.c.h.bf16 %v4209
    %v4228 = vunpack.c.l.bf16 %v4210
    %v4229 = vunpack.c.h.bf16 %v4210
    %v4230 = vunpack.c.l.bf16 %v4211
    %v4231 = vunpack.c.h.bf16 %v4211
    %v4232 = vunpack.c.l.bf16 %v4212
    %v4233 = vunpack.c.h.bf16 %v4212
    %v4234 = vunpack.c.l.bf16 %v4213
    %v4235 = vunpack.c.h.bf16 %v4213
    %v4236 = vunpack.c.l.bf16 %v4214
    %v4237 = vunpack.c.h.bf16 %v4214
    %v4238 = vunpack.c.l.bf16 %v4215
    %v4239 = vunpack.c.h.bf16 %v4215
    %v4240 = vunpack.c.l.bf16 %v4216
    %v4241 = vunpack.c.h.bf16 %v4216
    %v4242 = vunpack.c.l.bf16 %v4217
    %v4243 = vunpack.c.h.bf16 %v4217
    %v4244 = vunpack.c.l.bf16 %v4218
    %v4245 = vunpack.c.h.bf16 %v4218
    %v4246 = vunpack.c.l.bf16 %v4219
    %v4247 = vunpack.c.h.bf16 %v4219
    %v4248 = vunpack.c.l.bf16 %v4220
    %v4249 = vunpack.c.h.bf16 %v4220
    %v4250 = vunpack.c.l.bf16 %v4221
    %v4251 = vunpack.c.h.bf16 %v4221
    %v4252 = vunpack.c.l.bf16 %v4222
    %v4253 = vunpack.c.h.bf16 %v4222
    %v4254 = vunpack.c.l.bf16 %v4223
    %v4255 = vunpack.c.h.bf16 %v4223
    %4288 = vrot.lane.b32.xlu0 %v4224, 32
    %v4289 = vpop.permute.xlu0 %4288
    %4290 = vrot.lane.b32.xlu0 %v4225, 32
    %v4291 = vpop.permute.xlu0 %4290
    %4292 = vrot.lane.b32.xlu0 %v4226, 32
    %v4293 = vpop.permute.xlu0 %4292
    %4294 = vrot.lane.b32.xlu0 %v4227, 32
    %v4295 = vpop.permute.xlu0 %4294
    %4296 = vrot.lane.b32.xlu0 %v4228, 32
    %v4297 = vpop.permute.xlu0 %4296
    %4298 = vrot.lane.b32.xlu0 %v4229, 32
    %v4299 = vpop.permute.xlu0 %4298
    %4300 = vrot.lane.b32.xlu0 %v4230, 32
    %v4301 = vpop.permute.xlu0 %4300
    %4302 = vrot.lane.b32.xlu0 %v4231, 32
    %v4303 = vpop.permute.xlu0 %4302
    %4304 = vrot.lane.b32.xlu0 %v4232, 32
    %v4305 = vpop.permute.xlu0 %4304
    %4306 = vrot.lane.b32.xlu0 %v4233, 32
    %v4307 = vpop.permute.xlu0 %4306
    %4308 = vrot.lane.b32.xlu0 %v4234, 32
    %v4309 = vpop.permute.xlu0 %4308
    %4310 = vrot.lane.b32.xlu0 %v4235, 32
    %v4311 = vpop.permute.xlu0 %4310
    %4312 = vrot.lane.b32.xlu0 %v4236, 32
    %v4313 = vpop.permute.xlu0 %4312
    %4314 = vrot.lane.b32.xlu0 %v4237, 32
    %v4315 = vpop.permute.xlu0 %4314
    %4316 = vrot.lane.b32.xlu0 %v4238, 32
    %v4317 = vpop.permute.xlu0 %4316
    %4318 = vrot.lane.b32.xlu0 %v4239, 32
    %v4319 = vpop.permute.xlu0 %4318
    %4320 = vrot.lane.b32.xlu0 %v4240, 32
    %v4321 = vpop.permute.xlu0 %4320
    %4322 = vrot.lane.b32.xlu0 %v4241, 32
    %v4323 = vpop.permute.xlu0 %4322
    %4324 = vrot.lane.b32.xlu0 %v4242, 32
    %v4325 = vpop.permute.xlu0 %4324
    %4326 = vrot.lane.b32.xlu0 %v4243, 32
    %v4327 = vpop.permute.xlu0 %4326
    %4328 = vrot.lane.b32.xlu0 %v4244, 32
    %v4329 = vpop.permute.xlu0 %4328
    %4330 = vrot.lane.b32.xlu0 %v4245, 32
    %v4331 = vpop.permute.xlu0 %4330
    %4332 = vrot.lane.b32.xlu0 %v4246, 32
    %v4333 = vpop.permute.xlu0 %4332
    %4334 = vrot.lane.b32.xlu0 %v4247, 32
    %v4335 = vpop.permute.xlu0 %4334
    %4336 = vrot.lane.b32.xlu0 %v4248, 32
    %v4337 = vpop.permute.xlu0 %4336
    %4338 = vrot.lane.b32.xlu0 %v4249, 32
    %v4339 = vpop.permute.xlu0 %4338
    %4340 = vrot.lane.b32.xlu0 %v4250, 32
    %v4341 = vpop.permute.xlu0 %4340
    %4342 = vrot.lane.b32.xlu0 %v4251, 32
    %v4343 = vpop.permute.xlu0 %4342
    %4344 = vrot.lane.b32.xlu0 %v4252, 32
    %v4345 = vpop.permute.xlu0 %4344
    %4346 = vrot.lane.b32.xlu0 %v4253, 32
    %v4347 = vpop.permute.xlu0 %4346
    %4348 = vrot.lane.b32.xlu0 %v4254, 32
    %v4349 = vpop.permute.xlu0 %4348
    %4350 = vrot.lane.b32.xlu0 %v4255, 32
    %v4351 = vpop.permute.xlu0 %4350
    %v4384 = vadd.f32 %v4112, %v4289
    %v4385 = vadd.f32 %v4113, %v4291
    %v4386 = vadd.f32 %v4114, %v4293
    %v4387 = vadd.f32 %v4115, %v4295
    %v4388 = vadd.f32 %v4116, %v4297
    %v4389 = vadd.f32 %v4117, %v4299
    %v4390 = vadd.f32 %v4118, %v4301
    %v4391 = vadd.f32 %v4119, %v4303
    %v4392 = vadd.f32 %v4120, %v4305
    %v4393 = vadd.f32 %v4121, %v4307
    %v4394 = vadd.f32 %v4122, %v4309
    %v4395 = vadd.f32 %v4123, %v4311
    %v4396 = vadd.f32 %v4124, %v4313
    %v4397 = vadd.f32 %v4125, %v4315
    %v4398 = vadd.f32 %v4126, %v4317
    %v4399 = vadd.f32 %v4127, %v4319
    %v4400 = vadd.f32 %v4128, %v4321
    %v4401 = vadd.f32 %v4129, %v4323
    %v4402 = vadd.f32 %v4130, %v4325
    %v4403 = vadd.f32 %v4131, %v4327
    %v4404 = vadd.f32 %v4132, %v4329
    %v4405 = vadd.f32 %v4133, %v4331
    %v4406 = vadd.f32 %v4134, %v4333
    %v4407 = vadd.f32 %v4135, %v4335
    %v4408 = vadd.f32 %v4136, %v4337
    %v4409 = vadd.f32 %v4137, %v4339
    %v4410 = vadd.f32 %v4138, %v4341
    %v4411 = vadd.f32 %v4139, %v4343
    %v4412 = vadd.f32 %v4140, %v4345
    %v4413 = vadd.f32 %v4141, %v4347
    %v4414 = vadd.f32 %v4142, %v4349
    %v4415 = vadd.f32 %v4143, %v4351
    %v4416 = vpack.c.bf16 %v4385, %v4384
    %v4417 = vpack.c.bf16 %v4387, %v4386
    %v4418 = vpack.c.bf16 %v4389, %v4388
    %v4419 = vpack.c.bf16 %v4391, %v4390
    %v4420 = vpack.c.bf16 %v4393, %v4392
    %v4421 = vpack.c.bf16 %v4395, %v4394
    %v4422 = vpack.c.bf16 %v4397, %v4396
    %v4423 = vpack.c.bf16 %v4399, %v4398
    %v4424 = vpack.c.bf16 %v4401, %v4400
    %v4425 = vpack.c.bf16 %v4403, %v4402
    %v4426 = vpack.c.bf16 %v4405, %v4404
    %v4427 = vpack.c.bf16 %v4407, %v4406
    %v4428 = vpack.c.bf16 %v4409, %v4408
    %v4429 = vpack.c.bf16 %v4411, %v4410
    %v4430 = vpack.c.bf16 %v4413, %v4412
    %v4431 = vpack.c.bf16 %v4415, %v4414
    %v4432 = vtanh.bf16.pop %v4416
    %v4433 = vtanh.bf16.pop %v4417
    %v4434 = vtanh.bf16.pop %v4418
    %v4435 = vtanh.bf16.pop %v4419
    %v4436 = vtanh.bf16.pop %v4420
    %v4437 = vtanh.bf16.pop %v4421
    %v4438 = vtanh.bf16.pop %v4422
    %v4439 = vtanh.bf16.pop %v4423
    %v4440 = vtanh.bf16.pop %v4424
    %v4441 = vtanh.bf16.pop %v4425
    %v4442 = vtanh.bf16.pop %v4426
    %v4443 = vtanh.bf16.pop %v4427
    %v4444 = vtanh.bf16.pop %v4428
    %v4445 = vtanh.bf16.pop %v4429
    %v4446 = vtanh.bf16.pop %v4430
    %v4447 = vtanh.bf16.pop %v4431
    %4464 = vrot.lane.b32.xlu0 %v4432, 64
    %v4465 = vpop.permute.xlu0 %4464
    %4466 = vrot.lane.b32.xlu0 %v4433, 64
    %v4467 = vpop.permute.xlu0 %4466
    %4468 = vrot.lane.b32.xlu0 %v4434, 64
    %v4469 = vpop.permute.xlu0 %4468
    %4470 = vrot.lane.b32.xlu0 %v4435, 64
    %v4471 = vpop.permute.xlu0 %4470
    %4472 = vrot.lane.b32.xlu0 %v4436, 64
    %v4473 = vpop.permute.xlu0 %4472
    %4474 = vrot.lane.b32.xlu0 %v4437, 64
    %v4475 = vpop.permute.xlu0 %4474
    %4476 = vrot.lane.b32.xlu0 %v4438, 64
    %v4477 = vpop.permute.xlu0 %4476
    %4478 = vrot.lane.b32.xlu0 %v4439, 64
    %v4479 = vpop.permute.xlu0 %4478
    %4480 = vrot.lane.b32.xlu0 %v4440, 64
    %v4481 = vpop.permute.xlu0 %4480
    %4482 = vrot.lane.b32.xlu0 %v4441, 64
    %v4483 = vpop.permute.xlu0 %4482
    %4484 = vrot.lane.b32.xlu0 %v4442, 64
    %v4485 = vpop.permute.xlu0 %4484
    %4486 = vrot.lane.b32.xlu0 %v4443, 64
    %v4487 = vpop.permute.xlu0 %4486
    %4488 = vrot.lane.b32.xlu0 %v4444, 64
    %v4489 = vpop.permute.xlu0 %4488
    %4490 = vrot.lane.b32.xlu0 %v4445, 64
    %v4491 = vpop.permute.xlu0 %4490
    %4492 = vrot.lane.b32.xlu0 %v4446, 64
    %v4493 = vpop.permute.xlu0 %4492
    %4494 = vrot.lane.b32.xlu0 %v4447, 64
    %v4495 = vpop.permute.xlu0 %4494
    %v4512 = vmul.bf16 %v4033, %v4465
    %v4513 = vmul.bf16 %v4035, %v4467
    %v4514 = vmul.bf16 %v4037, %v4469
    %v4515 = vmul.bf16 %v4039, %v4471
    %v4516 = vmul.bf16 %v4041, %v4473
    %v4517 = vmul.bf16 %v4043, %v4475
    %v4518 = vmul.bf16 %v4045, %v4477
    %v4519 = vmul.bf16 %v4047, %v4479
    %v4520 = vmul.bf16 %v4049, %v4481
    %v4521 = vmul.bf16 %v4051, %v4483
    %v4522 = vmul.bf16 %v4053, %v4485
    %v4523 = vmul.bf16 %v4055, %v4487
    %v4524 = vmul.bf16 %v4057, %v4489
    %v4525 = vmul.bf16 %v4059, %v4491
    %v4526 = vmul.bf16 %v4061, %v4493
    %v4527 = vmul.bf16 %v4063, %v4495
    %s4528 = scalar_lea.vmem [#allocation2], 128
    %v4529 = vld [vmem:[%s4528] sm:$0xf]
    %v4530 = vld [vmem:[%s4528 + $0x4] sm:$0xf]
    %v4531 = vld [vmem:[%s4528 + $0x8] sm:$0xf]
    %v4532 = vld [vmem:[%s4528 + $0xc] sm:$0xf]
    %v4533 = vld [vmem:[%s4528 + $0x10] sm:$0xf]
    %v4534 = vld [vmem:[%s4528 + $0x14] sm:$0xf]
    %v4535 = vld [vmem:[%s4528 + $0x18] sm:$0xf]
    %v4536 = vld [vmem:[%s4528 + $0x1c] sm:$0xf]
    %v4537 = vld [vmem:[%s4528 + $0x20] sm:$0xf]
    %v4538 = vld [vmem:[%s4528 + $0x24] sm:$0xf]
    %v4539 = vld [vmem:[%s4528 + $0x28] sm:$0xf]
    %v4540 = vld [vmem:[%s4528 + $0x2c] sm:$0xf]
    %v4541 = vld [vmem:[%s4528 + $0x30] sm:$0xf]
    %v4542 = vld [vmem:[%s4528 + $0x34] sm:$0xf]
    %v4543 = vld [vmem:[%s4528 + $0x38] sm:$0xf]
    %v4544 = vld [vmem:[%s4528 + $0x3c] sm:$0xf]
    %v4545 = vld [vmem:[%s4528 + $0x40] sm:$0xf]
    %v4546 = vld [vmem:[%s4528 + $0x44] sm:$0xf]
    %v4547 = vld [vmem:[%s4528 + $0x48] sm:$0xf]
    %v4548 = vld [vmem:[%s4528 + $0x4c] sm:$0xf]
    %v4549 = vld [vmem:[%s4528 + $0x50] sm:$0xf]
    %v4550 = vld [vmem:[%s4528 + $0x54] sm:$0xf]
    %v4551 = vld [vmem:[%s4528 + $0x58] sm:$0xf]
    %v4552 = vld [vmem:[%s4528 + $0x5c] sm:$0xf]
    %v4553 = vld [vmem:[%s4528 + $0x60] sm:$0xf]
    %v4554 = vld [vmem:[%s4528 + $0x64] sm:$0xf]
    %v4555 = vld [vmem:[%s4528 + $0x68] sm:$0xf]
    %v4556 = vld [vmem:[%s4528 + $0x6c] sm:$0xf]
    %v4557 = vld [vmem:[%s4528 + $0x70] sm:$0xf]
    %v4558 = vld [vmem:[%s4528 + $0x74] sm:$0xf]
    %v4559 = vld [vmem:[%s4528 + $0x78] sm:$0xf]
    %v4560 = vld [vmem:[%s4528 + $0x7c] sm:$0xf]
    %v4561 = vunpack.c.l.bf16 %v4529
    %v4562 = vunpack.c.l.bf16 %v4530
    %v4563 = vunpack.c.l.bf16 %v4531
    %v4564 = vunpack.c.l.bf16 %v4532
    %v4565 = vunpack.c.l.bf16 %v4533
    %v4566 = vunpack.c.l.bf16 %v4534
    %v4567 = vunpack.c.l.bf16 %v4535
    %v4568 = vunpack.c.l.bf16 %v4536
    %v4569 = vunpack.c.l.bf16 %v4537
    %v4570 = vunpack.c.l.bf16 %v4538
    %v4571 = vunpack.c.l.bf16 %v4539
    %v4572 = vunpack.c.l.bf16 %v4540
    %v4573 = vunpack.c.l.bf16 %v4541
    %v4574 = vunpack.c.l.bf16 %v4542
    %v4575 = vunpack.c.l.bf16 %v4543
    %v4576 = vunpack.c.l.bf16 %v4544
    %v4577 = vunpack.c.l.bf16 %v4545
    %v4578 = vunpack.c.l.bf16 %v4546
    %v4579 = vunpack.c.l.bf16 %v4547
    %v4580 = vunpack.c.l.bf16 %v4548
    %v4581 = vunpack.c.l.bf16 %v4549
    %v4582 = vunpack.c.l.bf16 %v4550
    %v4583 = vunpack.c.l.bf16 %v4551
    %v4584 = vunpack.c.l.bf16 %v4552
    %v4585 = vunpack.c.l.bf16 %v4553
    %v4586 = vunpack.c.l.bf16 %v4554
    %v4587 = vunpack.c.l.bf16 %v4555
    %v4588 = vunpack.c.l.bf16 %v4556
    %v4589 = vunpack.c.l.bf16 %v4557
    %v4590 = vunpack.c.l.bf16 %v4558
    %v4591 = vunpack.c.l.bf16 %v4559
    %v4592 = vunpack.c.l.bf16 %v4560
    %4609 = vrot.lane.b32.xlu0 %v4512, 32
    %v4610 = vpop.permute.xlu0 %4609
    %4611 = vrot.lane.b32.xlu0 %v4513, 32
    %v4612 = vpop.permute.xlu0 %4611
    %4613 = vrot.lane.b32.xlu0 %v4514, 32
    %v4614 = vpop.permute.xlu0 %4613
    %4615 = vrot.lane.b32.xlu0 %v4515, 32
    %v4616 = vpop.permute.xlu0 %4615
    %4617 = vrot.lane.b32.xlu0 %v4516, 32
    %v4618 = vpop.permute.xlu0 %4617
    %4619 = vrot.lane.b32.xlu0 %v4517, 32
    %v4620 = vpop.permute.xlu0 %4619
    %4621 = vrot.lane.b32.xlu0 %v4518, 32
    %v4622 = vpop.permute.xlu0 %4621
    %4623 = vrot.lane.b32.xlu0 %v4519, 32
    %v4624 = vpop.permute.xlu0 %4623
    %4625 = vrot.lane.b32.xlu0 %v4520, 32
    %v4626 = vpop.permute.xlu0 %4625
    %4627 = vrot.lane.b32.xlu0 %v4521, 32
    %v4628 = vpop.permute.xlu0 %4627
    %4629 = vrot.lane.b32.xlu0 %v4522, 32
    %v4630 = vpop.permute.xlu0 %4629
    %4631 = vrot.lane.b32.xlu0 %v4523, 32
    %v4632 = vpop.permute.xlu0 %4631
    %4633 = vrot.lane.b32.xlu0 %v4524, 32
    %v4634 = vpop.permute.xlu0 %4633
    %4635 = vrot.lane.b32.xlu0 %v4525, 32
    %v4636 = vpop.permute.xlu0 %4635
    %4637 = vrot.lane.b32.xlu0 %v4526, 32
    %v4638 = vpop.permute.xlu0 %4637
    %4639 = vrot.lane.b32.xlu0 %v4527, 32
    %v4640 = vpop.permute.xlu0 %4639
    %v4642 = vsel %vm3739, %v4610, 0
    %v4645 = vsel %vm3739, %v4612, 0
    %v4648 = vsel %vm3739, %v4614, 0
    %v4651 = vsel %vm3739, %v4616, 0
    %v4654 = vsel %vm3739, %v4618, 0
    %v4657 = vsel %vm3739, %v4620, 0
    %v4660 = vsel %vm3739, %v4622, 0
    %v4663 = vsel %vm3739, %v4624, 0
    %v4666 = vsel %vm3739, %v4626, 0
    %v4669 = vsel %vm3739, %v4628, 0
    %v4672 = vsel %vm3739, %v4630, 0
    %v4675 = vsel %vm3739, %v4632, 0
    %v4678 = vsel %vm3739, %v4634, 0
    %v4681 = vsel %vm3739, %v4636, 0
    %v4684 = vsel %vm3739, %v4638, 0
    %v4687 = vsel %vm3739, %v4640, 0
    %4689 = vmatprep.subr.bf16.mxu0 0
    %4690 = vmatpush1.bf16.msra.mxu0 0
    %4691 = vmatprep.subr.bf16.mxu0 0
    %4692 = vmatpush1.bf16.msra.mxu0 0
    %4693 = vmatprep.subr.bf16.mxu0 0
    %4694 = vmatpush1.bf16.msra.mxu0 0
    %4695 = vmatprep.subr.bf16.mxu0 0
    %4696 = vmatpush1.bf16.msra.mxu0 0
    %4697 = vmatprep.subr.bf16.mxu0 0
    %4698 = vmatpush1.bf16.msra.mxu0 0
    %4699 = vmatprep.subr.bf16.mxu0 0
    %4700 = vmatpush1.bf16.msra.mxu0 0
    %4701 = vmatprep.subr.bf16.mxu0 0
    %4702 = vmatpush1.bf16.msra.mxu0 %v3736
    %4703 = vmatprep.subr.bf16.mxu0 0
    %4704 = vmatpush1.bf16.msra.mxu0 %v3735
    %4705 = vmatprep.subr.bf16.mxu0 0
    %4706 = vmatpush2.bf16.msra.mxu0 0
    %4707 = vmatprep.subr.bf16.mxu0 0
    %4708 = vmatpush2.bf16.msra.mxu0 0
    %4709 = vmatprep.subr.bf16.mxu0 0
    %4710 = vmatpush2.bf16.msra.mxu0 0
    %4711 = vmatprep.subr.bf16.mxu0 0
    %4712 = vmatpush2.bf16.msra.mxu0 0
    %4713 = vmatprep.subr.bf16.mxu0 0
    %4714 = vmatpush2.bf16.msra.mxu0 0
    %4715 = vmatprep.subr.bf16.mxu0 0
    %4716 = vmatpush2.bf16.msra.mxu0 0
    %4717 = vmatprep.subr.bf16.mxu0 0
    %4718 = vmatpush2.bf16.msra.mxu0 0
    %4719 = vmatprep.subr.bf16.mxu0 0
    %4720 = vmatpush2.bf16.msra.mxu0 0
    %4721 = vmatprep.mubr.bf16.mxu0 0
    %4722 = vmatmul.mubr.bf16.gmra.mxu0 %v4642
    %v4723 = vpop.f32.mrf.mxu0
    %v4724 = vadd.f32 0.0, %v4723
    %v4725 = vpop.f32.mrf.mxu0
    %v4726 = vpop.f32.mrf.mxu0
    %v4727 = vadd.f32 0.0, %v4726
    %v4728 = vpop.f32.mrf.mxu0
    %4729 = vmatprep.mubr.bf16.mxu0 0
    %4730 = vmatmul.mubr.bf16.gmra.mxu0 %v4645
    %v4731 = vpop.f32.mrf.mxu0
    %v4732 = vadd.f32 0.0, %v4731
    %v4733 = vpop.f32.mrf.mxu0
    %v4734 = vpop.f32.mrf.mxu0
    %v4735 = vadd.f32 0.0, %v4734
    %v4736 = vpop.f32.mrf.mxu0
    %4737 = vmatprep.mubr.bf16.mxu0 0
    %4738 = vmatmul.mubr.bf16.gmra.mxu0 %v4648
    %v4739 = vpop.f32.mrf.mxu0
    %v4740 = vadd.f32 0.0, %v4739
    %v4741 = vpop.f32.mrf.mxu0
    %v4742 = vpop.f32.mrf.mxu0
    %v4743 = vadd.f32 0.0, %v4742
    %v4744 = vpop.f32.mrf.mxu0
    %4745 = vmatprep.mubr.bf16.mxu0 0
    %4746 = vmatmul.mubr.bf16.gmra.mxu0 %v4651
    %v4747 = vpop.f32.mrf.mxu0
    %v4748 = vadd.f32 0.0, %v4747
    %v4749 = vpop.f32.mrf.mxu0
    %v4750 = vpop.f32.mrf.mxu0
    %v4751 = vadd.f32 0.0, %v4750
    %v4752 = vpop.f32.mrf.mxu0
    %4753 = vmatprep.mubr.bf16.mxu0 0
    %4754 = vmatmul.mubr.bf16.gmra.mxu0 %v4654
    %v4755 = vpop.f32.mrf.mxu0
    %v4756 = vadd.f32 0.0, %v4755
    %v4757 = vpop.f32.mrf.mxu0
    %v4758 = vpop.f32.mrf.mxu0
    %v4759 = vadd.f32 0.0, %v4758
    %v4760 = vpop.f32.mrf.mxu0
    %4761 = vmatprep.mubr.bf16.mxu0 0
    %4762 = vmatmul.mubr.bf16.gmra.mxu0 %v4657
    %v4763 = vpop.f32.mrf.mxu0
    %v4764 = vadd.f32 0.0, %v4763
    %v4765 = vpop.f32.mrf.mxu0
    %v4766 = vpop.f32.mrf.mxu0
    %v4767 = vadd.f32 0.0, %v4766
    %v4768 = vpop.f32.mrf.mxu0
    %4769 = vmatprep.mubr.bf16.mxu0 0
    %4770 = vmatmul.mubr.bf16.gmra.mxu0 %v4660
    %v4771 = vpop.f32.mrf.mxu0
    %v4772 = vadd.f32 0.0, %v4771
    %v4773 = vpop.f32.mrf.mxu0
    %v4774 = vpop.f32.mrf.mxu0
    %v4775 = vadd.f32 0.0, %v4774
    %v4776 = vpop.f32.mrf.mxu0
    %4777 = vmatprep.mubr.bf16.mxu0 0
    %4778 = vmatmul.mubr.bf16.gmra.mxu0 %v4663
    %v4779 = vpop.f32.mrf.mxu0
    %v4780 = vadd.f32 0.0, %v4779
    %v4781 = vpop.f32.mrf.mxu0
    %v4782 = vpop.f32.mrf.mxu0
    %v4783 = vadd.f32 0.0, %v4782
    %v4784 = vpop.f32.mrf.mxu0
    %4785 = vmatprep.mubr.bf16.mxu0 0
    %4786 = vmatmul.mubr.bf16.gmra.mxu0 %v4666
    %v4787 = vpop.f32.mrf.mxu0
    %v4788 = vadd.f32 0.0, %v4787
    %v4789 = vpop.f32.mrf.mxu0
    %v4790 = vpop.f32.mrf.mxu0
    %v4791 = vadd.f32 0.0, %v4790
    %v4792 = vpop.f32.mrf.mxu0
    %4793 = vmatprep.mubr.bf16.mxu0 0
    %4794 = vmatmul.mubr.bf16.gmra.mxu0 %v4669
    %v4795 = vpop.f32.mrf.mxu0
    %v4796 = vadd.f32 0.0, %v4795
    %v4797 = vpop.f32.mrf.mxu0
    %v4798 = vpop.f32.mrf.mxu0
    %v4799 = vadd.f32 0.0, %v4798
    %v4800 = vpop.f32.mrf.mxu0
    %4801 = vmatprep.mubr.bf16.mxu0 0
    %4802 = vmatmul.mubr.bf16.gmra.mxu0 %v4672
    %v4803 = vpop.f32.mrf.mxu0
    %v4804 = vadd.f32 0.0, %v4803
    %v4805 = vpop.f32.mrf.mxu0
    %v4806 = vpop.f32.mrf.mxu0
    %v4807 = vadd.f32 0.0, %v4806
    %v4808 = vpop.f32.mrf.mxu0
    %4809 = vmatprep.mubr.bf16.mxu0 0
    %4810 = vmatmul.mubr.bf16.gmra.mxu0 %v4675
    %v4811 = vpop.f32.mrf.mxu0
    %v4812 = vadd.f32 0.0, %v4811
    %v4813 = vpop.f32.mrf.mxu0
    %v4814 = vpop.f32.mrf.mxu0
    %v4815 = vadd.f32 0.0, %v4814
    %v4816 = vpop.f32.mrf.mxu0
    %4817 = vmatprep.mubr.bf16.mxu0 0
    %4818 = vmatmul.mubr.bf16.gmra.mxu0 %v4678
    %v4819 = vpop.f32.mrf.mxu0
    %v4820 = vadd.f32 0.0, %v4819
    %v4821 = vpop.f32.mrf.mxu0
    %v4822 = vpop.f32.mrf.mxu0
    %v4823 = vadd.f32 0.0, %v4822
    %v4824 = vpop.f32.mrf.mxu0
    %4825 = vmatprep.mubr.bf16.mxu0 0
    %4826 = vmatmul.mubr.bf16.gmra.mxu0 %v4681
    %v4827 = vpop.f32.mrf.mxu0
    %v4828 = vadd.f32 0.0, %v4827
    %v4829 = vpop.f32.mrf.mxu0
    %v4830 = vpop.f32.mrf.mxu0
    %v4831 = vadd.f32 0.0, %v4830
    %v4832 = vpop.f32.mrf.mxu0
    %4833 = vmatprep.mubr.bf16.mxu0 0
    %4834 = vmatmul.mubr.bf16.gmra.mxu0 %v4684
    %v4835 = vpop.f32.mrf.mxu0
    %v4836 = vadd.f32 0.0, %v4835
    %v4837 = vpop.f32.mrf.mxu0
    %v4838 = vpop.f32.mrf.mxu0
    %v4839 = vadd.f32 0.0, %v4838
    %v4840 = vpop.f32.mrf.mxu0
    %4841 = vmatprep.mubr.bf16.mxu0 0
    %4842 = vmatmul.mubr.bf16.gmra.mxu0 %v4687
    %v4843 = vpop.f32.mrf.mxu0
    %v4844 = vadd.f32 0.0, %v4843
    %v4845 = vpop.f32.mrf.mxu0
    %v4846 = vpop.f32.mrf.mxu0
    %v4847 = vadd.f32 0.0, %v4846
    %v4848 = vpop.f32.mrf.mxu0
    %4849 = vdwg.mxu0
    %v4850 = vadd.f32 %v4561, %v4724
    %v4851 = vadd.f32 %v4562, %v4727
    %v4852 = vadd.f32 %v4563, %v4732
    %v4853 = vadd.f32 %v4564, %v4735
    %v4854 = vadd.f32 %v4565, %v4740
    %v4855 = vadd.f32 %v4566, %v4743
    %v4856 = vadd.f32 %v4567, %v4748
    %v4857 = vadd.f32 %v4568, %v4751
    %v4858 = vadd.f32 %v4569, %v4756
    %v4859 = vadd.f32 %v4570, %v4759
    %v4860 = vadd.f32 %v4571, %v4764
    %v4861 = vadd.f32 %v4572, %v4767
    %v4862 = vadd.f32 %v4573, %v4772
    %v4863 = vadd.f32 %v4574, %v4775
    %v4864 = vadd.f32 %v4575, %v4780
    %v4865 = vadd.f32 %v4576, %v4783
    %v4866 = vadd.f32 %v4577, %v4788
    %v4867 = vadd.f32 %v4578, %v4791
    %v4868 = vadd.f32 %v4579, %v4796
    %v4869 = vadd.f32 %v4580, %v4799
    %v4870 = vadd.f32 %v4581, %v4804
    %v4871 = vadd.f32 %v4582, %v4807
    %v4872 = vadd.f32 %v4583, %v4812
    %v4873 = vadd.f32 %v4584, %v4815
    %v4874 = vadd.f32 %v4585, %v4820
    %v4875 = vadd.f32 %v4586, %v4823
    %v4876 = vadd.f32 %v4587, %v4828
    %v4877 = vadd.f32 %v4588, %v4831
    %v4878 = vadd.f32 %v4589, %v4836
    %v4879 = vadd.f32 %v4590, %v4839
    %v4880 = vadd.f32 %v4591, %v4844
    %v4881 = vadd.f32 %v4592, %v4847
    %v4882 = vpack.c.bf16 %v4851, %v4850
    %v4883 = vpack.c.bf16 %v4853, %v4852
    %v4884 = vpack.c.bf16 %v4855, %v4854
    %v4885 = vpack.c.bf16 %v4857, %v4856
    %v4886 = vpack.c.bf16 %v4859, %v4858
    %v4887 = vpack.c.bf16 %v4861, %v4860
    %v4888 = vpack.c.bf16 %v4863, %v4862
    %v4889 = vpack.c.bf16 %v4865, %v4864
    %v4890 = vpack.c.bf16 %v4867, %v4866
    %v4891 = vpack.c.bf16 %v4869, %v4868
    %v4892 = vpack.c.bf16 %v4871, %v4870
    %v4893 = vpack.c.bf16 %v4873, %v4872
    %v4894 = vpack.c.bf16 %v4875, %v4874
    %v4895 = vpack.c.bf16 %v4877, %v4876
    %v4896 = vpack.c.bf16 %v4879, %v4878
    %v4897 = vpack.c.bf16 %v4881, %v4880
    %v4898 = vxor.u32 %v4882, 2147516416
    %v4899 = vxor.u32 %v4883, 2147516416
    %v4900 = vxor.u32 %v4884, 2147516416
    %v4901 = vxor.u32 %v4885, 2147516416
    %v4902 = vxor.u32 %v4886, 2147516416
    %v4903 = vxor.u32 %v4887, 2147516416
    %v4904 = vxor.u32 %v4888, 2147516416
    %v4905 = vxor.u32 %v4889, 2147516416
    %v4906 = vxor.u32 %v4890, 2147516416
    %v4907 = vxor.u32 %v4891, 2147516416
    %v4908 = vxor.u32 %v4892, 2147516416
    %v4909 = vxor.u32 %v4893, 2147516416
    %v4910 = vxor.u32 %v4894, 2147516416
    %v4911 = vxor.u32 %v4895, 2147516416
    %v4912 = vxor.u32 %v4896, 2147516416
    %v4913 = vxor.u32 %v4897, 2147516416
    %v4915 = vmul.bf16 %v4898, 1069105081
    %v4916 = vpow.bf16.pop %v4915
    %v4918 = vmul.bf16 %v4899, 1069105081
    %v4919 = vpow.bf16.pop %v4918
    %v4921 = vmul.bf16 %v4900, 1069105081
    %v4922 = vpow.bf16.pop %v4921
    %v4924 = vmul.bf16 %v4901, 1069105081
    %v4925 = vpow.bf16.pop %v4924
    %v4927 = vmul.bf16 %v4902, 1069105081
    %v4928 = vpow.bf16.pop %v4927
    %v4930 = vmul.bf16 %v4903, 1069105081
    %v4931 = vpow.bf16.pop %v4930
    %v4933 = vmul.bf16 %v4904, 1069105081
    %v4934 = vpow.bf16.pop %v4933
    %v4936 = vmul.bf16 %v4905, 1069105081
    %v4937 = vpow.bf16.pop %v4936
    %v4939 = vmul.bf16 %v4906, 1069105081
    %v4940 = vpow.bf16.pop %v4939
    %v4942 = vmul.bf16 %v4907, 1069105081
    %v4943 = vpow.bf16.pop %v4942
    %v4945 = vmul.bf16 %v4908, 1069105081
    %v4946 = vpow.bf16.pop %v4945
    %v4948 = vmul.bf16 %v4909, 1069105081
    %v4949 = vpow.bf16.pop %v4948
    %v4951 = vmul.bf16 %v4910, 1069105081
    %v4952 = vpow.bf16.pop %v4951
    %v4954 = vmul.bf16 %v4911, 1069105081
    %v4955 = vpow.bf16.pop %v4954
    %v4957 = vmul.bf16 %v4912, 1069105081
    %v4958 = vpow.bf16.pop %v4957
    %v4960 = vmul.bf16 %v4913, 1069105081
    %v4961 = vpow.bf16.pop %v4960
    %v4962 = vadd.bf16 %v4916, 1065369472
    %v4963 = vadd.bf16 %v4919, 1065369472
    %v4964 = vadd.bf16 %v4922, 1065369472
    %v4965 = vadd.bf16 %v4925, 1065369472
    %v4966 = vadd.bf16 %v4928, 1065369472
    %v4967 = vadd.bf16 %v4931, 1065369472
    %v4968 = vadd.bf16 %v4934, 1065369472
    %v4969 = vadd.bf16 %v4937, 1065369472
    %v4970 = vadd.bf16 %v4940, 1065369472
    %v4971 = vadd.bf16 %v4943, 1065369472
    %v4972 = vadd.bf16 %v4946, 1065369472
    %v4973 = vadd.bf16 %v4949, 1065369472
    %v4974 = vadd.bf16 %v4952, 1065369472
    %v4975 = vadd.bf16 %v4955, 1065369472
    %v4976 = vadd.bf16 %v4958, 1065369472
    %v4977 = vadd.bf16 %v4961, 1065369472
    %v4978 = vrcp.bf16.pop %v4962
    %v4979 = vmul.bf16 1065369472, %v4978
    %v4980 = vrcp.bf16.pop %v4963
    %v4981 = vmul.bf16 1065369472, %v4980
    %v4982 = vrcp.bf16.pop %v4964
    %v4983 = vmul.bf16 1065369472, %v4982
    %v4984 = vrcp.bf16.pop %v4965
    %v4985 = vmul.bf16 1065369472, %v4984
    %v4986 = vrcp.bf16.pop %v4966
    %v4987 = vmul.bf16 1065369472, %v4986
    %v4988 = vrcp.bf16.pop %v4967
    %v4989 = vmul.bf16 1065369472, %v4988
    %v4990 = vrcp.bf16.pop %v4968
    %v4991 = vmul.bf16 1065369472, %v4990
    %v4992 = vrcp.bf16.pop %v4969
    %v4993 = vmul.bf16 1065369472, %v4992
    %v4994 = vrcp.bf16.pop %v4970
    %v4995 = vmul.bf16 1065369472, %v4994
    %v4996 = vrcp.bf16.pop %v4971
    %v4997 = vmul.bf16 1065369472, %v4996
    %v4998 = vrcp.bf16.pop %v4972
    %v4999 = vmul.bf16 1065369472, %v4998
    %v5000 = vrcp.bf16.pop %v4973
    %v5001 = vmul.bf16 1065369472, %v5000
    %v5002 = vrcp.bf16.pop %v4974
    %v5003 = vmul.bf16 1065369472, %v5002
    %v5004 = vrcp.bf16.pop %v4975
    %v5005 = vmul.bf16 1065369472, %v5004
    %v5006 = vrcp.bf16.pop %v4976
    %v5007 = vmul.bf16 1065369472, %v5006
    %v5008 = vrcp.bf16.pop %v4977
    %v5009 = vmul.bf16 1065369472, %v5008
    %v5010 = vtanh.bf16.pop %v4882
    %v5011 = vtanh.bf16.pop %v4883
    %v5012 = vtanh.bf16.pop %v4884
    %v5013 = vtanh.bf16.pop %v4885
    %v5014 = vtanh.bf16.pop %v4886
    %v5015 = vtanh.bf16.pop %v4887
    %v5016 = vtanh.bf16.pop %v4888
    %v5017 = vtanh.bf16.pop %v4889
    %v5018 = vtanh.bf16.pop %v4890
    %v5019 = vtanh.bf16.pop %v4891
    %v5020 = vtanh.bf16.pop %v4892
    %v5021 = vtanh.bf16.pop %v4893
    %v5022 = vtanh.bf16.pop %v4894
    %v5023 = vtanh.bf16.pop %v4895
    %v5024 = vtanh.bf16.pop %v4896
    %v5025 = vtanh.bf16.pop %v4897
    %v5026 = vunpack.c.l.bf16 %v4979
    %v5027 = vunpack.c.h.bf16 %v4979
    %v5028 = vunpack.c.l.bf16 %v4981
    %v5029 = vunpack.c.h.bf16 %v4981
    %v5030 = vunpack.c.l.bf16 %v4983
    %v5031 = vunpack.c.h.bf16 %v4983
    %v5032 = vunpack.c.l.bf16 %v4985
    %v5033 = vunpack.c.h.bf16 %v4985
    %v5034 = vunpack.c.l.bf16 %v4987
    %v5035 = vunpack.c.h.bf16 %v4987
    %v5036 = vunpack.c.l.bf16 %v4989
    %v5037 = vunpack.c.h.bf16 %v4989
    %v5038 = vunpack.c.l.bf16 %v4991
    %v5039 = vunpack.c.h.bf16 %v4991
    %v5040 = vunpack.c.l.bf16 %v4993
    %v5041 = vunpack.c.h.bf16 %v4993
    %v5042 = vunpack.c.l.bf16 %v4995
    %v5043 = vunpack.c.h.bf16 %v4995
    %v5044 = vunpack.c.l.bf16 %v4997
    %v5045 = vunpack.c.h.bf16 %v4997
    %v5046 = vunpack.c.l.bf16 %v4999
    %v5047 = vunpack.c.h.bf16 %v4999
    %v5048 = vunpack.c.l.bf16 %v5001
    %v5049 = vunpack.c.h.bf16 %v5001
    %v5050 = vunpack.c.l.bf16 %v5003
    %v5051 = vunpack.c.h.bf16 %v5003
    %v5052 = vunpack.c.l.bf16 %v5005
    %v5053 = vunpack.c.h.bf16 %v5005
    %v5054 = vunpack.c.l.bf16 %v5007
    %v5055 = vunpack.c.h.bf16 %v5007
    %v5056 = vunpack.c.l.bf16 %v5009
    %v5057 = vunpack.c.h.bf16 %v5009
    %v5058 = vmul.f32 %v5026, %v4384
    %v5059 = vmul.f32 %v5027, %v4385
    %v5060 = vmul.f32 %v5028, %v4386
    %v5061 = vmul.f32 %v5029, %v4387
    %v5062 = vmul.f32 %v5030, %v4388
    %v5063 = vmul.f32 %v5031, %v4389
    %v5064 = vmul.f32 %v5032, %v4390
    %v5065 = vmul.f32 %v5033, %v4391
    %v5066 = vmul.f32 %v5034, %v4392
    %v5067 = vmul.f32 %v5035, %v4393
    %v5068 = vmul.f32 %v5036, %v4394
    %v5069 = vmul.f32 %v5037, %v4395
    %v5070 = vmul.f32 %v5038, %v4396
    %v5071 = vmul.f32 %v5039, %v4397
    %v5072 = vmul.f32 %v5040, %v4398
    %v5073 = vmul.f32 %v5041, %v4399
    %v5074 = vmul.f32 %v5042, %v4400
    %v5075 = vmul.f32 %v5043, %v4401
    %v5076 = vmul.f32 %v5044, %v4402
    %v5077 = vmul.f32 %v5045, %v4403
    %v5078 = vmul.f32 %v5046, %v4404
    %v5079 = vmul.f32 %v5047, %v4405
    %v5080 = vmul.f32 %v5048, %v4406
    %v5081 = vmul.f32 %v5049, %v4407
    %v5082 = vmul.f32 %v5050, %v4408
    %v5083 = vmul.f32 %v5051, %v4409
    %v5084 = vmul.f32 %v5052, %v4410
    %v5085 = vmul.f32 %v5053, %v4411
    %v5086 = vmul.f32 %v5054, %v4412
    %v5087 = vmul.f32 %v5055, %v4413
    %v5088 = vmul.f32 %v5056, %v4414
    %v5089 = vmul.f32 %v5057, %v4415
    %5106 = vrot.lane.b32.xlu0 %v5010, 64
    %v5107 = vpop.permute.xlu0 %5106
    %5108 = vrot.lane.b32.xlu0 %v5011, 64
    %v5109 = vpop.permute.xlu0 %5108
    %5110 = vrot.lane.b32.xlu0 %v5012, 64
    %v5111 = vpop.permute.xlu0 %5110
    %5112 = vrot.lane.b32.xlu0 %v5013, 64
    %v5113 = vpop.permute.xlu0 %5112
    %5114 = vrot.lane.b32.xlu0 %v5014, 64
    %v5115 = vpop.permute.xlu0 %5114
    %5116 = vrot.lane.b32.xlu0 %v5015, 64
    %v5117 = vpop.permute.xlu0 %5116
    %5118 = vrot.lane.b32.xlu0 %v5016, 64
    %v5119 = vpop.permute.xlu0 %5118
    %5120 = vrot.lane.b32.xlu0 %v5017, 64
    %v5121 = vpop.permute.xlu0 %5120
    %5122 = vrot.lane.b32.xlu0 %v5018, 64
    %v5123 = vpop.permute.xlu0 %5122
    %5124 = vrot.lane.b32.xlu0 %v5019, 64
    %v5125 = vpop.permute.xlu0 %5124
    %5126 = vrot.lane.b32.xlu0 %v5020, 64
    %v5127 = vpop.permute.xlu0 %5126
    %5128 = vrot.lane.b32.xlu0 %v5021, 64
    %v5129 = vpop.permute.xlu0 %5128
    %5130 = vrot.lane.b32.xlu0 %v5022, 64
    %v5131 = vpop.permute.xlu0 %5130
    %5132 = vrot.lane.b32.xlu0 %v5023, 64
    %v5133 = vpop.permute.xlu0 %5132
    %5134 = vrot.lane.b32.xlu0 %v5024, 64
    %v5135 = vpop.permute.xlu0 %5134
    %5136 = vrot.lane.b32.xlu0 %v5025, 64
    %v5137 = vpop.permute.xlu0 %5136
    %v5154 = vmul.bf16 %v4979, %v5107
    %v5155 = vmul.bf16 %v4981, %v5109
    %v5156 = vmul.bf16 %v4983, %v5111
    %v5157 = vmul.bf16 %v4985, %v5113
    %v5158 = vmul.bf16 %v4987, %v5115
    %v5159 = vmul.bf16 %v4989, %v5117
    %v5160 = vmul.bf16 %v4991, %v5119
    %v5161 = vmul.bf16 %v4993, %v5121
    %v5162 = vmul.bf16 %v4995, %v5123
    %v5163 = vmul.bf16 %v4997, %v5125
    %v5164 = vmul.bf16 %v4999, %v5127
    %v5165 = vmul.bf16 %v5001, %v5129
    %v5166 = vmul.bf16 %v5003, %v5131
    %v5167 = vmul.bf16 %v5005, %v5133
    %v5168 = vmul.bf16 %v5007, %v5135
    %v5169 = vmul.bf16 %v5009, %v5137
    %v5170 = vunpack.c.l.bf16 %v5154
    %v5171 = vunpack.c.h.bf16 %v5154
    %v5172 = vunpack.c.l.bf16 %v5155
    %v5173 = vunpack.c.h.bf16 %v5155
    %v5174 = vunpack.c.l.bf16 %v5156
    %v5175 = vunpack.c.h.bf16 %v5156
    %v5176 = vunpack.c.l.bf16 %v5157
    %v5177 = vunpack.c.h.bf16 %v5157
    %v5178 = vunpack.c.l.bf16 %v5158
    %v5179 = vunpack.c.h.bf16 %v5158
    %v5180 = vunpack.c.l.bf16 %v5159
    %v5181 = vunpack.c.h.bf16 %v5159
    %v5182 = vunpack.c.l.bf16 %v5160
    %v5183 = vunpack.c.h.bf16 %v5160
    %v5184 = vunpack.c.l.bf16 %v5161
    %v5185 = vunpack.c.h.bf16 %v5161
    %v5186 = vunpack.c.l.bf16 %v5162
    %v5187 = vunpack.c.h.bf16 %v5162
    %v5188 = vunpack.c.l.bf16 %v5163
    %v5189 = vunpack.c.h.bf16 %v5163
    %v5190 = vunpack.c.l.bf16 %v5164
    %v5191 = vunpack.c.h.bf16 %v5164
    %v5192 = vunpack.c.l.bf16 %v5165
    %v5193 = vunpack.c.h.bf16 %v5165
    %v5194 = vunpack.c.l.bf16 %v5166
    %v5195 = vunpack.c.h.bf16 %v5166
    %v5196 = vunpack.c.l.bf16 %v5167
    %v5197 = vunpack.c.h.bf16 %v5167
    %v5198 = vunpack.c.l.bf16 %v5168
    %v5199 = vunpack.c.h.bf16 %v5168
    %v5200 = vunpack.c.l.bf16 %v5169
    %v5201 = vunpack.c.h.bf16 %v5169
    %5234 = vrot.lane.b32.xlu0 %v5170, 32
    %v5235 = vpop.permute.xlu0 %5234
    %5236 = vrot.lane.b32.xlu0 %v5171, 32
    %v5237 = vpop.permute.xlu0 %5236
    %5238 = vrot.lane.b32.xlu0 %v5172, 32
    %v5239 = vpop.permute.xlu0 %5238
    %5240 = vrot.lane.b32.xlu0 %v5173, 32
    %v5241 = vpop.permute.xlu0 %5240
    %5242 = vrot.lane.b32.xlu0 %v5174, 32
    %v5243 = vpop.permute.xlu0 %5242
    %5244 = vrot.lane.b32.xlu0 %v5175, 32
    %v5245 = vpop.permute.xlu0 %5244
    %5246 = vrot.lane.b32.xlu0 %v5176, 32
    %v5247 = vpop.permute.xlu0 %5246
    %5248 = vrot.lane.b32.xlu0 %v5177, 32
    %v5249 = vpop.permute.xlu0 %5248
    %5250 = vrot.lane.b32.xlu0 %v5178, 32
    %v5251 = vpop.permute.xlu0 %5250
    %5252 = vrot.lane.b32.xlu0 %v5179, 32
    %v5253 = vpop.permute.xlu0 %5252
    %5254 = vrot.lane.b32.xlu0 %v5180, 32
    %v5255 = vpop.permute.xlu0 %5254
    %5256 = vrot.lane.b32.xlu0 %v5181, 32
    %v5257 = vpop.permute.xlu0 %5256
    %5258 = vrot.lane.b32.xlu0 %v5182, 32
    %v5259 = vpop.permute.xlu0 %5258
    %5260 = vrot.lane.b32.xlu0 %v5183, 32
    %v5261 = vpop.permute.xlu0 %5260
    %5262 = vrot.lane.b32.xlu0 %v5184, 32
    %v5263 = vpop.permute.xlu0 %5262
    %5264 = vrot.lane.b32.xlu0 %v5185, 32
    %v5265 = vpop.permute.xlu0 %5264
    %5266 = vrot.lane.b32.xlu0 %v5186, 32
    %v5267 = vpop.permute.xlu0 %5266
    %5268 = vrot.lane.b32.xlu0 %v5187, 32
    %v5269 = vpop.permute.xlu0 %5268
    %5270 = vrot.lane.b32.xlu0 %v5188, 32
    %v5271 = vpop.permute.xlu0 %5270
    %5272 = vrot.lane.b32.xlu0 %v5189, 32
    %v5273 = vpop.permute.xlu0 %5272
    %5274 = vrot.lane.b32.xlu0 %v5190, 32
    %v5275 = vpop.permute.xlu0 %5274
    %5276 = vrot.lane.b32.xlu0 %v5191, 32
    %v5277 = vpop.permute.xlu0 %5276
    %5278 = vrot.lane.b32.xlu0 %v5192, 32
    %v5279 = vpop.permute.xlu0 %5278
    %5280 = vrot.lane.b32.xlu0 %v5193, 32
    %v5281 = vpop.permute.xlu0 %5280
    %5282 = vrot.lane.b32.xlu0 %v5194, 32
    %v5283 = vpop.permute.xlu0 %5282
    %5284 = vrot.lane.b32.xlu0 %v5195, 32
    %v5285 = vpop.permute.xlu0 %5284
    %5286 = vrot.lane.b32.xlu0 %v5196, 32
    %v5287 = vpop.permute.xlu0 %5286
    %5288 = vrot.lane.b32.xlu0 %v5197, 32
    %v5289 = vpop.permute.xlu0 %5288
    %5290 = vrot.lane.b32.xlu0 %v5198, 32
    %v5291 = vpop.permute.xlu0 %5290
    %5292 = vrot.lane.b32.xlu0 %v5199, 32
    %v5293 = vpop.permute.xlu0 %5292
    %5294 = vrot.lane.b32.xlu0 %v5200, 32
    %v5295 = vpop.permute.xlu0 %5294
    %5296 = vrot.lane.b32.xlu0 %v5201, 32
    %v5297 = vpop.permute.xlu0 %5296
    %v5330 = vadd.f32 %v5058, %v5235
    %v5331 = vadd.f32 %v5059, %v5237
    %v5332 = vadd.f32 %v5060, %v5239
    %v5333 = vadd.f32 %v5061, %v5241
    %v5334 = vadd.f32 %v5062, %v5243
    %v5335 = vadd.f32 %v5063, %v5245
    %v5336 = vadd.f32 %v5064, %v5247
    %v5337 = vadd.f32 %v5065, %v5249
    %v5338 = vadd.f32 %v5066, %v5251
    %v5339 = vadd.f32 %v5067, %v5253
    %v5340 = vadd.f32 %v5068, %v5255
    %v5341 = vadd.f32 %v5069, %v5257
    %v5342 = vadd.f32 %v5070, %v5259
    %v5343 = vadd.f32 %v5071, %v5261
    %v5344 = vadd.f32 %v5072, %v5263
    %v5345 = vadd.f32 %v5073, %v5265
    %v5346 = vadd.f32 %v5074, %v5267
    %v5347 = vadd.f32 %v5075, %v5269
    %v5348 = vadd.f32 %v5076, %v5271
    %v5349 = vadd.f32 %v5077, %v5273
    %v5350 = vadd.f32 %v5078, %v5275
    %v5351 = vadd.f32 %v5079, %v5277
    %v5352 = vadd.f32 %v5080, %v5279
    %v5353 = vadd.f32 %v5081, %v5281
    %v5354 = vadd.f32 %v5082, %v5283
    %v5355 = vadd.f32 %v5083, %v5285
    %v5356 = vadd.f32 %v5084, %v5287
    %v5357 = vadd.f32 %v5085, %v5289
    %v5358 = vadd.f32 %v5086, %v5291
    %v5359 = vadd.f32 %v5087, %v5293
    %v5360 = vadd.f32 %v5088, %v5295
    %v5361 = vadd.f32 %v5089, %v5297
    %v5362 = vpack.c.bf16 %v5331, %v5330
    %v5363 = vpack.c.bf16 %v5333, %v5332
    %v5364 = vpack.c.bf16 %v5335, %v5334
    %v5365 = vpack.c.bf16 %v5337, %v5336
    %v5366 = vpack.c.bf16 %v5339, %v5338
    %v5367 = vpack.c.bf16 %v5341, %v5340
    %v5368 = vpack.c.bf16 %v5343, %v5342
    %v5369 = vpack.c.bf16 %v5345, %v5344
    %v5370 = vpack.c.bf16 %v5347, %v5346
    %v5371 = vpack.c.bf16 %v5349, %v5348
    %v5372 = vpack.c.bf16 %v5351, %v5350
    %v5373 = vpack.c.bf16 %v5353, %v5352
    %v5374 = vpack.c.bf16 %v5355, %v5354
    %v5375 = vpack.c.bf16 %v5357, %v5356
    %v5376 = vpack.c.bf16 %v5359, %v5358
    %v5377 = vpack.c.bf16 %v5361, %v5360
    %v5378 = vtanh.bf16.pop %v5362
    %v5379 = vtanh.bf16.pop %v5363
    %v5380 = vtanh.bf16.pop %v5364
    %v5381 = vtanh.bf16.pop %v5365
    %v5382 = vtanh.bf16.pop %v5366
    %v5383 = vtanh.bf16.pop %v5367
    %v5384 = vtanh.bf16.pop %v5368
    %v5385 = vtanh.bf16.pop %v5369
    %v5386 = vtanh.bf16.pop %v5370
    %v5387 = vtanh.bf16.pop %v5371
    %v5388 = vtanh.bf16.pop %v5372
    %v5389 = vtanh.bf16.pop %v5373
    %v5390 = vtanh.bf16.pop %v5374
    %v5391 = vtanh.bf16.pop %v5375
    %v5392 = vtanh.bf16.pop %v5376
    %v5393 = vtanh.bf16.pop %v5377
    %5410 = vrot.lane.b32.xlu0 %v5378, 64
    %v5411 = vpop.permute.xlu0 %5410
    %5412 = vrot.lane.b32.xlu0 %v5379, 64
    %v5413 = vpop.permute.xlu0 %5412
    %5414 = vrot.lane.b32.xlu0 %v5380, 64
    %v5415 = vpop.permute.xlu0 %5414
    %5416 = vrot.lane.b32.xlu0 %v5381, 64
    %v5417 = vpop.permute.xlu0 %5416
    %5418 = vrot.lane.b32.xlu0 %v5382, 64
    %v5419 = vpop.permute.xlu0 %5418
    %5420 = vrot.lane.b32.xlu0 %v5383, 64
    %v5421 = vpop.permute.xlu0 %5420
    %5422 = vrot.lane.b32.xlu0 %v5384, 64
    %v5423 = vpop.permute.xlu0 %5422
    %5424 = vrot.lane.b32.xlu0 %v5385, 64
    %v5425 = vpop.permute.xlu0 %5424
    %5426 = vrot.lane.b32.xlu0 %v5386, 64
    %v5427 = vpop.permute.xlu0 %5426
    %5428 = vrot.lane.b32.xlu0 %v5387, 64
    %v5429 = vpop.permute.xlu0 %5428
    %5430 = vrot.lane.b32.xlu0 %v5388, 64
    %v5431 = vpop.permute.xlu0 %5430
    %5432 = vrot.lane.b32.xlu0 %v5389, 64
    %v5433 = vpop.permute.xlu0 %5432
    %5434 = vrot.lane.b32.xlu0 %v5390, 64
    %v5435 = vpop.permute.xlu0 %5434
    %5436 = vrot.lane.b32.xlu0 %v5391, 64
    %v5437 = vpop.permute.xlu0 %5436
    %5438 = vrot.lane.b32.xlu0 %v5392, 64
    %v5439 = vpop.permute.xlu0 %5438
    %5440 = vrot.lane.b32.xlu0 %v5393, 64
    %v5441 = vpop.permute.xlu0 %5440
    %v5458 = vmul.bf16 %v4979, %v5411
    %v5459 = vmul.bf16 %v4981, %v5413
    %v5460 = vmul.bf16 %v4983, %v5415
    %v5461 = vmul.bf16 %v4985, %v5417
    %v5462 = vmul.bf16 %v4987, %v5419
    %v5463 = vmul.bf16 %v4989, %v5421
    %v5464 = vmul.bf16 %v4991, %v5423
    %v5465 = vmul.bf16 %v4993, %v5425
    %v5466 = vmul.bf16 %v4995, %v5427
    %v5467 = vmul.bf16 %v4997, %v5429
    %v5468 = vmul.bf16 %v4999, %v5431
    %v5469 = vmul.bf16 %v5001, %v5433
    %v5470 = vmul.bf16 %v5003, %v5435
    %v5471 = vmul.bf16 %v5005, %v5437
    %v5472 = vmul.bf16 %v5007, %v5439
    %v5473 = vmul.bf16 %v5009, %v5441
    %s5474 = scalar_lea.vmem [#allocation2], 256
    %v5475 = vld [vmem:[%s5474] sm:$0xf]
    %v5476 = vld [vmem:[%s5474 + $0x4] sm:$0xf]
    %v5477 = vld [vmem:[%s5474 + $0x8] sm:$0xf]
    %v5478 = vld [vmem:[%s5474 + $0xc] sm:$0xf]
    %v5479 = vld [vmem:[%s5474 + $0x10] sm:$0xf]
    %v5480 = vld [vmem:[%s5474 + $0x14] sm:$0xf]
    %v5481 = vld [vmem:[%s5474 + $0x18] sm:$0xf]
    %v5482 = vld [vmem:[%s5474 + $0x1c] sm:$0xf]
    %v5483 = vld [vmem:[%s5474 + $0x20] sm:$0xf]
    %v5484 = vld [vmem:[%s5474 + $0x24] sm:$0xf]
    %v5485 = vld [vmem:[%s5474 + $0x28] sm:$0xf]
    %v5486 = vld [vmem:[%s5474 + $0x2c] sm:$0xf]
    %v5487 = vld [vmem:[%s5474 + $0x30] sm:$0xf]
    %v5488 = vld [vmem:[%s5474 + $0x34] sm:$0xf]
    %v5489 = vld [vmem:[%s5474 + $0x38] sm:$0xf]
    %v5490 = vld [vmem:[%s5474 + $0x3c] sm:$0xf]
    %v5491 = vld [vmem:[%s5474 + $0x40] sm:$0xf]
    %v5492 = vld [vmem:[%s5474 + $0x44] sm:$0xf]
    %v5493 = vld [vmem:[%s5474 + $0x48] sm:$0xf]
    %v5494 = vld [vmem:[%s5474 + $0x4c] sm:$0xf]
    %v5495 = vld [vmem:[%s5474 + $0x50] sm:$0xf]
    %v5496 = vld [vmem:[%s5474 + $0x54] sm:$0xf]
    %v5497 = vld [vmem:[%s5474 + $0x58] sm:$0xf]
    %v5498 = vld [vmem:[%s5474 + $0x5c] sm:$0xf]
    %v5499 = vld [vmem:[%s5474 + $0x60] sm:$0xf]
    %v5500 = vld [vmem:[%s5474 + $0x64] sm:$0xf]
    %v5501 = vld [vmem:[%s5474 + $0x68] sm:$0xf]
    %v5502 = vld [vmem:[%s5474 + $0x6c] sm:$0xf]
    %v5503 = vld [vmem:[%s5474 + $0x70] sm:$0xf]
    %v5504 = vld [vmem:[%s5474 + $0x74] sm:$0xf]
    %v5505 = vld [vmem:[%s5474 + $0x78] sm:$0xf]
    %v5506 = vld [vmem:[%s5474 + $0x7c] sm:$0xf]
    %v5507 = vunpack.c.l.bf16 %v5475
    %v5508 = vunpack.c.l.bf16 %v5476
    %v5509 = vunpack.c.l.bf16 %v5477
    %v5510 = vunpack.c.l.bf16 %v5478
    %v5511 = vunpack.c.l.bf16 %v5479
    %v5512 = vunpack.c.l.bf16 %v5480
    %v5513 = vunpack.c.l.bf16 %v5481
    %v5514 = vunpack.c.l.bf16 %v5482
    %v5515 = vunpack.c.l.bf16 %v5483
    %v5516 = vunpack.c.l.bf16 %v5484
    %v5517 = vunpack.c.l.bf16 %v5485
    %v5518 = vunpack.c.l.bf16 %v5486
    %v5519 = vunpack.c.l.bf16 %v5487
    %v5520 = vunpack.c.l.bf16 %v5488
    %v5521 = vunpack.c.l.bf16 %v5489
    %v5522 = vunpack.c.l.bf16 %v5490
    %v5523 = vunpack.c.l.bf16 %v5491
    %v5524 = vunpack.c.l.bf16 %v5492
    %v5525 = vunpack.c.l.bf16 %v5493
    %v5526 = vunpack.c.l.bf16 %v5494
    %v5527 = vunpack.c.l.bf16 %v5495
    %v5528 = vunpack.c.l.bf16 %v5496
    %v5529 = vunpack.c.l.bf16 %v5497
    %v5530 = vunpack.c.l.bf16 %v5498
    %v5531 = vunpack.c.l.bf16 %v5499
    %v5532 = vunpack.c.l.bf16 %v5500
    %v5533 = vunpack.c.l.bf16 %v5501
    %v5534 = vunpack.c.l.bf16 %v5502
    %v5535 = vunpack.c.l.bf16 %v5503
    %v5536 = vunpack.c.l.bf16 %v5504
    %v5537 = vunpack.c.l.bf16 %v5505
    %v5538 = vunpack.c.l.bf16 %v5506
    %5555 = vrot.lane.b32.xlu0 %v5458, 32
    %v5556 = vpop.permute.xlu0 %5555
    %5557 = vrot.lane.b32.xlu0 %v5459, 32
    %v5558 = vpop.permute.xlu0 %5557
    %5559 = vrot.lane.b32.xlu0 %v5460, 32
    %v5560 = vpop.permute.xlu0 %5559
    %5561 = vrot.lane.b32.xlu0 %v5461, 32
    %v5562 = vpop.permute.xlu0 %5561
    %5563 = vrot.lane.b32.xlu0 %v5462, 32
    %v5564 = vpop.permute.xlu0 %5563
    %5565 = vrot.lane.b32.xlu0 %v5463, 32
    %v5566 = vpop.permute.xlu0 %5565
    %5567 = vrot.lane.b32.xlu0 %v5464, 32
    %v5568 = vpop.permute.xlu0 %5567
    %5569 = vrot.lane.b32.xlu0 %v5465, 32
    %v5570 = vpop.permute.xlu0 %5569
    %5571 = vrot.lane.b32.xlu0 %v5466, 32
    %v5572 = vpop.permute.xlu0 %5571
    %5573 = vrot.lane.b32.xlu0 %v5467, 32
    %v5574 = vpop.permute.xlu0 %5573
    %5575 = vrot.lane.b32.xlu0 %v5468, 32
    %v5576 = vpop.permute.xlu0 %5575
    %5577 = vrot.lane.b32.xlu0 %v5469, 32
    %v5578 = vpop.permute.xlu0 %5577
    %5579 = vrot.lane.b32.xlu0 %v5470, 32
    %v5580 = vpop.permute.xlu0 %5579
    %5581 = vrot.lane.b32.xlu0 %v5471, 32
    %v5582 = vpop.permute.xlu0 %5581
    %5583 = vrot.lane.b32.xlu0 %v5472, 32
    %v5584 = vpop.permute.xlu0 %5583
    %5585 = vrot.lane.b32.xlu0 %v5473, 32
    %v5586 = vpop.permute.xlu0 %5585
    %v5588 = vsel %vm3739, %v5556, 0
    %v5591 = vsel %vm3739, %v5558, 0
    %v5594 = vsel %vm3739, %v5560, 0
    %v5597 = vsel %vm3739, %v5562, 0
    %v5600 = vsel %vm3739, %v5564, 0
    %v5603 = vsel %vm3739, %v5566, 0
    %v5606 = vsel %vm3739, %v5568, 0
    %v5609 = vsel %vm3739, %v5570, 0
    %v5612 = vsel %vm3739, %v5572, 0
    %v5615 = vsel %vm3739, %v5574, 0
    %v5618 = vsel %vm3739, %v5576, 0
    %v5621 = vsel %vm3739, %v5578, 0
    %v5624 = vsel %vm3739, %v5580, 0
    %v5627 = vsel %vm3739, %v5582, 0
    %v5630 = vsel %vm3739, %v5584, 0
    %v5633 = vsel %vm3739, %v5586, 0
    %5635 = vmatprep.subr.bf16.mxu0 0
    %5636 = vmatpush1.bf16.msra.mxu0 0
    %5637 = vmatprep.subr.bf16.mxu0 0
    %5638 = vmatpush1.bf16.msra.mxu0 0
    %5639 = vmatprep.subr.bf16.mxu0 0
    %5640 = vmatpush1.bf16.msra.mxu0 0
    %5641 = vmatprep.subr.bf16.mxu0 0
    %5642 = vmatpush1.bf16.msra.mxu0 0
    %5643 = vmatprep.subr.bf16.mxu0 0
    %5644 = vmatpush1.bf16.msra.mxu0 0
    %5645 = vmatprep.subr.bf16.mxu0 0
    %5646 = vmatpush1.bf16.msra.mxu0 0
    %5647 = vmatprep.subr.bf16.mxu0 0
    %5648 = vmatpush1.bf16.msra.mxu0 %v3736
    %5649 = vmatprep.subr.bf16.mxu0 0
    %5650 = vmatpush1.bf16.msra.mxu0 %v3735
    %5651 = vmatprep.subr.bf16.mxu0 0
    %5652 = vmatpush2.bf16.msra.mxu0 0
    %5653 = vmatprep.subr.bf16.mxu0 0
    %5654 = vmatpush2.bf16.msra.mxu0 0
    %5655 = vmatprep.subr.bf16.mxu0 0
    %5656 = vmatpush2.bf16.msra.mxu0 0
    %5657 = vmatprep.subr.bf16.mxu0 0
    %5658 = vmatpush2.bf16.msra.mxu0 0
    %5659 = vmatprep.subr.bf16.mxu0 0
    %5660 = vmatpush2.bf16.msra.mxu0 0
    %5661 = vmatprep.subr.bf16.mxu0 0
    %5662 = vmatpush2.bf16.msra.mxu0 0
    %5663 = vmatprep.subr.bf16.mxu0 0
    %5664 = vmatpush2.bf16.msra.mxu0 0
    %5665 = vmatprep.subr.bf16.mxu0 0
    %5666 = vmatpush2.bf16.msra.mxu0 0
    %5667 = vmatprep.mubr.bf16.mxu0 0
    %5668 = vmatmul.mubr.bf16.gmra.mxu0 %v5588
    %v5669 = vpop.f32.mrf.mxu0
    %v5670 = vadd.f32 0.0, %v5669
    %v5671 = vpop.f32.mrf.mxu0
    %v5672 = vpop.f32.mrf.mxu0
    %v5673 = vadd.f32 0.0, %v5672
    %v5674 = vpop.f32.mrf.mxu0
    %5675 = vmatprep.mubr.bf16.mxu0 0
    %5676 = vmatmul.mubr.bf16.gmra.mxu0 %v5591
    %v5677 = vpop.f32.mrf.mxu0
    %v5678 = vadd.f32 0.0, %v5677
    %v5679 = vpop.f32.mrf.mxu0
    %v5680 = vpop.f32.mrf.mxu0
    %v5681 = vadd.f32 0.0, %v5680
    %v5682 = vpop.f32.mrf.mxu0
    %5683 = vmatprep.mubr.bf16.mxu0 0
    %5684 = vmatmul.mubr.bf16.gmra.mxu0 %v5594
    %v5685 = vpop.f32.mrf.mxu0
    %v5686 = vadd.f32 0.0, %v5685
    %v5687 = vpop.f32.mrf.mxu0
    %v5688 = vpop.f32.mrf.mxu0
    %v5689 = vadd.f32 0.0, %v5688
    %v5690 = vpop.f32.mrf.mxu0
    %5691 = vmatprep.mubr.bf16.mxu0 0
    %5692 = vmatmul.mubr.bf16.gmra.mxu0 %v5597
    %v5693 = vpop.f32.mrf.mxu0
    %v5694 = vadd.f32 0.0, %v5693
    %v5695 = vpop.f32.mrf.mxu0
    %v5696 = vpop.f32.mrf.mxu0
    %v5697 = vadd.f32 0.0, %v5696
    %v5698 = vpop.f32.mrf.mxu0
    %5699 = vmatprep.mubr.bf16.mxu0 0
    %5700 = vmatmul.mubr.bf16.gmra.mxu0 %v5600
    %v5701 = vpop.f32.mrf.mxu0
    %v5702 = vadd.f32 0.0, %v5701
    %v5703 = vpop.f32.mrf.mxu0
    %v5704 = vpop.f32.mrf.mxu0
    %v5705 = vadd.f32 0.0, %v5704
    %v5706 = vpop.f32.mrf.mxu0
    %5707 = vmatprep.mubr.bf16.mxu0 0
    %5708 = vmatmul.mubr.bf16.gmra.mxu0 %v5603
    %v5709 = vpop.f32.mrf.mxu0
    %v5710 = vadd.f32 0.0, %v5709
    %v5711 = vpop.f32.mrf.mxu0
    %v5712 = vpop.f32.mrf.mxu0
    %v5713 = vadd.f32 0.0, %v5712
    %v5714 = vpop.f32.mrf.mxu0
    %5715 = vmatprep.mubr.bf16.mxu0 0
    %5716 = vmatmul.mubr.bf16.gmra.mxu0 %v5606
    %v5717 = vpop.f32.mrf.mxu0
    %v5718 = vadd.f32 0.0, %v5717
    %v5719 = vpop.f32.mrf.mxu0
    %v5720 = vpop.f32.mrf.mxu0
    %v5721 = vadd.f32 0.0, %v5720
    %v5722 = vpop.f32.mrf.mxu0
    %5723 = vmatprep.mubr.bf16.mxu0 0
    %5724 = vmatmul.mubr.bf16.gmra.mxu0 %v5609
    %v5725 = vpop.f32.mrf.mxu0
    %v5726 = vadd.f32 0.0, %v5725
    %v5727 = vpop.f32.mrf.mxu0
    %v5728 = vpop.f32.mrf.mxu0
    %v5729 = vadd.f32 0.0, %v5728
    %v5730 = vpop.f32.mrf.mxu0
    %5731 = vmatprep.mubr.bf16.mxu0 0
    %5732 = vmatmul.mubr.bf16.gmra.mxu0 %v5612
    %v5733 = vpop.f32.mrf.mxu0
    %v5734 = vadd.f32 0.0, %v5733
    %v5735 = vpop.f32.mrf.mxu0
    %v5736 = vpop.f32.mrf.mxu0
    %v5737 = vadd.f32 0.0, %v5736
    %v5738 = vpop.f32.mrf.mxu0
    %5739 = vmatprep.mubr.bf16.mxu0 0
    %5740 = vmatmul.mubr.bf16.gmra.mxu0 %v5615
    %v5741 = vpop.f32.mrf.mxu0
    %v5742 = vadd.f32 0.0, %v5741
    %v5743 = vpop.f32.mrf.mxu0
    %v5744 = vpop.f32.mrf.mxu0
    %v5745 = vadd.f32 0.0, %v5744
    %v5746 = vpop.f32.mrf.mxu0
    %5747 = vmatprep.mubr.bf16.mxu0 0
    %5748 = vmatmul.mubr.bf16.gmra.mxu0 %v5618
    %v5749 = vpop.f32.mrf.mxu0
    %v5750 = vadd.f32 0.0, %v5749
    %v5751 = vpop.f32.mrf.mxu0
    %v5752 = vpop.f32.mrf.mxu0
    %v5753 = vadd.f32 0.0, %v5752
    %v5754 = vpop.f32.mrf.mxu0
    %5755 = vmatprep.mubr.bf16.mxu0 0
    %5756 = vmatmul.mubr.bf16.gmra.mxu0 %v5621
    %v5757 = vpop.f32.mrf.mxu0
    %v5758 = vadd.f32 0.0, %v5757
    %v5759 = vpop.f32.mrf.mxu0
    %v5760 = vpop.f32.mrf.mxu0
    %v5761 = vadd.f32 0.0, %v5760
    %v5762 = vpop.f32.mrf.mxu0
    %5763 = vmatprep.mubr.bf16.mxu0 0
    %5764 = vmatmul.mubr.bf16.gmra.mxu0 %v5624
    %v5765 = vpop.f32.mrf.mxu0
    %v5766 = vadd.f32 0.0, %v5765
    %v5767 = vpop.f32.mrf.mxu0
    %v5768 = vpop.f32.mrf.mxu0
    %v5769 = vadd.f32 0.0, %v5768
    %v5770 = vpop.f32.mrf.mxu0
    %5771 = vmatprep.mubr.bf16.mxu0 0
    %5772 = vmatmul.mubr.bf16.gmra.mxu0 %v5627
    %v5773 = vpop.f32.mrf.mxu0
    %v5774 = vadd.f32 0.0, %v5773
    %v5775 = vpop.f32.mrf.mxu0
    %v5776 = vpop.f32.mrf.mxu0
    %v5777 = vadd.f32 0.0, %v5776
    %v5778 = vpop.f32.mrf.mxu0
    %5779 = vmatprep.mubr.bf16.mxu0 0
    %5780 = vmatmul.mubr.bf16.gmra.mxu0 %v5630
    %v5781 = vpop.f32.mrf.mxu0
    %v5782 = vadd.f32 0.0, %v5781
    %v5783 = vpop.f32.mrf.mxu0
    %v5784 = vpop.f32.mrf.mxu0
    %v5785 = vadd.f32 0.0, %v5784
    %v5786 = vpop.f32.mrf.mxu0
    %5787 = vmatprep.mubr.bf16.mxu0 0
    %5788 = vmatmul.mubr.bf16.gmra.mxu0 %v5633
    %v5789 = vpop.f32.mrf.mxu0
    %v5790 = vadd.f32 0.0, %v5789
    %v5791 = vpop.f32.mrf.mxu0
    %v5792 = vpop.f32.mrf.mxu0
    %v5793 = vadd.f32 0.0, %v5792
    %v5794 = vpop.f32.mrf.mxu0
    %5795 = vdwg.mxu0
    %v5796 = vadd.f32 %v5507, %v5670
    %v5797 = vadd.f32 %v5508, %v5673
    %v5798 = vadd.f32 %v5509, %v5678
    %v5799 = vadd.f32 %v5510, %v5681
    %v5800 = vadd.f32 %v5511, %v5686
    %v5801 = vadd.f32 %v5512, %v5689
    %v5802 = vadd.f32 %v5513, %v5694
    %v5803 = vadd.f32 %v5514, %v5697
    %v5804 = vadd.f32 %v5515, %v5702
    %v5805 = vadd.f32 %v5516, %v5705
    %v5806 = vadd.f32 %v5517, %v5710
    %v5807 = vadd.f32 %v5518, %v5713
    %v5808 = vadd.f32 %v5519, %v5718
    %v5809 = vadd.f32 %v5520, %v5721
    %v5810 = vadd.f32 %v5521, %v5726
    %v5811 = vadd.f32 %v5522, %v5729
    %v5812 = vadd.f32 %v5523, %v5734
    %v5813 = vadd.f32 %v5524, %v5737
    %v5814 = vadd.f32 %v5525, %v5742
    %v5815 = vadd.f32 %v5526, %v5745
    %v5816 = vadd.f32 %v5527, %v5750
    %v5817 = vadd.f32 %v5528, %v5753
    %v5818 = vadd.f32 %v5529, %v5758
    %v5819 = vadd.f32 %v5530, %v5761
    %v5820 = vadd.f32 %v5531, %v5766
    %v5821 = vadd.f32 %v5532, %v5769
    %v5822 = vadd.f32 %v5533, %v5774
    %v5823 = vadd.f32 %v5534, %v5777
    %v5824 = vadd.f32 %v5535, %v5782
    %v5825 = vadd.f32 %v5536, %v5785
    %v5826 = vadd.f32 %v5537, %v5790
    %v5827 = vadd.f32 %v5538, %v5793
    %v5828 = vpack.c.bf16 %v5797, %v5796
    %v5829 = vpack.c.bf16 %v5799, %v5798
    %v5830 = vpack.c.bf16 %v5801, %v5800
    %v5831 = vpack.c.bf16 %v5803, %v5802
    %v5832 = vpack.c.bf16 %v5805, %v5804
    %v5833 = vpack.c.bf16 %v5807, %v5806
    %v5834 = vpack.c.bf16 %v5809, %v5808
    %v5835 = vpack.c.bf16 %v5811, %v5810
    %v5836 = vpack.c.bf16 %v5813, %v5812
    %v5837 = vpack.c.bf16 %v5815, %v5814
    %v5838 = vpack.c.bf16 %v5817, %v5816
    %v5839 = vpack.c.bf16 %v5819, %v5818
    %v5840 = vpack.c.bf16 %v5821, %v5820
    %v5841 = vpack.c.bf16 %v5823, %v5822
    %v5842 = vpack.c.bf16 %v5825, %v5824
    %v5843 = vpack.c.bf16 %v5827, %v5826
    %v5844 = vxor.u32 %v5828, 2147516416
    %v5845 = vxor.u32 %v5829, 2147516416
    %v5846 = vxor.u32 %v5830, 2147516416
    %v5847 = vxor.u32 %v5831, 2147516416
    %v5848 = vxor.u32 %v5832, 2147516416
    %v5849 = vxor.u32 %v5833, 2147516416
    %v5850 = vxor.u32 %v5834, 2147516416
    %v5851 = vxor.u32 %v5835, 2147516416
    %v5852 = vxor.u32 %v5836, 2147516416
    %v5853 = vxor.u32 %v5837, 2147516416
    %v5854 = vxor.u32 %v5838, 2147516416
    %v5855 = vxor.u32 %v5839, 2147516416
    %v5856 = vxor.u32 %v5840, 2147516416
    %v5857 = vxor.u32 %v5841, 2147516416
    %v5858 = vxor.u32 %v5842, 2147516416
    %v5859 = vxor.u32 %v5843, 2147516416
    %v5861 = vmul.bf16 %v5844, 1069105081
    %v5862 = vpow.bf16.pop %v5861
    %v5864 = vmul.bf16 %v5845, 1069105081
    %v5865 = vpow.bf16.pop %v5864
    %v5867 = vmul.bf16 %v5846, 1069105081
    %v5868 = vpow.bf16.pop %v5867
    %v5870 = vmul.bf16 %v5847, 1069105081
    %v5871 = vpow.bf16.pop %v5870
    %v5873 = vmul.bf16 %v5848, 1069105081
    %v5874 = vpow.bf16.pop %v5873
    %v5876 = vmul.bf16 %v5849, 1069105081
    %v5877 = vpow.bf16.pop %v5876
    %v5879 = vmul.bf16 %v5850, 1069105081
    %v5880 = vpow.bf16.pop %v5879
    %v5882 = vmul.bf16 %v5851, 1069105081
    %v5883 = vpow.bf16.pop %v5882
    %v5885 = vmul.bf16 %v5852, 1069105081
    %v5886 = vpow.bf16.pop %v5885
    %v5888 = vmul.bf16 %v5853, 1069105081
    %v5889 = vpow.bf16.pop %v5888
    %v5891 = vmul.bf16 %v5854, 1069105081
    %v5892 = vpow.bf16.pop %v5891
    %v5894 = vmul.bf16 %v5855, 1069105081
    %v5895 = vpow.bf16.pop %v5894
    %v5897 = vmul.bf16 %v5856, 1069105081
    %v5898 = vpow.bf16.pop %v5897
    %v5900 = vmul.bf16 %v5857, 1069105081
    %v5901 = vpow.bf16.pop %v5900
    %v5903 = vmul.bf16 %v5858, 1069105081
    %v5904 = vpow.bf16.pop %v5903
    %v5906 = vmul.bf16 %v5859, 1069105081
    %v5907 = vpow.bf16.pop %v5906
    %v5908 = vadd.bf16 %v5862, 1065369472
    %v5909 = vadd.bf16 %v5865, 1065369472
    %v5910 = vadd.bf16 %v5868, 1065369472
    %v5911 = vadd.bf16 %v5871, 1065369472
    %v5912 = vadd.bf16 %v5874, 1065369472
    %v5913 = vadd.bf16 %v5877, 1065369472
    %v5914 = vadd.bf16 %v5880, 1065369472
    %v5915 = vadd.bf16 %v5883, 1065369472
    %v5916 = vadd.bf16 %v5886, 1065369472
    %v5917 = vadd.bf16 %v5889, 1065369472
    %v5918 = vadd.bf16 %v5892, 1065369472
    %v5919 = vadd.bf16 %v5895, 1065369472
    %v5920 = vadd.bf16 %v5898, 1065369472
    %v5921 = vadd.bf16 %v5901, 1065369472
    %v5922 = vadd.bf16 %v5904, 1065369472
    %v5923 = vadd.bf16 %v5907, 1065369472
    %v5924 = vrcp.bf16.pop %v5908
    %v5925 = vmul.bf16 1065369472, %v5924
    %v5926 = vrcp.bf16.pop %v5909
    %v5927 = vmul.bf16 1065369472, %v5926
    %v5928 = vrcp.bf16.pop %v5910
    %v5929 = vmul.bf16 1065369472, %v5928
    %v5930 = vrcp.bf16.pop %v5911
    %v5931 = vmul.bf16 1065369472, %v5930
    %v5932 = vrcp.bf16.pop %v5912
    %v5933 = vmul.bf16 1065369472, %v5932
    %v5934 = vrcp.bf16.pop %v5913
    %v5935 = vmul.bf16 1065369472, %v5934
    %v5936 = vrcp.bf16.pop %v5914
    %v5937 = vmul.bf16 1065369472, %v5936
    %v5938 = vrcp.bf16.pop %v5915
    %v5939 = vmul.bf16 1065369472, %v5938
    %v5940 = vrcp.bf16.pop %v5916
    %v5941 = vmul.bf16 1065369472, %v5940
    %v5942 = vrcp.bf16.pop %v5917
    %v5943 = vmul.bf16 1065369472, %v5942
    %v5944 = vrcp.bf16.pop %v5918
    %v5945 = vmul.bf16 1065369472, %v5944
    %v5946 = vrcp.bf16.pop %v5919
    %v5947 = vmul.bf16 1065369472, %v5946
    %v5948 = vrcp.bf16.pop %v5920
    %v5949 = vmul.bf16 1065369472, %v5948
    %v5950 = vrcp.bf16.pop %v5921
    %v5951 = vmul.bf16 1065369472, %v5950
    %v5952 = vrcp.bf16.pop %v5922
    %v5953 = vmul.bf16 1065369472, %v5952
    %v5954 = vrcp.bf16.pop %v5923
    %v5955 = vmul.bf16 1065369472, %v5954
    %v5956 = vtanh.bf16.pop %v5828
    %v5957 = vtanh.bf16.pop %v5829
    %v5958 = vtanh.bf16.pop %v5830
    %v5959 = vtanh.bf16.pop %v5831
    %v5960 = vtanh.bf16.pop %v5832
    %v5961 = vtanh.bf16.pop %v5833
    %v5962 = vtanh.bf16.pop %v5834
    %v5963 = vtanh.bf16.pop %v5835
    %v5964 = vtanh.bf16.pop %v5836
    %v5965 = vtanh.bf16.pop %v5837
    %v5966 = vtanh.bf16.pop %v5838
    %v5967 = vtanh.bf16.pop %v5839
    %v5968 = vtanh.bf16.pop %v5840
    %v5969 = vtanh.bf16.pop %v5841
    %v5970 = vtanh.bf16.pop %v5842
    %v5971 = vtanh.bf16.pop %v5843
    %v5972 = vunpack.c.l.bf16 %v5925
    %v5973 = vunpack.c.h.bf16 %v5925
    %v5974 = vunpack.c.l.bf16 %v5927
    %v5975 = vunpack.c.h.bf16 %v5927
    %v5976 = vunpack.c.l.bf16 %v5929
    %v5977 = vunpack.c.h.bf16 %v5929
    %v5978 = vunpack.c.l.bf16 %v5931
    %v5979 = vunpack.c.h.bf16 %v5931
    %v5980 = vunpack.c.l.bf16 %v5933
    %v5981 = vunpack.c.h.bf16 %v5933
    %v5982 = vunpack.c.l.bf16 %v5935
    %v5983 = vunpack.c.h.bf16 %v5935
    %v5984 = vunpack.c.l.bf16 %v5937
    %v5985 = vunpack.c.h.bf16 %v5937
    %v5986 = vunpack.c.l.bf16 %v5939
    %v5987 = vunpack.c.h.bf16 %v5939
    %v5988 = vunpack.c.l.bf16 %v5941
    %v5989 = vunpack.c.h.bf16 %v5941
    %v5990 = vunpack.c.l.bf16 %v5943
    %v5991 = vunpack.c.h.bf16 %v5943
    %v5992 = vunpack.c.l.bf16 %v5945
    %v5993 = vunpack.c.h.bf16 %v5945
    %v5994 = vunpack.c.l.bf16 %v5947
    %v5995 = vunpack.c.h.bf16 %v5947
    %v5996 = vunpack.c.l.bf16 %v5949
    %v5997 = vunpack.c.h.bf16 %v5949
    %v5998 = vunpack.c.l.bf16 %v5951
    %v5999 = vunpack.c.h.bf16 %v5951
    %v6000 = vunpack.c.l.bf16 %v5953
    %v6001 = vunpack.c.h.bf16 %v5953
    %v6002 = vunpack.c.l.bf16 %v5955
    %v6003 = vunpack.c.h.bf16 %v5955
    %v6004 = vmul.f32 %v5972, %v5330
    %v6005 = vmul.f32 %v5973, %v5331
    %v6006 = vmul.f32 %v5974, %v5332
    %v6007 = vmul.f32 %v5975, %v5333
    %v6008 = vmul.f32 %v5976, %v5334
    %v6009 = vmul.f32 %v5977, %v5335
    %v6010 = vmul.f32 %v5978, %v5336
    %v6011 = vmul.f32 %v5979, %v5337
    %v6012 = vmul.f32 %v5980, %v5338
    %v6013 = vmul.f32 %v5981, %v5339
    %v6014 = vmul.f32 %v5982, %v5340
    %v6015 = vmul.f32 %v5983, %v5341
    %v6016 = vmul.f32 %v5984, %v5342
    %v6017 = vmul.f32 %v5985, %v5343
    %v6018 = vmul.f32 %v5986, %v5344
    %v6019 = vmul.f32 %v5987, %v5345
    %v6020 = vmul.f32 %v5988, %v5346
    %v6021 = vmul.f32 %v5989, %v5347
    %v6022 = vmul.f32 %v5990, %v5348
    %v6023 = vmul.f32 %v5991, %v5349
    %v6024 = vmul.f32 %v5992, %v5350
    %v6025 = vmul.f32 %v5993, %v5351
    %v6026 = vmul.f32 %v5994, %v5352
    %v6027 = vmul.f32 %v5995, %v5353
    %v6028 = vmul.f32 %v5996, %v5354
    %v6029 = vmul.f32 %v5997, %v5355
    %v6030 = vmul.f32 %v5998, %v5356
    %v6031 = vmul.f32 %v5999, %v5357
    %v6032 = vmul.f32 %v6000, %v5358
    %v6033 = vmul.f32 %v6001, %v5359
    %v6034 = vmul.f32 %v6002, %v5360
    %v6035 = vmul.f32 %v6003, %v5361
    %6052 = vrot.lane.b32.xlu0 %v5956, 64
    %v6053 = vpop.permute.xlu0 %6052
    %6054 = vrot.lane.b32.xlu0 %v5957, 64
    %v6055 = vpop.permute.xlu0 %6054
    %6056 = vrot.lane.b32.xlu0 %v5958, 64
    %v6057 = vpop.permute.xlu0 %6056
    %6058 = vrot.lane.b32.xlu0 %v5959, 64
    %v6059 = vpop.permute.xlu0 %6058
    %6060 = vrot.lane.b32.xlu0 %v5960, 64
    %v6061 = vpop.permute.xlu0 %6060
    %6062 = vrot.lane.b32.xlu0 %v5961, 64
    %v6063 = vpop.permute.xlu0 %6062
    %6064 = vrot.lane.b32.xlu0 %v5962, 64
    %v6065 = vpop.permute.xlu0 %6064
    %6066 = vrot.lane.b32.xlu0 %v5963, 64
    %v6067 = vpop.permute.xlu0 %6066
    %6068 = vrot.lane.b32.xlu0 %v5964, 64
    %v6069 = vpop.permute.xlu0 %6068
    %6070 = vrot.lane.b32.xlu0 %v5965, 64
    %v6071 = vpop.permute.xlu0 %6070
    %6072 = vrot.lane.b32.xlu0 %v5966, 64
    %v6073 = vpop.permute.xlu0 %6072
    %6074 = vrot.lane.b32.xlu0 %v5967, 64
    %v6075 = vpop.permute.xlu0 %6074
    %6076 = vrot.lane.b32.xlu0 %v5968, 64
    %v6077 = vpop.permute.xlu0 %6076
    %6078 = vrot.lane.b32.xlu0 %v5969, 64
    %v6079 = vpop.permute.xlu0 %6078
    %6080 = vrot.lane.b32.xlu0 %v5970, 64
    %v6081 = vpop.permute.xlu0 %6080
    %6082 = vrot.lane.b32.xlu0 %v5971, 64
    %v6083 = vpop.permute.xlu0 %6082
    %v6100 = vmul.bf16 %v5925, %v6053
    %v6101 = vmul.bf16 %v5927, %v6055
    %v6102 = vmul.bf16 %v5929, %v6057
    %v6103 = vmul.bf16 %v5931, %v6059
    %v6104 = vmul.bf16 %v5933, %v6061
    %v6105 = vmul.bf16 %v5935, %v6063
    %v6106 = vmul.bf16 %v5937, %v6065
    %v6107 = vmul.bf16 %v5939, %v6067
    %v6108 = vmul.bf16 %v5941, %v6069
    %v6109 = vmul.bf16 %v5943, %v6071
    %v6110 = vmul.bf16 %v5945, %v6073
    %v6111 = vmul.bf16 %v5947, %v6075
    %v6112 = vmul.bf16 %v5949, %v6077
    %v6113 = vmul.bf16 %v5951, %v6079
    %v6114 = vmul.bf16 %v5953, %v6081
    %v6115 = vmul.bf16 %v5955, %v6083
    %v6116 = vunpack.c.l.bf16 %v6100
    %v6117 = vunpack.c.h.bf16 %v6100
    %v6118 = vunpack.c.l.bf16 %v6101
    %v6119 = vunpack.c.h.bf16 %v6101
    %v6120 = vunpack.c.l.bf16 %v6102
    %v6121 = vunpack.c.h.bf16 %v6102
    %v6122 = vunpack.c.l.bf16 %v6103
    %v6123 = vunpack.c.h.bf16 %v6103
    %v6124 = vunpack.c.l.bf16 %v6104
    %v6125 = vunpack.c.h.bf16 %v6104
    %v6126 = vunpack.c.l.bf16 %v6105
    %v6127 = vunpack.c.h.bf16 %v6105
    %v6128 = vunpack.c.l.bf16 %v6106
    %v6129 = vunpack.c.h.bf16 %v6106
    %v6130 = vunpack.c.l.bf16 %v6107
    %v6131 = vunpack.c.h.bf16 %v6107
    %v6132 = vunpack.c.l.bf16 %v6108
    %v6133 = vunpack.c.h.bf16 %v6108
    %v6134 = vunpack.c.l.bf16 %v6109
    %v6135 = vunpack.c.h.bf16 %v6109
    %v6136 = vunpack.c.l.bf16 %v6110
    %v6137 = vunpack.c.h.bf16 %v6110
    %v6138 = vunpack.c.l.bf16 %v6111
    %v6139 = vunpack.c.h.bf16 %v6111
    %v6140 = vunpack.c.l.bf16 %v6112
    %v6141 = vunpack.c.h.bf16 %v6112
    %v6142 = vunpack.c.l.bf16 %v6113
    %v6143 = vunpack.c.h.bf16 %v6113
    %v6144 = vunpack.c.l.bf16 %v6114
    %v6145 = vunpack.c.h.bf16 %v6114
    %v6146 = vunpack.c.l.bf16 %v6115
    %v6147 = vunpack.c.h.bf16 %v6115
    %6180 = vrot.lane.b32.xlu0 %v6116, 32
    %v6181 = vpop.permute.xlu0 %6180
    %6182 = vrot.lane.b32.xlu0 %v6117, 32
    %v6183 = vpop.permute.xlu0 %6182
    %6184 = vrot.lane.b32.xlu0 %v6118, 32
    %v6185 = vpop.permute.xlu0 %6184
    %6186 = vrot.lane.b32.xlu0 %v6119, 32
    %v6187 = vpop.permute.xlu0 %6186
    %6188 = vrot.lane.b32.xlu0 %v6120, 32
    %v6189 = vpop.permute.xlu0 %6188
    %6190 = vrot.lane.b32.xlu0 %v6121, 32
    %v6191 = vpop.permute.xlu0 %6190
    %6192 = vrot.lane.b32.xlu0 %v6122, 32
    %v6193 = vpop.permute.xlu0 %6192
    %6194 = vrot.lane.b32.xlu0 %v6123, 32
    %v6195 = vpop.permute.xlu0 %6194
    %6196 = vrot.lane.b32.xlu0 %v6124, 32
    %v6197 = vpop.permute.xlu0 %6196
    %6198 = vrot.lane.b32.xlu0 %v6125, 32
    %v6199 = vpop.permute.xlu0 %6198
    %6200 = vrot.lane.b32.xlu0 %v6126, 32
    %v6201 = vpop.permute.xlu0 %6200
    %6202 = vrot.lane.b32.xlu0 %v6127, 32
    %v6203 = vpop.permute.xlu0 %6202
    %6204 = vrot.lane.b32.xlu0 %v6128, 32
    %v6205 = vpop.permute.xlu0 %6204
    %6206 = vrot.lane.b32.xlu0 %v6129, 32
    %v6207 = vpop.permute.xlu0 %6206
    %6208 = vrot.lane.b32.xlu0 %v6130, 32
    %v6209 = vpop.permute.xlu0 %6208
    %6210 = vrot.lane.b32.xlu0 %v6131, 32
    %v6211 = vpop.permute.xlu0 %6210
    %6212 = vrot.lane.b32.xlu0 %v6132, 32
    %v6213 = vpop.permute.xlu0 %6212
    %6214 = vrot.lane.b32.xlu0 %v6133, 32
    %v6215 = vpop.permute.xlu0 %6214
    %6216 = vrot.lane.b32.xlu0 %v6134, 32
    %v6217 = vpop.permute.xlu0 %6216
    %6218 = vrot.lane.b32.xlu0 %v6135, 32
    %v6219 = vpop.permute.xlu0 %6218
    %6220 = vrot.lane.b32.xlu0 %v6136, 32
    %v6221 = vpop.permute.xlu0 %6220
    %6222 = vrot.lane.b32.xlu0 %v6137, 32
    %v6223 = vpop.permute.xlu0 %6222
    %6224 = vrot.lane.b32.xlu0 %v6138, 32
    %v6225 = vpop.permute.xlu0 %6224
    %6226 = vrot.lane.b32.xlu0 %v6139, 32
    %v6227 = vpop.permute.xlu0 %6226
    %6228 = vrot.lane.b32.xlu0 %v6140, 32
    %v6229 = vpop.permute.xlu0 %6228
    %6230 = vrot.lane.b32.xlu0 %v6141, 32
    %v6231 = vpop.permute.xlu0 %6230
    %6232 = vrot.lane.b32.xlu0 %v6142, 32
    %v6233 = vpop.permute.xlu0 %6232
    %6234 = vrot.lane.b32.xlu0 %v6143, 32
    %v6235 = vpop.permute.xlu0 %6234
    %6236 = vrot.lane.b32.xlu0 %v6144, 32
    %v6237 = vpop.permute.xlu0 %6236
    %6238 = vrot.lane.b32.xlu0 %v6145, 32
    %v6239 = vpop.permute.xlu0 %6238
    %6240 = vrot.lane.b32.xlu0 %v6146, 32
    %v6241 = vpop.permute.xlu0 %6240
    %6242 = vrot.lane.b32.xlu0 %v6147, 32
    %v6243 = vpop.permute.xlu0 %6242
    %v6276 = vadd.f32 %v6004, %v6181
    %v6277 = vadd.f32 %v6005, %v6183
    %v6278 = vadd.f32 %v6006, %v6185
    %v6279 = vadd.f32 %v6007, %v6187
    %v6280 = vadd.f32 %v6008, %v6189
    %v6281 = vadd.f32 %v6009, %v6191
    %v6282 = vadd.f32 %v6010, %v6193
    %v6283 = vadd.f32 %v6011, %v6195
    %v6284 = vadd.f32 %v6012, %v6197
    %v6285 = vadd.f32 %v6013, %v6199
    %v6286 = vadd.f32 %v6014, %v6201
    %v6287 = vadd.f32 %v6015, %v6203
    %v6288 = vadd.f32 %v6016, %v6205
    %v6289 = vadd.f32 %v6017, %v6207
    %v6290 = vadd.f32 %v6018, %v6209
    %v6291 = vadd.f32 %v6019, %v6211
    %v6292 = vadd.f32 %v6020, %v6213
    %v6293 = vadd.f32 %v6021, %v6215
    %v6294 = vadd.f32 %v6022, %v6217
    %v6295 = vadd.f32 %v6023, %v6219
    %v6296 = vadd.f32 %v6024, %v6221
    %v6297 = vadd.f32 %v6025, %v6223
    %v6298 = vadd.f32 %v6026, %v6225
    %v6299 = vadd.f32 %v6027, %v6227
    %v6300 = vadd.f32 %v6028, %v6229
    %v6301 = vadd.f32 %v6029, %v6231
    %v6302 = vadd.f32 %v6030, %v6233
    %v6303 = vadd.f32 %v6031, %v6235
    %v6304 = vadd.f32 %v6032, %v6237
    %v6305 = vadd.f32 %v6033, %v6239
    %v6306 = vadd.f32 %v6034, %v6241
    %v6307 = vadd.f32 %v6035, %v6243
    %v6308 = vpack.c.bf16 %v6277, %v6276
    %v6309 = vpack.c.bf16 %v6279, %v6278
    %v6310 = vpack.c.bf16 %v6281, %v6280
    %v6311 = vpack.c.bf16 %v6283, %v6282
    %v6312 = vpack.c.bf16 %v6285, %v6284
    %v6313 = vpack.c.bf16 %v6287, %v6286
    %v6314 = vpack.c.bf16 %v6289, %v6288
    %v6315 = vpack.c.bf16 %v6291, %v6290
    %v6316 = vpack.c.bf16 %v6293, %v6292
    %v6317 = vpack.c.bf16 %v6295, %v6294
    %v6318 = vpack.c.bf16 %v6297, %v6296
    %v6319 = vpack.c.bf16 %v6299, %v6298
    %v6320 = vpack.c.bf16 %v6301, %v6300
    %v6321 = vpack.c.bf16 %v6303, %v6302
    %v6322 = vpack.c.bf16 %v6305, %v6304
    %v6323 = vpack.c.bf16 %v6307, %v6306
    %v6324 = vtanh.bf16.pop %v6308
    %v6325 = vtanh.bf16.pop %v6309
    %v6326 = vtanh.bf16.pop %v6310
    %v6327 = vtanh.bf16.pop %v6311
    %v6328 = vtanh.bf16.pop %v6312
    %v6329 = vtanh.bf16.pop %v6313
    %v6330 = vtanh.bf16.pop %v6314
    %v6331 = vtanh.bf16.pop %v6315
    %v6332 = vtanh.bf16.pop %v6316
    %v6333 = vtanh.bf16.pop %v6317
    %v6334 = vtanh.bf16.pop %v6318
    %v6335 = vtanh.bf16.pop %v6319
    %v6336 = vtanh.bf16.pop %v6320
    %v6337 = vtanh.bf16.pop %v6321
    %v6338 = vtanh.bf16.pop %v6322
    %v6339 = vtanh.bf16.pop %v6323
    %6356 = vrot.lane.b32.xlu0 %v6324, 64
    %v6357 = vpop.permute.xlu0 %6356
    %6358 = vrot.lane.b32.xlu0 %v6325, 64
    %v6359 = vpop.permute.xlu0 %6358
    %6360 = vrot.lane.b32.xlu0 %v6326, 64
    %v6361 = vpop.permute.xlu0 %6360
    %6362 = vrot.lane.b32.xlu0 %v6327, 64
    %v6363 = vpop.permute.xlu0 %6362
    %6364 = vrot.lane.b32.xlu0 %v6328, 64
    %v6365 = vpop.permute.xlu0 %6364
    %6366 = vrot.lane.b32.xlu0 %v6329, 64
    %v6367 = vpop.permute.xlu0 %6366
    %6368 = vrot.lane.b32.xlu0 %v6330, 64
    %v6369 = vpop.permute.xlu0 %6368
    %6370 = vrot.lane.b32.xlu0 %v6331, 64
    %v6371 = vpop.permute.xlu0 %6370
    %6372 = vrot.lane.b32.xlu0 %v6332, 64
    %v6373 = vpop.permute.xlu0 %6372
    %6374 = vrot.lane.b32.xlu0 %v6333, 64
    %v6375 = vpop.permute.xlu0 %6374
    %6376 = vrot.lane.b32.xlu0 %v6334, 64
    %v6377 = vpop.permute.xlu0 %6376
    %6378 = vrot.lane.b32.xlu0 %v6335, 64
    %v6379 = vpop.permute.xlu0 %6378
    %6380 = vrot.lane.b32.xlu0 %v6336, 64
    %v6381 = vpop.permute.xlu0 %6380
    %6382 = vrot.lane.b32.xlu0 %v6337, 64
    %v6383 = vpop.permute.xlu0 %6382
    %6384 = vrot.lane.b32.xlu0 %v6338, 64
    %v6385 = vpop.permute.xlu0 %6384
    %6386 = vrot.lane.b32.xlu0 %v6339, 64
    %v6387 = vpop.permute.xlu0 %6386
    %v6404 = vmul.bf16 %v5925, %v6357
    %v6405 = vmul.bf16 %v5927, %v6359
    %v6406 = vmul.bf16 %v5929, %v6361
    %v6407 = vmul.bf16 %v5931, %v6363
    %v6408 = vmul.bf16 %v5933, %v6365
    %v6409 = vmul.bf16 %v5935, %v6367
    %v6410 = vmul.bf16 %v5937, %v6369
    %v6411 = vmul.bf16 %v5939, %v6371
    %v6412 = vmul.bf16 %v5941, %v6373
    %v6413 = vmul.bf16 %v5943, %v6375
    %v6414 = vmul.bf16 %v5945, %v6377
    %v6415 = vmul.bf16 %v5947, %v6379
    %v6416 = vmul.bf16 %v5949, %v6381
    %v6417 = vmul.bf16 %v5951, %v6383
    %v6418 = vmul.bf16 %v5953, %v6385
    %v6419 = vmul.bf16 %v5955, %v6387
    %s6420 = scalar_lea.vmem [#allocation2], 384
    %v6421 = vld [vmem:[%s6420] sm:$0xf]
    %v6422 = vld [vmem:[%s6420 + $0x4] sm:$0xf]
    %v6423 = vld [vmem:[%s6420 + $0x8] sm:$0xf]
    %v6424 = vld [vmem:[%s6420 + $0xc] sm:$0xf]
    %v6425 = vld [vmem:[%s6420 + $0x10] sm:$0xf]
    %v6426 = vld [vmem:[%s6420 + $0x14] sm:$0xf]
    %v6427 = vld [vmem:[%s6420 + $0x18] sm:$0xf]
    %v6428 = vld [vmem:[%s6420 + $0x1c] sm:$0xf]
    %v6429 = vld [vmem:[%s6420 + $0x20] sm:$0xf]
    %v6430 = vld [vmem:[%s6420 + $0x24] sm:$0xf]
    %v6431 = vld [vmem:[%s6420 + $0x28] sm:$0xf]
    %v6432 = vld [vmem:[%s6420 + $0x2c] sm:$0xf]
    %v6433 = vld [vmem:[%s6420 + $0x30] sm:$0xf]
    %v6434 = vld [vmem:[%s6420 + $0x34] sm:$0xf]
    %v6435 = vld [vmem:[%s6420 + $0x38] sm:$0xf]
    %v6436 = vld [vmem:[%s6420 + $0x3c] sm:$0xf]
    %v6437 = vld [vmem:[%s6420 + $0x40] sm:$0xf]
    %v6438 = vld [vmem:[%s6420 + $0x44] sm:$0xf]
    %v6439 = vld [vmem:[%s6420 + $0x48] sm:$0xf]
    %v6440 = vld [vmem:[%s6420 + $0x4c] sm:$0xf]
    %v6441 = vld [vmem:[%s6420 + $0x50] sm:$0xf]
    %v6442 = vld [vmem:[%s6420 + $0x54] sm:$0xf]
    %v6443 = vld [vmem:[%s6420 + $0x58] sm:$0xf]
    %v6444 = vld [vmem:[%s6420 + $0x5c] sm:$0xf]
    %v6445 = vld [vmem:[%s6420 + $0x60] sm:$0xf]
    %v6446 = vld [vmem:[%s6420 + $0x64] sm:$0xf]
    %v6447 = vld [vmem:[%s6420 + $0x68] sm:$0xf]
    %v6448 = vld [vmem:[%s6420 + $0x6c] sm:$0xf]
    %v6449 = vld [vmem:[%s6420 + $0x70] sm:$0xf]
    %v6450 = vld [vmem:[%s6420 + $0x74] sm:$0xf]
    %v6451 = vld [vmem:[%s6420 + $0x78] sm:$0xf]
    %v6452 = vld [vmem:[%s6420 + $0x7c] sm:$0xf]
    %v6453 = vunpack.c.l.bf16 %v6421
    %v6454 = vunpack.c.l.bf16 %v6422
    %v6455 = vunpack.c.l.bf16 %v6423
    %v6456 = vunpack.c.l.bf16 %v6424
    %v6457 = vunpack.c.l.bf16 %v6425
    %v6458 = vunpack.c.l.bf16 %v6426
    %v6459 = vunpack.c.l.bf16 %v6427
    %v6460 = vunpack.c.l.bf16 %v6428
    %v6461 = vunpack.c.l.bf16 %v6429
    %v6462 = vunpack.c.l.bf16 %v6430
    %v6463 = vunpack.c.l.bf16 %v6431
    %v6464 = vunpack.c.l.bf16 %v6432
    %v6465 = vunpack.c.l.bf16 %v6433
    %v6466 = vunpack.c.l.bf16 %v6434
    %v6467 = vunpack.c.l.bf16 %v6435
    %v6468 = vunpack.c.l.bf16 %v6436
    %v6469 = vunpack.c.l.bf16 %v6437
    %v6470 = vunpack.c.l.bf16 %v6438
    %v6471 = vunpack.c.l.bf16 %v6439
    %v6472 = vunpack.c.l.bf16 %v6440
    %v6473 = vunpack.c.l.bf16 %v6441
    %v6474 = vunpack.c.l.bf16 %v6442
    %v6475 = vunpack.c.l.bf16 %v6443
    %v6476 = vunpack.c.l.bf16 %v6444
    %v6477 = vunpack.c.l.bf16 %v6445
    %v6478 = vunpack.c.l.bf16 %v6446
    %v6479 = vunpack.c.l.bf16 %v6447
    %v6480 = vunpack.c.l.bf16 %v6448
    %v6481 = vunpack.c.l.bf16 %v6449
    %v6482 = vunpack.c.l.bf16 %v6450
    %v6483 = vunpack.c.l.bf16 %v6451
    %v6484 = vunpack.c.l.bf16 %v6452
    %6501 = vrot.lane.b32.xlu0 %v6404, 32
    %v6502 = vpop.permute.xlu0 %6501
    %6503 = vrot.lane.b32.xlu0 %v6405, 32
    %v6504 = vpop.permute.xlu0 %6503
    %6505 = vrot.lane.b32.xlu0 %v6406, 32
    %v6506 = vpop.permute.xlu0 %6505
    %6507 = vrot.lane.b32.xlu0 %v6407, 32
    %v6508 = vpop.permute.xlu0 %6507
    %6509 = vrot.lane.b32.xlu0 %v6408, 32
    %v6510 = vpop.permute.xlu0 %6509
    %6511 = vrot.lane.b32.xlu0 %v6409, 32
    %v6512 = vpop.permute.xlu0 %6511
    %6513 = vrot.lane.b32.xlu0 %v6410, 32
    %v6514 = vpop.permute.xlu0 %6513
    %6515 = vrot.lane.b32.xlu0 %v6411, 32
    %v6516 = vpop.permute.xlu0 %6515
    %6517 = vrot.lane.b32.xlu0 %v6412, 32
    %v6518 = vpop.permute.xlu0 %6517
    %6519 = vrot.lane.b32.xlu0 %v6413, 32
    %v6520 = vpop.permute.xlu0 %6519
    %6521 = vrot.lane.b32.xlu0 %v6414, 32
    %v6522 = vpop.permute.xlu0 %6521
    %6523 = vrot.lane.b32.xlu0 %v6415, 32
    %v6524 = vpop.permute.xlu0 %6523
    %6525 = vrot.lane.b32.xlu0 %v6416, 32
    %v6526 = vpop.permute.xlu0 %6525
    %6527 = vrot.lane.b32.xlu0 %v6417, 32
    %v6528 = vpop.permute.xlu0 %6527
    %6529 = vrot.lane.b32.xlu0 %v6418, 32
    %v6530 = vpop.permute.xlu0 %6529
    %6531 = vrot.lane.b32.xlu0 %v6419, 32
    %v6532 = vpop.permute.xlu0 %6531
    %v6534 = vsel %vm3739, %v6502, 0
    %v6537 = vsel %vm3739, %v6504, 0
    %v6540 = vsel %vm3739, %v6506, 0
    %v6543 = vsel %vm3739, %v6508, 0
    %v6546 = vsel %vm3739, %v6510, 0
    %v6549 = vsel %vm3739, %v6512, 0
    %v6552 = vsel %vm3739, %v6514, 0
    %v6555 = vsel %vm3739, %v6516, 0
    %v6558 = vsel %vm3739, %v6518, 0
    %v6561 = vsel %vm3739, %v6520, 0
    %v6564 = vsel %vm3739, %v6522, 0
    %v6567 = vsel %vm3739, %v6524, 0
    %v6570 = vsel %vm3739, %v6526, 0
    %v6573 = vsel %vm3739, %v6528, 0
    %v6576 = vsel %vm3739, %v6530, 0
    %v6579 = vsel %vm3739, %v6532, 0
    %6581 = vmatprep.subr.bf16.mxu0 0
    %6582 = vmatpush1.bf16.msra.mxu0 0
    %6583 = vmatprep.subr.bf16.mxu0 0
    %6584 = vmatpush1.bf16.msra.mxu0 0
    %6585 = vmatprep.subr.bf16.mxu0 0
    %6586 = vmatpush1.bf16.msra.mxu0 0
    %6587 = vmatprep.subr.bf16.mxu0 0
    %6588 = vmatpush1.bf16.msra.mxu0 0
    %6589 = vmatprep.subr.bf16.mxu0 0
    %6590 = vmatpush1.bf16.msra.mxu0 0
    %6591 = vmatprep.subr.bf16.mxu0 0
    %6592 = vmatpush1.bf16.msra.mxu0 0
    %6593 = vmatprep.subr.bf16.mxu0 0
    %6594 = vmatpush1.bf16.msra.mxu0 %v3736
    %6595 = vmatprep.subr.bf16.mxu0 0
    %6596 = vmatpush1.bf16.msra.mxu0 %v3735
    %6597 = vmatprep.subr.bf16.mxu0 0
    %6598 = vmatpush2.bf16.msra.mxu0 0
    %6599 = vmatprep.subr.bf16.mxu0 0
    %6600 = vmatpush2.bf16.msra.mxu0 0
    %6601 = vmatprep.subr.bf16.mxu0 0
    %6602 = vmatpush2.bf16.msra.mxu0 0
    %6603 = vmatprep.subr.bf16.mxu0 0
    %6604 = vmatpush2.bf16.msra.mxu0 0
    %6605 = vmatprep.subr.bf16.mxu0 0
    %6606 = vmatpush2.bf16.msra.mxu0 0
    %6607 = vmatprep.subr.bf16.mxu0 0
    %6608 = vmatpush2.bf16.msra.mxu0 0
    %6609 = vmatprep.subr.bf16.mxu0 0
    %6610 = vmatpush2.bf16.msra.mxu0 0
    %6611 = vmatprep.subr.bf16.mxu0 0
    %6612 = vmatpush2.bf16.msra.mxu0 0
    %6613 = vmatprep.mubr.bf16.mxu0 0
    %6614 = vmatmul.mubr.bf16.gmra.mxu0 %v6534
    %v6615 = vpop.f32.mrf.mxu0
    %v6616 = vadd.f32 0.0, %v6615
    %v6617 = vpop.f32.mrf.mxu0
    %v6618 = vpop.f32.mrf.mxu0
    %v6619 = vadd.f32 0.0, %v6618
    %v6620 = vpop.f32.mrf.mxu0
    %6621 = vmatprep.mubr.bf16.mxu0 0
    %6622 = vmatmul.mubr.bf16.gmra.mxu0 %v6537
    %v6623 = vpop.f32.mrf.mxu0
    %v6624 = vadd.f32 0.0, %v6623
    %v6625 = vpop.f32.mrf.mxu0
    %v6626 = vpop.f32.mrf.mxu0
    %v6627 = vadd.f32 0.0, %v6626
    %v6628 = vpop.f32.mrf.mxu0
    %6629 = vmatprep.mubr.bf16.mxu0 0
    %6630 = vmatmul.mubr.bf16.gmra.mxu0 %v6540
    %v6631 = vpop.f32.mrf.mxu0
    %v6632 = vadd.f32 0.0, %v6631
    %v6633 = vpop.f32.mrf.mxu0
    %v6634 = vpop.f32.mrf.mxu0
    %v6635 = vadd.f32 0.0, %v6634
    %v6636 = vpop.f32.mrf.mxu0
    %6637 = vmatprep.mubr.bf16.mxu0 0
    %6638 = vmatmul.mubr.bf16.gmra.mxu0 %v6543
    %v6639 = vpop.f32.mrf.mxu0
    %v6640 = vadd.f32 0.0, %v6639
    %v6641 = vpop.f32.mrf.mxu0
    %v6642 = vpop.f32.mrf.mxu0
    %v6643 = vadd.f32 0.0, %v6642
    %v6644 = vpop.f32.mrf.mxu0
    %6645 = vmatprep.mubr.bf16.mxu0 0
    %6646 = vmatmul.mubr.bf16.gmra.mxu0 %v6546
    %v6647 = vpop.f32.mrf.mxu0
    %v6648 = vadd.f32 0.0, %v6647
    %v6649 = vpop.f32.mrf.mxu0
    %v6650 = vpop.f32.mrf.mxu0
    %v6651 = vadd.f32 0.0, %v6650
    %v6652 = vpop.f32.mrf.mxu0
    %6653 = vmatprep.mubr.bf16.mxu0 0
    %6654 = vmatmul.mubr.bf16.gmra.mxu0 %v6549
    %v6655 = vpop.f32.mrf.mxu0
    %v6656 = vadd.f32 0.0, %v6655
    %v6657 = vpop.f32.mrf.mxu0
    %v6658 = vpop.f32.mrf.mxu0
    %v6659 = vadd.f32 0.0, %v6658
    %v6660 = vpop.f32.mrf.mxu0
    %6661 = vmatprep.mubr.bf16.mxu0 0
    %6662 = vmatmul.mubr.bf16.gmra.mxu0 %v6552
    %v6663 = vpop.f32.mrf.mxu0
    %v6664 = vadd.f32 0.0, %v6663
    %v6665 = vpop.f32.mrf.mxu0
    %v6666 = vpop.f32.mrf.mxu0
    %v6667 = vadd.f32 0.0, %v6666
    %v6668 = vpop.f32.mrf.mxu0
    %6669 = vmatprep.mubr.bf16.mxu0 0
    %6670 = vmatmul.mubr.bf16.gmra.mxu0 %v6555
    %v6671 = vpop.f32.mrf.mxu0
    %v6672 = vadd.f32 0.0, %v6671
    %v6673 = vpop.f32.mrf.mxu0
    %v6674 = vpop.f32.mrf.mxu0
    %v6675 = vadd.f32 0.0, %v6674
    %v6676 = vpop.f32.mrf.mxu0
    %6677 = vmatprep.mubr.bf16.mxu0 0
    %6678 = vmatmul.mubr.bf16.gmra.mxu0 %v6558
    %v6679 = vpop.f32.mrf.mxu0
    %v6680 = vadd.f32 0.0, %v6679
    %v6681 = vpop.f32.mrf.mxu0
    %v6682 = vpop.f32.mrf.mxu0
    %v6683 = vadd.f32 0.0, %v6682
    %v6684 = vpop.f32.mrf.mxu0
    %6685 = vmatprep.mubr.bf16.mxu0 0
    %6686 = vmatmul.mubr.bf16.gmra.mxu0 %v6561
    %v6687 = vpop.f32.mrf.mxu0
    %v6688 = vadd.f32 0.0, %v6687
    %v6689 = vpop.f32.mrf.mxu0
    %v6690 = vpop.f32.mrf.mxu0
    %v6691 = vadd.f32 0.0, %v6690
    %v6692 = vpop.f32.mrf.mxu0
    %6693 = vmatprep.mubr.bf16.mxu0 0
    %6694 = vmatmul.mubr.bf16.gmra.mxu0 %v6564
    %v6695 = vpop.f32.mrf.mxu0
    %v6696 = vadd.f32 0.0, %v6695
    %v6697 = vpop.f32.mrf.mxu0
    %v6698 = vpop.f32.mrf.mxu0
    %v6699 = vadd.f32 0.0, %v6698
    %v6700 = vpop.f32.mrf.mxu0
    %6701 = vmatprep.mubr.bf16.mxu0 0
    %6702 = vmatmul.mubr.bf16.gmra.mxu0 %v6567
    %v6703 = vpop.f32.mrf.mxu0
    %v6704 = vadd.f32 0.0, %v6703
    %v6705 = vpop.f32.mrf.mxu0
    %v6706 = vpop.f32.mrf.mxu0
    %v6707 = vadd.f32 0.0, %v6706
    %v6708 = vpop.f32.mrf.mxu0
    %6709 = vmatprep.mubr.bf16.mxu0 0
    %6710 = vmatmul.mubr.bf16.gmra.mxu0 %v6570
    %v6711 = vpop.f32.mrf.mxu0
    %v6712 = vadd.f32 0.0, %v6711
    %v6713 = vpop.f32.mrf.mxu0
    %v6714 = vpop.f32.mrf.mxu0
    %v6715 = vadd.f32 0.0, %v6714
    %v6716 = vpop.f32.mrf.mxu0
    %6717 = vmatprep.mubr.bf16.mxu0 0
    %6718 = vmatmul.mubr.bf16.gmra.mxu0 %v6573
    %v6719 = vpop.f32.mrf.mxu0
    %v6720 = vadd.f32 0.0, %v6719
    %v6721 = vpop.f32.mrf.mxu0
    %v6722 = vpop.f32.mrf.mxu0
    %v6723 = vadd.f32 0.0, %v6722
    %v6724 = vpop.f32.mrf.mxu0
    %6725 = vmatprep.mubr.bf16.mxu0 0
    %6726 = vmatmul.mubr.bf16.gmra.mxu0 %v6576
    %v6727 = vpop.f32.mrf.mxu0
    %v6728 = vadd.f32 0.0, %v6727
    %v6729 = vpop.f32.mrf.mxu0
    %v6730 = vpop.f32.mrf.mxu0
    %v6731 = vadd.f32 0.0, %v6730
    %v6732 = vpop.f32.mrf.mxu0
    %6733 = vmatprep.mubr.bf16.mxu0 0
    %6734 = vmatmul.mubr.bf16.gmra.mxu0 %v6579
    %v6735 = vpop.f32.mrf.mxu0
    %v6736 = vadd.f32 0.0, %v6735
    %v6737 = vpop.f32.mrf.mxu0
    %v6738 = vpop.f32.mrf.mxu0
    %v6739 = vadd.f32 0.0, %v6738
    %v6740 = vpop.f32.mrf.mxu0
    %6741 = vdwg.mxu0
    %v6742 = vadd.f32 %v6453, %v6616
    %v6743 = vadd.f32 %v6454, %v6619
    %v6744 = vadd.f32 %v6455, %v6624
    %v6745 = vadd.f32 %v6456, %v6627
    %v6746 = vadd.f32 %v6457, %v6632
    %v6747 = vadd.f32 %v6458, %v6635
    %v6748 = vadd.f32 %v6459, %v6640
    %v6749 = vadd.f32 %v6460, %v6643
    %v6750 = vadd.f32 %v6461, %v6648
    %v6751 = vadd.f32 %v6462, %v6651
    %v6752 = vadd.f32 %v6463, %v6656
    %v6753 = vadd.f32 %v6464, %v6659
    %v6754 = vadd.f32 %v6465, %v6664
    %v6755 = vadd.f32 %v6466, %v6667
    %v6756 = vadd.f32 %v6467, %v6672
    %v6757 = vadd.f32 %v6468, %v6675
    %v6758 = vadd.f32 %v6469, %v6680
    %v6759 = vadd.f32 %v6470, %v6683
    %v6760 = vadd.f32 %v6471, %v6688
    %v6761 = vadd.f32 %v6472, %v6691
    %v6762 = vadd.f32 %v6473, %v6696
    %v6763 = vadd.f32 %v6474, %v6699
    %v6764 = vadd.f32 %v6475, %v6704
    %v6765 = vadd.f32 %v6476, %v6707
    %v6766 = vadd.f32 %v6477, %v6712
    %v6767 = vadd.f32 %v6478, %v6715
    %v6768 = vadd.f32 %v6479, %v6720
    %v6769 = vadd.f32 %v6480, %v6723
    %v6770 = vadd.f32 %v6481, %v6728
    %v6771 = vadd.f32 %v6482, %v6731
    %v6772 = vadd.f32 %v6483, %v6736
    %v6773 = vadd.f32 %v6484, %v6739
    %v6774 = vpack.c.bf16 %v6743, %v6742
    %v6775 = vpack.c.bf16 %v6745, %v6744
    %v6776 = vpack.c.bf16 %v6747, %v6746
    %v6777 = vpack.c.bf16 %v6749, %v6748
    %v6778 = vpack.c.bf16 %v6751, %v6750
    %v6779 = vpack.c.bf16 %v6753, %v6752
    %v6780 = vpack.c.bf16 %v6755, %v6754
    %v6781 = vpack.c.bf16 %v6757, %v6756
    %v6782 = vpack.c.bf16 %v6759, %v6758
    %v6783 = vpack.c.bf16 %v6761, %v6760
    %v6784 = vpack.c.bf16 %v6763, %v6762
    %v6785 = vpack.c.bf16 %v6765, %v6764
    %v6786 = vpack.c.bf16 %v6767, %v6766
    %v6787 = vpack.c.bf16 %v6769, %v6768
    %v6788 = vpack.c.bf16 %v6771, %v6770
    %v6789 = vpack.c.bf16 %v6773, %v6772
    %v6790 = vxor.u32 %v6774, 2147516416
    %v6791 = vxor.u32 %v6775, 2147516416
    %v6792 = vxor.u32 %v6776, 2147516416
    %v6793 = vxor.u32 %v6777, 2147516416
    %v6794 = vxor.u32 %v6778, 2147516416
    %v6795 = vxor.u32 %v6779, 2147516416
    %v6796 = vxor.u32 %v6780, 2147516416
    %v6797 = vxor.u32 %v6781, 2147516416
    %v6798 = vxor.u32 %v6782, 2147516416
    %v6799 = vxor.u32 %v6783, 2147516416
    %v6800 = vxor.u32 %v6784, 2147516416
    %v6801 = vxor.u32 %v6785, 2147516416
    %v6802 = vxor.u32 %v6786, 2147516416
    %v6803 = vxor.u32 %v6787, 2147516416
    %v6804 = vxor.u32 %v6788, 2147516416
    %v6805 = vxor.u32 %v6789, 2147516416
    %v6807 = vmul.bf16 %v6790, 1069105081
    %v6808 = vpow.bf16.pop %v6807
    %v6810 = vmul.bf16 %v6791, 1069105081
    %v6811 = vpow.bf16.pop %v6810
    %v6813 = vmul.bf16 %v6792, 1069105081
    %v6814 = vpow.bf16.pop %v6813
    %v6816 = vmul.bf16 %v6793, 1069105081
    %v6817 = vpow.bf16.pop %v6816
    %v6819 = vmul.bf16 %v6794, 1069105081
    %v6820 = vpow.bf16.pop %v6819
    %v6822 = vmul.bf16 %v6795, 1069105081
    %v6823 = vpow.bf16.pop %v6822
    %v6825 = vmul.bf16 %v6796, 1069105081
    %v6826 = vpow.bf16.pop %v6825
    %v6828 = vmul.bf16 %v6797, 1069105081
    %v6829 = vpow.bf16.pop %v6828
    %v6831 = vmul.bf16 %v6798, 1069105081
    %v6832 = vpow.bf16.pop %v6831
    %v6834 = vmul.bf16 %v6799, 1069105081
    %v6835 = vpow.bf16.pop %v6834
    %v6837 = vmul.bf16 %v6800, 1069105081
    %v6838 = vpow.bf16.pop %v6837
    %v6840 = vmul.bf16 %v6801, 1069105081
    %v6841 = vpow.bf16.pop %v6840
    %v6843 = vmul.bf16 %v6802, 1069105081
    %v6844 = vpow.bf16.pop %v6843
    %v6846 = vmul.bf16 %v6803, 1069105081
    %v6847 = vpow.bf16.pop %v6846
    %v6849 = vmul.bf16 %v6804, 1069105081
    %v6850 = vpow.bf16.pop %v6849
    %v6852 = vmul.bf16 %v6805, 1069105081
    %v6853 = vpow.bf16.pop %v6852
    %v6854 = vadd.bf16 %v6808, 1065369472
    %v6855 = vadd.bf16 %v6811, 1065369472
    %v6856 = vadd.bf16 %v6814, 1065369472
    %v6857 = vadd.bf16 %v6817, 1065369472
    %v6858 = vadd.bf16 %v6820, 1065369472
    %v6859 = vadd.bf16 %v6823, 1065369472
    %v6860 = vadd.bf16 %v6826, 1065369472
    %v6861 = vadd.bf16 %v6829, 1065369472
    %v6862 = vadd.bf16 %v6832, 1065369472
    %v6863 = vadd.bf16 %v6835, 1065369472
    %v6864 = vadd.bf16 %v6838, 1065369472
    %v6865 = vadd.bf16 %v6841, 1065369472
    %v6866 = vadd.bf16 %v6844, 1065369472
    %v6867 = vadd.bf16 %v6847, 1065369472
    %v6868 = vadd.bf16 %v6850, 1065369472
    %v6869 = vadd.bf16 %v6853, 1065369472
    %v6870 = vrcp.bf16.pop %v6854
    %v6871 = vmul.bf16 1065369472, %v6870
    %v6872 = vrcp.bf16.pop %v6855
    %v6873 = vmul.bf16 1065369472, %v6872
    %v6874 = vrcp.bf16.pop %v6856
    %v6875 = vmul.bf16 1065369472, %v6874
    %v6876 = vrcp.bf16.pop %v6857
    %v6877 = vmul.bf16 1065369472, %v6876
    %v6878 = vrcp.bf16.pop %v6858
    %v6879 = vmul.bf16 1065369472, %v6878
    %v6880 = vrcp.bf16.pop %v6859
    %v6881 = vmul.bf16 1065369472, %v6880
    %v6882 = vrcp.bf16.pop %v6860
    %v6883 = vmul.bf16 1065369472, %v6882
    %v6884 = vrcp.bf16.pop %v6861
    %v6885 = vmul.bf16 1065369472, %v6884
    %v6886 = vrcp.bf16.pop %v6862
    %v6887 = vmul.bf16 1065369472, %v6886
    %v6888 = vrcp.bf16.pop %v6863
    %v6889 = vmul.bf16 1065369472, %v6888
    %v6890 = vrcp.bf16.pop %v6864
    %v6891 = vmul.bf16 1065369472, %v6890
    %v6892 = vrcp.bf16.pop %v6865
    %v6893 = vmul.bf16 1065369472, %v6892
    %v6894 = vrcp.bf16.pop %v6866
    %v6895 = vmul.bf16 1065369472, %v6894
    %v6896 = vrcp.bf16.pop %v6867
    %v6897 = vmul.bf16 1065369472, %v6896
    %v6898 = vrcp.bf16.pop %v6868
    %v6899 = vmul.bf16 1065369472, %v6898
    %v6900 = vrcp.bf16.pop %v6869
    %v6901 = vmul.bf16 1065369472, %v6900
    %v6902 = vtanh.bf16.pop %v6774
    %v6903 = vtanh.bf16.pop %v6775
    %v6904 = vtanh.bf16.pop %v6776
    %v6905 = vtanh.bf16.pop %v6777
    %v6906 = vtanh.bf16.pop %v6778
    %v6907 = vtanh.bf16.pop %v6779
    %v6908 = vtanh.bf16.pop %v6780
    %v6909 = vtanh.bf16.pop %v6781
    %v6910 = vtanh.bf16.pop %v6782
    %v6911 = vtanh.bf16.pop %v6783
    %v6912 = vtanh.bf16.pop %v6784
    %v6913 = vtanh.bf16.pop %v6785
    %v6914 = vtanh.bf16.pop %v6786
    %v6915 = vtanh.bf16.pop %v6787
    %v6916 = vtanh.bf16.pop %v6788
    %v6917 = vtanh.bf16.pop %v6789
    %v6918 = vunpack.c.l.bf16 %v6871
    %v6919 = vunpack.c.h.bf16 %v6871
    %v6920 = vunpack.c.l.bf16 %v6873
    %v6921 = vunpack.c.h.bf16 %v6873
    %v6922 = vunpack.c.l.bf16 %v6875
    %v6923 = vunpack.c.h.bf16 %v6875
    %v6924 = vunpack.c.l.bf16 %v6877
    %v6925 = vunpack.c.h.bf16 %v6877
    %v6926 = vunpack.c.l.bf16 %v6879
    %v6927 = vunpack.c.h.bf16 %v6879
    %v6928 = vunpack.c.l.bf16 %v6881
    %v6929 = vunpack.c.h.bf16 %v6881
    %v6930 = vunpack.c.l.bf16 %v6883
    %v6931 = vunpack.c.h.bf16 %v6883
    %v6932 = vunpack.c.l.bf16 %v6885
    %v6933 = vunpack.c.h.bf16 %v6885
    %v6934 = vunpack.c.l.bf16 %v6887
    %v6935 = vunpack.c.h.bf16 %v6887
    %v6936 = vunpack.c.l.bf16 %v6889
    %v6937 = vunpack.c.h.bf16 %v6889
    %v6938 = vunpack.c.l.bf16 %v6891
    %v6939 = vunpack.c.h.bf16 %v6891
    %v6940 = vunpack.c.l.bf16 %v6893
    %v6941 = vunpack.c.h.bf16 %v6893
    %v6942 = vunpack.c.l.bf16 %v6895
    %v6943 = vunpack.c.h.bf16 %v6895
    %v6944 = vunpack.c.l.bf16 %v6897
    %v6945 = vunpack.c.h.bf16 %v6897
    %v6946 = vunpack.c.l.bf16 %v6899
    %v6947 = vunpack.c.h.bf16 %v6899
    %v6948 = vunpack.c.l.bf16 %v6901
    %v6949 = vunpack.c.h.bf16 %v6901
    %v6950 = vmul.f32 %v6918, %v6276
    %v6951 = vmul.f32 %v6919, %v6277
    %v6952 = vmul.f32 %v6920, %v6278
    %v6953 = vmul.f32 %v6921, %v6279
    %v6954 = vmul.f32 %v6922, %v6280
    %v6955 = vmul.f32 %v6923, %v6281
    %v6956 = vmul.f32 %v6924, %v6282
    %v6957 = vmul.f32 %v6925, %v6283
    %v6958 = vmul.f32 %v6926, %v6284
    %v6959 = vmul.f32 %v6927, %v6285
    %v6960 = vmul.f32 %v6928, %v6286
    %v6961 = vmul.f32 %v6929, %v6287
    %v6962 = vmul.f32 %v6930, %v6288
    %v6963 = vmul.f32 %v6931, %v6289
    %v6964 = vmul.f32 %v6932, %v6290
    %v6965 = vmul.f32 %v6933, %v6291
    %v6966 = vmul.f32 %v6934, %v6292
    %v6967 = vmul.f32 %v6935, %v6293
    %v6968 = vmul.f32 %v6936, %v6294
    %v6969 = vmul.f32 %v6937, %v6295
    %v6970 = vmul.f32 %v6938, %v6296
    %v6971 = vmul.f32 %v6939, %v6297
    %v6972 = vmul.f32 %v6940, %v6298
    %v6973 = vmul.f32 %v6941, %v6299
    %v6974 = vmul.f32 %v6942, %v6300
    %v6975 = vmul.f32 %v6943, %v6301
    %v6976 = vmul.f32 %v6944, %v6302
    %v6977 = vmul.f32 %v6945, %v6303
    %v6978 = vmul.f32 %v6946, %v6304
    %v6979 = vmul.f32 %v6947, %v6305
    %v6980 = vmul.f32 %v6948, %v6306
    %v6981 = vmul.f32 %v6949, %v6307
    %6998 = vrot.lane.b32.xlu0 %v6902, 64
    %v6999 = vpop.permute.xlu0 %6998
    %7000 = vrot.lane.b32.xlu0 %v6903, 64
    %v7001 = vpop.permute.xlu0 %7000
    %7002 = vrot.lane.b32.xlu0 %v6904, 64
    %v7003 = vpop.permute.xlu0 %7002
    %7004 = vrot.lane.b32.xlu0 %v6905, 64
    %v7005 = vpop.permute.xlu0 %7004
    %7006 = vrot.lane.b32.xlu0 %v6906, 64
    %v7007 = vpop.permute.xlu0 %7006
    %7008 = vrot.lane.b32.xlu0 %v6907, 64
    %v7009 = vpop.permute.xlu0 %7008
    %7010 = vrot.lane.b32.xlu0 %v6908, 64
    %v7011 = vpop.permute.xlu0 %7010
    %7012 = vrot.lane.b32.xlu0 %v6909, 64
    %v7013 = vpop.permute.xlu0 %7012
    %7014 = vrot.lane.b32.xlu0 %v6910, 64
    %v7015 = vpop.permute.xlu0 %7014
    %7016 = vrot.lane.b32.xlu0 %v6911, 64
    %v7017 = vpop.permute.xlu0 %7016
    %7018 = vrot.lane.b32.xlu0 %v6912, 64
    %v7019 = vpop.permute.xlu0 %7018
    %7020 = vrot.lane.b32.xlu0 %v6913, 64
    %v7021 = vpop.permute.xlu0 %7020
    %7022 = vrot.lane.b32.xlu0 %v6914, 64
    %v7023 = vpop.permute.xlu0 %7022
    %7024 = vrot.lane.b32.xlu0 %v6915, 64
    %v7025 = vpop.permute.xlu0 %7024
    %7026 = vrot.lane.b32.xlu0 %v6916, 64
    %v7027 = vpop.permute.xlu0 %7026
    %7028 = vrot.lane.b32.xlu0 %v6917, 64
    %v7029 = vpop.permute.xlu0 %7028
    %v7046 = vmul.bf16 %v6871, %v6999
    %v7047 = vmul.bf16 %v6873, %v7001
    %v7048 = vmul.bf16 %v6875, %v7003
    %v7049 = vmul.bf16 %v6877, %v7005
    %v7050 = vmul.bf16 %v6879, %v7007
    %v7051 = vmul.bf16 %v6881, %v7009
    %v7052 = vmul.bf16 %v6883, %v7011
    %v7053 = vmul.bf16 %v6885, %v7013
    %v7054 = vmul.bf16 %v6887, %v7015
    %v7055 = vmul.bf16 %v6889, %v7017
    %v7056 = vmul.bf16 %v6891, %v7019
    %v7057 = vmul.bf16 %v6893, %v7021
    %v7058 = vmul.bf16 %v6895, %v7023
    %v7059 = vmul.bf16 %v6897, %v7025
    %v7060 = vmul.bf16 %v6899, %v7027
    %v7061 = vmul.bf16 %v6901, %v7029
    %v7062 = vunpack.c.l.bf16 %v7046
    %v7063 = vunpack.c.h.bf16 %v7046
    %v7064 = vunpack.c.l.bf16 %v7047
    %v7065 = vunpack.c.h.bf16 %v7047
    %v7066 = vunpack.c.l.bf16 %v7048
    %v7067 = vunpack.c.h.bf16 %v7048
    %v7068 = vunpack.c.l.bf16 %v7049
    %v7069 = vunpack.c.h.bf16 %v7049
    %v7070 = vunpack.c.l.bf16 %v7050
    %v7071 = vunpack.c.h.bf16 %v7050
    %v7072 = vunpack.c.l.bf16 %v7051
    %v7073 = vunpack.c.h.bf16 %v7051
    %v7074 = vunpack.c.l.bf16 %v7052
    %v7075 = vunpack.c.h.bf16 %v7052
    %v7076 = vunpack.c.l.bf16 %v7053
    %v7077 = vunpack.c.h.bf16 %v7053
    %v7078 = vunpack.c.l.bf16 %v7054
    %v7079 = vunpack.c.h.bf16 %v7054
    %v7080 = vunpack.c.l.bf16 %v7055
    %v7081 = vunpack.c.h.bf16 %v7055
    %v7082 = vunpack.c.l.bf16 %v7056
    %v7083 = vunpack.c.h.bf16 %v7056
    %v7084 = vunpack.c.l.bf16 %v7057
    %v7085 = vunpack.c.h.bf16 %v7057
    %v7086 = vunpack.c.l.bf16 %v7058
    %v7087 = vunpack.c.h.bf16 %v7058
    %v7088 = vunpack.c.l.bf16 %v7059
    %v7089 = vunpack.c.h.bf16 %v7059
    %v7090 = vunpack.c.l.bf16 %v7060
    %v7091 = vunpack.c.h.bf16 %v7060
    %v7092 = vunpack.c.l.bf16 %v7061
    %v7093 = vunpack.c.h.bf16 %v7061
    %7126 = vrot.lane.b32.xlu0 %v7062, 32
    %v7127 = vpop.permute.xlu0 %7126
    %7128 = vrot.lane.b32.xlu0 %v7063, 32
    %v7129 = vpop.permute.xlu0 %7128
    %7130 = vrot.lane.b32.xlu0 %v7064, 32
    %v7131 = vpop.permute.xlu0 %7130
    %7132 = vrot.lane.b32.xlu0 %v7065, 32
    %v7133 = vpop.permute.xlu0 %7132
    %7134 = vrot.lane.b32.xlu0 %v7066, 32
    %v7135 = vpop.permute.xlu0 %7134
    %7136 = vrot.lane.b32.xlu0 %v7067, 32
    %v7137 = vpop.permute.xlu0 %7136
    %7138 = vrot.lane.b32.xlu0 %v7068, 32
    %v7139 = vpop.permute.xlu0 %7138
    %7140 = vrot.lane.b32.xlu0 %v7069, 32
    %v7141 = vpop.permute.xlu0 %7140
    %7142 = vrot.lane.b32.xlu0 %v7070, 32
    %v7143 = vpop.permute.xlu0 %7142
    %7144 = vrot.lane.b32.xlu0 %v7071, 32
    %v7145 = vpop.permute.xlu0 %7144
    %7146 = vrot.lane.b32.xlu0 %v7072, 32
    %v7147 = vpop.permute.xlu0 %7146
    %7148 = vrot.lane.b32.xlu0 %v7073, 32
    %v7149 = vpop.permute.xlu0 %7148
    %7150 = vrot.lane.b32.xlu0 %v7074, 32
    %v7151 = vpop.permute.xlu0 %7150
    %7152 = vrot.lane.b32.xlu0 %v7075, 32
    %v7153 = vpop.permute.xlu0 %7152
    %7154 = vrot.lane.b32.xlu0 %v7076, 32
    %v7155 = vpop.permute.xlu0 %7154
    %7156 = vrot.lane.b32.xlu0 %v7077, 32
    %v7157 = vpop.permute.xlu0 %7156
    %7158 = vrot.lane.b32.xlu0 %v7078, 32
    %v7159 = vpop.permute.xlu0 %7158
    %7160 = vrot.lane.b32.xlu0 %v7079, 32
    %v7161 = vpop.permute.xlu0 %7160
    %7162 = vrot.lane.b32.xlu0 %v7080, 32
    %v7163 = vpop.permute.xlu0 %7162
    %7164 = vrot.lane.b32.xlu0 %v7081, 32
    %v7165 = vpop.permute.xlu0 %7164
    %7166 = vrot.lane.b32.xlu0 %v7082, 32
    %v7167 = vpop.permute.xlu0 %7166
    %7168 = vrot.lane.b32.xlu0 %v7083, 32
    %v7169 = vpop.permute.xlu0 %7168
    %7170 = vrot.lane.b32.xlu0 %v7084, 32
    %v7171 = vpop.permute.xlu0 %7170
    %7172 = vrot.lane.b32.xlu0 %v7085, 32
    %v7173 = vpop.permute.xlu0 %7172
    %7174 = vrot.lane.b32.xlu0 %v7086, 32
    %v7175 = vpop.permute.xlu0 %7174
    %7176 = vrot.lane.b32.xlu0 %v7087, 32
    %v7177 = vpop.permute.xlu0 %7176
    %7178 = vrot.lane.b32.xlu0 %v7088, 32
    %v7179 = vpop.permute.xlu0 %7178
    %7180 = vrot.lane.b32.xlu0 %v7089, 32
    %v7181 = vpop.permute.xlu0 %7180
    %7182 = vrot.lane.b32.xlu0 %v7090, 32
    %v7183 = vpop.permute.xlu0 %7182
    %7184 = vrot.lane.b32.xlu0 %v7091, 32
    %v7185 = vpop.permute.xlu0 %7184
    %7186 = vrot.lane.b32.xlu0 %v7092, 32
    %v7187 = vpop.permute.xlu0 %7186
    %7188 = vrot.lane.b32.xlu0 %v7093, 32
    %v7189 = vpop.permute.xlu0 %7188
    %v7222 = vadd.f32 %v6950, %v7127
    %v7223 = vadd.f32 %v6951, %v7129
    %v7224 = vadd.f32 %v6952, %v7131
    %v7225 = vadd.f32 %v6953, %v7133
    %v7226 = vadd.f32 %v6954, %v7135
    %v7227 = vadd.f32 %v6955, %v7137
    %v7228 = vadd.f32 %v6956, %v7139
    %v7229 = vadd.f32 %v6957, %v7141
    %v7230 = vadd.f32 %v6958, %v7143
    %v7231 = vadd.f32 %v6959, %v7145
    %v7232 = vadd.f32 %v6960, %v7147
    %v7233 = vadd.f32 %v6961, %v7149
    %v7234 = vadd.f32 %v6962, %v7151
    %v7235 = vadd.f32 %v6963, %v7153
    %v7236 = vadd.f32 %v6964, %v7155
    %v7237 = vadd.f32 %v6965, %v7157
    %v7238 = vadd.f32 %v6966, %v7159
    %v7239 = vadd.f32 %v6967, %v7161
    %v7240 = vadd.f32 %v6968, %v7163
    %v7241 = vadd.f32 %v6969, %v7165
    %v7242 = vadd.f32 %v6970, %v7167
    %v7243 = vadd.f32 %v6971, %v7169
    %v7244 = vadd.f32 %v6972, %v7171
    %v7245 = vadd.f32 %v6973, %v7173
    %v7246 = vadd.f32 %v6974, %v7175
    %v7247 = vadd.f32 %v6975, %v7177
    %v7248 = vadd.f32 %v6976, %v7179
    %v7249 = vadd.f32 %v6977, %v7181
    %v7250 = vadd.f32 %v6978, %v7183
    %v7251 = vadd.f32 %v6979, %v7185
    %v7252 = vadd.f32 %v6980, %v7187
    %v7253 = vadd.f32 %v6981, %v7189
    %v7254 = vpack.c.bf16 %v7223, %v7222
    %v7255 = vpack.c.bf16 %v7225, %v7224
    %v7256 = vpack.c.bf16 %v7227, %v7226
    %v7257 = vpack.c.bf16 %v7229, %v7228
    %v7258 = vpack.c.bf16 %v7231, %v7230
    %v7259 = vpack.c.bf16 %v7233, %v7232
    %v7260 = vpack.c.bf16 %v7235, %v7234
    %v7261 = vpack.c.bf16 %v7237, %v7236
    %v7262 = vpack.c.bf16 %v7239, %v7238
    %v7263 = vpack.c.bf16 %v7241, %v7240
    %v7264 = vpack.c.bf16 %v7243, %v7242
    %v7265 = vpack.c.bf16 %v7245, %v7244
    %v7266 = vpack.c.bf16 %v7247, %v7246
    %v7267 = vpack.c.bf16 %v7249, %v7248
    %v7268 = vpack.c.bf16 %v7251, %v7250
    %v7269 = vpack.c.bf16 %v7253, %v7252
    %v7270 = vtanh.bf16.pop %v7254
    %v7271 = vtanh.bf16.pop %v7255
    %v7272 = vtanh.bf16.pop %v7256
    %v7273 = vtanh.bf16.pop %v7257
    %v7274 = vtanh.bf16.pop %v7258
    %v7275 = vtanh.bf16.pop %v7259
    %v7276 = vtanh.bf16.pop %v7260
    %v7277 = vtanh.bf16.pop %v7261
    %v7278 = vtanh.bf16.pop %v7262
    %v7279 = vtanh.bf16.pop %v7263
    %v7280 = vtanh.bf16.pop %v7264
    %v7281 = vtanh.bf16.pop %v7265
    %v7282 = vtanh.bf16.pop %v7266
    %v7283 = vtanh.bf16.pop %v7267
    %v7284 = vtanh.bf16.pop %v7268
    %v7285 = vtanh.bf16.pop %v7269
    %7302 = vrot.lane.b32.xlu0 %v7270, 64
    %v7303 = vpop.permute.xlu0 %7302
    %7304 = vrot.lane.b32.xlu0 %v7271, 64
    %v7305 = vpop.permute.xlu0 %7304
    %7306 = vrot.lane.b32.xlu0 %v7272, 64
    %v7307 = vpop.permute.xlu0 %7306
    %7308 = vrot.lane.b32.xlu0 %v7273, 64
    %v7309 = vpop.permute.xlu0 %7308
    %7310 = vrot.lane.b32.xlu0 %v7274, 64
    %v7311 = vpop.permute.xlu0 %7310
    %7312 = vrot.lane.b32.xlu0 %v7275, 64
    %v7313 = vpop.permute.xlu0 %7312
    %7314 = vrot.lane.b32.xlu0 %v7276, 64
    %v7315 = vpop.permute.xlu0 %7314
    %7316 = vrot.lane.b32.xlu0 %v7277, 64
    %v7317 = vpop.permute.xlu0 %7316
    %7318 = vrot.lane.b32.xlu0 %v7278, 64
    %v7319 = vpop.permute.xlu0 %7318
    %7320 = vrot.lane.b32.xlu0 %v7279, 64
    %v7321 = vpop.permute.xlu0 %7320
    %7322 = vrot.lane.b32.xlu0 %v7280, 64
    %v7323 = vpop.permute.xlu0 %7322
    %7324 = vrot.lane.b32.xlu0 %v7281, 64
    %v7325 = vpop.permute.xlu0 %7324
    %7326 = vrot.lane.b32.xlu0 %v7282, 64
    %v7327 = vpop.permute.xlu0 %7326
    %7328 = vrot.lane.b32.xlu0 %v7283, 64
    %v7329 = vpop.permute.xlu0 %7328
    %7330 = vrot.lane.b32.xlu0 %v7284, 64
    %v7331 = vpop.permute.xlu0 %7330
    %7332 = vrot.lane.b32.xlu0 %v7285, 64
    %v7333 = vpop.permute.xlu0 %7332
    %v7350 = vmul.bf16 %v6871, %v7303
    %v7351 = vmul.bf16 %v6873, %v7305
    %v7352 = vmul.bf16 %v6875, %v7307
    %v7353 = vmul.bf16 %v6877, %v7309
    %v7354 = vmul.bf16 %v6879, %v7311
    %v7355 = vmul.bf16 %v6881, %v7313
    %v7356 = vmul.bf16 %v6883, %v7315
    %v7357 = vmul.bf16 %v6885, %v7317
    %v7358 = vmul.bf16 %v6887, %v7319
    %v7359 = vmul.bf16 %v6889, %v7321
    %v7360 = vmul.bf16 %v6891, %v7323
    %v7361 = vmul.bf16 %v6893, %v7325
    %v7362 = vmul.bf16 %v6895, %v7327
    %v7363 = vmul.bf16 %v6897, %v7329
    %v7364 = vmul.bf16 %v6899, %v7331
    %v7365 = vmul.bf16 %v6901, %v7333
    %s7366 = scalar_lea.vmem [#allocation2], 512
    %v7367 = vld [vmem:[%s7366] sm:$0xf]
    %v7368 = vld [vmem:[%s7366 + $0x4] sm:$0xf]
    %v7369 = vld [vmem:[%s7366 + $0x8] sm:$0xf]
    %v7370 = vld [vmem:[%s7366 + $0xc] sm:$0xf]
    %v7371 = vld [vmem:[%s7366 + $0x10] sm:$0xf]
    %v7372 = vld [vmem:[%s7366 + $0x14] sm:$0xf]
    %v7373 = vld [vmem:[%s7366 + $0x18] sm:$0xf]
    %v7374 = vld [vmem:[%s7366 + $0x1c] sm:$0xf]
    %v7375 = vld [vmem:[%s7366 + $0x20] sm:$0xf]
    %v7376 = vld [vmem:[%s7366 + $0x24] sm:$0xf]
    %v7377 = vld [vmem:[%s7366 + $0x28] sm:$0xf]
    %v7378 = vld [vmem:[%s7366 + $0x2c] sm:$0xf]
    %v7379 = vld [vmem:[%s7366 + $0x30] sm:$0xf]
    %v7380 = vld [vmem:[%s7366 + $0x34] sm:$0xf]
    %v7381 = vld [vmem:[%s7366 + $0x38] sm:$0xf]
    %v7382 = vld [vmem:[%s7366 + $0x3c] sm:$0xf]
    %v7383 = vld [vmem:[%s7366 + $0x40] sm:$0xf]
    %v7384 = vld [vmem:[%s7366 + $0x44] sm:$0xf]
    %v7385 = vld [vmem:[%s7366 + $0x48] sm:$0xf]
    %v7386 = vld [vmem:[%s7366 + $0x4c] sm:$0xf]
    %v7387 = vld [vmem:[%s7366 + $0x50] sm:$0xf]
    %v7388 = vld [vmem:[%s7366 + $0x54] sm:$0xf]
    %v7389 = vld [vmem:[%s7366 + $0x58] sm:$0xf]
    %v7390 = vld [vmem:[%s7366 + $0x5c] sm:$0xf]
    %v7391 = vld [vmem:[%s7366 + $0x60] sm:$0xf]
    %v7392 = vld [vmem:[%s7366 + $0x64] sm:$0xf]
    %v7393 = vld [vmem:[%s7366 + $0x68] sm:$0xf]
    %v7394 = vld [vmem:[%s7366 + $0x6c] sm:$0xf]
    %v7395 = vld [vmem:[%s7366 + $0x70] sm:$0xf]
    %v7396 = vld [vmem:[%s7366 + $0x74] sm:$0xf]
    %v7397 = vld [vmem:[%s7366 + $0x78] sm:$0xf]
    %v7398 = vld [vmem:[%s7366 + $0x7c] sm:$0xf]
    %v7399 = vunpack.c.l.bf16 %v7367
    %v7400 = vunpack.c.l.bf16 %v7368
    %v7401 = vunpack.c.l.bf16 %v7369
    %v7402 = vunpack.c.l.bf16 %v7370
    %v7403 = vunpack.c.l.bf16 %v7371
    %v7404 = vunpack.c.l.bf16 %v7372
    %v7405 = vunpack.c.l.bf16 %v7373
    %v7406 = vunpack.c.l.bf16 %v7374
    %v7407 = vunpack.c.l.bf16 %v7375
    %v7408 = vunpack.c.l.bf16 %v7376
    %v7409 = vunpack.c.l.bf16 %v7377
    %v7410 = vunpack.c.l.bf16 %v7378
    %v7411 = vunpack.c.l.bf16 %v7379
    %v7412 = vunpack.c.l.bf16 %v7380
    %v7413 = vunpack.c.l.bf16 %v7381
    %v7414 = vunpack.c.l.bf16 %v7382
    %v7415 = vunpack.c.l.bf16 %v7383
    %v7416 = vunpack.c.l.bf16 %v7384
    %v7417 = vunpack.c.l.bf16 %v7385
    %v7418 = vunpack.c.l.bf16 %v7386
    %v7419 = vunpack.c.l.bf16 %v7387
    %v7420 = vunpack.c.l.bf16 %v7388
    %v7421 = vunpack.c.l.bf16 %v7389
    %v7422 = vunpack.c.l.bf16 %v7390
    %v7423 = vunpack.c.l.bf16 %v7391
    %v7424 = vunpack.c.l.bf16 %v7392
    %v7425 = vunpack.c.l.bf16 %v7393
    %v7426 = vunpack.c.l.bf16 %v7394
    %v7427 = vunpack.c.l.bf16 %v7395
    %v7428 = vunpack.c.l.bf16 %v7396
    %v7429 = vunpack.c.l.bf16 %v7397
    %v7430 = vunpack.c.l.bf16 %v7398
    %7447 = vrot.lane.b32.xlu0 %v7350, 32
    %v7448 = vpop.permute.xlu0 %7447
    %7449 = vrot.lane.b32.xlu0 %v7351, 32
    %v7450 = vpop.permute.xlu0 %7449
    %7451 = vrot.lane.b32.xlu0 %v7352, 32
    %v7452 = vpop.permute.xlu0 %7451
    %7453 = vrot.lane.b32.xlu0 %v7353, 32
    %v7454 = vpop.permute.xlu0 %7453
    %7455 = vrot.lane.b32.xlu0 %v7354, 32
    %v7456 = vpop.permute.xlu0 %7455
    %7457 = vrot.lane.b32.xlu0 %v7355, 32
    %v7458 = vpop.permute.xlu0 %7457
    %7459 = vrot.lane.b32.xlu0 %v7356, 32
    %v7460 = vpop.permute.xlu0 %7459
    %7461 = vrot.lane.b32.xlu0 %v7357, 32
    %v7462 = vpop.permute.xlu0 %7461
    %7463 = vrot.lane.b32.xlu0 %v7358, 32
    %v7464 = vpop.permute.xlu0 %7463
    %7465 = vrot.lane.b32.xlu0 %v7359, 32
    %v7466 = vpop.permute.xlu0 %7465
    %7467 = vrot.lane.b32.xlu0 %v7360, 32
    %v7468 = vpop.permute.xlu0 %7467
    %7469 = vrot.lane.b32.xlu0 %v7361, 32
    %v7470 = vpop.permute.xlu0 %7469
    %7471 = vrot.lane.b32.xlu0 %v7362, 32
    %v7472 = vpop.permute.xlu0 %7471
    %7473 = vrot.lane.b32.xlu0 %v7363, 32
    %v7474 = vpop.permute.xlu0 %7473
    %7475 = vrot.lane.b32.xlu0 %v7364, 32
    %v7476 = vpop.permute.xlu0 %7475
    %7477 = vrot.lane.b32.xlu0 %v7365, 32
    %v7478 = vpop.permute.xlu0 %7477
    %v7480 = vsel %vm3739, %v7448, 0
    %v7483 = vsel %vm3739, %v7450, 0
    %v7486 = vsel %vm3739, %v7452, 0
    %v7489 = vsel %vm3739, %v7454, 0
    %v7492 = vsel %vm3739, %v7456, 0
    %v7495 = vsel %vm3739, %v7458, 0
    %v7498 = vsel %vm3739, %v7460, 0
    %v7501 = vsel %vm3739, %v7462, 0
    %v7504 = vsel %vm3739, %v7464, 0
    %v7507 = vsel %vm3739, %v7466, 0
    %v7510 = vsel %vm3739, %v7468, 0
    %v7513 = vsel %vm3739, %v7470, 0
    %v7516 = vsel %vm3739, %v7472, 0
    %v7519 = vsel %vm3739, %v7474, 0
    %v7522 = vsel %vm3739, %v7476, 0
    %v7525 = vsel %vm3739, %v7478, 0
    %7527 = vmatprep.subr.bf16.mxu0 0
    %7528 = vmatpush1.bf16.msra.mxu0 0
    %7529 = vmatprep.subr.bf16.mxu0 0
    %7530 = vmatpush1.bf16.msra.mxu0 0
    %7531 = vmatprep.subr.bf16.mxu0 0
    %7532 = vmatpush1.bf16.msra.mxu0 0
    %7533 = vmatprep.subr.bf16.mxu0 0
    %7534 = vmatpush1.bf16.msra.mxu0 0
    %7535 = vmatprep.subr.bf16.mxu0 0
    %7536 = vmatpush1.bf16.msra.mxu0 0
    %7537 = vmatprep.subr.bf16.mxu0 0
    %7538 = vmatpush1.bf16.msra.mxu0 0
    %7539 = vmatprep.subr.bf16.mxu0 0
    %7540 = vmatpush1.bf16.msra.mxu0 %v3736
    %7541 = vmatprep.subr.bf16.mxu0 0
    %7542 = vmatpush1.bf16.msra.mxu0 %v3735
    %7543 = vmatprep.subr.bf16.mxu0 0
    %7544 = vmatpush2.bf16.msra.mxu0 0
    %7545 = vmatprep.subr.bf16.mxu0 0
    %7546 = vmatpush2.bf16.msra.mxu0 0
    %7547 = vmatprep.subr.bf16.mxu0 0
    %7548 = vmatpush2.bf16.msra.mxu0 0
    %7549 = vmatprep.subr.bf16.mxu0 0
    %7550 = vmatpush2.bf16.msra.mxu0 0
    %7551 = vmatprep.subr.bf16.mxu0 0
    %7552 = vmatpush2.bf16.msra.mxu0 0
    %7553 = vmatprep.subr.bf16.mxu0 0
    %7554 = vmatpush2.bf16.msra.mxu0 0
    %7555 = vmatprep.subr.bf16.mxu0 0
    %7556 = vmatpush2.bf16.msra.mxu0 0
    %7557 = vmatprep.subr.bf16.mxu0 0
    %7558 = vmatpush2.bf16.msra.mxu0 0
    %7559 = vmatprep.mubr.bf16.mxu0 0
    %7560 = vmatmul.mubr.bf16.gmra.mxu0 %v7480
    %v7561 = vpop.f32.mrf.mxu0
    %v7562 = vadd.f32 0.0, %v7561
    %v7563 = vpop.f32.mrf.mxu0
    %v7564 = vpop.f32.mrf.mxu0
    %v7565 = vadd.f32 0.0, %v7564
    %v7566 = vpop.f32.mrf.mxu0
    %7567 = vmatprep.mubr.bf16.mxu0 0
    %7568 = vmatmul.mubr.bf16.gmra.mxu0 %v7483
    %v7569 = vpop.f32.mrf.mxu0
    %v7570 = vadd.f32 0.0, %v7569
    %v7571 = vpop.f32.mrf.mxu0
    %v7572 = vpop.f32.mrf.mxu0
    %v7573 = vadd.f32 0.0, %v7572
    %v7574 = vpop.f32.mrf.mxu0
    %7575 = vmatprep.mubr.bf16.mxu0 0
    %7576 = vmatmul.mubr.bf16.gmra.mxu0 %v7486
    %v7577 = vpop.f32.mrf.mxu0
    %v7578 = vadd.f32 0.0, %v7577
    %v7579 = vpop.f32.mrf.mxu0
    %v7580 = vpop.f32.mrf.mxu0
    %v7581 = vadd.f32 0.0, %v7580
    %v7582 = vpop.f32.mrf.mxu0
    %7583 = vmatprep.mubr.bf16.mxu0 0
    %7584 = vmatmul.mubr.bf16.gmra.mxu0 %v7489
    %v7585 = vpop.f32.mrf.mxu0
    %v7586 = vadd.f32 0.0, %v7585
    %v7587 = vpop.f32.mrf.mxu0
    %v7588 = vpop.f32.mrf.mxu0
    %v7589 = vadd.f32 0.0, %v7588
    %v7590 = vpop.f32.mrf.mxu0
    %7591 = vmatprep.mubr.bf16.mxu0 0
    %7592 = vmatmul.mubr.bf16.gmra.mxu0 %v7492
    %v7593 = vpop.f32.mrf.mxu0
    %v7594 = vadd.f32 0.0, %v7593
    %v7595 = vpop.f32.mrf.mxu0
    %v7596 = vpop.f32.mrf.mxu0
    %v7597 = vadd.f32 0.0, %v7596
    %v7598 = vpop.f32.mrf.mxu0
    %7599 = vmatprep.mubr.bf16.mxu0 0
    %7600 = vmatmul.mubr.bf16.gmra.mxu0 %v7495
    %v7601 = vpop.f32.mrf.mxu0
    %v7602 = vadd.f32 0.0, %v7601
    %v7603 = vpop.f32.mrf.mxu0
    %v7604 = vpop.f32.mrf.mxu0
    %v7605 = vadd.f32 0.0, %v7604
    %v7606 = vpop.f32.mrf.mxu0
    %7607 = vmatprep.mubr.bf16.mxu0 0
    %7608 = vmatmul.mubr.bf16.gmra.mxu0 %v7498
    %v7609 = vpop.f32.mrf.mxu0
    %v7610 = vadd.f32 0.0, %v7609
    %v7611 = vpop.f32.mrf.mxu0
    %v7612 = vpop.f32.mrf.mxu0
    %v7613 = vadd.f32 0.0, %v7612
    %v7614 = vpop.f32.mrf.mxu0
    %7615 = vmatprep.mubr.bf16.mxu0 0
    %7616 = vmatmul.mubr.bf16.gmra.mxu0 %v7501
    %v7617 = vpop.f32.mrf.mxu0
    %v7618 = vadd.f32 0.0, %v7617
    %v7619 = vpop.f32.mrf.mxu0
    %v7620 = vpop.f32.mrf.mxu0
    %v7621 = vadd.f32 0.0, %v7620
    %v7622 = vpop.f32.mrf.mxu0
    %7623 = vmatprep.mubr.bf16.mxu0 0
    %7624 = vmatmul.mubr.bf16.gmra.mxu0 %v7504
    %v7625 = vpop.f32.mrf.mxu0
    %v7626 = vadd.f32 0.0, %v7625
    %v7627 = vpop.f32.mrf.mxu0
    %v7628 = vpop.f32.mrf.mxu0
    %v7629 = vadd.f32 0.0, %v7628
    %v7630 = vpop.f32.mrf.mxu0
    %7631 = vmatprep.mubr.bf16.mxu0 0
    %7632 = vmatmul.mubr.bf16.gmra.mxu0 %v7507
    %v7633 = vpop.f32.mrf.mxu0
    %v7634 = vadd.f32 0.0, %v7633
    %v7635 = vpop.f32.mrf.mxu0
    %v7636 = vpop.f32.mrf.mxu0
    %v7637 = vadd.f32 0.0, %v7636
    %v7638 = vpop.f32.mrf.mxu0
    %7639 = vmatprep.mubr.bf16.mxu0 0
    %7640 = vmatmul.mubr.bf16.gmra.mxu0 %v7510
    %v7641 = vpop.f32.mrf.mxu0
    %v7642 = vadd.f32 0.0, %v7641
    %v7643 = vpop.f32.mrf.mxu0
    %v7644 = vpop.f32.mrf.mxu0
    %v7645 = vadd.f32 0.0, %v7644
    %v7646 = vpop.f32.mrf.mxu0
    %7647 = vmatprep.mubr.bf16.mxu0 0
    %7648 = vmatmul.mubr.bf16.gmra.mxu0 %v7513
    %v7649 = vpop.f32.mrf.mxu0
    %v7650 = vadd.f32 0.0, %v7649
    %v7651 = vpop.f32.mrf.mxu0
    %v7652 = vpop.f32.mrf.mxu0
    %v7653 = vadd.f32 0.0, %v7652
    %v7654 = vpop.f32.mrf.mxu0
    %7655 = vmatprep.mubr.bf16.mxu0 0
    %7656 = vmatmul.mubr.bf16.gmra.mxu0 %v7516
    %v7657 = vpop.f32.mrf.mxu0
    %v7658 = vadd.f32 0.0, %v7657
    %v7659 = vpop.f32.mrf.mxu0
    %v7660 = vpop.f32.mrf.mxu0
    %v7661 = vadd.f32 0.0, %v7660
    %v7662 = vpop.f32.mrf.mxu0
    %7663 = vmatprep.mubr.bf16.mxu0 0
    %7664 = vmatmul.mubr.bf16.gmra.mxu0 %v7519
    %v7665 = vpop.f32.mrf.mxu0
    %v7666 = vadd.f32 0.0, %v7665
    %v7667 = vpop.f32.mrf.mxu0
    %v7668 = vpop.f32.mrf.mxu0
    %v7669 = vadd.f32 0.0, %v7668
    %v7670 = vpop.f32.mrf.mxu0
    %7671 = vmatprep.mubr.bf16.mxu0 0
    %7672 = vmatmul.mubr.bf16.gmra.mxu0 %v7522
    %v7673 = vpop.f32.mrf.mxu0
    %v7674 = vadd.f32 0.0, %v7673
    %v7675 = vpop.f32.mrf.mxu0
    %v7676 = vpop.f32.mrf.mxu0
    %v7677 = vadd.f32 0.0, %v7676
    %v7678 = vpop.f32.mrf.mxu0
    %7679 = vmatprep.mubr.bf16.mxu0 0
    %7680 = vmatmul.mubr.bf16.gmra.mxu0 %v7525
    %v7681 = vpop.f32.mrf.mxu0
    %v7682 = vadd.f32 0.0, %v7681
    %v7683 = vpop.f32.mrf.mxu0
    %v7684 = vpop.f32.mrf.mxu0
    %v7685 = vadd.f32 0.0, %v7684
    %v7686 = vpop.f32.mrf.mxu0
    %7687 = vdwg.mxu0
    %v7688 = vadd.f32 %v7399, %v7562
    %v7689 = vadd.f32 %v7400, %v7565
    %v7690 = vadd.f32 %v7401, %v7570
    %v7691 = vadd.f32 %v7402, %v7573
    %v7692 = vadd.f32 %v7403, %v7578
    %v7693 = vadd.f32 %v7404, %v7581
    %v7694 = vadd.f32 %v7405, %v7586
    %v7695 = vadd.f32 %v7406, %v7589
    %v7696 = vadd.f32 %v7407, %v7594
    %v7697 = vadd.f32 %v7408, %v7597
    %v7698 = vadd.f32 %v7409, %v7602
    %v7699 = vadd.f32 %v7410, %v7605
    %v7700 = vadd.f32 %v7411, %v7610
    %v7701 = vadd.f32 %v7412, %v7613
    %v7702 = vadd.f32 %v7413, %v7618
    %v7703 = vadd.f32 %v7414, %v7621
    %v7704 = vadd.f32 %v7415, %v7626
    %v7705 = vadd.f32 %v7416, %v7629
    %v7706 = vadd.f32 %v7417, %v7634
    %v7707 = vadd.f32 %v7418, %v7637
    %v7708 = vadd.f32 %v7419, %v7642
    %v7709 = vadd.f32 %v7420, %v7645
    %v7710 = vadd.f32 %v7421, %v7650
    %v7711 = vadd.f32 %v7422, %v7653
    %v7712 = vadd.f32 %v7423, %v7658
    %v7713 = vadd.f32 %v7424, %v7661
    %v7714 = vadd.f32 %v7425, %v7666
    %v7715 = vadd.f32 %v7426, %v7669
    %v7716 = vadd.f32 %v7427, %v7674
    %v7717 = vadd.f32 %v7428, %v7677
    %v7718 = vadd.f32 %v7429, %v7682
    %v7719 = vadd.f32 %v7430, %v7685
    %v7720 = vpack.c.bf16 %v7689, %v7688
    %v7721 = vpack.c.bf16 %v7691, %v7690
    %v7722 = vpack.c.bf16 %v7693, %v7692
    %v7723 = vpack.c.bf16 %v7695, %v7694
    %v7724 = vpack.c.bf16 %v7697, %v7696
    %v7725 = vpack.c.bf16 %v7699, %v7698
    %v7726 = vpack.c.bf16 %v7701, %v7700
    %v7727 = vpack.c.bf16 %v7703, %v7702
    %v7728 = vpack.c.bf16 %v7705, %v7704
    %v7729 = vpack.c.bf16 %v7707, %v7706
    %v7730 = vpack.c.bf16 %v7709, %v7708
    %v7731 = vpack.c.bf16 %v7711, %v7710
    %v7732 = vpack.c.bf16 %v7713, %v7712
    %v7733 = vpack.c.bf16 %v7715, %v7714
    %v7734 = vpack.c.bf16 %v7717, %v7716
    %v7735 = vpack.c.bf16 %v7719, %v7718
    %v7736 = vxor.u32 %v7720, 2147516416
    %v7737 = vxor.u32 %v7721, 2147516416
    %v7738 = vxor.u32 %v7722, 2147516416
    %v7739 = vxor.u32 %v7723, 2147516416
    %v7740 = vxor.u32 %v7724, 2147516416
    %v7741 = vxor.u32 %v7725, 2147516416
    %v7742 = vxor.u32 %v7726, 2147516416
    %v7743 = vxor.u32 %v7727, 2147516416
    %v7744 = vxor.u32 %v7728, 2147516416
    %v7745 = vxor.u32 %v7729, 2147516416
    %v7746 = vxor.u32 %v7730, 2147516416
    %v7747 = vxor.u32 %v7731, 2147516416
    %v7748 = vxor.u32 %v7732, 2147516416
    %v7749 = vxor.u32 %v7733, 2147516416
    %v7750 = vxor.u32 %v7734, 2147516416
    %v7751 = vxor.u32 %v7735, 2147516416
    %v7753 = vmul.bf16 %v7736, 1069105081
    %v7754 = vpow.bf16.pop %v7753
    %v7756 = vmul.bf16 %v7737, 1069105081
    %v7757 = vpow.bf16.pop %v7756
    %v7759 = vmul.bf16 %v7738, 1069105081
    %v7760 = vpow.bf16.pop %v7759
    %v7762 = vmul.bf16 %v7739, 1069105081
    %v7763 = vpow.bf16.pop %v7762
    %v7765 = vmul.bf16 %v7740, 1069105081
    %v7766 = vpow.bf16.pop %v7765
    %v7768 = vmul.bf16 %v7741, 1069105081
    %v7769 = vpow.bf16.pop %v7768
    %v7771 = vmul.bf16 %v7742, 1069105081
    %v7772 = vpow.bf16.pop %v7771
    %v7774 = vmul.bf16 %v7743, 1069105081
    %v7775 = vpow.bf16.pop %v7774
    %v7777 = vmul.bf16 %v7744, 1069105081
    %v7778 = vpow.bf16.pop %v7777
    %v7780 = vmul.bf16 %v7745, 1069105081
    %v7781 = vpow.bf16.pop %v7780
    %v7783 = vmul.bf16 %v7746, 1069105081
    %v7784 = vpow.bf16.pop %v7783
    %v7786 = vmul.bf16 %v7747, 1069105081
    %v7787 = vpow.bf16.pop %v7786
    %v7789 = vmul.bf16 %v7748, 1069105081
    %v7790 = vpow.bf16.pop %v7789
    %v7792 = vmul.bf16 %v7749, 1069105081
    %v7793 = vpow.bf16.pop %v7792
    %v7795 = vmul.bf16 %v7750, 1069105081
    %v7796 = vpow.bf16.pop %v7795
    %v7798 = vmul.bf16 %v7751, 1069105081
    %v7799 = vpow.bf16.pop %v7798
    %v7800 = vadd.bf16 %v7754, 1065369472
    %v7801 = vadd.bf16 %v7757, 1065369472
    %v7802 = vadd.bf16 %v7760, 1065369472
    %v7803 = vadd.bf16 %v7763, 1065369472
    %v7804 = vadd.bf16 %v7766, 1065369472
    %v7805 = vadd.bf16 %v7769, 1065369472
    %v7806 = vadd.bf16 %v7772, 1065369472
    %v7807 = vadd.bf16 %v7775, 1065369472
    %v7808 = vadd.bf16 %v7778, 1065369472
    %v7809 = vadd.bf16 %v7781, 1065369472
    %v7810 = vadd.bf16 %v7784, 1065369472
    %v7811 = vadd.bf16 %v7787, 1065369472
    %v7812 = vadd.bf16 %v7790, 1065369472
    %v7813 = vadd.bf16 %v7793, 1065369472
    %v7814 = vadd.bf16 %v7796, 1065369472
    %v7815 = vadd.bf16 %v7799, 1065369472
    %v7816 = vrcp.bf16.pop %v7800
    %v7817 = vmul.bf16 1065369472, %v7816
    %v7818 = vrcp.bf16.pop %v7801
    %v7819 = vmul.bf16 1065369472, %v7818
    %v7820 = vrcp.bf16.pop %v7802
    %v7821 = vmul.bf16 1065369472, %v7820
    %v7822 = vrcp.bf16.pop %v7803
    %v7823 = vmul.bf16 1065369472, %v7822
    %v7824 = vrcp.bf16.pop %v7804
    %v7825 = vmul.bf16 1065369472, %v7824
    %v7826 = vrcp.bf16.pop %v7805
    %v7827 = vmul.bf16 1065369472, %v7826
    %v7828 = vrcp.bf16.pop %v7806
    %v7829 = vmul.bf16 1065369472, %v7828
    %v7830 = vrcp.bf16.pop %v7807
    %v7831 = vmul.bf16 1065369472, %v7830
    %v7832 = vrcp.bf16.pop %v7808
    %v7833 = vmul.bf16 1065369472, %v7832
    %v7834 = vrcp.bf16.pop %v7809
    %v7835 = vmul.bf16 1065369472, %v7834
    %v7836 = vrcp.bf16.pop %v7810
    %v7837 = vmul.bf16 1065369472, %v7836
    %v7838 = vrcp.bf16.pop %v7811
    %v7839 = vmul.bf16 1065369472, %v7838
    %v7840 = vrcp.bf16.pop %v7812
    %v7841 = vmul.bf16 1065369472, %v7840
    %v7842 = vrcp.bf16.pop %v7813
    %v7843 = vmul.bf16 1065369472, %v7842
    %v7844 = vrcp.bf16.pop %v7814
    %v7845 = vmul.bf16 1065369472, %v7844
    %v7846 = vrcp.bf16.pop %v7815
    %v7847 = vmul.bf16 1065369472, %v7846
    %v7848 = vtanh.bf16.pop %v7720
    %v7849 = vtanh.bf16.pop %v7721
    %v7850 = vtanh.bf16.pop %v7722
    %v7851 = vtanh.bf16.pop %v7723
    %v7852 = vtanh.bf16.pop %v7724
    %v7853 = vtanh.bf16.pop %v7725
    %v7854 = vtanh.bf16.pop %v7726
    %v7855 = vtanh.bf16.pop %v7727
    %v7856 = vtanh.bf16.pop %v7728
    %v7857 = vtanh.bf16.pop %v7729
    %v7858 = vtanh.bf16.pop %v7730
    %v7859 = vtanh.bf16.pop %v7731
    %v7860 = vtanh.bf16.pop %v7732
    %v7861 = vtanh.bf16.pop %v7733
    %v7862 = vtanh.bf16.pop %v7734
    %v7863 = vtanh.bf16.pop %v7735
    %v7864 = vunpack.c.l.bf16 %v7817
    %v7865 = vunpack.c.h.bf16 %v7817
    %v7866 = vunpack.c.l.bf16 %v7819
    %v7867 = vunpack.c.h.bf16 %v7819
    %v7868 = vunpack.c.l.bf16 %v7821
    %v7869 = vunpack.c.h.bf16 %v7821
    %v7870 = vunpack.c.l.bf16 %v7823
    %v7871 = vunpack.c.h.bf16 %v7823
    %v7872 = vunpack.c.l.bf16 %v7825
    %v7873 = vunpack.c.h.bf16 %v7825
    %v7874 = vunpack.c.l.bf16 %v7827
    %v7875 = vunpack.c.h.bf16 %v7827
    %v7876 = vunpack.c.l.bf16 %v7829
    %v7877 = vunpack.c.h.bf16 %v7829
    %v7878 = vunpack.c.l.bf16 %v7831
    %v7879 = vunpack.c.h.bf16 %v7831
    %v7880 = vunpack.c.l.bf16 %v7833
    %v7881 = vunpack.c.h.bf16 %v7833
    %v7882 = vunpack.c.l.bf16 %v7835
    %v7883 = vunpack.c.h.bf16 %v7835
    %v7884 = vunpack.c.l.bf16 %v7837
    %v7885 = vunpack.c.h.bf16 %v7837
    %v7886 = vunpack.c.l.bf16 %v7839
    %v7887 = vunpack.c.h.bf16 %v7839
    %v7888 = vunpack.c.l.bf16 %v7841
    %v7889 = vunpack.c.h.bf16 %v7841
    %v7890 = vunpack.c.l.bf16 %v7843
    %v7891 = vunpack.c.h.bf16 %v7843
    %v7892 = vunpack.c.l.bf16 %v7845
    %v7893 = vunpack.c.h.bf16 %v7845
    %v7894 = vunpack.c.l.bf16 %v7847
    %v7895 = vunpack.c.h.bf16 %v7847
    %v7896 = vmul.f32 %v7864, %v7222
    %v7897 = vmul.f32 %v7865, %v7223
    %v7898 = vmul.f32 %v7866, %v7224
    %v7899 = vmul.f32 %v7867, %v7225
    %v7900 = vmul.f32 %v7868, %v7226
    %v7901 = vmul.f32 %v7869, %v7227
    %v7902 = vmul.f32 %v7870, %v7228
    %v7903 = vmul.f32 %v7871, %v7229
    %v7904 = vmul.f32 %v7872, %v7230
    %v7905 = vmul.f32 %v7873, %v7231
    %v7906 = vmul.f32 %v7874, %v7232
    %v7907 = vmul.f32 %v7875, %v7233
    %v7908 = vmul.f32 %v7876, %v7234
    %v7909 = vmul.f32 %v7877, %v7235
    %v7910 = vmul.f32 %v7878, %v7236
    %v7911 = vmul.f32 %v7879, %v7237
    %v7912 = vmul.f32 %v7880, %v7238
    %v7913 = vmul.f32 %v7881, %v7239
    %v7914 = vmul.f32 %v7882, %v7240
    %v7915 = vmul.f32 %v7883, %v7241
    %v7916 = vmul.f32 %v7884, %v7242
    %v7917 = vmul.f32 %v7885, %v7243
    %v7918 = vmul.f32 %v7886, %v7244
    %v7919 = vmul.f32 %v7887, %v7245
    %v7920 = vmul.f32 %v7888, %v7246
    %v7921 = vmul.f32 %v7889, %v7247
    %v7922 = vmul.f32 %v7890, %v7248
    %v7923 = vmul.f32 %v7891, %v7249
    %v7924 = vmul.f32 %v7892, %v7250
    %v7925 = vmul.f32 %v7893, %v7251
    %v7926 = vmul.f32 %v7894, %v7252
    %v7927 = vmul.f32 %v7895, %v7253
    %7944 = vrot.lane.b32.xlu0 %v7848, 64
    %v7945 = vpop.permute.xlu0 %7944
    %7946 = vrot.lane.b32.xlu0 %v7849, 64
    %v7947 = vpop.permute.xlu0 %7946
    %7948 = vrot.lane.b32.xlu0 %v7850, 64
    %v7949 = vpop.permute.xlu0 %7948
    %7950 = vrot.lane.b32.xlu0 %v7851, 64
    %v7951 = vpop.permute.xlu0 %7950
    %7952 = vrot.lane.b32.xlu0 %v7852, 64
    %v7953 = vpop.permute.xlu0 %7952
    %7954 = vrot.lane.b32.xlu0 %v7853, 64
    %v7955 = vpop.permute.xlu0 %7954
    %7956 = vrot.lane.b32.xlu0 %v7854, 64
    %v7957 = vpop.permute.xlu0 %7956
    %7958 = vrot.lane.b32.xlu0 %v7855, 64
    %v7959 = vpop.permute.xlu0 %7958
    %7960 = vrot.lane.b32.xlu0 %v7856, 64
    %v7961 = vpop.permute.xlu0 %7960
    %7962 = vrot.lane.b32.xlu0 %v7857, 64
    %v7963 = vpop.permute.xlu0 %7962
    %7964 = vrot.lane.b32.xlu0 %v7858, 64
    %v7965 = vpop.permute.xlu0 %7964
    %7966 = vrot.lane.b32.xlu0 %v7859, 64
    %v7967 = vpop.permute.xlu0 %7966
    %7968 = vrot.lane.b32.xlu0 %v7860, 64
    %v7969 = vpop.permute.xlu0 %7968
    %7970 = vrot.lane.b32.xlu0 %v7861, 64
    %v7971 = vpop.permute.xlu0 %7970
    %7972 = vrot.lane.b32.xlu0 %v7862, 64
    %v7973 = vpop.permute.xlu0 %7972
    %7974 = vrot.lane.b32.xlu0 %v7863, 64
    %v7975 = vpop.permute.xlu0 %7974
    %v7992 = vmul.bf16 %v7817, %v7945
    %v7993 = vmul.bf16 %v7819, %v7947
    %v7994 = vmul.bf16 %v7821, %v7949
    %v7995 = vmul.bf16 %v7823, %v7951
    %v7996 = vmul.bf16 %v7825, %v7953
    %v7997 = vmul.bf16 %v7827, %v7955
    %v7998 = vmul.bf16 %v7829, %v7957
    %v7999 = vmul.bf16 %v7831, %v7959
    %v8000 = vmul.bf16 %v7833, %v7961
    %v8001 = vmul.bf16 %v7835, %v7963
    %v8002 = vmul.bf16 %v7837, %v7965
    %v8003 = vmul.bf16 %v7839, %v7967
    %v8004 = vmul.bf16 %v7841, %v7969
    %v8005 = vmul.bf16 %v7843, %v7971
    %v8006 = vmul.bf16 %v7845, %v7973
    %v8007 = vmul.bf16 %v7847, %v7975
    %v8008 = vunpack.c.l.bf16 %v7992
    %v8009 = vunpack.c.h.bf16 %v7992
    %v8010 = vunpack.c.l.bf16 %v7993
    %v8011 = vunpack.c.h.bf16 %v7993
    %v8012 = vunpack.c.l.bf16 %v7994
    %v8013 = vunpack.c.h.bf16 %v7994
    %v8014 = vunpack.c.l.bf16 %v7995
    %v8015 = vunpack.c.h.bf16 %v7995
    %v8016 = vunpack.c.l.bf16 %v7996
    %v8017 = vunpack.c.h.bf16 %v7996
    %v8018 = vunpack.c.l.bf16 %v7997
    %v8019 = vunpack.c.h.bf16 %v7997
    %v8020 = vunpack.c.l.bf16 %v7998
    %v8021 = vunpack.c.h.bf16 %v7998
    %v8022 = vunpack.c.l.bf16 %v7999
    %v8023 = vunpack.c.h.bf16 %v7999
    %v8024 = vunpack.c.l.bf16 %v8000
    %v8025 = vunpack.c.h.bf16 %v8000
    %v8026 = vunpack.c.l.bf16 %v8001
    %v8027 = vunpack.c.h.bf16 %v8001
    %v8028 = vunpack.c.l.bf16 %v8002
    %v8029 = vunpack.c.h.bf16 %v8002
    %v8030 = vunpack.c.l.bf16 %v8003
    %v8031 = vunpack.c.h.bf16 %v8003
    %v8032 = vunpack.c.l.bf16 %v8004
    %v8033 = vunpack.c.h.bf16 %v8004
    %v8034 = vunpack.c.l.bf16 %v8005
    %v8035 = vunpack.c.h.bf16 %v8005
    %v8036 = vunpack.c.l.bf16 %v8006
    %v8037 = vunpack.c.h.bf16 %v8006
    %v8038 = vunpack.c.l.bf16 %v8007
    %v8039 = vunpack.c.h.bf16 %v8007
    %8072 = vrot.lane.b32.xlu0 %v8008, 32
    %v8073 = vpop.permute.xlu0 %8072
    %8074 = vrot.lane.b32.xlu0 %v8009, 32
    %v8075 = vpop.permute.xlu0 %8074
    %8076 = vrot.lane.b32.xlu0 %v8010, 32
    %v8077 = vpop.permute.xlu0 %8076
    %8078 = vrot.lane.b32.xlu0 %v8011, 32
    %v8079 = vpop.permute.xlu0 %8078
    %8080 = vrot.lane.b32.xlu0 %v8012, 32
    %v8081 = vpop.permute.xlu0 %8080
    %8082 = vrot.lane.b32.xlu0 %v8013, 32
    %v8083 = vpop.permute.xlu0 %8082
    %8084 = vrot.lane.b32.xlu0 %v8014, 32
    %v8085 = vpop.permute.xlu0 %8084
    %8086 = vrot.lane.b32.xlu0 %v8015, 32
    %v8087 = vpop.permute.xlu0 %8086
    %8088 = vrot.lane.b32.xlu0 %v8016, 32
    %v8089 = vpop.permute.xlu0 %8088
    %8090 = vrot.lane.b32.xlu0 %v8017, 32
    %v8091 = vpop.permute.xlu0 %8090
    %8092 = vrot.lane.b32.xlu0 %v8018, 32
    %v8093 = vpop.permute.xlu0 %8092
    %8094 = vrot.lane.b32.xlu0 %v8019, 32
    %v8095 = vpop.permute.xlu0 %8094
    %8096 = vrot.lane.b32.xlu0 %v8020, 32
    %v8097 = vpop.permute.xlu0 %8096
    %8098 = vrot.lane.b32.xlu0 %v8021, 32
    %v8099 = vpop.permute.xlu0 %8098
    %8100 = vrot.lane.b32.xlu0 %v8022, 32
    %v8101 = vpop.permute.xlu0 %8100
    %8102 = vrot.lane.b32.xlu0 %v8023, 32
    %v8103 = vpop.permute.xlu0 %8102
    %8104 = vrot.lane.b32.xlu0 %v8024, 32
    %v8105 = vpop.permute.xlu0 %8104
    %8106 = vrot.lane.b32.xlu0 %v8025, 32
    %v8107 = vpop.permute.xlu0 %8106
    %8108 = vrot.lane.b32.xlu0 %v8026, 32
    %v8109 = vpop.permute.xlu0 %8108
    %8110 = vrot.lane.b32.xlu0 %v8027, 32
    %v8111 = vpop.permute.xlu0 %8110
    %8112 = vrot.lane.b32.xlu0 %v8028, 32
    %v8113 = vpop.permute.xlu0 %8112
    %8114 = vrot.lane.b32.xlu0 %v8029, 32
    %v8115 = vpop.permute.xlu0 %8114
    %8116 = vrot.lane.b32.xlu0 %v8030, 32
    %v8117 = vpop.permute.xlu0 %8116
    %8118 = vrot.lane.b32.xlu0 %v8031, 32
    %v8119 = vpop.permute.xlu0 %8118
    %8120 = vrot.lane.b32.xlu0 %v8032, 32
    %v8121 = vpop.permute.xlu0 %8120
    %8122 = vrot.lane.b32.xlu0 %v8033, 32
    %v8123 = vpop.permute.xlu0 %8122
    %8124 = vrot.lane.b32.xlu0 %v8034, 32
    %v8125 = vpop.permute.xlu0 %8124
    %8126 = vrot.lane.b32.xlu0 %v8035, 32
    %v8127 = vpop.permute.xlu0 %8126
    %8128 = vrot.lane.b32.xlu0 %v8036, 32
    %v8129 = vpop.permute.xlu0 %8128
    %8130 = vrot.lane.b32.xlu0 %v8037, 32
    %v8131 = vpop.permute.xlu0 %8130
    %8132 = vrot.lane.b32.xlu0 %v8038, 32
    %v8133 = vpop.permute.xlu0 %8132
    %8134 = vrot.lane.b32.xlu0 %v8039, 32
    %v8135 = vpop.permute.xlu0 %8134
    %v8168 = vadd.f32 %v7896, %v8073
    %v8169 = vadd.f32 %v7897, %v8075
    %v8170 = vadd.f32 %v7898, %v8077
    %v8171 = vadd.f32 %v7899, %v8079
    %v8172 = vadd.f32 %v7900, %v8081
    %v8173 = vadd.f32 %v7901, %v8083
    %v8174 = vadd.f32 %v7902, %v8085
    %v8175 = vadd.f32 %v7903, %v8087
    %v8176 = vadd.f32 %v7904, %v8089
    %v8177 = vadd.f32 %v7905, %v8091
    %v8178 = vadd.f32 %v7906, %v8093
    %v8179 = vadd.f32 %v7907, %v8095
    %v8180 = vadd.f32 %v7908, %v8097
    %v8181 = vadd.f32 %v7909, %v8099
    %v8182 = vadd.f32 %v7910, %v8101
    %v8183 = vadd.f32 %v7911, %v8103
    %v8184 = vadd.f32 %v7912, %v8105
    %v8185 = vadd.f32 %v7913, %v8107
    %v8186 = vadd.f32 %v7914, %v8109
    %v8187 = vadd.f32 %v7915, %v8111
    %v8188 = vadd.f32 %v7916, %v8113
    %v8189 = vadd.f32 %v7917, %v8115
    %v8190 = vadd.f32 %v7918, %v8117
    %v8191 = vadd.f32 %v7919, %v8119
    %v8192 = vadd.f32 %v7920, %v8121
    %v8193 = vadd.f32 %v7921, %v8123
    %v8194 = vadd.f32 %v7922, %v8125
    %v8195 = vadd.f32 %v7923, %v8127
    %v8196 = vadd.f32 %v7924, %v8129
    %v8197 = vadd.f32 %v7925, %v8131
    %v8198 = vadd.f32 %v7926, %v8133
    %v8199 = vadd.f32 %v7927, %v8135
    %v8200 = vpack.c.bf16 %v8169, %v8168
    %v8201 = vpack.c.bf16 %v8171, %v8170
    %v8202 = vpack.c.bf16 %v8173, %v8172
    %v8203 = vpack.c.bf16 %v8175, %v8174
    %v8204 = vpack.c.bf16 %v8177, %v8176
    %v8205 = vpack.c.bf16 %v8179, %v8178
    %v8206 = vpack.c.bf16 %v8181, %v8180
    %v8207 = vpack.c.bf16 %v8183, %v8182
    %v8208 = vpack.c.bf16 %v8185, %v8184
    %v8209 = vpack.c.bf16 %v8187, %v8186
    %v8210 = vpack.c.bf16 %v8189, %v8188
    %v8211 = vpack.c.bf16 %v8191, %v8190
    %v8212 = vpack.c.bf16 %v8193, %v8192
    %v8213 = vpack.c.bf16 %v8195, %v8194
    %v8214 = vpack.c.bf16 %v8197, %v8196
    %v8215 = vpack.c.bf16 %v8199, %v8198
    %v8216 = vtanh.bf16.pop %v8200
    %v8217 = vtanh.bf16.pop %v8201
    %v8218 = vtanh.bf16.pop %v8202
    %v8219 = vtanh.bf16.pop %v8203
    %v8220 = vtanh.bf16.pop %v8204
    %v8221 = vtanh.bf16.pop %v8205
    %v8222 = vtanh.bf16.pop %v8206
    %v8223 = vtanh.bf16.pop %v8207
    %v8224 = vtanh.bf16.pop %v8208
    %v8225 = vtanh.bf16.pop %v8209
    %v8226 = vtanh.bf16.pop %v8210
    %v8227 = vtanh.bf16.pop %v8211
    %v8228 = vtanh.bf16.pop %v8212
    %v8229 = vtanh.bf16.pop %v8213
    %v8230 = vtanh.bf16.pop %v8214
    %v8231 = vtanh.bf16.pop %v8215
    %8248 = vrot.lane.b32.xlu0 %v8216, 64
    %v8249 = vpop.permute.xlu0 %8248
    %8250 = vrot.lane.b32.xlu0 %v8217, 64
    %v8251 = vpop.permute.xlu0 %8250
    %8252 = vrot.lane.b32.xlu0 %v8218, 64
    %v8253 = vpop.permute.xlu0 %8252
    %8254 = vrot.lane.b32.xlu0 %v8219, 64
    %v8255 = vpop.permute.xlu0 %8254
    %8256 = vrot.lane.b32.xlu0 %v8220, 64
    %v8257 = vpop.permute.xlu0 %8256
    %8258 = vrot.lane.b32.xlu0 %v8221, 64
    %v8259 = vpop.permute.xlu0 %8258
    %8260 = vrot.lane.b32.xlu0 %v8222, 64
    %v8261 = vpop.permute.xlu0 %8260
    %8262 = vrot.lane.b32.xlu0 %v8223, 64
    %v8263 = vpop.permute.xlu0 %8262
    %8264 = vrot.lane.b32.xlu0 %v8224, 64
    %v8265 = vpop.permute.xlu0 %8264
    %8266 = vrot.lane.b32.xlu0 %v8225, 64
    %v8267 = vpop.permute.xlu0 %8266
    %8268 = vrot.lane.b32.xlu0 %v8226, 64
    %v8269 = vpop.permute.xlu0 %8268
    %8270 = vrot.lane.b32.xlu0 %v8227, 64
    %v8271 = vpop.permute.xlu0 %8270
    %8272 = vrot.lane.b32.xlu0 %v8228, 64
    %v8273 = vpop.permute.xlu0 %8272
    %8274 = vrot.lane.b32.xlu0 %v8229, 64
    %v8275 = vpop.permute.xlu0 %8274
    %8276 = vrot.lane.b32.xlu0 %v8230, 64
    %v8277 = vpop.permute.xlu0 %8276
    %8278 = vrot.lane.b32.xlu0 %v8231, 64
    %v8279 = vpop.permute.xlu0 %8278
    %v8296 = vmul.bf16 %v7817, %v8249
    %v8297 = vmul.bf16 %v7819, %v8251
    %v8298 = vmul.bf16 %v7821, %v8253
    %v8299 = vmul.bf16 %v7823, %v8255
    %v8300 = vmul.bf16 %v7825, %v8257
    %v8301 = vmul.bf16 %v7827, %v8259
    %v8302 = vmul.bf16 %v7829, %v8261
    %v8303 = vmul.bf16 %v7831, %v8263
    %v8304 = vmul.bf16 %v7833, %v8265
    %v8305 = vmul.bf16 %v7835, %v8267
    %v8306 = vmul.bf16 %v7837, %v8269
    %v8307 = vmul.bf16 %v7839, %v8271
    %v8308 = vmul.bf16 %v7841, %v8273
    %v8309 = vmul.bf16 %v7843, %v8275
    %v8310 = vmul.bf16 %v7845, %v8277
    %v8311 = vmul.bf16 %v7847, %v8279
    %s8312 = scalar_lea.vmem [#allocation2], 640
    %v8313 = vld [vmem:[%s8312] sm:$0xf]
    %v8314 = vld [vmem:[%s8312 + $0x4] sm:$0xf]
    %v8315 = vld [vmem:[%s8312 + $0x8] sm:$0xf]
    %v8316 = vld [vmem:[%s8312 + $0xc] sm:$0xf]
    %v8317 = vld [vmem:[%s8312 + $0x10] sm:$0xf]
    %v8318 = vld [vmem:[%s8312 + $0x14] sm:$0xf]
    %v8319 = vld [vmem:[%s8312 + $0x18] sm:$0xf]
    %v8320 = vld [vmem:[%s8312 + $0x1c] sm:$0xf]
    %v8321 = vld [vmem:[%s8312 + $0x20] sm:$0xf]
    %v8322 = vld [vmem:[%s8312 + $0x24] sm:$0xf]
    %v8323 = vld [vmem:[%s8312 + $0x28] sm:$0xf]
    %v8324 = vld [vmem:[%s8312 + $0x2c] sm:$0xf]
    %v8325 = vld [vmem:[%s8312 + $0x30] sm:$0xf]
    %v8326 = vld [vmem:[%s8312 + $0x34] sm:$0xf]
    %v8327 = vld [vmem:[%s8312 + $0x38] sm:$0xf]
    %v8328 = vld [vmem:[%s8312 + $0x3c] sm:$0xf]
    %v8329 = vld [vmem:[%s8312 + $0x40] sm:$0xf]
    %v8330 = vld [vmem:[%s8312 + $0x44] sm:$0xf]
    %v8331 = vld [vmem:[%s8312 + $0x48] sm:$0xf]
    %v8332 = vld [vmem:[%s8312 + $0x4c] sm:$0xf]
    %v8333 = vld [vmem:[%s8312 + $0x50] sm:$0xf]
    %v8334 = vld [vmem:[%s8312 + $0x54] sm:$0xf]
    %v8335 = vld [vmem:[%s8312 + $0x58] sm:$0xf]
    %v8336 = vld [vmem:[%s8312 + $0x5c] sm:$0xf]
    %v8337 = vld [vmem:[%s8312 + $0x60] sm:$0xf]
    %v8338 = vld [vmem:[%s8312 + $0x64] sm:$0xf]
    %v8339 = vld [vmem:[%s8312 + $0x68] sm:$0xf]
    %v8340 = vld [vmem:[%s8312 + $0x6c] sm:$0xf]
    %v8341 = vld [vmem:[%s8312 + $0x70] sm:$0xf]
    %v8342 = vld [vmem:[%s8312 + $0x74] sm:$0xf]
    %v8343 = vld [vmem:[%s8312 + $0x78] sm:$0xf]
    %v8344 = vld [vmem:[%s8312 + $0x7c] sm:$0xf]
    %v8345 = vunpack.c.l.bf16 %v8313
    %v8346 = vunpack.c.l.bf16 %v8314
    %v8347 = vunpack.c.l.bf16 %v8315
    %v8348 = vunpack.c.l.bf16 %v8316
    %v8349 = vunpack.c.l.bf16 %v8317
    %v8350 = vunpack.c.l.bf16 %v8318
    %v8351 = vunpack.c.l.bf16 %v8319
    %v8352 = vunpack.c.l.bf16 %v8320
    %v8353 = vunpack.c.l.bf16 %v8321
    %v8354 = vunpack.c.l.bf16 %v8322
    %v8355 = vunpack.c.l.bf16 %v8323
    %v8356 = vunpack.c.l.bf16 %v8324
    %v8357 = vunpack.c.l.bf16 %v8325
    %v8358 = vunpack.c.l.bf16 %v8326
    %v8359 = vunpack.c.l.bf16 %v8327
    %v8360 = vunpack.c.l.bf16 %v8328
    %v8361 = vunpack.c.l.bf16 %v8329
    %v8362 = vunpack.c.l.bf16 %v8330
    %v8363 = vunpack.c.l.bf16 %v8331
    %v8364 = vunpack.c.l.bf16 %v8332
    %v8365 = vunpack.c.l.bf16 %v8333
    %v8366 = vunpack.c.l.bf16 %v8334
    %v8367 = vunpack.c.l.bf16 %v8335
    %v8368 = vunpack.c.l.bf16 %v8336
    %v8369 = vunpack.c.l.bf16 %v8337
    %v8370 = vunpack.c.l.bf16 %v8338
    %v8371 = vunpack.c.l.bf16 %v8339
    %v8372 = vunpack.c.l.bf16 %v8340
    %v8373 = vunpack.c.l.bf16 %v8341
    %v8374 = vunpack.c.l.bf16 %v8342
    %v8375 = vunpack.c.l.bf16 %v8343
    %v8376 = vunpack.c.l.bf16 %v8344
    %8393 = vrot.lane.b32.xlu0 %v8296, 32
    %v8394 = vpop.permute.xlu0 %8393
    %8395 = vrot.lane.b32.xlu0 %v8297, 32
    %v8396 = vpop.permute.xlu0 %8395
    %8397 = vrot.lane.b32.xlu0 %v8298, 32
    %v8398 = vpop.permute.xlu0 %8397
    %8399 = vrot.lane.b32.xlu0 %v8299, 32
    %v8400 = vpop.permute.xlu0 %8399
    %8401 = vrot.lane.b32.xlu0 %v8300, 32
    %v8402 = vpop.permute.xlu0 %8401
    %8403 = vrot.lane.b32.xlu0 %v8301, 32
    %v8404 = vpop.permute.xlu0 %8403
    %8405 = vrot.lane.b32.xlu0 %v8302, 32
    %v8406 = vpop.permute.xlu0 %8405
    %8407 = vrot.lane.b32.xlu0 %v8303, 32
    %v8408 = vpop.permute.xlu0 %8407
    %8409 = vrot.lane.b32.xlu0 %v8304, 32
    %v8410 = vpop.permute.xlu0 %8409
    %8411 = vrot.lane.b32.xlu0 %v8305, 32
    %v8412 = vpop.permute.xlu0 %8411
    %8413 = vrot.lane.b32.xlu0 %v8306, 32
    %v8414 = vpop.permute.xlu0 %8413
    %8415 = vrot.lane.b32.xlu0 %v8307, 32
    %v8416 = vpop.permute.xlu0 %8415
    %8417 = vrot.lane.b32.xlu0 %v8308, 32
    %v8418 = vpop.permute.xlu0 %8417
    %8419 = vrot.lane.b32.xlu0 %v8309, 32
    %v8420 = vpop.permute.xlu0 %8419
    %8421 = vrot.lane.b32.xlu0 %v8310, 32
    %v8422 = vpop.permute.xlu0 %8421
    %8423 = vrot.lane.b32.xlu0 %v8311, 32
    %v8424 = vpop.permute.xlu0 %8423
    %v8426 = vsel %vm3739, %v8394, 0
    %v8429 = vsel %vm3739, %v8396, 0
    %v8432 = vsel %vm3739, %v8398, 0
    %v8435 = vsel %vm3739, %v8400, 0
    %v8438 = vsel %vm3739, %v8402, 0
    %v8441 = vsel %vm3739, %v8404, 0
    %v8444 = vsel %vm3739, %v8406, 0
    %v8447 = vsel %vm3739, %v8408, 0
    %v8450 = vsel %vm3739, %v8410, 0
    %v8453 = vsel %vm3739, %v8412, 0
    %v8456 = vsel %vm3739, %v8414, 0
    %v8459 = vsel %vm3739, %v8416, 0
    %v8462 = vsel %vm3739, %v8418, 0
    %v8465 = vsel %vm3739, %v8420, 0
    %v8468 = vsel %vm3739, %v8422, 0
    %v8471 = vsel %vm3739, %v8424, 0
    %8473 = vmatprep.subr.bf16.mxu0 0
    %8474 = vmatpush1.bf16.msra.mxu0 0
    %8475 = vmatprep.subr.bf16.mxu0 0
    %8476 = vmatpush1.bf16.msra.mxu0 0
    %8477 = vmatprep.subr.bf16.mxu0 0
    %8478 = vmatpush1.bf16.msra.mxu0 0
    %8479 = vmatprep.subr.bf16.mxu0 0
    %8480 = vmatpush1.bf16.msra.mxu0 0
    %8481 = vmatprep.subr.bf16.mxu0 0
    %8482 = vmatpush1.bf16.msra.mxu0 0
    %8483 = vmatprep.subr.bf16.mxu0 0
    %8484 = vmatpush1.bf16.msra.mxu0 0
    %8485 = vmatprep.subr.bf16.mxu0 0
    %8486 = vmatpush1.bf16.msra.mxu0 %v3736
    %8487 = vmatprep.subr.bf16.mxu0 0
    %8488 = vmatpush1.bf16.msra.mxu0 %v3735
    %8489 = vmatprep.subr.bf16.mxu0 0
    %8490 = vmatpush2.bf16.msra.mxu0 0
    %8491 = vmatprep.subr.bf16.mxu0 0
    %8492 = vmatpush2.bf16.msra.mxu0 0
    %8493 = vmatprep.subr.bf16.mxu0 0
    %8494 = vmatpush2.bf16.msra.mxu0 0
    %8495 = vmatprep.subr.bf16.mxu0 0
    %8496 = vmatpush2.bf16.msra.mxu0 0
    %8497 = vmatprep.subr.bf16.mxu0 0
    %8498 = vmatpush2.bf16.msra.mxu0 0
    %8499 = vmatprep.subr.bf16.mxu0 0
    %8500 = vmatpush2.bf16.msra.mxu0 0
    %8501 = vmatprep.subr.bf16.mxu0 0
    %8502 = vmatpush2.bf16.msra.mxu0 0
    %8503 = vmatprep.subr.bf16.mxu0 0
    %8504 = vmatpush2.bf16.msra.mxu0 0
    %8505 = vmatprep.mubr.bf16.mxu0 0
    %8506 = vmatmul.mubr.bf16.gmra.mxu0 %v8426
    %v8507 = vpop.f32.mrf.mxu0
    %v8508 = vadd.f32 0.0, %v8507
    %v8509 = vpop.f32.mrf.mxu0
    %v8510 = vpop.f32.mrf.mxu0
    %v8511 = vadd.f32 0.0, %v8510
    %v8512 = vpop.f32.mrf.mxu0
    %8513 = vmatprep.mubr.bf16.mxu0 0
    %8514 = vmatmul.mubr.bf16.gmra.mxu0 %v8429
    %v8515 = vpop.f32.mrf.mxu0
    %v8516 = vadd.f32 0.0, %v8515
    %v8517 = vpop.f32.mrf.mxu0
    %v8518 = vpop.f32.mrf.mxu0
    %v8519 = vadd.f32 0.0, %v8518
    %v8520 = vpop.f32.mrf.mxu0
    %8521 = vmatprep.mubr.bf16.mxu0 0
    %8522 = vmatmul.mubr.bf16.gmra.mxu0 %v8432
    %v8523 = vpop.f32.mrf.mxu0
    %v8524 = vadd.f32 0.0, %v8523
    %v8525 = vpop.f32.mrf.mxu0
    %v8526 = vpop.f32.mrf.mxu0
    %v8527 = vadd.f32 0.0, %v8526
    %v8528 = vpop.f32.mrf.mxu0
    %8529 = vmatprep.mubr.bf16.mxu0 0
    %8530 = vmatmul.mubr.bf16.gmra.mxu0 %v8435
    %v8531 = vpop.f32.mrf.mxu0
    %v8532 = vadd.f32 0.0, %v8531
    %v8533 = vpop.f32.mrf.mxu0
    %v8534 = vpop.f32.mrf.mxu0
    %v8535 = vadd.f32 0.0, %v8534
    %v8536 = vpop.f32.mrf.mxu0
    %8537 = vmatprep.mubr.bf16.mxu0 0
    %8538 = vmatmul.mubr.bf16.gmra.mxu0 %v8438
    %v8539 = vpop.f32.mrf.mxu0
    %v8540 = vadd.f32 0.0, %v8539
    %v8541 = vpop.f32.mrf.mxu0
    %v8542 = vpop.f32.mrf.mxu0
    %v8543 = vadd.f32 0.0, %v8542
    %v8544 = vpop.f32.mrf.mxu0
    %8545 = vmatprep.mubr.bf16.mxu0 0
    %8546 = vmatmul.mubr.bf16.gmra.mxu0 %v8441
    %v8547 = vpop.f32.mrf.mxu0
    %v8548 = vadd.f32 0.0, %v8547
    %v8549 = vpop.f32.mrf.mxu0
    %v8550 = vpop.f32.mrf.mxu0
    %v8551 = vadd.f32 0.0, %v8550
    %v8552 = vpop.f32.mrf.mxu0
    %8553 = vmatprep.mubr.bf16.mxu0 0
    %8554 = vmatmul.mubr.bf16.gmra.mxu0 %v8444
    %v8555 = vpop.f32.mrf.mxu0
    %v8556 = vadd.f32 0.0, %v8555
    %v8557 = vpop.f32.mrf.mxu0
    %v8558 = vpop.f32.mrf.mxu0
    %v8559 = vadd.f32 0.0, %v8558
    %v8560 = vpop.f32.mrf.mxu0
    %8561 = vmatprep.mubr.bf16.mxu0 0
    %8562 = vmatmul.mubr.bf16.gmra.mxu0 %v8447
    %v8563 = vpop.f32.mrf.mxu0
    %v8564 = vadd.f32 0.0, %v8563
    %v8565 = vpop.f32.mrf.mxu0
    %v8566 = vpop.f32.mrf.mxu0
    %v8567 = vadd.f32 0.0, %v8566
    %v8568 = vpop.f32.mrf.mxu0
    %8569 = vmatprep.mubr.bf16.mxu0 0
    %8570 = vmatmul.mubr.bf16.gmra.mxu0 %v8450
    %v8571 = vpop.f32.mrf.mxu0
    %v8572 = vadd.f32 0.0, %v8571
    %v8573 = vpop.f32.mrf.mxu0
    %v8574 = vpop.f32.mrf.mxu0
    %v8575 = vadd.f32 0.0, %v8574
    %v8576 = vpop.f32.mrf.mxu0
    %8577 = vmatprep.mubr.bf16.mxu0 0
    %8578 = vmatmul.mubr.bf16.gmra.mxu0 %v8453
    %v8579 = vpop.f32.mrf.mxu0
    %v8580 = vadd.f32 0.0, %v8579
    %v8581 = vpop.f32.mrf.mxu0
    %v8582 = vpop.f32.mrf.mxu0
    %v8583 = vadd.f32 0.0, %v8582
    %v8584 = vpop.f32.mrf.mxu0
    %8585 = vmatprep.mubr.bf16.mxu0 0
    %8586 = vmatmul.mubr.bf16.gmra.mxu0 %v8456
    %v8587 = vpop.f32.mrf.mxu0
    %v8588 = vadd.f32 0.0, %v8587
    %v8589 = vpop.f32.mrf.mxu0
    %v8590 = vpop.f32.mrf.mxu0
    %v8591 = vadd.f32 0.0, %v8590
    %v8592 = vpop.f32.mrf.mxu0
    %8593 = vmatprep.mubr.bf16.mxu0 0
    %8594 = vmatmul.mubr.bf16.gmra.mxu0 %v8459
    %v8595 = vpop.f32.mrf.mxu0
    %v8596 = vadd.f32 0.0, %v8595
    %v8597 = vpop.f32.mrf.mxu0
    %v8598 = vpop.f32.mrf.mxu0
    %v8599 = vadd.f32 0.0, %v8598
    %v8600 = vpop.f32.mrf.mxu0
    %8601 = vmatprep.mubr.bf16.mxu0 0
    %8602 = vmatmul.mubr.bf16.gmra.mxu0 %v8462
    %v8603 = vpop.f32.mrf.mxu0
    %v8604 = vadd.f32 0.0, %v8603
    %v8605 = vpop.f32.mrf.mxu0
    %v8606 = vpop.f32.mrf.mxu0
    %v8607 = vadd.f32 0.0, %v8606
    %v8608 = vpop.f32.mrf.mxu0
    %8609 = vmatprep.mubr.bf16.mxu0 0
    %8610 = vmatmul.mubr.bf16.gmra.mxu0 %v8465
    %v8611 = vpop.f32.mrf.mxu0
    %v8612 = vadd.f32 0.0, %v8611
    %v8613 = vpop.f32.mrf.mxu0
    %v8614 = vpop.f32.mrf.mxu0
    %v8615 = vadd.f32 0.0, %v8614
    %v8616 = vpop.f32.mrf.mxu0
    %8617 = vmatprep.mubr.bf16.mxu0 0
    %8618 = vmatmul.mubr.bf16.gmra.mxu0 %v8468
    %v8619 = vpop.f32.mrf.mxu0
    %v8620 = vadd.f32 0.0, %v8619
    %v8621 = vpop.f32.mrf.mxu0
    %v8622 = vpop.f32.mrf.mxu0
    %v8623 = vadd.f32 0.0, %v8622
    %v8624 = vpop.f32.mrf.mxu0
    %8625 = vmatprep.mubr.bf16.mxu0 0
    %8626 = vmatmul.mubr.bf16.gmra.mxu0 %v8471
    %v8627 = vpop.f32.mrf.mxu0
    %v8628 = vadd.f32 0.0, %v8627
    %v8629 = vpop.f32.mrf.mxu0
    %v8630 = vpop.f32.mrf.mxu0
    %v8631 = vadd.f32 0.0, %v8630
    %v8632 = vpop.f32.mrf.mxu0
    %8633 = vdwg.mxu0
    %v8634 = vadd.f32 %v8345, %v8508
    %v8635 = vadd.f32 %v8346, %v8511
    %v8636 = vadd.f32 %v8347, %v8516
    %v8637 = vadd.f32 %v8348, %v8519
    %v8638 = vadd.f32 %v8349, %v8524
    %v8639 = vadd.f32 %v8350, %v8527
    %v8640 = vadd.f32 %v8351, %v8532
    %v8641 = vadd.f32 %v8352, %v8535
    %v8642 = vadd.f32 %v8353, %v8540
    %v8643 = vadd.f32 %v8354, %v8543
    %v8644 = vadd.f32 %v8355, %v8548
    %v8645 = vadd.f32 %v8356, %v8551
    %v8646 = vadd.f32 %v8357, %v8556
    %v8647 = vadd.f32 %v8358, %v8559
    %v8648 = vadd.f32 %v8359, %v8564
    %v8649 = vadd.f32 %v8360, %v8567
    %v8650 = vadd.f32 %v8361, %v8572
    %v8651 = vadd.f32 %v8362, %v8575
    %v8652 = vadd.f32 %v8363, %v8580
    %v8653 = vadd.f32 %v8364, %v8583
    %v8654 = vadd.f32 %v8365, %v8588
    %v8655 = vadd.f32 %v8366, %v8591
    %v8656 = vadd.f32 %v8367, %v8596
    %v8657 = vadd.f32 %v8368, %v8599
    %v8658 = vadd.f32 %v8369, %v8604
    %v8659 = vadd.f32 %v8370, %v8607
    %v8660 = vadd.f32 %v8371, %v8612
    %v8661 = vadd.f32 %v8372, %v8615
    %v8662 = vadd.f32 %v8373, %v8620
    %v8663 = vadd.f32 %v8374, %v8623
    %v8664 = vadd.f32 %v8375, %v8628
    %v8665 = vadd.f32 %v8376, %v8631
    %v8666 = vpack.c.bf16 %v8635, %v8634
    %v8667 = vpack.c.bf16 %v8637, %v8636
    %v8668 = vpack.c.bf16 %v8639, %v8638
    %v8669 = vpack.c.bf16 %v8641, %v8640
    %v8670 = vpack.c.bf16 %v8643, %v8642
    %v8671 = vpack.c.bf16 %v8645, %v8644
    %v8672 = vpack.c.bf16 %v8647, %v8646
    %v8673 = vpack.c.bf16 %v8649, %v8648
    %v8674 = vpack.c.bf16 %v8651, %v8650
    %v8675 = vpack.c.bf16 %v8653, %v8652
    %v8676 = vpack.c.bf16 %v8655, %v8654
    %v8677 = vpack.c.bf16 %v8657, %v8656
    %v8678 = vpack.c.bf16 %v8659, %v8658
    %v8679 = vpack.c.bf16 %v8661, %v8660
    %v8680 = vpack.c.bf16 %v8663, %v8662
    %v8681 = vpack.c.bf16 %v8665, %v8664
    %v8682 = vxor.u32 %v8666, 2147516416
    %v8683 = vxor.u32 %v8667, 2147516416
    %v8684 = vxor.u32 %v8668, 2147516416
    %v8685 = vxor.u32 %v8669, 2147516416
    %v8686 = vxor.u32 %v8670, 2147516416
    %v8687 = vxor.u32 %v8671, 2147516416
    %v8688 = vxor.u32 %v8672, 2147516416
    %v8689 = vxor.u32 %v8673, 2147516416
    %v8690 = vxor.u32 %v8674, 2147516416
    %v8691 = vxor.u32 %v8675, 2147516416
    %v8692 = vxor.u32 %v8676, 2147516416
    %v8693 = vxor.u32 %v8677, 2147516416
    %v8694 = vxor.u32 %v8678, 2147516416
    %v8695 = vxor.u32 %v8679, 2147516416
    %v8696 = vxor.u32 %v8680, 2147516416
    %v8697 = vxor.u32 %v8681, 2147516416
    %v8699 = vmul.bf16 %v8682, 1069105081
    %v8700 = vpow.bf16.pop %v8699
    %v8702 = vmul.bf16 %v8683, 1069105081
    %v8703 = vpow.bf16.pop %v8702
    %v8705 = vmul.bf16 %v8684, 1069105081
    %v8706 = vpow.bf16.pop %v8705
    %v8708 = vmul.bf16 %v8685, 1069105081
    %v8709 = vpow.bf16.pop %v8708
    %v8711 = vmul.bf16 %v8686, 1069105081
    %v8712 = vpow.bf16.pop %v8711
    %v8714 = vmul.bf16 %v8687, 1069105081
    %v8715 = vpow.bf16.pop %v8714
    %v8717 = vmul.bf16 %v8688, 1069105081
    %v8718 = vpow.bf16.pop %v8717
    %v8720 = vmul.bf16 %v8689, 1069105081
    %v8721 = vpow.bf16.pop %v8720
    %v8723 = vmul.bf16 %v8690, 1069105081
    %v8724 = vpow.bf16.pop %v8723
    %v8726 = vmul.bf16 %v8691, 1069105081
    %v8727 = vpow.bf16.pop %v8726
    %v8729 = vmul.bf16 %v8692, 1069105081
    %v8730 = vpow.bf16.pop %v8729
    %v8732 = vmul.bf16 %v8693, 1069105081
    %v8733 = vpow.bf16.pop %v8732
    %v8735 = vmul.bf16 %v8694, 1069105081
    %v8736 = vpow.bf16.pop %v8735
    %v8738 = vmul.bf16 %v8695, 1069105081
    %v8739 = vpow.bf16.pop %v8738
    %v8741 = vmul.bf16 %v8696, 1069105081
    %v8742 = vpow.bf16.pop %v8741
    %v8744 = vmul.bf16 %v8697, 1069105081
    %v8745 = vpow.bf16.pop %v8744
    %v8746 = vadd.bf16 %v8700, 1065369472
    %v8747 = vadd.bf16 %v8703, 1065369472
    %v8748 = vadd.bf16 %v8706, 1065369472
    %v8749 = vadd.bf16 %v8709, 1065369472
    %v8750 = vadd.bf16 %v8712, 1065369472
    %v8751 = vadd.bf16 %v8715, 1065369472
    %v8752 = vadd.bf16 %v8718, 1065369472
    %v8753 = vadd.bf16 %v8721, 1065369472
    %v8754 = vadd.bf16 %v8724, 1065369472
    %v8755 = vadd.bf16 %v8727, 1065369472
    %v8756 = vadd.bf16 %v8730, 1065369472
    %v8757 = vadd.bf16 %v8733, 1065369472
    %v8758 = vadd.bf16 %v8736, 1065369472
    %v8759 = vadd.bf16 %v8739, 1065369472
    %v8760 = vadd.bf16 %v8742, 1065369472
    %v8761 = vadd.bf16 %v8745, 1065369472
    %v8762 = vrcp.bf16.pop %v8746
    %v8763 = vmul.bf16 1065369472, %v8762
    %v8764 = vrcp.bf16.pop %v8747
    %v8765 = vmul.bf16 1065369472, %v8764
    %v8766 = vrcp.bf16.pop %v8748
    %v8767 = vmul.bf16 1065369472, %v8766
    %v8768 = vrcp.bf16.pop %v8749
    %v8769 = vmul.bf16 1065369472, %v8768
    %v8770 = vrcp.bf16.pop %v8750
    %v8771 = vmul.bf16 1065369472, %v8770
    %v8772 = vrcp.bf16.pop %v8751
    %v8773 = vmul.bf16 1065369472, %v8772
    %v8774 = vrcp.bf16.pop %v8752
    %v8775 = vmul.bf16 1065369472, %v8774
    %v8776 = vrcp.bf16.pop %v8753
    %v8777 = vmul.bf16 1065369472, %v8776
    %v8778 = vrcp.bf16.pop %v8754
    %v8779 = vmul.bf16 1065369472, %v8778
    %v8780 = vrcp.bf16.pop %v8755
    %v8781 = vmul.bf16 1065369472, %v8780
    %v8782 = vrcp.bf16.pop %v8756
    %v8783 = vmul.bf16 1065369472, %v8782
    %v8784 = vrcp.bf16.pop %v8757
    %v8785 = vmul.bf16 1065369472, %v8784
    %v8786 = vrcp.bf16.pop %v8758
    %v8787 = vmul.bf16 1065369472, %v8786
    %v8788 = vrcp.bf16.pop %v8759
    %v8789 = vmul.bf16 1065369472, %v8788
    %v8790 = vrcp.bf16.pop %v8760
    %v8791 = vmul.bf16 1065369472, %v8790
    %v8792 = vrcp.bf16.pop %v8761
    %v8793 = vmul.bf16 1065369472, %v8792
    %v8794 = vtanh.bf16.pop %v8666
    %v8795 = vtanh.bf16.pop %v8667
    %v8796 = vtanh.bf16.pop %v8668
    %v8797 = vtanh.bf16.pop %v8669
    %v8798 = vtanh.bf16.pop %v8670
    %v8799 = vtanh.bf16.pop %v8671
    %v8800 = vtanh.bf16.pop %v8672
    %v8801 = vtanh.bf16.pop %v8673
    %v8802 = vtanh.bf16.pop %v8674
    %v8803 = vtanh.bf16.pop %v8675
    %v8804 = vtanh.bf16.pop %v8676
    %v8805 = vtanh.bf16.pop %v8677
    %v8806 = vtanh.bf16.pop %v8678
    %v8807 = vtanh.bf16.pop %v8679
    %v8808 = vtanh.bf16.pop %v8680
    %v8809 = vtanh.bf16.pop %v8681
    %v8810 = vunpack.c.l.bf16 %v8763
    %v8811 = vunpack.c.h.bf16 %v8763
    %v8812 = vunpack.c.l.bf16 %v8765
    %v8813 = vunpack.c.h.bf16 %v8765
    %v8814 = vunpack.c.l.bf16 %v8767
    %v8815 = vunpack.c.h.bf16 %v8767
    %v8816 = vunpack.c.l.bf16 %v8769
    %v8817 = vunpack.c.h.bf16 %v8769
    %v8818 = vunpack.c.l.bf16 %v8771
    %v8819 = vunpack.c.h.bf16 %v8771
    %v8820 = vunpack.c.l.bf16 %v8773
    %v8821 = vunpack.c.h.bf16 %v8773
    %v8822 = vunpack.c.l.bf16 %v8775
    %v8823 = vunpack.c.h.bf16 %v8775
    %v8824 = vunpack.c.l.bf16 %v8777
    %v8825 = vunpack.c.h.bf16 %v8777
    %v8826 = vunpack.c.l.bf16 %v8779
    %v8827 = vunpack.c.h.bf16 %v8779
    %v8828 = vunpack.c.l.bf16 %v8781
    %v8829 = vunpack.c.h.bf16 %v8781
    %v8830 = vunpack.c.l.bf16 %v8783
    %v8831 = vunpack.c.h.bf16 %v8783
    %v8832 = vunpack.c.l.bf16 %v8785
    %v8833 = vunpack.c.h.bf16 %v8785
    %v8834 = vunpack.c.l.bf16 %v8787
    %v8835 = vunpack.c.h.bf16 %v8787
    %v8836 = vunpack.c.l.bf16 %v8789
    %v8837 = vunpack.c.h.bf16 %v8789
    %v8838 = vunpack.c.l.bf16 %v8791
    %v8839 = vunpack.c.h.bf16 %v8791
    %v8840 = vunpack.c.l.bf16 %v8793
    %v8841 = vunpack.c.h.bf16 %v8793
    %v8842 = vmul.f32 %v8810, %v8168
    %v8843 = vmul.f32 %v8811, %v8169
    %v8844 = vmul.f32 %v8812, %v8170
    %v8845 = vmul.f32 %v8813, %v8171
    %v8846 = vmul.f32 %v8814, %v8172
    %v8847 = vmul.f32 %v8815, %v8173
    %v8848 = vmul.f32 %v8816, %v8174
    %v8849 = vmul.f32 %v8817, %v8175
    %v8850 = vmul.f32 %v8818, %v8176
    %v8851 = vmul.f32 %v8819, %v8177
    %v8852 = vmul.f32 %v8820, %v8178
    %v8853 = vmul.f32 %v8821, %v8179
    %v8854 = vmul.f32 %v8822, %v8180
    %v8855 = vmul.f32 %v8823, %v8181
    %v8856 = vmul.f32 %v8824, %v8182
    %v8857 = vmul.f32 %v8825, %v8183
    %v8858 = vmul.f32 %v8826, %v8184
    %v8859 = vmul.f32 %v8827, %v8185
    %v8860 = vmul.f32 %v8828, %v8186
    %v8861 = vmul.f32 %v8829, %v8187
    %v8862 = vmul.f32 %v8830, %v8188
    %v8863 = vmul.f32 %v8831, %v8189
    %v8864 = vmul.f32 %v8832, %v8190
    %v8865 = vmul.f32 %v8833, %v8191
    %v8866 = vmul.f32 %v8834, %v8192
    %v8867 = vmul.f32 %v8835, %v8193
    %v8868 = vmul.f32 %v8836, %v8194
    %v8869 = vmul.f32 %v8837, %v8195
    %v8870 = vmul.f32 %v8838, %v8196
    %v8871 = vmul.f32 %v8839, %v8197
    %v8872 = vmul.f32 %v8840, %v8198
    %v8873 = vmul.f32 %v8841, %v8199
    %8890 = vrot.lane.b32.xlu0 %v8794, 64
    %v8891 = vpop.permute.xlu0 %8890
    %8892 = vrot.lane.b32.xlu0 %v8795, 64
    %v8893 = vpop.permute.xlu0 %8892
    %8894 = vrot.lane.b32.xlu0 %v8796, 64
    %v8895 = vpop.permute.xlu0 %8894
    %8896 = vrot.lane.b32.xlu0 %v8797, 64
    %v8897 = vpop.permute.xlu0 %8896
    %8898 = vrot.lane.b32.xlu0 %v8798, 64
    %v8899 = vpop.permute.xlu0 %8898
    %8900 = vrot.lane.b32.xlu0 %v8799, 64
    %v8901 = vpop.permute.xlu0 %8900
    %8902 = vrot.lane.b32.xlu0 %v8800, 64
    %v8903 = vpop.permute.xlu0 %8902
    %8904 = vrot.lane.b32.xlu0 %v8801, 64
    %v8905 = vpop.permute.xlu0 %8904
    %8906 = vrot.lane.b32.xlu0 %v8802, 64
    %v8907 = vpop.permute.xlu0 %8906
    %8908 = vrot.lane.b32.xlu0 %v8803, 64
    %v8909 = vpop.permute.xlu0 %8908
    %8910 = vrot.lane.b32.xlu0 %v8804, 64
    %v8911 = vpop.permute.xlu0 %8910
    %8912 = vrot.lane.b32.xlu0 %v8805, 64
    %v8913 = vpop.permute.xlu0 %8912
    %8914 = vrot.lane.b32.xlu0 %v8806, 64
    %v8915 = vpop.permute.xlu0 %8914
    %8916 = vrot.lane.b32.xlu0 %v8807, 64
    %v8917 = vpop.permute.xlu0 %8916
    %8918 = vrot.lane.b32.xlu0 %v8808, 64
    %v8919 = vpop.permute.xlu0 %8918
    %8920 = vrot.lane.b32.xlu0 %v8809, 64
    %v8921 = vpop.permute.xlu0 %8920
    %v8938 = vmul.bf16 %v8763, %v8891
    %v8939 = vmul.bf16 %v8765, %v8893
    %v8940 = vmul.bf16 %v8767, %v8895
    %v8941 = vmul.bf16 %v8769, %v8897
    %v8942 = vmul.bf16 %v8771, %v8899
    %v8943 = vmul.bf16 %v8773, %v8901
    %v8944 = vmul.bf16 %v8775, %v8903
    %v8945 = vmul.bf16 %v8777, %v8905
    %v8946 = vmul.bf16 %v8779, %v8907
    %v8947 = vmul.bf16 %v8781, %v8909
    %v8948 = vmul.bf16 %v8783, %v8911
    %v8949 = vmul.bf16 %v8785, %v8913
    %v8950 = vmul.bf16 %v8787, %v8915
    %v8951 = vmul.bf16 %v8789, %v8917
    %v8952 = vmul.bf16 %v8791, %v8919
    %v8953 = vmul.bf16 %v8793, %v8921
    %v8954 = vunpack.c.l.bf16 %v8938
    %v8955 = vunpack.c.h.bf16 %v8938
    %v8956 = vunpack.c.l.bf16 %v8939
    %v8957 = vunpack.c.h.bf16 %v8939
    %v8958 = vunpack.c.l.bf16 %v8940
    %v8959 = vunpack.c.h.bf16 %v8940
    %v8960 = vunpack.c.l.bf16 %v8941
    %v8961 = vunpack.c.h.bf16 %v8941
    %v8962 = vunpack.c.l.bf16 %v8942
    %v8963 = vunpack.c.h.bf16 %v8942
    %v8964 = vunpack.c.l.bf16 %v8943
    %v8965 = vunpack.c.h.bf16 %v8943
    %v8966 = vunpack.c.l.bf16 %v8944
    %v8967 = vunpack.c.h.bf16 %v8944
    %v8968 = vunpack.c.l.bf16 %v8945
    %v8969 = vunpack.c.h.bf16 %v8945
    %v8970 = vunpack.c.l.bf16 %v8946
    %v8971 = vunpack.c.h.bf16 %v8946
    %v8972 = vunpack.c.l.bf16 %v8947
    %v8973 = vunpack.c.h.bf16 %v8947
    %v8974 = vunpack.c.l.bf16 %v8948
    %v8975 = vunpack.c.h.bf16 %v8948
    %v8976 = vunpack.c.l.bf16 %v8949
    %v8977 = vunpack.c.h.bf16 %v8949
    %v8978 = vunpack.c.l.bf16 %v8950
    %v8979 = vunpack.c.h.bf16 %v8950
    %v8980 = vunpack.c.l.bf16 %v8951
    %v8981 = vunpack.c.h.bf16 %v8951
    %v8982 = vunpack.c.l.bf16 %v8952
    %v8983 = vunpack.c.h.bf16 %v8952
    %v8984 = vunpack.c.l.bf16 %v8953
    %v8985 = vunpack.c.h.bf16 %v8953
    %9018 = vrot.lane.b32.xlu0 %v8954, 32
    %v9019 = vpop.permute.xlu0 %9018
    %9020 = vrot.lane.b32.xlu0 %v8955, 32
    %v9021 = vpop.permute.xlu0 %9020
    %9022 = vrot.lane.b32.xlu0 %v8956, 32
    %v9023 = vpop.permute.xlu0 %9022
    %9024 = vrot.lane.b32.xlu0 %v8957, 32
    %v9025 = vpop.permute.xlu0 %9024
    %9026 = vrot.lane.b32.xlu0 %v8958, 32
    %v9027 = vpop.permute.xlu0 %9026
    %9028 = vrot.lane.b32.xlu0 %v8959, 32
    %v9029 = vpop.permute.xlu0 %9028
    %9030 = vrot.lane.b32.xlu0 %v8960, 32
    %v9031 = vpop.permute.xlu0 %9030
    %9032 = vrot.lane.b32.xlu0 %v8961, 32
    %v9033 = vpop.permute.xlu0 %9032
    %9034 = vrot.lane.b32.xlu0 %v8962, 32
    %v9035 = vpop.permute.xlu0 %9034
    %9036 = vrot.lane.b32.xlu0 %v8963, 32
    %v9037 = vpop.permute.xlu0 %9036
    %9038 = vrot.lane.b32.xlu0 %v8964, 32
    %v9039 = vpop.permute.xlu0 %9038
    %9040 = vrot.lane.b32.xlu0 %v8965, 32
    %v9041 = vpop.permute.xlu0 %9040
    %9042 = vrot.lane.b32.xlu0 %v8966, 32
    %v9043 = vpop.permute.xlu0 %9042
    %9044 = vrot.lane.b32.xlu0 %v8967, 32
    %v9045 = vpop.permute.xlu0 %9044
    %9046 = vrot.lane.b32.xlu0 %v8968, 32
    %v9047 = vpop.permute.xlu0 %9046
    %9048 = vrot.lane.b32.xlu0 %v8969, 32
    %v9049 = vpop.permute.xlu0 %9048
    %9050 = vrot.lane.b32.xlu0 %v8970, 32
    %v9051 = vpop.permute.xlu0 %9050
    %9052 = vrot.lane.b32.xlu0 %v8971, 32
    %v9053 = vpop.permute.xlu0 %9052
    %9054 = vrot.lane.b32.xlu0 %v8972, 32
    %v9055 = vpop.permute.xlu0 %9054
    %9056 = vrot.lane.b32.xlu0 %v8973, 32
    %v9057 = vpop.permute.xlu0 %9056
    %9058 = vrot.lane.b32.xlu0 %v8974, 32
    %v9059 = vpop.permute.xlu0 %9058
    %9060 = vrot.lane.b32.xlu0 %v8975, 32
    %v9061 = vpop.permute.xlu0 %9060
    %9062 = vrot.lane.b32.xlu0 %v8976, 32
    %v9063 = vpop.permute.xlu0 %9062
    %9064 = vrot.lane.b32.xlu0 %v8977, 32
    %v9065 = vpop.permute.xlu0 %9064
    %9066 = vrot.lane.b32.xlu0 %v8978, 32
    %v9067 = vpop.permute.xlu0 %9066
    %9068 = vrot.lane.b32.xlu0 %v8979, 32
    %v9069 = vpop.permute.xlu0 %9068
    %9070 = vrot.lane.b32.xlu0 %v8980, 32
    %v9071 = vpop.permute.xlu0 %9070
    %9072 = vrot.lane.b32.xlu0 %v8981, 32
    %v9073 = vpop.permute.xlu0 %9072
    %9074 = vrot.lane.b32.xlu0 %v8982, 32
    %v9075 = vpop.permute.xlu0 %9074
    %9076 = vrot.lane.b32.xlu0 %v8983, 32
    %v9077 = vpop.permute.xlu0 %9076
    %9078 = vrot.lane.b32.xlu0 %v8984, 32
    %v9079 = vpop.permute.xlu0 %9078
    %9080 = vrot.lane.b32.xlu0 %v8985, 32
    %v9081 = vpop.permute.xlu0 %9080
    %v9114 = vadd.f32 %v8842, %v9019
    %v9115 = vadd.f32 %v8843, %v9021
    %v9116 = vadd.f32 %v8844, %v9023
    %v9117 = vadd.f32 %v8845, %v9025
    %v9118 = vadd.f32 %v8846, %v9027
    %v9119 = vadd.f32 %v8847, %v9029
    %v9120 = vadd.f32 %v8848, %v9031
    %v9121 = vadd.f32 %v8849, %v9033
    %v9122 = vadd.f32 %v8850, %v9035
    %v9123 = vadd.f32 %v8851, %v9037
    %v9124 = vadd.f32 %v8852, %v9039
    %v9125 = vadd.f32 %v8853, %v9041
    %v9126 = vadd.f32 %v8854, %v9043
    %v9127 = vadd.f32 %v8855, %v9045
    %v9128 = vadd.f32 %v8856, %v9047
    %v9129 = vadd.f32 %v8857, %v9049
    %v9130 = vadd.f32 %v8858, %v9051
    %v9131 = vadd.f32 %v8859, %v9053
    %v9132 = vadd.f32 %v8860, %v9055
    %v9133 = vadd.f32 %v8861, %v9057
    %v9134 = vadd.f32 %v8862, %v9059
    %v9135 = vadd.f32 %v8863, %v9061
    %v9136 = vadd.f32 %v8864, %v9063
    %v9137 = vadd.f32 %v8865, %v9065
    %v9138 = vadd.f32 %v8866, %v9067
    %v9139 = vadd.f32 %v8867, %v9069
    %v9140 = vadd.f32 %v8868, %v9071
    %v9141 = vadd.f32 %v8869, %v9073
    %v9142 = vadd.f32 %v8870, %v9075
    %v9143 = vadd.f32 %v8871, %v9077
    %v9144 = vadd.f32 %v8872, %v9079
    %v9145 = vadd.f32 %v8873, %v9081
    %v9146 = vpack.c.bf16 %v9115, %v9114
    %v9147 = vpack.c.bf16 %v9117, %v9116
    %v9148 = vpack.c.bf16 %v9119, %v9118
    %v9149 = vpack.c.bf16 %v9121, %v9120
    %v9150 = vpack.c.bf16 %v9123, %v9122
    %v9151 = vpack.c.bf16 %v9125, %v9124
    %v9152 = vpack.c.bf16 %v9127, %v9126
    %v9153 = vpack.c.bf16 %v9129, %v9128
    %v9154 = vpack.c.bf16 %v9131, %v9130
    %v9155 = vpack.c.bf16 %v9133, %v9132
    %v9156 = vpack.c.bf16 %v9135, %v9134
    %v9157 = vpack.c.bf16 %v9137, %v9136
    %v9158 = vpack.c.bf16 %v9139, %v9138
    %v9159 = vpack.c.bf16 %v9141, %v9140
    %v9160 = vpack.c.bf16 %v9143, %v9142
    %v9161 = vpack.c.bf16 %v9145, %v9144
    %v9162 = vtanh.bf16.pop %v9146
    %v9163 = vtanh.bf16.pop %v9147
    %v9164 = vtanh.bf16.pop %v9148
    %v9165 = vtanh.bf16.pop %v9149
    %v9166 = vtanh.bf16.pop %v9150
    %v9167 = vtanh.bf16.pop %v9151
    %v9168 = vtanh.bf16.pop %v9152
    %v9169 = vtanh.bf16.pop %v9153
    %v9170 = vtanh.bf16.pop %v9154
    %v9171 = vtanh.bf16.pop %v9155
    %v9172 = vtanh.bf16.pop %v9156
    %v9173 = vtanh.bf16.pop %v9157
    %v9174 = vtanh.bf16.pop %v9158
    %v9175 = vtanh.bf16.pop %v9159
    %v9176 = vtanh.bf16.pop %v9160
    %v9177 = vtanh.bf16.pop %v9161
    %9194 = vrot.lane.b32.xlu0 %v9162, 64
    %v9195 = vpop.permute.xlu0 %9194
    %9196 = vrot.lane.b32.xlu0 %v9163, 64
    %v9197 = vpop.permute.xlu0 %9196
    %9198 = vrot.lane.b32.xlu0 %v9164, 64
    %v9199 = vpop.permute.xlu0 %9198
    %9200 = vrot.lane.b32.xlu0 %v9165, 64
    %v9201 = vpop.permute.xlu0 %9200
    %9202 = vrot.lane.b32.xlu0 %v9166, 64
    %v9203 = vpop.permute.xlu0 %9202
    %9204 = vrot.lane.b32.xlu0 %v9167, 64
    %v9205 = vpop.permute.xlu0 %9204
    %9206 = vrot.lane.b32.xlu0 %v9168, 64
    %v9207 = vpop.permute.xlu0 %9206
    %9208 = vrot.lane.b32.xlu0 %v9169, 64
    %v9209 = vpop.permute.xlu0 %9208
    %9210 = vrot.lane.b32.xlu0 %v9170, 64
    %v9211 = vpop.permute.xlu0 %9210
    %9212 = vrot.lane.b32.xlu0 %v9171, 64
    %v9213 = vpop.permute.xlu0 %9212
    %9214 = vrot.lane.b32.xlu0 %v9172, 64
    %v9215 = vpop.permute.xlu0 %9214
    %9216 = vrot.lane.b32.xlu0 %v9173, 64
    %v9217 = vpop.permute.xlu0 %9216
    %9218 = vrot.lane.b32.xlu0 %v9174, 64
    %v9219 = vpop.permute.xlu0 %9218
    %9220 = vrot.lane.b32.xlu0 %v9175, 64
    %v9221 = vpop.permute.xlu0 %9220
    %9222 = vrot.lane.b32.xlu0 %v9176, 64
    %v9223 = vpop.permute.xlu0 %9222
    %9224 = vrot.lane.b32.xlu0 %v9177, 64
    %v9225 = vpop.permute.xlu0 %9224
    %v9242 = vmul.bf16 %v8763, %v9195
    %v9243 = vmul.bf16 %v8765, %v9197
    %v9244 = vmul.bf16 %v8767, %v9199
    %v9245 = vmul.bf16 %v8769, %v9201
    %v9246 = vmul.bf16 %v8771, %v9203
    %v9247 = vmul.bf16 %v8773, %v9205
    %v9248 = vmul.bf16 %v8775, %v9207
    %v9249 = vmul.bf16 %v8777, %v9209
    %v9250 = vmul.bf16 %v8779, %v9211
    %v9251 = vmul.bf16 %v8781, %v9213
    %v9252 = vmul.bf16 %v8783, %v9215
    %v9253 = vmul.bf16 %v8785, %v9217
    %v9254 = vmul.bf16 %v8787, %v9219
    %v9255 = vmul.bf16 %v8789, %v9221
    %v9256 = vmul.bf16 %v8791, %v9223
    %v9257 = vmul.bf16 %v8793, %v9225
    %s9258 = scalar_lea.vmem [#allocation2], 768
    %v9259 = vld [vmem:[%s9258] sm:$0xf]
    %v9260 = vld [vmem:[%s9258 + $0x4] sm:$0xf]
    %v9261 = vld [vmem:[%s9258 + $0x8] sm:$0xf]
    %v9262 = vld [vmem:[%s9258 + $0xc] sm:$0xf]
    %v9263 = vld [vmem:[%s9258 + $0x10] sm:$0xf]
    %v9264 = vld [vmem:[%s9258 + $0x14] sm:$0xf]
    %v9265 = vld [vmem:[%s9258 + $0x18] sm:$0xf]
    %v9266 = vld [vmem:[%s9258 + $0x1c] sm:$0xf]
    %v9267 = vld [vmem:[%s9258 + $0x20] sm:$0xf]
    %v9268 = vld [vmem:[%s9258 + $0x24] sm:$0xf]
    %v9269 = vld [vmem:[%s9258 + $0x28] sm:$0xf]
    %v9270 = vld [vmem:[%s9258 + $0x2c] sm:$0xf]
    %v9271 = vld [vmem:[%s9258 + $0x30] sm:$0xf]
    %v9272 = vld [vmem:[%s9258 + $0x34] sm:$0xf]
    %v9273 = vld [vmem:[%s9258 + $0x38] sm:$0xf]
    %v9274 = vld [vmem:[%s9258 + $0x3c] sm:$0xf]
    %v9275 = vld [vmem:[%s9258 + $0x40] sm:$0xf]
    %v9276 = vld [vmem:[%s9258 + $0x44] sm:$0xf]
    %v9277 = vld [vmem:[%s9258 + $0x48] sm:$0xf]
    %v9278 = vld [vmem:[%s9258 + $0x4c] sm:$0xf]
    %v9279 = vld [vmem:[%s9258 + $0x50] sm:$0xf]
    %v9280 = vld [vmem:[%s9258 + $0x54] sm:$0xf]
    %v9281 = vld [vmem:[%s9258 + $0x58] sm:$0xf]
    %v9282 = vld [vmem:[%s9258 + $0x5c] sm:$0xf]
    %v9283 = vld [vmem:[%s9258 + $0x60] sm:$0xf]
    %v9284 = vld [vmem:[%s9258 + $0x64] sm:$0xf]
    %v9285 = vld [vmem:[%s9258 + $0x68] sm:$0xf]
    %v9286 = vld [vmem:[%s9258 + $0x6c] sm:$0xf]
    %v9287 = vld [vmem:[%s9258 + $0x70] sm:$0xf]
    %v9288 = vld [vmem:[%s9258 + $0x74] sm:$0xf]
    %v9289 = vld [vmem:[%s9258 + $0x78] sm:$0xf]
    %v9290 = vld [vmem:[%s9258 + $0x7c] sm:$0xf]
    %v9291 = vunpack.c.l.bf16 %v9259
    %v9292 = vunpack.c.l.bf16 %v9260
    %v9293 = vunpack.c.l.bf16 %v9261
    %v9294 = vunpack.c.l.bf16 %v9262
    %v9295 = vunpack.c.l.bf16 %v9263
    %v9296 = vunpack.c.l.bf16 %v9264
    %v9297 = vunpack.c.l.bf16 %v9265
    %v9298 = vunpack.c.l.bf16 %v9266
    %v9299 = vunpack.c.l.bf16 %v9267
    %v9300 = vunpack.c.l.bf16 %v9268
    %v9301 = vunpack.c.l.bf16 %v9269
    %v9302 = vunpack.c.l.bf16 %v9270
    %v9303 = vunpack.c.l.bf16 %v9271
    %v9304 = vunpack.c.l.bf16 %v9272
    %v9305 = vunpack.c.l.bf16 %v9273
    %v9306 = vunpack.c.l.bf16 %v9274
    %v9307 = vunpack.c.l.bf16 %v9275
    %v9308 = vunpack.c.l.bf16 %v9276
    %v9309 = vunpack.c.l.bf16 %v9277
    %v9310 = vunpack.c.l.bf16 %v9278
    %v9311 = vunpack.c.l.bf16 %v9279
    %v9312 = vunpack.c.l.bf16 %v9280
    %v9313 = vunpack.c.l.bf16 %v9281
    %v9314 = vunpack.c.l.bf16 %v9282
    %v9315 = vunpack.c.l.bf16 %v9283
    %v9316 = vunpack.c.l.bf16 %v9284
    %v9317 = vunpack.c.l.bf16 %v9285
    %v9318 = vunpack.c.l.bf16 %v9286
    %v9319 = vunpack.c.l.bf16 %v9287
    %v9320 = vunpack.c.l.bf16 %v9288
    %v9321 = vunpack.c.l.bf16 %v9289
    %v9322 = vunpack.c.l.bf16 %v9290
    %9339 = vrot.lane.b32.xlu0 %v9242, 32
    %v9340 = vpop.permute.xlu0 %9339
    %9341 = vrot.lane.b32.xlu0 %v9243, 32
    %v9342 = vpop.permute.xlu0 %9341
    %9343 = vrot.lane.b32.xlu0 %v9244, 32
    %v9344 = vpop.permute.xlu0 %9343
    %9345 = vrot.lane.b32.xlu0 %v9245, 32
    %v9346 = vpop.permute.xlu0 %9345
    %9347 = vrot.lane.b32.xlu0 %v9246, 32
    %v9348 = vpop.permute.xlu0 %9347
    %9349 = vrot.lane.b32.xlu0 %v9247, 32
    %v9350 = vpop.permute.xlu0 %9349
    %9351 = vrot.lane.b32.xlu0 %v9248, 32
    %v9352 = vpop.permute.xlu0 %9351
    %9353 = vrot.lane.b32.xlu0 %v9249, 32
    %v9354 = vpop.permute.xlu0 %9353
    %9355 = vrot.lane.b32.xlu0 %v9250, 32
    %v9356 = vpop.permute.xlu0 %9355
    %9357 = vrot.lane.b32.xlu0 %v9251, 32
    %v9358 = vpop.permute.xlu0 %9357
    %9359 = vrot.lane.b32.xlu0 %v9252, 32
    %v9360 = vpop.permute.xlu0 %9359
    %9361 = vrot.lane.b32.xlu0 %v9253, 32
    %v9362 = vpop.permute.xlu0 %9361
    %9363 = vrot.lane.b32.xlu0 %v9254, 32
    %v9364 = vpop.permute.xlu0 %9363
    %9365 = vrot.lane.b32.xlu0 %v9255, 32
    %v9366 = vpop.permute.xlu0 %9365
    %9367 = vrot.lane.b32.xlu0 %v9256, 32
    %v9368 = vpop.permute.xlu0 %9367
    %9369 = vrot.lane.b32.xlu0 %v9257, 32
    %v9370 = vpop.permute.xlu0 %9369
    %v9372 = vsel %vm3739, %v9340, 0
    %v9375 = vsel %vm3739, %v9342, 0
    %v9378 = vsel %vm3739, %v9344, 0
    %v9381 = vsel %vm3739, %v9346, 0
    %v9384 = vsel %vm3739, %v9348, 0
    %v9387 = vsel %vm3739, %v9350, 0
    %v9390 = vsel %vm3739, %v9352, 0
    %v9393 = vsel %vm3739, %v9354, 0
    %v9396 = vsel %vm3739, %v9356, 0
    %v9399 = vsel %vm3739, %v9358, 0
    %v9402 = vsel %vm3739, %v9360, 0
    %v9405 = vsel %vm3739, %v9362, 0
    %v9408 = vsel %vm3739, %v9364, 0
    %v9411 = vsel %vm3739, %v9366, 0
    %v9414 = vsel %vm3739, %v9368, 0
    %v9417 = vsel %vm3739, %v9370, 0
    %9419 = vmatprep.subr.bf16.mxu0 0
    %9420 = vmatpush1.bf16.msra.mxu0 0
    %9421 = vmatprep.subr.bf16.mxu0 0
    %9422 = vmatpush1.bf16.msra.mxu0 0
    %9423 = vmatprep.subr.bf16.mxu0 0
    %9424 = vmatpush1.bf16.msra.mxu0 0
    %9425 = vmatprep.subr.bf16.mxu0 0
    %9426 = vmatpush1.bf16.msra.mxu0 0
    %9427 = vmatprep.subr.bf16.mxu0 0
    %9428 = vmatpush1.bf16.msra.mxu0 0
    %9429 = vmatprep.subr.bf16.mxu0 0
    %9430 = vmatpush1.bf16.msra.mxu0 0
    %9431 = vmatprep.subr.bf16.mxu0 0
    %9432 = vmatpush1.bf16.msra.mxu0 %v3736
    %9433 = vmatprep.subr.bf16.mxu0 0
    %9434 = vmatpush1.bf16.msra.mxu0 %v3735
    %9435 = vmatprep.subr.bf16.mxu0 0
    %9436 = vmatpush2.bf16.msra.mxu0 0
    %9437 = vmatprep.subr.bf16.mxu0 0
    %9438 = vmatpush2.bf16.msra.mxu0 0
    %9439 = vmatprep.subr.bf16.mxu0 0
    %9440 = vmatpush2.bf16.msra.mxu0 0
    %9441 = vmatprep.subr.bf16.mxu0 0
    %9442 = vmatpush2.bf16.msra.mxu0 0
    %9443 = vmatprep.subr.bf16.mxu0 0
    %9444 = vmatpush2.bf16.msra.mxu0 0
    %9445 = vmatprep.subr.bf16.mxu0 0
    %9446 = vmatpush2.bf16.msra.mxu0 0
    %9447 = vmatprep.subr.bf16.mxu0 0
    %9448 = vmatpush2.bf16.msra.mxu0 0
    %9449 = vmatprep.subr.bf16.mxu0 0
    %9450 = vmatpush2.bf16.msra.mxu0 0
    %9451 = vmatprep.mubr.bf16.mxu0 0
    %9452 = vmatmul.mubr.bf16.gmra.mxu0 %v9372
    %v9453 = vpop.f32.mrf.mxu0
    %v9454 = vadd.f32 0.0, %v9453
    %v9455 = vpop.f32.mrf.mxu0
    %v9456 = vpop.f32.mrf.mxu0
    %v9457 = vadd.f32 0.0, %v9456
    %v9458 = vpop.f32.mrf.mxu0
    %9459 = vmatprep.mubr.bf16.mxu0 0
    %9460 = vmatmul.mubr.bf16.gmra.mxu0 %v9375
    %v9461 = vpop.f32.mrf.mxu0
    %v9462 = vadd.f32 0.0, %v9461
    %v9463 = vpop.f32.mrf.mxu0
    %v9464 = vpop.f32.mrf.mxu0
    %v9465 = vadd.f32 0.0, %v9464
    %v9466 = vpop.f32.mrf.mxu0
    %9467 = vmatprep.mubr.bf16.mxu0 0
    %9468 = vmatmul.mubr.bf16.gmra.mxu0 %v9378
    %v9469 = vpop.f32.mrf.mxu0
    %v9470 = vadd.f32 0.0, %v9469
    %v9471 = vpop.f32.mrf.mxu0
    %v9472 = vpop.f32.mrf.mxu0
    %v9473 = vadd.f32 0.0, %v9472
    %v9474 = vpop.f32.mrf.mxu0
    %9475 = vmatprep.mubr.bf16.mxu0 0
    %9476 = vmatmul.mubr.bf16.gmra.mxu0 %v9381
    %v9477 = vpop.f32.mrf.mxu0
    %v9478 = vadd.f32 0.0, %v9477
    %v9479 = vpop.f32.mrf.mxu0
    %v9480 = vpop.f32.mrf.mxu0
    %v9481 = vadd.f32 0.0, %v9480
    %v9482 = vpop.f32.mrf.mxu0
    %9483 = vmatprep.mubr.bf16.mxu0 0
    %9484 = vmatmul.mubr.bf16.gmra.mxu0 %v9384
    %v9485 = vpop.f32.mrf.mxu0
    %v9486 = vadd.f32 0.0, %v9485
    %v9487 = vpop.f32.mrf.mxu0
    %v9488 = vpop.f32.mrf.mxu0
    %v9489 = vadd.f32 0.0, %v9488
    %v9490 = vpop.f32.mrf.mxu0
    %9491 = vmatprep.mubr.bf16.mxu0 0
    %9492 = vmatmul.mubr.bf16.gmra.mxu0 %v9387
    %v9493 = vpop.f32.mrf.mxu0
    %v9494 = vadd.f32 0.0, %v9493
    %v9495 = vpop.f32.mrf.mxu0
    %v9496 = vpop.f32.mrf.mxu0
    %v9497 = vadd.f32 0.0, %v9496
    %v9498 = vpop.f32.mrf.mxu0
    %9499 = vmatprep.mubr.bf16.mxu0 0
    %9500 = vmatmul.mubr.bf16.gmra.mxu0 %v9390
    %v9501 = vpop.f32.mrf.mxu0
    %v9502 = vadd.f32 0.0, %v9501
    %v9503 = vpop.f32.mrf.mxu0
    %v9504 = vpop.f32.mrf.mxu0
    %v9505 = vadd.f32 0.0, %v9504
    %v9506 = vpop.f32.mrf.mxu0
    %9507 = vmatprep.mubr.bf16.mxu0 0
    %9508 = vmatmul.mubr.bf16.gmra.mxu0 %v9393
    %v9509 = vpop.f32.mrf.mxu0
    %v9510 = vadd.f32 0.0, %v9509
    %v9511 = vpop.f32.mrf.mxu0
    %v9512 = vpop.f32.mrf.mxu0
    %v9513 = vadd.f32 0.0, %v9512
    %v9514 = vpop.f32.mrf.mxu0
    %9515 = vmatprep.mubr.bf16.mxu0 0
    %9516 = vmatmul.mubr.bf16.gmra.mxu0 %v9396
    %v9517 = vpop.f32.mrf.mxu0
    %v9518 = vadd.f32 0.0, %v9517
    %v9519 = vpop.f32.mrf.mxu0
    %v9520 = vpop.f32.mrf.mxu0
    %v9521 = vadd.f32 0.0, %v9520
    %v9522 = vpop.f32.mrf.mxu0
    %9523 = vmatprep.mubr.bf16.mxu0 0
    %9524 = vmatmul.mubr.bf16.gmra.mxu0 %v9399
    %v9525 = vpop.f32.mrf.mxu0
    %v9526 = vadd.f32 0.0, %v9525
    %v9527 = vpop.f32.mrf.mxu0
    %v9528 = vpop.f32.mrf.mxu0
    %v9529 = vadd.f32 0.0, %v9528
    %v9530 = vpop.f32.mrf.mxu0
    %9531 = vmatprep.mubr.bf16.mxu0 0
    %9532 = vmatmul.mubr.bf16.gmra.mxu0 %v9402
    %v9533 = vpop.f32.mrf.mxu0
    %v9534 = vadd.f32 0.0, %v9533
    %v9535 = vpop.f32.mrf.mxu0
    %v9536 = vpop.f32.mrf.mxu0
    %v9537 = vadd.f32 0.0, %v9536
    %v9538 = vpop.f32.mrf.mxu0
    %9539 = vmatprep.mubr.bf16.mxu0 0
    %9540 = vmatmul.mubr.bf16.gmra.mxu0 %v9405
    %v9541 = vpop.f32.mrf.mxu0
    %v9542 = vadd.f32 0.0, %v9541
    %v9543 = vpop.f32.mrf.mxu0
    %v9544 = vpop.f32.mrf.mxu0
    %v9545 = vadd.f32 0.0, %v9544
    %v9546 = vpop.f32.mrf.mxu0
    %9547 = vmatprep.mubr.bf16.mxu0 0
    %9548 = vmatmul.mubr.bf16.gmra.mxu0 %v9408
    %v9549 = vpop.f32.mrf.mxu0
    %v9550 = vadd.f32 0.0, %v9549
    %v9551 = vpop.f32.mrf.mxu0
    %v9552 = vpop.f32.mrf.mxu0
    %v9553 = vadd.f32 0.0, %v9552
    %v9554 = vpop.f32.mrf.mxu0
    %9555 = vmatprep.mubr.bf16.mxu0 0
    %9556 = vmatmul.mubr.bf16.gmra.mxu0 %v9411
    %v9557 = vpop.f32.mrf.mxu0
    %v9558 = vadd.f32 0.0, %v9557
    %v9559 = vpop.f32.mrf.mxu0
    %v9560 = vpop.f32.mrf.mxu0
    %v9561 = vadd.f32 0.0, %v9560
    %v9562 = vpop.f32.mrf.mxu0
    %9563 = vmatprep.mubr.bf16.mxu0 0
    %9564 = vmatmul.mubr.bf16.gmra.mxu0 %v9414
    %v9565 = vpop.f32.mrf.mxu0
    %v9566 = vadd.f32 0.0, %v9565
    %v9567 = vpop.f32.mrf.mxu0
    %v9568 = vpop.f32.mrf.mxu0
    %v9569 = vadd.f32 0.0, %v9568
    %v9570 = vpop.f32.mrf.mxu0
    %9571 = vmatprep.mubr.bf16.mxu0 0
    %9572 = vmatmul.mubr.bf16.gmra.mxu0 %v9417
    %v9573 = vpop.f32.mrf.mxu0
    %v9574 = vadd.f32 0.0, %v9573
    %v9575 = vpop.f32.mrf.mxu0
    %v9576 = vpop.f32.mrf.mxu0
    %v9577 = vadd.f32 0.0, %v9576
    %v9578 = vpop.f32.mrf.mxu0
    %9579 = vdwg.mxu0
    %v9580 = vadd.f32 %v9291, %v9454
    %v9581 = vadd.f32 %v9292, %v9457
    %v9582 = vadd.f32 %v9293, %v9462
    %v9583 = vadd.f32 %v9294, %v9465
    %v9584 = vadd.f32 %v9295, %v9470
    %v9585 = vadd.f32 %v9296, %v9473
    %v9586 = vadd.f32 %v9297, %v9478
    %v9587 = vadd.f32 %v9298, %v9481
    %v9588 = vadd.f32 %v9299, %v9486
    %v9589 = vadd.f32 %v9300, %v9489
    %v9590 = vadd.f32 %v9301, %v9494
    %v9591 = vadd.f32 %v9302, %v9497
    %v9592 = vadd.f32 %v9303, %v9502
    %v9593 = vadd.f32 %v9304, %v9505
    %v9594 = vadd.f32 %v9305, %v9510
    %v9595 = vadd.f32 %v9306, %v9513
    %v9596 = vadd.f32 %v9307, %v9518
    %v9597 = vadd.f32 %v9308, %v9521
    %v9598 = vadd.f32 %v9309, %v9526
    %v9599 = vadd.f32 %v9310, %v9529
    %v9600 = vadd.f32 %v9311, %v9534
    %v9601 = vadd.f32 %v9312, %v9537
    %v9602 = vadd.f32 %v9313, %v9542
    %v9603 = vadd.f32 %v9314, %v9545
    %v9604 = vadd.f32 %v9315, %v9550
    %v9605 = vadd.f32 %v9316, %v9553
    %v9606 = vadd.f32 %v9317, %v9558
    %v9607 = vadd.f32 %v9318, %v9561
    %v9608 = vadd.f32 %v9319, %v9566
    %v9609 = vadd.f32 %v9320, %v9569
    %v9610 = vadd.f32 %v9321, %v9574
    %v9611 = vadd.f32 %v9322, %v9577
    %v9612 = vpack.c.bf16 %v9581, %v9580
    %v9613 = vpack.c.bf16 %v9583, %v9582
    %v9614 = vpack.c.bf16 %v9585, %v9584
    %v9615 = vpack.c.bf16 %v9587, %v9586
    %v9616 = vpack.c.bf16 %v9589, %v9588
    %v9617 = vpack.c.bf16 %v9591, %v9590
    %v9618 = vpack.c.bf16 %v9593, %v9592
    %v9619 = vpack.c.bf16 %v9595, %v9594
    %v9620 = vpack.c.bf16 %v9597, %v9596
    %v9621 = vpack.c.bf16 %v9599, %v9598
    %v9622 = vpack.c.bf16 %v9601, %v9600
    %v9623 = vpack.c.bf16 %v9603, %v9602
    %v9624 = vpack.c.bf16 %v9605, %v9604
    %v9625 = vpack.c.bf16 %v9607, %v9606
    %v9626 = vpack.c.bf16 %v9609, %v9608
    %v9627 = vpack.c.bf16 %v9611, %v9610
    %v9628 = vxor.u32 %v9612, 2147516416
    %v9629 = vxor.u32 %v9613, 2147516416
    %v9630 = vxor.u32 %v9614, 2147516416
    %v9631 = vxor.u32 %v9615, 2147516416
    %v9632 = vxor.u32 %v9616, 2147516416
    %v9633 = vxor.u32 %v9617, 2147516416
    %v9634 = vxor.u32 %v9618, 2147516416
    %v9635 = vxor.u32 %v9619, 2147516416
    %v9636 = vxor.u32 %v9620, 2147516416
    %v9637 = vxor.u32 %v9621, 2147516416
    %v9638 = vxor.u32 %v9622, 2147516416
    %v9639 = vxor.u32 %v9623, 2147516416
    %v9640 = vxor.u32 %v9624, 2147516416
    %v9641 = vxor.u32 %v9625, 2147516416
    %v9642 = vxor.u32 %v9626, 2147516416
    %v9643 = vxor.u32 %v9627, 2147516416
    %v9645 = vmul.bf16 %v9628, 1069105081
    %v9646 = vpow.bf16.pop %v9645
    %v9648 = vmul.bf16 %v9629, 1069105081
    %v9649 = vpow.bf16.pop %v9648
    %v9651 = vmul.bf16 %v9630, 1069105081
    %v9652 = vpow.bf16.pop %v9651
    %v9654 = vmul.bf16 %v9631, 1069105081
    %v9655 = vpow.bf16.pop %v9654
    %v9657 = vmul.bf16 %v9632, 1069105081
    %v9658 = vpow.bf16.pop %v9657
    %v9660 = vmul.bf16 %v9633, 1069105081
    %v9661 = vpow.bf16.pop %v9660
    %v9663 = vmul.bf16 %v9634, 1069105081
    %v9664 = vpow.bf16.pop %v9663
    %v9666 = vmul.bf16 %v9635, 1069105081
    %v9667 = vpow.bf16.pop %v9666
    %v9669 = vmul.bf16 %v9636, 1069105081
    %v9670 = vpow.bf16.pop %v9669
    %v9672 = vmul.bf16 %v9637, 1069105081
    %v9673 = vpow.bf16.pop %v9672
    %v9675 = vmul.bf16 %v9638, 1069105081
    %v9676 = vpow.bf16.pop %v9675
    %v9678 = vmul.bf16 %v9639, 1069105081
    %v9679 = vpow.bf16.pop %v9678
    %v9681 = vmul.bf16 %v9640, 1069105081
    %v9682 = vpow.bf16.pop %v9681
    %v9684 = vmul.bf16 %v9641, 1069105081
    %v9685 = vpow.bf16.pop %v9684
    %v9687 = vmul.bf16 %v9642, 1069105081
    %v9688 = vpow.bf16.pop %v9687
    %v9690 = vmul.bf16 %v9643, 1069105081
    %v9691 = vpow.bf16.pop %v9690
    %v9692 = vadd.bf16 %v9646, 1065369472
    %v9693 = vadd.bf16 %v9649, 1065369472
    %v9694 = vadd.bf16 %v9652, 1065369472
    %v9695 = vadd.bf16 %v9655, 1065369472
    %v9696 = vadd.bf16 %v9658, 1065369472
    %v9697 = vadd.bf16 %v9661, 1065369472
    %v9698 = vadd.bf16 %v9664, 1065369472
    %v9699 = vadd.bf16 %v9667, 1065369472
    %v9700 = vadd.bf16 %v9670, 1065369472
    %v9701 = vadd.bf16 %v9673, 1065369472
    %v9702 = vadd.bf16 %v9676, 1065369472
    %v9703 = vadd.bf16 %v9679, 1065369472
    %v9704 = vadd.bf16 %v9682, 1065369472
    %v9705 = vadd.bf16 %v9685, 1065369472
    %v9706 = vadd.bf16 %v9688, 1065369472
    %v9707 = vadd.bf16 %v9691, 1065369472
    %v9708 = vrcp.bf16.pop %v9692
    %v9709 = vmul.bf16 1065369472, %v9708
    %v9710 = vrcp.bf16.pop %v9693
    %v9711 = vmul.bf16 1065369472, %v9710
    %v9712 = vrcp.bf16.pop %v9694
    %v9713 = vmul.bf16 1065369472, %v9712
    %v9714 = vrcp.bf16.pop %v9695
    %v9715 = vmul.bf16 1065369472, %v9714
    %v9716 = vrcp.bf16.pop %v9696
    %v9717 = vmul.bf16 1065369472, %v9716
    %v9718 = vrcp.bf16.pop %v9697
    %v9719 = vmul.bf16 1065369472, %v9718
    %v9720 = vrcp.bf16.pop %v9698
    %v9721 = vmul.bf16 1065369472, %v9720
    %v9722 = vrcp.bf16.pop %v9699
    %v9723 = vmul.bf16 1065369472, %v9722
    %v9724 = vrcp.bf16.pop %v9700
    %v9725 = vmul.bf16 1065369472, %v9724
    %v9726 = vrcp.bf16.pop %v9701
    %v9727 = vmul.bf16 1065369472, %v9726
    %v9728 = vrcp.bf16.pop %v9702
    %v9729 = vmul.bf16 1065369472, %v9728
    %v9730 = vrcp.bf16.pop %v9703
    %v9731 = vmul.bf16 1065369472, %v9730
    %v9732 = vrcp.bf16.pop %v9704
    %v9733 = vmul.bf16 1065369472, %v9732
    %v9734 = vrcp.bf16.pop %v9705
    %v9735 = vmul.bf16 1065369472, %v9734
    %v9736 = vrcp.bf16.pop %v9706
    %v9737 = vmul.bf16 1065369472, %v9736
    %v9738 = vrcp.bf16.pop %v9707
    %v9739 = vmul.bf16 1065369472, %v9738
    %v9740 = vtanh.bf16.pop %v9612
    %v9741 = vtanh.bf16.pop %v9613
    %v9742 = vtanh.bf16.pop %v9614
    %v9743 = vtanh.bf16.pop %v9615
    %v9744 = vtanh.bf16.pop %v9616
    %v9745 = vtanh.bf16.pop %v9617
    %v9746 = vtanh.bf16.pop %v9618
    %v9747 = vtanh.bf16.pop %v9619
    %v9748 = vtanh.bf16.pop %v9620
    %v9749 = vtanh.bf16.pop %v9621
    %v9750 = vtanh.bf16.pop %v9622
    %v9751 = vtanh.bf16.pop %v9623
    %v9752 = vtanh.bf16.pop %v9624
    %v9753 = vtanh.bf16.pop %v9625
    %v9754 = vtanh.bf16.pop %v9626
    %v9755 = vtanh.bf16.pop %v9627
    %v9756 = vunpack.c.l.bf16 %v9709
    %v9757 = vunpack.c.h.bf16 %v9709
    %v9758 = vunpack.c.l.bf16 %v9711
    %v9759 = vunpack.c.h.bf16 %v9711
    %v9760 = vunpack.c.l.bf16 %v9713
    %v9761 = vunpack.c.h.bf16 %v9713
    %v9762 = vunpack.c.l.bf16 %v9715
    %v9763 = vunpack.c.h.bf16 %v9715
    %v9764 = vunpack.c.l.bf16 %v9717
    %v9765 = vunpack.c.h.bf16 %v9717
    %v9766 = vunpack.c.l.bf16 %v9719
    %v9767 = vunpack.c.h.bf16 %v9719
    %v9768 = vunpack.c.l.bf16 %v9721
    %v9769 = vunpack.c.h.bf16 %v9721
    %v9770 = vunpack.c.l.bf16 %v9723
    %v9771 = vunpack.c.h.bf16 %v9723
    %v9772 = vunpack.c.l.bf16 %v9725
    %v9773 = vunpack.c.h.bf16 %v9725
    %v9774 = vunpack.c.l.bf16 %v9727
    %v9775 = vunpack.c.h.bf16 %v9727
    %v9776 = vunpack.c.l.bf16 %v9729
    %v9777 = vunpack.c.h.bf16 %v9729
    %v9778 = vunpack.c.l.bf16 %v9731
    %v9779 = vunpack.c.h.bf16 %v9731
    %v9780 = vunpack.c.l.bf16 %v9733
    %v9781 = vunpack.c.h.bf16 %v9733
    %v9782 = vunpack.c.l.bf16 %v9735
    %v9783 = vunpack.c.h.bf16 %v9735
    %v9784 = vunpack.c.l.bf16 %v9737
    %v9785 = vunpack.c.h.bf16 %v9737
    %v9786 = vunpack.c.l.bf16 %v9739
    %v9787 = vunpack.c.h.bf16 %v9739
    %v9788 = vmul.f32 %v9756, %v9114
    %v9789 = vmul.f32 %v9757, %v9115
    %v9790 = vmul.f32 %v9758, %v9116
    %v9791 = vmul.f32 %v9759, %v9117
    %v9792 = vmul.f32 %v9760, %v9118
    %v9793 = vmul.f32 %v9761, %v9119
    %v9794 = vmul.f32 %v9762, %v9120
    %v9795 = vmul.f32 %v9763, %v9121
    %v9796 = vmul.f32 %v9764, %v9122
    %v9797 = vmul.f32 %v9765, %v9123
    %v9798 = vmul.f32 %v9766, %v9124
    %v9799 = vmul.f32 %v9767, %v9125
    %v9800 = vmul.f32 %v9768, %v9126
    %v9801 = vmul.f32 %v9769, %v9127
    %v9802 = vmul.f32 %v9770, %v9128
    %v9803 = vmul.f32 %v9771, %v9129
    %v9804 = vmul.f32 %v9772, %v9130
    %v9805 = vmul.f32 %v9773, %v9131
    %v9806 = vmul.f32 %v9774, %v9132
    %v9807 = vmul.f32 %v9775, %v9133
    %v9808 = vmul.f32 %v9776, %v9134
    %v9809 = vmul.f32 %v9777, %v9135
    %v9810 = vmul.f32 %v9778, %v9136
    %v9811 = vmul.f32 %v9779, %v9137
    %v9812 = vmul.f32 %v9780, %v9138
    %v9813 = vmul.f32 %v9781, %v9139
    %v9814 = vmul.f32 %v9782, %v9140
    %v9815 = vmul.f32 %v9783, %v9141
    %v9816 = vmul.f32 %v9784, %v9142
    %v9817 = vmul.f32 %v9785, %v9143
    %v9818 = vmul.f32 %v9786, %v9144
    %v9819 = vmul.f32 %v9787, %v9145
    %9836 = vrot.lane.b32.xlu0 %v9740, 64
    %v9837 = vpop.permute.xlu0 %9836
    %9838 = vrot.lane.b32.xlu0 %v9741, 64
    %v9839 = vpop.permute.xlu0 %9838
    %9840 = vrot.lane.b32.xlu0 %v9742, 64
    %v9841 = vpop.permute.xlu0 %9840
    %9842 = vrot.lane.b32.xlu0 %v9743, 64
    %v9843 = vpop.permute.xlu0 %9842
    %9844 = vrot.lane.b32.xlu0 %v9744, 64
    %v9845 = vpop.permute.xlu0 %9844
    %9846 = vrot.lane.b32.xlu0 %v9745, 64
    %v9847 = vpop.permute.xlu0 %9846
    %9848 = vrot.lane.b32.xlu0 %v9746, 64
    %v9849 = vpop.permute.xlu0 %9848
    %9850 = vrot.lane.b32.xlu0 %v9747, 64
    %v9851 = vpop.permute.xlu0 %9850
    %9852 = vrot.lane.b32.xlu0 %v9748, 64
    %v9853 = vpop.permute.xlu0 %9852
    %9854 = vrot.lane.b32.xlu0 %v9749, 64
    %v9855 = vpop.permute.xlu0 %9854
    %9856 = vrot.lane.b32.xlu0 %v9750, 64
    %v9857 = vpop.permute.xlu0 %9856
    %9858 = vrot.lane.b32.xlu0 %v9751, 64
    %v9859 = vpop.permute.xlu0 %9858
    %9860 = vrot.lane.b32.xlu0 %v9752, 64
    %v9861 = vpop.permute.xlu0 %9860
    %9862 = vrot.lane.b32.xlu0 %v9753, 64
    %v9863 = vpop.permute.xlu0 %9862
    %9864 = vrot.lane.b32.xlu0 %v9754, 64
    %v9865 = vpop.permute.xlu0 %9864
    %9866 = vrot.lane.b32.xlu0 %v9755, 64
    %v9867 = vpop.permute.xlu0 %9866
    %v9884 = vmul.bf16 %v9709, %v9837
    %v9885 = vmul.bf16 %v9711, %v9839
    %v9886 = vmul.bf16 %v9713, %v9841
    %v9887 = vmul.bf16 %v9715, %v9843
    %v9888 = vmul.bf16 %v9717, %v9845
    %v9889 = vmul.bf16 %v9719, %v9847
    %v9890 = vmul.bf16 %v9721, %v9849
    %v9891 = vmul.bf16 %v9723, %v9851
    %v9892 = vmul.bf16 %v9725, %v9853
    %v9893 = vmul.bf16 %v9727, %v9855
    %v9894 = vmul.bf16 %v9729, %v9857
    %v9895 = vmul.bf16 %v9731, %v9859
    %v9896 = vmul.bf16 %v9733, %v9861
    %v9897 = vmul.bf16 %v9735, %v9863
    %v9898 = vmul.bf16 %v9737, %v9865
    %v9899 = vmul.bf16 %v9739, %v9867
    %v9900 = vunpack.c.l.bf16 %v9884
    %v9901 = vunpack.c.h.bf16 %v9884
    %v9902 = vunpack.c.l.bf16 %v9885
    %v9903 = vunpack.c.h.bf16 %v9885
    %v9904 = vunpack.c.l.bf16 %v9886
    %v9905 = vunpack.c.h.bf16 %v9886
    %v9906 = vunpack.c.l.bf16 %v9887
    %v9907 = vunpack.c.h.bf16 %v9887
    %v9908 = vunpack.c.l.bf16 %v9888
    %v9909 = vunpack.c.h.bf16 %v9888
    %v9910 = vunpack.c.l.bf16 %v9889
    %v9911 = vunpack.c.h.bf16 %v9889
    %v9912 = vunpack.c.l.bf16 %v9890
    %v9913 = vunpack.c.h.bf16 %v9890
    %v9914 = vunpack.c.l.bf16 %v9891
    %v9915 = vunpack.c.h.bf16 %v9891
    %v9916 = vunpack.c.l.bf16 %v9892
    %v9917 = vunpack.c.h.bf16 %v9892
    %v9918 = vunpack.c.l.bf16 %v9893
    %v9919 = vunpack.c.h.bf16 %v9893
    %v9920 = vunpack.c.l.bf16 %v9894
    %v9921 = vunpack.c.h.bf16 %v9894
    %v9922 = vunpack.c.l.bf16 %v9895
    %v9923 = vunpack.c.h.bf16 %v9895
    %v9924 = vunpack.c.l.bf16 %v9896
    %v9925 = vunpack.c.h.bf16 %v9896
    %v9926 = vunpack.c.l.bf16 %v9897
    %v9927 = vunpack.c.h.bf16 %v9897
    %v9928 = vunpack.c.l.bf16 %v9898
    %v9929 = vunpack.c.h.bf16 %v9898
    %v9930 = vunpack.c.l.bf16 %v9899
    %v9931 = vunpack.c.h.bf16 %v9899
    %9964 = vrot.lane.b32.xlu0 %v9900, 32
    %v9965 = vpop.permute.xlu0 %9964
    %9966 = vrot.lane.b32.xlu0 %v9901, 32
    %v9967 = vpop.permute.xlu0 %9966
    %9968 = vrot.lane.b32.xlu0 %v9902, 32
    %v9969 = vpop.permute.xlu0 %9968
    %9970 = vrot.lane.b32.xlu0 %v9903, 32
    %v9971 = vpop.permute.xlu0 %9970
    %9972 = vrot.lane.b32.xlu0 %v9904, 32
    %v9973 = vpop.permute.xlu0 %9972
    %9974 = vrot.lane.b32.xlu0 %v9905, 32
    %v9975 = vpop.permute.xlu0 %9974
    %9976 = vrot.lane.b32.xlu0 %v9906, 32
    %v9977 = vpop.permute.xlu0 %9976
    %9978 = vrot.lane.b32.xlu0 %v9907, 32
    %v9979 = vpop.permute.xlu0 %9978
    %9980 = vrot.lane.b32.xlu0 %v9908, 32
    %v9981 = vpop.permute.xlu0 %9980
    %9982 = vrot.lane.b32.xlu0 %v9909, 32
    %v9983 = vpop.permute.xlu0 %9982
    %9984 = vrot.lane.b32.xlu0 %v9910, 32
    %v9985 = vpop.permute.xlu0 %9984
    %9986 = vrot.lane.b32.xlu0 %v9911, 32
    %v9987 = vpop.permute.xlu0 %9986
    %9988 = vrot.lane.b32.xlu0 %v9912, 32
    %v9989 = vpop.permute.xlu0 %9988
    %9990 = vrot.lane.b32.xlu0 %v9913, 32
    %v9991 = vpop.permute.xlu0 %9990
    %9992 = vrot.lane.b32.xlu0 %v9914, 32
    %v9993 = vpop.permute.xlu0 %9992
    %9994 = vrot.lane.b32.xlu0 %v9915, 32
    %v9995 = vpop.permute.xlu0 %9994
    %9996 = vrot.lane.b32.xlu0 %v9916, 32
    %v9997 = vpop.permute.xlu0 %9996
    %9998 = vrot.lane.b32.xlu0 %v9917, 32
    %v9999 = vpop.permute.xlu0 %9998
    %10000 = vrot.lane.b32.xlu0 %v9918, 32
    %v10001 = vpop.permute.xlu0 %10000
    %10002 = vrot.lane.b32.xlu0 %v9919, 32
    %v10003 = vpop.permute.xlu0 %10002
    %10004 = vrot.lane.b32.xlu0 %v9920, 32
    %v10005 = vpop.permute.xlu0 %10004
    %10006 = vrot.lane.b32.xlu0 %v9921, 32
    %v10007 = vpop.permute.xlu0 %10006
    %10008 = vrot.lane.b32.xlu0 %v9922, 32
    %v10009 = vpop.permute.xlu0 %10008
    %10010 = vrot.lane.b32.xlu0 %v9923, 32
    %v10011 = vpop.permute.xlu0 %10010
    %10012 = vrot.lane.b32.xlu0 %v9924, 32
    %v10013 = vpop.permute.xlu0 %10012
    %10014 = vrot.lane.b32.xlu0 %v9925, 32
    %v10015 = vpop.permute.xlu0 %10014
    %10016 = vrot.lane.b32.xlu0 %v9926, 32
    %v10017 = vpop.permute.xlu0 %10016
    %10018 = vrot.lane.b32.xlu0 %v9927, 32
    %v10019 = vpop.permute.xlu0 %10018
    %10020 = vrot.lane.b32.xlu0 %v9928, 32
    %v10021 = vpop.permute.xlu0 %10020
    %10022 = vrot.lane.b32.xlu0 %v9929, 32
    %v10023 = vpop.permute.xlu0 %10022
    %10024 = vrot.lane.b32.xlu0 %v9930, 32
    %v10025 = vpop.permute.xlu0 %10024
    %10026 = vrot.lane.b32.xlu0 %v9931, 32
    %v10027 = vpop.permute.xlu0 %10026
    %v10060 = vadd.f32 %v9788, %v9965
    %v10061 = vadd.f32 %v9789, %v9967
    %v10062 = vadd.f32 %v9790, %v9969
    %v10063 = vadd.f32 %v9791, %v9971
    %v10064 = vadd.f32 %v9792, %v9973
    %v10065 = vadd.f32 %v9793, %v9975
    %v10066 = vadd.f32 %v9794, %v9977
    %v10067 = vadd.f32 %v9795, %v9979
    %v10068 = vadd.f32 %v9796, %v9981
    %v10069 = vadd.f32 %v9797, %v9983
    %v10070 = vadd.f32 %v9798, %v9985
    %v10071 = vadd.f32 %v9799, %v9987
    %v10072 = vadd.f32 %v9800, %v9989
    %v10073 = vadd.f32 %v9801, %v9991
    %v10074 = vadd.f32 %v9802, %v9993
    %v10075 = vadd.f32 %v9803, %v9995
    %v10076 = vadd.f32 %v9804, %v9997
    %v10077 = vadd.f32 %v9805, %v9999
    %v10078 = vadd.f32 %v9806, %v10001
    %v10079 = vadd.f32 %v9807, %v10003
    %v10080 = vadd.f32 %v9808, %v10005
    %v10081 = vadd.f32 %v9809, %v10007
    %v10082 = vadd.f32 %v9810, %v10009
    %v10083 = vadd.f32 %v9811, %v10011
    %v10084 = vadd.f32 %v9812, %v10013
    %v10085 = vadd.f32 %v9813, %v10015
    %v10086 = vadd.f32 %v9814, %v10017
    %v10087 = vadd.f32 %v9815, %v10019
    %v10088 = vadd.f32 %v9816, %v10021
    %v10089 = vadd.f32 %v9817, %v10023
    %v10090 = vadd.f32 %v9818, %v10025
    %v10091 = vadd.f32 %v9819, %v10027
    %v10092 = vpack.c.bf16 %v10061, %v10060
    %v10093 = vpack.c.bf16 %v10063, %v10062
    %v10094 = vpack.c.bf16 %v10065, %v10064
    %v10095 = vpack.c.bf16 %v10067, %v10066
    %v10096 = vpack.c.bf16 %v10069, %v10068
    %v10097 = vpack.c.bf16 %v10071, %v10070
    %v10098 = vpack.c.bf16 %v10073, %v10072
    %v10099 = vpack.c.bf16 %v10075, %v10074
    %v10100 = vpack.c.bf16 %v10077, %v10076
    %v10101 = vpack.c.bf16 %v10079, %v10078
    %v10102 = vpack.c.bf16 %v10081, %v10080
    %v10103 = vpack.c.bf16 %v10083, %v10082
    %v10104 = vpack.c.bf16 %v10085, %v10084
    %v10105 = vpack.c.bf16 %v10087, %v10086
    %v10106 = vpack.c.bf16 %v10089, %v10088
    %v10107 = vpack.c.bf16 %v10091, %v10090
    %v10108 = vtanh.bf16.pop %v10092
    %v10109 = vtanh.bf16.pop %v10093
    %v10110 = vtanh.bf16.pop %v10094
    %v10111 = vtanh.bf16.pop %v10095
    %v10112 = vtanh.bf16.pop %v10096
    %v10113 = vtanh.bf16.pop %v10097
    %v10114 = vtanh.bf16.pop %v10098
    %v10115 = vtanh.bf16.pop %v10099
    %v10116 = vtanh.bf16.pop %v10100
    %v10117 = vtanh.bf16.pop %v10101
    %v10118 = vtanh.bf16.pop %v10102
    %v10119 = vtanh.bf16.pop %v10103
    %v10120 = vtanh.bf16.pop %v10104
    %v10121 = vtanh.bf16.pop %v10105
    %v10122 = vtanh.bf16.pop %v10106
    %v10123 = vtanh.bf16.pop %v10107
    %10140 = vrot.lane.b32.xlu0 %v10108, 64
    %v10141 = vpop.permute.xlu0 %10140
    %10142 = vrot.lane.b32.xlu0 %v10109, 64
    %v10143 = vpop.permute.xlu0 %10142
    %10144 = vrot.lane.b32.xlu0 %v10110, 64
    %v10145 = vpop.permute.xlu0 %10144
    %10146 = vrot.lane.b32.xlu0 %v10111, 64
    %v10147 = vpop.permute.xlu0 %10146
    %10148 = vrot.lane.b32.xlu0 %v10112, 64
    %v10149 = vpop.permute.xlu0 %10148
    %10150 = vrot.lane.b32.xlu0 %v10113, 64
    %v10151 = vpop.permute.xlu0 %10150
    %10152 = vrot.lane.b32.xlu0 %v10114, 64
    %v10153 = vpop.permute.xlu0 %10152
    %10154 = vrot.lane.b32.xlu0 %v10115, 64
    %v10155 = vpop.permute.xlu0 %10154
    %10156 = vrot.lane.b32.xlu0 %v10116, 64
    %v10157 = vpop.permute.xlu0 %10156
    %10158 = vrot.lane.b32.xlu0 %v10117, 64
    %v10159 = vpop.permute.xlu0 %10158
    %10160 = vrot.lane.b32.xlu0 %v10118, 64
    %v10161 = vpop.permute.xlu0 %10160
    %10162 = vrot.lane.b32.xlu0 %v10119, 64
    %v10163 = vpop.permute.xlu0 %10162
    %10164 = vrot.lane.b32.xlu0 %v10120, 64
    %v10165 = vpop.permute.xlu0 %10164
    %10166 = vrot.lane.b32.xlu0 %v10121, 64
    %v10167 = vpop.permute.xlu0 %10166
    %10168 = vrot.lane.b32.xlu0 %v10122, 64
    %v10169 = vpop.permute.xlu0 %10168
    %10170 = vrot.lane.b32.xlu0 %v10123, 64
    %v10171 = vpop.permute.xlu0 %10170
    %v10188 = vmul.bf16 %v9709, %v10141
    %v10189 = vmul.bf16 %v9711, %v10143
    %v10190 = vmul.bf16 %v9713, %v10145
    %v10191 = vmul.bf16 %v9715, %v10147
    %v10192 = vmul.bf16 %v9717, %v10149
    %v10193 = vmul.bf16 %v9719, %v10151
    %v10194 = vmul.bf16 %v9721, %v10153
    %v10195 = vmul.bf16 %v9723, %v10155
    %v10196 = vmul.bf16 %v9725, %v10157
    %v10197 = vmul.bf16 %v9727, %v10159
    %v10198 = vmul.bf16 %v9729, %v10161
    %v10199 = vmul.bf16 %v9731, %v10163
    %v10200 = vmul.bf16 %v9733, %v10165
    %v10201 = vmul.bf16 %v9735, %v10167
    %v10202 = vmul.bf16 %v9737, %v10169
    %v10203 = vmul.bf16 %v9739, %v10171
    %s10204 = scalar_lea.vmem [#allocation2], 896
    %v10205 = vld [vmem:[%s10204] sm:$0xf]
    %v10206 = vld [vmem:[%s10204 + $0x4] sm:$0xf]
    %v10207 = vld [vmem:[%s10204 + $0x8] sm:$0xf]
    %v10208 = vld [vmem:[%s10204 + $0xc] sm:$0xf]
    %v10209 = vld [vmem:[%s10204 + $0x10] sm:$0xf]
    %v10210 = vld [vmem:[%s10204 + $0x14] sm:$0xf]
    %v10211 = vld [vmem:[%s10204 + $0x18] sm:$0xf]
    %v10212 = vld [vmem:[%s10204 + $0x1c] sm:$0xf]
    %v10213 = vld [vmem:[%s10204 + $0x20] sm:$0xf]
    %v10214 = vld [vmem:[%s10204 + $0x24] sm:$0xf]
    %v10215 = vld [vmem:[%s10204 + $0x28] sm:$0xf]
    %v10216 = vld [vmem:[%s10204 + $0x2c] sm:$0xf]
    %v10217 = vld [vmem:[%s10204 + $0x30] sm:$0xf]
    %v10218 = vld [vmem:[%s10204 + $0x34] sm:$0xf]
    %v10219 = vld [vmem:[%s10204 + $0x38] sm:$0xf]
    %v10220 = vld [vmem:[%s10204 + $0x3c] sm:$0xf]
    %v10221 = vld [vmem:[%s10204 + $0x40] sm:$0xf]
    %v10222 = vld [vmem:[%s10204 + $0x44] sm:$0xf]
    %v10223 = vld [vmem:[%s10204 + $0x48] sm:$0xf]
    %v10224 = vld [vmem:[%s10204 + $0x4c] sm:$0xf]
    %v10225 = vld [vmem:[%s10204 + $0x50] sm:$0xf]
    %v10226 = vld [vmem:[%s10204 + $0x54] sm:$0xf]
    %v10227 = vld [vmem:[%s10204 + $0x58] sm:$0xf]
    %v10228 = vld [vmem:[%s10204 + $0x5c] sm:$0xf]
    %v10229 = vld [vmem:[%s10204 + $0x60] sm:$0xf]
    %v10230 = vld [vmem:[%s10204 + $0x64] sm:$0xf]
    %v10231 = vld [vmem:[%s10204 + $0x68] sm:$0xf]
    %v10232 = vld [vmem:[%s10204 + $0x6c] sm:$0xf]
    %v10233 = vld [vmem:[%s10204 + $0x70] sm:$0xf]
    %v10234 = vld [vmem:[%s10204 + $0x74] sm:$0xf]
    %v10235 = vld [vmem:[%s10204 + $0x78] sm:$0xf]
    %v10236 = vld [vmem:[%s10204 + $0x7c] sm:$0xf]
    %v10237 = vunpack.c.l.bf16 %v10205
    %v10238 = vunpack.c.l.bf16 %v10206
    %v10239 = vunpack.c.l.bf16 %v10207
    %v10240 = vunpack.c.l.bf16 %v10208
    %v10241 = vunpack.c.l.bf16 %v10209
    %v10242 = vunpack.c.l.bf16 %v10210
    %v10243 = vunpack.c.l.bf16 %v10211
    %v10244 = vunpack.c.l.bf16 %v10212
    %v10245 = vunpack.c.l.bf16 %v10213
    %v10246 = vunpack.c.l.bf16 %v10214
    %v10247 = vunpack.c.l.bf16 %v10215
    %v10248 = vunpack.c.l.bf16 %v10216
    %v10249 = vunpack.c.l.bf16 %v10217
    %v10250 = vunpack.c.l.bf16 %v10218
    %v10251 = vunpack.c.l.bf16 %v10219
    %v10252 = vunpack.c.l.bf16 %v10220
    %v10253 = vunpack.c.l.bf16 %v10221
    %v10254 = vunpack.c.l.bf16 %v10222
    %v10255 = vunpack.c.l.bf16 %v10223
    %v10256 = vunpack.c.l.bf16 %v10224
    %v10257 = vunpack.c.l.bf16 %v10225
    %v10258 = vunpack.c.l.bf16 %v10226
    %v10259 = vunpack.c.l.bf16 %v10227
    %v10260 = vunpack.c.l.bf16 %v10228
    %v10261 = vunpack.c.l.bf16 %v10229
    %v10262 = vunpack.c.l.bf16 %v10230
    %v10263 = vunpack.c.l.bf16 %v10231
    %v10264 = vunpack.c.l.bf16 %v10232
    %v10265 = vunpack.c.l.bf16 %v10233
    %v10266 = vunpack.c.l.bf16 %v10234
    %v10267 = vunpack.c.l.bf16 %v10235
    %v10268 = vunpack.c.l.bf16 %v10236
    %10285 = vrot.lane.b32.xlu0 %v10188, 32
    %v10286 = vpop.permute.xlu0 %10285
    %10287 = vrot.lane.b32.xlu0 %v10189, 32
    %v10288 = vpop.permute.xlu0 %10287
    %10289 = vrot.lane.b32.xlu0 %v10190, 32
    %v10290 = vpop.permute.xlu0 %10289
    %10291 = vrot.lane.b32.xlu0 %v10191, 32
    %v10292 = vpop.permute.xlu0 %10291
    %10293 = vrot.lane.b32.xlu0 %v10192, 32
    %v10294 = vpop.permute.xlu0 %10293
    %10295 = vrot.lane.b32.xlu0 %v10193, 32
    %v10296 = vpop.permute.xlu0 %10295
    %10297 = vrot.lane.b32.xlu0 %v10194, 32
    %v10298 = vpop.permute.xlu0 %10297
    %10299 = vrot.lane.b32.xlu0 %v10195, 32
    %v10300 = vpop.permute.xlu0 %10299
    %10301 = vrot.lane.b32.xlu0 %v10196, 32
    %v10302 = vpop.permute.xlu0 %10301
    %10303 = vrot.lane.b32.xlu0 %v10197, 32
    %v10304 = vpop.permute.xlu0 %10303
    %10305 = vrot.lane.b32.xlu0 %v10198, 32
    %v10306 = vpop.permute.xlu0 %10305
    %10307 = vrot.lane.b32.xlu0 %v10199, 32
    %v10308 = vpop.permute.xlu0 %10307
    %10309 = vrot.lane.b32.xlu0 %v10200, 32
    %v10310 = vpop.permute.xlu0 %10309
    %10311 = vrot.lane.b32.xlu0 %v10201, 32
    %v10312 = vpop.permute.xlu0 %10311
    %10313 = vrot.lane.b32.xlu0 %v10202, 32
    %v10314 = vpop.permute.xlu0 %10313
    %10315 = vrot.lane.b32.xlu0 %v10203, 32
    %v10316 = vpop.permute.xlu0 %10315
    %v10318 = vsel %vm3739, %v10286, 0
    %v10321 = vsel %vm3739, %v10288, 0
    %v10324 = vsel %vm3739, %v10290, 0
    %v10327 = vsel %vm3739, %v10292, 0
    %v10330 = vsel %vm3739, %v10294, 0
    %v10333 = vsel %vm3739, %v10296, 0
    %v10336 = vsel %vm3739, %v10298, 0
    %v10339 = vsel %vm3739, %v10300, 0
    %v10342 = vsel %vm3739, %v10302, 0
    %v10345 = vsel %vm3739, %v10304, 0
    %v10348 = vsel %vm3739, %v10306, 0
    %v10351 = vsel %vm3739, %v10308, 0
    %v10354 = vsel %vm3739, %v10310, 0
    %v10357 = vsel %vm3739, %v10312, 0
    %v10360 = vsel %vm3739, %v10314, 0
    %v10363 = vsel %vm3739, %v10316, 0
    %10365 = vmatprep.subr.bf16.mxu0 0
    %10366 = vmatpush1.bf16.msra.mxu0 0
    %10367 = vmatprep.subr.bf16.mxu0 0
    %10368 = vmatpush1.bf16.msra.mxu0 0
    %10369 = vmatprep.subr.bf16.mxu0 0
    %10370 = vmatpush1.bf16.msra.mxu0 0
    %10371 = vmatprep.subr.bf16.mxu0 0
    %10372 = vmatpush1.bf16.msra.mxu0 0
    %10373 = vmatprep.subr.bf16.mxu0 0
    %10374 = vmatpush1.bf16.msra.mxu0 0
    %10375 = vmatprep.subr.bf16.mxu0 0
    %10376 = vmatpush1.bf16.msra.mxu0 0
    %10377 = vmatprep.subr.bf16.mxu0 0
    %10378 = vmatpush1.bf16.msra.mxu0 %v3736
    %10379 = vmatprep.subr.bf16.mxu0 0
    %10380 = vmatpush1.bf16.msra.mxu0 %v3735
    %10381 = vmatprep.subr.bf16.mxu0 0
    %10382 = vmatpush2.bf16.msra.mxu0 0
    %10383 = vmatprep.subr.bf16.mxu0 0
    %10384 = vmatpush2.bf16.msra.mxu0 0
    %10385 = vmatprep.subr.bf16.mxu0 0
    %10386 = vmatpush2.bf16.msra.mxu0 0
    %10387 = vmatprep.subr.bf16.mxu0 0
    %10388 = vmatpush2.bf16.msra.mxu0 0
    %10389 = vmatprep.subr.bf16.mxu0 0
    %10390 = vmatpush2.bf16.msra.mxu0 0
    %10391 = vmatprep.subr.bf16.mxu0 0
    %10392 = vmatpush2.bf16.msra.mxu0 0
    %10393 = vmatprep.subr.bf16.mxu0 0
    %10394 = vmatpush2.bf16.msra.mxu0 0
    %10395 = vmatprep.subr.bf16.mxu0 0
    %10396 = vmatpush2.bf16.msra.mxu0 0
    %10397 = vmatprep.mubr.bf16.mxu0 0
    %10398 = vmatmul.mubr.bf16.gmra.mxu0 %v10318
    %v10399 = vpop.f32.mrf.mxu0
    %v10400 = vadd.f32 0.0, %v10399
    %v10401 = vpop.f32.mrf.mxu0
    %v10402 = vpop.f32.mrf.mxu0
    %v10403 = vadd.f32 0.0, %v10402
    %v10404 = vpop.f32.mrf.mxu0
    %10405 = vmatprep.mubr.bf16.mxu0 0
    %10406 = vmatmul.mubr.bf16.gmra.mxu0 %v10321
    %v10407 = vpop.f32.mrf.mxu0
    %v10408 = vadd.f32 0.0, %v10407
    %v10409 = vpop.f32.mrf.mxu0
    %v10410 = vpop.f32.mrf.mxu0
    %v10411 = vadd.f32 0.0, %v10410
    %v10412 = vpop.f32.mrf.mxu0
    %10413 = vmatprep.mubr.bf16.mxu0 0
    %10414 = vmatmul.mubr.bf16.gmra.mxu0 %v10324
    %v10415 = vpop.f32.mrf.mxu0
    %v10416 = vadd.f32 0.0, %v10415
    %v10417 = vpop.f32.mrf.mxu0
    %v10418 = vpop.f32.mrf.mxu0
    %v10419 = vadd.f32 0.0, %v10418
    %v10420 = vpop.f32.mrf.mxu0
    %10421 = vmatprep.mubr.bf16.mxu0 0
    %10422 = vmatmul.mubr.bf16.gmra.mxu0 %v10327
    %v10423 = vpop.f32.mrf.mxu0
    %v10424 = vadd.f32 0.0, %v10423
    %v10425 = vpop.f32.mrf.mxu0
    %v10426 = vpop.f32.mrf.mxu0
    %v10427 = vadd.f32 0.0, %v10426
    %v10428 = vpop.f32.mrf.mxu0
    %10429 = vmatprep.mubr.bf16.mxu0 0
    %10430 = vmatmul.mubr.bf16.gmra.mxu0 %v10330
    %v10431 = vpop.f32.mrf.mxu0
    %v10432 = vadd.f32 0.0, %v10431
    %v10433 = vpop.f32.mrf.mxu0
    %v10434 = vpop.f32.mrf.mxu0
    %v10435 = vadd.f32 0.0, %v10434
    %v10436 = vpop.f32.mrf.mxu0
    %10437 = vmatprep.mubr.bf16.mxu0 0
    %10438 = vmatmul.mubr.bf16.gmra.mxu0 %v10333
    %v10439 = vpop.f32.mrf.mxu0
    %v10440 = vadd.f32 0.0, %v10439
    %v10441 = vpop.f32.mrf.mxu0
    %v10442 = vpop.f32.mrf.mxu0
    %v10443 = vadd.f32 0.0, %v10442
    %v10444 = vpop.f32.mrf.mxu0
    %10445 = vmatprep.mubr.bf16.mxu0 0
    %10446 = vmatmul.mubr.bf16.gmra.mxu0 %v10336
    %v10447 = vpop.f32.mrf.mxu0
    %v10448 = vadd.f32 0.0, %v10447
    %v10449 = vpop.f32.mrf.mxu0
    %v10450 = vpop.f32.mrf.mxu0
    %v10451 = vadd.f32 0.0, %v10450
    %v10452 = vpop.f32.mrf.mxu0
    %10453 = vmatprep.mubr.bf16.mxu0 0
    %10454 = vmatmul.mubr.bf16.gmra.mxu0 %v10339
    %v10455 = vpop.f32.mrf.mxu0
    %v10456 = vadd.f32 0.0, %v10455
    %v10457 = vpop.f32.mrf.mxu0
    %v10458 = vpop.f32.mrf.mxu0
    %v10459 = vadd.f32 0.0, %v10458
    %v10460 = vpop.f32.mrf.mxu0
    %10461 = vmatprep.mubr.bf16.mxu0 0
    %10462 = vmatmul.mubr.bf16.gmra.mxu0 %v10342
    %v10463 = vpop.f32.mrf.mxu0
    %v10464 = vadd.f32 0.0, %v10463
    %v10465 = vpop.f32.mrf.mxu0
    %v10466 = vpop.f32.mrf.mxu0
    %v10467 = vadd.f32 0.0, %v10466
    %v10468 = vpop.f32.mrf.mxu0
    %10469 = vmatprep.mubr.bf16.mxu0 0
    %10470 = vmatmul.mubr.bf16.gmra.mxu0 %v10345
    %v10471 = vpop.f32.mrf.mxu0
    %v10472 = vadd.f32 0.0, %v10471
    %v10473 = vpop.f32.mrf.mxu0
    %v10474 = vpop.f32.mrf.mxu0
    %v10475 = vadd.f32 0.0, %v10474
    %v10476 = vpop.f32.mrf.mxu0
    %10477 = vmatprep.mubr.bf16.mxu0 0
    %10478 = vmatmul.mubr.bf16.gmra.mxu0 %v10348
    %v10479 = vpop.f32.mrf.mxu0
    %v10480 = vadd.f32 0.0, %v10479
    %v10481 = vpop.f32.mrf.mxu0
    %v10482 = vpop.f32.mrf.mxu0
    %v10483 = vadd.f32 0.0, %v10482
    %v10484 = vpop.f32.mrf.mxu0
    %10485 = vmatprep.mubr.bf16.mxu0 0
    %10486 = vmatmul.mubr.bf16.gmra.mxu0 %v10351
    %v10487 = vpop.f32.mrf.mxu0
    %v10488 = vadd.f32 0.0, %v10487
    %v10489 = vpop.f32.mrf.mxu0
    %v10490 = vpop.f32.mrf.mxu0
    %v10491 = vadd.f32 0.0, %v10490
    %v10492 = vpop.f32.mrf.mxu0
    %10493 = vmatprep.mubr.bf16.mxu0 0
    %10494 = vmatmul.mubr.bf16.gmra.mxu0 %v10354
    %v10495 = vpop.f32.mrf.mxu0
    %v10496 = vadd.f32 0.0, %v10495
    %v10497 = vpop.f32.mrf.mxu0
    %v10498 = vpop.f32.mrf.mxu0
    %v10499 = vadd.f32 0.0, %v10498
    %v10500 = vpop.f32.mrf.mxu0
    %10501 = vmatprep.mubr.bf16.mxu0 0
    %10502 = vmatmul.mubr.bf16.gmra.mxu0 %v10357
    %v10503 = vpop.f32.mrf.mxu0
    %v10504 = vadd.f32 0.0, %v10503
    %v10505 = vpop.f32.mrf.mxu0
    %v10506 = vpop.f32.mrf.mxu0
    %v10507 = vadd.f32 0.0, %v10506
    %v10508 = vpop.f32.mrf.mxu0
    %10509 = vmatprep.mubr.bf16.mxu0 0
    %10510 = vmatmul.mubr.bf16.gmra.mxu0 %v10360
    %v10511 = vpop.f32.mrf.mxu0
    %v10512 = vadd.f32 0.0, %v10511
    %v10513 = vpop.f32.mrf.mxu0
    %v10514 = vpop.f32.mrf.mxu0
    %v10515 = vadd.f32 0.0, %v10514
    %v10516 = vpop.f32.mrf.mxu0
    %10517 = vmatprep.mubr.bf16.mxu0 0
    %10518 = vmatmul.mubr.bf16.gmra.mxu0 %v10363
    %v10519 = vpop.f32.mrf.mxu0
    %v10520 = vadd.f32 0.0, %v10519
    %v10521 = vpop.f32.mrf.mxu0
    %v10522 = vpop.f32.mrf.mxu0
    %v10523 = vadd.f32 0.0, %v10522
    %v10524 = vpop.f32.mrf.mxu0
    %10525 = vdwg.mxu0
    %v10526 = vadd.f32 %v10237, %v10400
    %v10527 = vadd.f32 %v10238, %v10403
    %v10528 = vadd.f32 %v10239, %v10408
    %v10529 = vadd.f32 %v10240, %v10411
    %v10530 = vadd.f32 %v10241, %v10416
    %v10531 = vadd.f32 %v10242, %v10419
    %v10532 = vadd.f32 %v10243, %v10424
    %v10533 = vadd.f32 %v10244, %v10427
    %v10534 = vadd.f32 %v10245, %v10432
    %v10535 = vadd.f32 %v10246, %v10435
    %v10536 = vadd.f32 %v10247, %v10440
    %v10537 = vadd.f32 %v10248, %v10443
    %v10538 = vadd.f32 %v10249, %v10448
    %v10539 = vadd.f32 %v10250, %v10451
    %v10540 = vadd.f32 %v10251, %v10456
    %v10541 = vadd.f32 %v10252, %v10459
    %v10542 = vadd.f32 %v10253, %v10464
    %v10543 = vadd.f32 %v10254, %v10467
    %v10544 = vadd.f32 %v10255, %v10472
    %v10545 = vadd.f32 %v10256, %v10475
    %v10546 = vadd.f32 %v10257, %v10480
    %v10547 = vadd.f32 %v10258, %v10483
    %v10548 = vadd.f32 %v10259, %v10488
    %v10549 = vadd.f32 %v10260, %v10491
    %v10550 = vadd.f32 %v10261, %v10496
    %v10551 = vadd.f32 %v10262, %v10499
    %v10552 = vadd.f32 %v10263, %v10504
    %v10553 = vadd.f32 %v10264, %v10507
    %v10554 = vadd.f32 %v10265, %v10512
    %v10555 = vadd.f32 %v10266, %v10515
    %v10556 = vadd.f32 %v10267, %v10520
    %v10557 = vadd.f32 %v10268, %v10523
    %v10558 = vpack.c.bf16 %v10527, %v10526
    %v10559 = vpack.c.bf16 %v10529, %v10528
    %v10560 = vpack.c.bf16 %v10531, %v10530
    %v10561 = vpack.c.bf16 %v10533, %v10532
    %v10562 = vpack.c.bf16 %v10535, %v10534
    %v10563 = vpack.c.bf16 %v10537, %v10536
    %v10564 = vpack.c.bf16 %v10539, %v10538
    %v10565 = vpack.c.bf16 %v10541, %v10540
    %v10566 = vpack.c.bf16 %v10543, %v10542
    %v10567 = vpack.c.bf16 %v10545, %v10544
    %v10568 = vpack.c.bf16 %v10547, %v10546
    %v10569 = vpack.c.bf16 %v10549, %v10548
    %v10570 = vpack.c.bf16 %v10551, %v10550
    %v10571 = vpack.c.bf16 %v10553, %v10552
    %v10572 = vpack.c.bf16 %v10555, %v10554
    %v10573 = vpack.c.bf16 %v10557, %v10556
    %v10574 = vxor.u32 %v10558, 2147516416
    %v10575 = vxor.u32 %v10559, 2147516416
    %v10576 = vxor.u32 %v10560, 2147516416
    %v10577 = vxor.u32 %v10561, 2147516416
    %v10578 = vxor.u32 %v10562, 2147516416
    %v10579 = vxor.u32 %v10563, 2147516416
    %v10580 = vxor.u32 %v10564, 2147516416
    %v10581 = vxor.u32 %v10565, 2147516416
    %v10582 = vxor.u32 %v10566, 2147516416
    %v10583 = vxor.u32 %v10567, 2147516416
    %v10584 = vxor.u32 %v10568, 2147516416
    %v10585 = vxor.u32 %v10569, 2147516416
    %v10586 = vxor.u32 %v10570, 2147516416
    %v10587 = vxor.u32 %v10571, 2147516416
    %v10588 = vxor.u32 %v10572, 2147516416
    %v10589 = vxor.u32 %v10573, 2147516416
    %v10591 = vmul.bf16 %v10574, 1069105081
    %v10592 = vpow.bf16.pop %v10591
    %v10594 = vmul.bf16 %v10575, 1069105081
    %v10595 = vpow.bf16.pop %v10594
    %v10597 = vmul.bf16 %v10576, 1069105081
    %v10598 = vpow.bf16.pop %v10597
    %v10600 = vmul.bf16 %v10577, 1069105081
    %v10601 = vpow.bf16.pop %v10600
    %v10603 = vmul.bf16 %v10578, 1069105081
    %v10604 = vpow.bf16.pop %v10603
    %v10606 = vmul.bf16 %v10579, 1069105081
    %v10607 = vpow.bf16.pop %v10606
    %v10609 = vmul.bf16 %v10580, 1069105081
    %v10610 = vpow.bf16.pop %v10609
    %v10612 = vmul.bf16 %v10581, 1069105081
    %v10613 = vpow.bf16.pop %v10612
    %v10615 = vmul.bf16 %v10582, 1069105081
    %v10616 = vpow.bf16.pop %v10615
    %v10618 = vmul.bf16 %v10583, 1069105081
    %v10619 = vpow.bf16.pop %v10618
    %v10621 = vmul.bf16 %v10584, 1069105081
    %v10622 = vpow.bf16.pop %v10621
    %v10624 = vmul.bf16 %v10585, 1069105081
    %v10625 = vpow.bf16.pop %v10624
    %v10627 = vmul.bf16 %v10586, 1069105081
    %v10628 = vpow.bf16.pop %v10627
    %v10630 = vmul.bf16 %v10587, 1069105081
    %v10631 = vpow.bf16.pop %v10630
    %v10633 = vmul.bf16 %v10588, 1069105081
    %v10634 = vpow.bf16.pop %v10633
    %v10636 = vmul.bf16 %v10589, 1069105081
    %v10637 = vpow.bf16.pop %v10636
    %v10638 = vadd.bf16 %v10592, 1065369472
    %v10639 = vadd.bf16 %v10595, 1065369472
    %v10640 = vadd.bf16 %v10598, 1065369472
    %v10641 = vadd.bf16 %v10601, 1065369472
    %v10642 = vadd.bf16 %v10604, 1065369472
    %v10643 = vadd.bf16 %v10607, 1065369472
    %v10644 = vadd.bf16 %v10610, 1065369472
    %v10645 = vadd.bf16 %v10613, 1065369472
    %v10646 = vadd.bf16 %v10616, 1065369472
    %v10647 = vadd.bf16 %v10619, 1065369472
    %v10648 = vadd.bf16 %v10622, 1065369472
    %v10649 = vadd.bf16 %v10625, 1065369472
    %v10650 = vadd.bf16 %v10628, 1065369472
    %v10651 = vadd.bf16 %v10631, 1065369472
    %v10652 = vadd.bf16 %v10634, 1065369472
    %v10653 = vadd.bf16 %v10637, 1065369472
    %v10654 = vrcp.bf16.pop %v10638
    %v10655 = vmul.bf16 1065369472, %v10654
    %v10656 = vrcp.bf16.pop %v10639
    %v10657 = vmul.bf16 1065369472, %v10656
    %v10658 = vrcp.bf16.pop %v10640
    %v10659 = vmul.bf16 1065369472, %v10658
    %v10660 = vrcp.bf16.pop %v10641
    %v10661 = vmul.bf16 1065369472, %v10660
    %v10662 = vrcp.bf16.pop %v10642
    %v10663 = vmul.bf16 1065369472, %v10662
    %v10664 = vrcp.bf16.pop %v10643
    %v10665 = vmul.bf16 1065369472, %v10664
    %v10666 = vrcp.bf16.pop %v10644
    %v10667 = vmul.bf16 1065369472, %v10666
    %v10668 = vrcp.bf16.pop %v10645
    %v10669 = vmul.bf16 1065369472, %v10668
    %v10670 = vrcp.bf16.pop %v10646
    %v10671 = vmul.bf16 1065369472, %v10670
    %v10672 = vrcp.bf16.pop %v10647
    %v10673 = vmul.bf16 1065369472, %v10672
    %v10674 = vrcp.bf16.pop %v10648
    %v10675 = vmul.bf16 1065369472, %v10674
    %v10676 = vrcp.bf16.pop %v10649
    %v10677 = vmul.bf16 1065369472, %v10676
    %v10678 = vrcp.bf16.pop %v10650
    %v10679 = vmul.bf16 1065369472, %v10678
    %v10680 = vrcp.bf16.pop %v10651
    %v10681 = vmul.bf16 1065369472, %v10680
    %v10682 = vrcp.bf16.pop %v10652
    %v10683 = vmul.bf16 1065369472, %v10682
    %v10684 = vrcp.bf16.pop %v10653
    %v10685 = vmul.bf16 1065369472, %v10684
    %v10686 = vtanh.bf16.pop %v10558
    %v10687 = vtanh.bf16.pop %v10559
    %v10688 = vtanh.bf16.pop %v10560
    %v10689 = vtanh.bf16.pop %v10561
    %v10690 = vtanh.bf16.pop %v10562
    %v10691 = vtanh.bf16.pop %v10563
    %v10692 = vtanh.bf16.pop %v10564
    %v10693 = vtanh.bf16.pop %v10565
    %v10694 = vtanh.bf16.pop %v10566
    %v10695 = vtanh.bf16.pop %v10567
    %v10696 = vtanh.bf16.pop %v10568
    %v10697 = vtanh.bf16.pop %v10569
    %v10698 = vtanh.bf16.pop %v10570
    %v10699 = vtanh.bf16.pop %v10571
    %v10700 = vtanh.bf16.pop %v10572
    %v10701 = vtanh.bf16.pop %v10573
    %v10702 = vunpack.c.l.bf16 %v10655
    %v10703 = vunpack.c.h.bf16 %v10655
    %v10704 = vunpack.c.l.bf16 %v10657
    %v10705 = vunpack.c.h.bf16 %v10657
    %v10706 = vunpack.c.l.bf16 %v10659
    %v10707 = vunpack.c.h.bf16 %v10659
    %v10708 = vunpack.c.l.bf16 %v10661
    %v10709 = vunpack.c.h.bf16 %v10661
    %v10710 = vunpack.c.l.bf16 %v10663
    %v10711 = vunpack.c.h.bf16 %v10663
    %v10712 = vunpack.c.l.bf16 %v10665
    %v10713 = vunpack.c.h.bf16 %v10665
    %v10714 = vunpack.c.l.bf16 %v10667
    %v10715 = vunpack.c.h.bf16 %v10667
    %v10716 = vunpack.c.l.bf16 %v10669
    %v10717 = vunpack.c.h.bf16 %v10669
    %v10718 = vunpack.c.l.bf16 %v10671
    %v10719 = vunpack.c.h.bf16 %v10671
    %v10720 = vunpack.c.l.bf16 %v10673
    %v10721 = vunpack.c.h.bf16 %v10673
    %v10722 = vunpack.c.l.bf16 %v10675
    %v10723 = vunpack.c.h.bf16 %v10675
    %v10724 = vunpack.c.l.bf16 %v10677
    %v10725 = vunpack.c.h.bf16 %v10677
    %v10726 = vunpack.c.l.bf16 %v10679
    %v10727 = vunpack.c.h.bf16 %v10679
    %v10728 = vunpack.c.l.bf16 %v10681
    %v10729 = vunpack.c.h.bf16 %v10681
    %v10730 = vunpack.c.l.bf16 %v10683
    %v10731 = vunpack.c.h.bf16 %v10683
    %v10732 = vunpack.c.l.bf16 %v10685
    %v10733 = vunpack.c.h.bf16 %v10685
    %v10734 = vmul.f32 %v10702, %v10060
    %v10735 = vmul.f32 %v10703, %v10061
    %v10736 = vmul.f32 %v10704, %v10062
    %v10737 = vmul.f32 %v10705, %v10063
    %v10738 = vmul.f32 %v10706, %v10064
    %v10739 = vmul.f32 %v10707, %v10065
    %v10740 = vmul.f32 %v10708, %v10066
    %v10741 = vmul.f32 %v10709, %v10067
    %v10742 = vmul.f32 %v10710, %v10068
    %v10743 = vmul.f32 %v10711, %v10069
    %v10744 = vmul.f32 %v10712, %v10070
    %v10745 = vmul.f32 %v10713, %v10071
    %v10746 = vmul.f32 %v10714, %v10072
    %v10747 = vmul.f32 %v10715, %v10073
    %v10748 = vmul.f32 %v10716, %v10074
    %v10749 = vmul.f32 %v10717, %v10075
    %v10750 = vmul.f32 %v10718, %v10076
    %v10751 = vmul.f32 %v10719, %v10077
    %v10752 = vmul.f32 %v10720, %v10078
    %v10753 = vmul.f32 %v10721, %v10079
    %v10754 = vmul.f32 %v10722, %v10080
    %v10755 = vmul.f32 %v10723, %v10081
    %v10756 = vmul.f32 %v10724, %v10082
    %v10757 = vmul.f32 %v10725, %v10083
    %v10758 = vmul.f32 %v10726, %v10084
    %v10759 = vmul.f32 %v10727, %v10085
    %v10760 = vmul.f32 %v10728, %v10086
    %v10761 = vmul.f32 %v10729, %v10087
    %v10762 = vmul.f32 %v10730, %v10088
    %v10763 = vmul.f32 %v10731, %v10089
    %v10764 = vmul.f32 %v10732, %v10090
    %v10765 = vmul.f32 %v10733, %v10091
    %10782 = vrot.lane.b32.xlu0 %v10686, 64
    %v10783 = vpop.permute.xlu0 %10782
    %10784 = vrot.lane.b32.xlu0 %v10687, 64
    %v10785 = vpop.permute.xlu0 %10784
    %10786 = vrot.lane.b32.xlu0 %v10688, 64
    %v10787 = vpop.permute.xlu0 %10786
    %10788 = vrot.lane.b32.xlu0 %v10689, 64
    %v10789 = vpop.permute.xlu0 %10788
    %10790 = vrot.lane.b32.xlu0 %v10690, 64
    %v10791 = vpop.permute.xlu0 %10790
    %10792 = vrot.lane.b32.xlu0 %v10691, 64
    %v10793 = vpop.permute.xlu0 %10792
    %10794 = vrot.lane.b32.xlu0 %v10692, 64
    %v10795 = vpop.permute.xlu0 %10794
    %10796 = vrot.lane.b32.xlu0 %v10693, 64
    %v10797 = vpop.permute.xlu0 %10796
    %10798 = vrot.lane.b32.xlu0 %v10694, 64
    %v10799 = vpop.permute.xlu0 %10798
    %10800 = vrot.lane.b32.xlu0 %v10695, 64
    %v10801 = vpop.permute.xlu0 %10800
    %10802 = vrot.lane.b32.xlu0 %v10696, 64
    %v10803 = vpop.permute.xlu0 %10802
    %10804 = vrot.lane.b32.xlu0 %v10697, 64
    %v10805 = vpop.permute.xlu0 %10804
    %10806 = vrot.lane.b32.xlu0 %v10698, 64
    %v10807 = vpop.permute.xlu0 %10806
    %10808 = vrot.lane.b32.xlu0 %v10699, 64
    %v10809 = vpop.permute.xlu0 %10808
    %10810 = vrot.lane.b32.xlu0 %v10700, 64
    %v10811 = vpop.permute.xlu0 %10810
    %10812 = vrot.lane.b32.xlu0 %v10701, 64
    %v10813 = vpop.permute.xlu0 %10812
    %v10830 = vmul.bf16 %v10655, %v10783
    %v10831 = vmul.bf16 %v10657, %v10785
    %v10832 = vmul.bf16 %v10659, %v10787
    %v10833 = vmul.bf16 %v10661, %v10789
    %v10834 = vmul.bf16 %v10663, %v10791
    %v10835 = vmul.bf16 %v10665, %v10793
    %v10836 = vmul.bf16 %v10667, %v10795
    %v10837 = vmul.bf16 %v10669, %v10797
    %v10838 = vmul.bf16 %v10671, %v10799
    %v10839 = vmul.bf16 %v10673, %v10801
    %v10840 = vmul.bf16 %v10675, %v10803
    %v10841 = vmul.bf16 %v10677, %v10805
    %v10842 = vmul.bf16 %v10679, %v10807
    %v10843 = vmul.bf16 %v10681, %v10809
    %v10844 = vmul.bf16 %v10683, %v10811
    %v10845 = vmul.bf16 %v10685, %v10813
    %v10846 = vunpack.c.l.bf16 %v10830
    %v10847 = vunpack.c.h.bf16 %v10830
    %v10848 = vunpack.c.l.bf16 %v10831
    %v10849 = vunpack.c.h.bf16 %v10831
    %v10850 = vunpack.c.l.bf16 %v10832
    %v10851 = vunpack.c.h.bf16 %v10832
    %v10852 = vunpack.c.l.bf16 %v10833
    %v10853 = vunpack.c.h.bf16 %v10833
    %v10854 = vunpack.c.l.bf16 %v10834
    %v10855 = vunpack.c.h.bf16 %v10834
    %v10856 = vunpack.c.l.bf16 %v10835
    %v10857 = vunpack.c.h.bf16 %v10835
    %v10858 = vunpack.c.l.bf16 %v10836
    %v10859 = vunpack.c.h.bf16 %v10836
    %v10860 = vunpack.c.l.bf16 %v10837
    %v10861 = vunpack.c.h.bf16 %v10837
    %v10862 = vunpack.c.l.bf16 %v10838
    %v10863 = vunpack.c.h.bf16 %v10838
    %v10864 = vunpack.c.l.bf16 %v10839
    %v10865 = vunpack.c.h.bf16 %v10839
    %v10866 = vunpack.c.l.bf16 %v10840
    %v10867 = vunpack.c.h.bf16 %v10840
    %v10868 = vunpack.c.l.bf16 %v10841
    %v10869 = vunpack.c.h.bf16 %v10841
    %v10870 = vunpack.c.l.bf16 %v10842
    %v10871 = vunpack.c.h.bf16 %v10842
    %v10872 = vunpack.c.l.bf16 %v10843
    %v10873 = vunpack.c.h.bf16 %v10843
    %v10874 = vunpack.c.l.bf16 %v10844
    %v10875 = vunpack.c.h.bf16 %v10844
    %v10876 = vunpack.c.l.bf16 %v10845
    %v10877 = vunpack.c.h.bf16 %v10845
    %10910 = vrot.lane.b32.xlu0 %v10846, 32
    %v10911 = vpop.permute.xlu0 %10910
    %10912 = vrot.lane.b32.xlu0 %v10847, 32
    %v10913 = vpop.permute.xlu0 %10912
    %10914 = vrot.lane.b32.xlu0 %v10848, 32
    %v10915 = vpop.permute.xlu0 %10914
    %10916 = vrot.lane.b32.xlu0 %v10849, 32
    %v10917 = vpop.permute.xlu0 %10916
    %10918 = vrot.lane.b32.xlu0 %v10850, 32
    %v10919 = vpop.permute.xlu0 %10918
    %10920 = vrot.lane.b32.xlu0 %v10851, 32
    %v10921 = vpop.permute.xlu0 %10920
    %10922 = vrot.lane.b32.xlu0 %v10852, 32
    %v10923 = vpop.permute.xlu0 %10922
    %10924 = vrot.lane.b32.xlu0 %v10853, 32
    %v10925 = vpop.permute.xlu0 %10924
    %10926 = vrot.lane.b32.xlu0 %v10854, 32
    %v10927 = vpop.permute.xlu0 %10926
    %10928 = vrot.lane.b32.xlu0 %v10855, 32
    %v10929 = vpop.permute.xlu0 %10928
    %10930 = vrot.lane.b32.xlu0 %v10856, 32
    %v10931 = vpop.permute.xlu0 %10930
    %10932 = vrot.lane.b32.xlu0 %v10857, 32
    %v10933 = vpop.permute.xlu0 %10932
    %10934 = vrot.lane.b32.xlu0 %v10858, 32
    %v10935 = vpop.permute.xlu0 %10934
    %10936 = vrot.lane.b32.xlu0 %v10859, 32
    %v10937 = vpop.permute.xlu0 %10936
    %10938 = vrot.lane.b32.xlu0 %v10860, 32
    %v10939 = vpop.permute.xlu0 %10938
    %10940 = vrot.lane.b32.xlu0 %v10861, 32
    %v10941 = vpop.permute.xlu0 %10940
    %10942 = vrot.lane.b32.xlu0 %v10862, 32
    %v10943 = vpop.permute.xlu0 %10942
    %10944 = vrot.lane.b32.xlu0 %v10863, 32
    %v10945 = vpop.permute.xlu0 %10944
    %10946 = vrot.lane.b32.xlu0 %v10864, 32
    %v10947 = vpop.permute.xlu0 %10946
    %10948 = vrot.lane.b32.xlu0 %v10865, 32
    %v10949 = vpop.permute.xlu0 %10948
    %10950 = vrot.lane.b32.xlu0 %v10866, 32
    %v10951 = vpop.permute.xlu0 %10950
    %10952 = vrot.lane.b32.xlu0 %v10867, 32
    %v10953 = vpop.permute.xlu0 %10952
    %10954 = vrot.lane.b32.xlu0 %v10868, 32
    %v10955 = vpop.permute.xlu0 %10954
    %10956 = vrot.lane.b32.xlu0 %v10869, 32
    %v10957 = vpop.permute.xlu0 %10956
    %10958 = vrot.lane.b32.xlu0 %v10870, 32
    %v10959 = vpop.permute.xlu0 %10958
    %10960 = vrot.lane.b32.xlu0 %v10871, 32
    %v10961 = vpop.permute.xlu0 %10960
    %10962 = vrot.lane.b32.xlu0 %v10872, 32
    %v10963 = vpop.permute.xlu0 %10962
    %10964 = vrot.lane.b32.xlu0 %v10873, 32
    %v10965 = vpop.permute.xlu0 %10964
    %10966 = vrot.lane.b32.xlu0 %v10874, 32
    %v10967 = vpop.permute.xlu0 %10966
    %10968 = vrot.lane.b32.xlu0 %v10875, 32
    %v10969 = vpop.permute.xlu0 %10968
    %10970 = vrot.lane.b32.xlu0 %v10876, 32
    %v10971 = vpop.permute.xlu0 %10970
    %10972 = vrot.lane.b32.xlu0 %v10877, 32
    %v10973 = vpop.permute.xlu0 %10972
    %v11006 = vadd.f32 %v10734, %v10911
    %v11007 = vadd.f32 %v10735, %v10913
    %v11008 = vadd.f32 %v10736, %v10915
    %v11009 = vadd.f32 %v10737, %v10917
    %v11010 = vadd.f32 %v10738, %v10919
    %v11011 = vadd.f32 %v10739, %v10921
    %v11012 = vadd.f32 %v10740, %v10923
    %v11013 = vadd.f32 %v10741, %v10925
    %v11014 = vadd.f32 %v10742, %v10927
    %v11015 = vadd.f32 %v10743, %v10929
    %v11016 = vadd.f32 %v10744, %v10931
    %v11017 = vadd.f32 %v10745, %v10933
    %v11018 = vadd.f32 %v10746, %v10935
    %v11019 = vadd.f32 %v10747, %v10937
    %v11020 = vadd.f32 %v10748, %v10939
    %v11021 = vadd.f32 %v10749, %v10941
    %v11022 = vadd.f32 %v10750, %v10943
    %v11023 = vadd.f32 %v10751, %v10945
    %v11024 = vadd.f32 %v10752, %v10947
    %v11025 = vadd.f32 %v10753, %v10949
    %v11026 = vadd.f32 %v10754, %v10951
    %v11027 = vadd.f32 %v10755, %v10953
    %v11028 = vadd.f32 %v10756, %v10955
    %v11029 = vadd.f32 %v10757, %v10957
    %v11030 = vadd.f32 %v10758, %v10959
    %v11031 = vadd.f32 %v10759, %v10961
    %v11032 = vadd.f32 %v10760, %v10963
    %v11033 = vadd.f32 %v10761, %v10965
    %v11034 = vadd.f32 %v10762, %v10967
    %v11035 = vadd.f32 %v10763, %v10969
    %v11036 = vadd.f32 %v10764, %v10971
    %v11037 = vadd.f32 %v10765, %v10973
    %v11038 = vpack.c.bf16 %v11007, %v11006
    %v11039 = vpack.c.bf16 %v11009, %v11008
    %v11040 = vpack.c.bf16 %v11011, %v11010
    %v11041 = vpack.c.bf16 %v11013, %v11012
    %v11042 = vpack.c.bf16 %v11015, %v11014
    %v11043 = vpack.c.bf16 %v11017, %v11016
    %v11044 = vpack.c.bf16 %v11019, %v11018
    %v11045 = vpack.c.bf16 %v11021, %v11020
    %v11046 = vpack.c.bf16 %v11023, %v11022
    %v11047 = vpack.c.bf16 %v11025, %v11024
    %v11048 = vpack.c.bf16 %v11027, %v11026
    %v11049 = vpack.c.bf16 %v11029, %v11028
    %v11050 = vpack.c.bf16 %v11031, %v11030
    %v11051 = vpack.c.bf16 %v11033, %v11032
    %v11052 = vpack.c.bf16 %v11035, %v11034
    %v11053 = vpack.c.bf16 %v11037, %v11036
    %v11054 = vtanh.bf16.pop %v11038
    %v11055 = vtanh.bf16.pop %v11039
    %v11056 = vtanh.bf16.pop %v11040
    %v11057 = vtanh.bf16.pop %v11041
    %v11058 = vtanh.bf16.pop %v11042
    %v11059 = vtanh.bf16.pop %v11043
    %v11060 = vtanh.bf16.pop %v11044
    %v11061 = vtanh.bf16.pop %v11045
    %v11062 = vtanh.bf16.pop %v11046
    %v11063 = vtanh.bf16.pop %v11047
    %v11064 = vtanh.bf16.pop %v11048
    %v11065 = vtanh.bf16.pop %v11049
    %v11066 = vtanh.bf16.pop %v11050
    %v11067 = vtanh.bf16.pop %v11051
    %v11068 = vtanh.bf16.pop %v11052
    %v11069 = vtanh.bf16.pop %v11053
    %11086 = vrot.lane.b32.xlu0 %v11054, 64
    %v11087 = vpop.permute.xlu0 %11086
    %11088 = vrot.lane.b32.xlu0 %v11055, 64
    %v11089 = vpop.permute.xlu0 %11088
    %11090 = vrot.lane.b32.xlu0 %v11056, 64
    %v11091 = vpop.permute.xlu0 %11090
    %11092 = vrot.lane.b32.xlu0 %v11057, 64
    %v11093 = vpop.permute.xlu0 %11092
    %11094 = vrot.lane.b32.xlu0 %v11058, 64
    %v11095 = vpop.permute.xlu0 %11094
    %11096 = vrot.lane.b32.xlu0 %v11059, 64
    %v11097 = vpop.permute.xlu0 %11096
    %11098 = vrot.lane.b32.xlu0 %v11060, 64
    %v11099 = vpop.permute.xlu0 %11098
    %11100 = vrot.lane.b32.xlu0 %v11061, 64
    %v11101 = vpop.permute.xlu0 %11100
    %11102 = vrot.lane.b32.xlu0 %v11062, 64
    %v11103 = vpop.permute.xlu0 %11102
    %11104 = vrot.lane.b32.xlu0 %v11063, 64
    %v11105 = vpop.permute.xlu0 %11104
    %11106 = vrot.lane.b32.xlu0 %v11064, 64
    %v11107 = vpop.permute.xlu0 %11106
    %11108 = vrot.lane.b32.xlu0 %v11065, 64
    %v11109 = vpop.permute.xlu0 %11108
    %11110 = vrot.lane.b32.xlu0 %v11066, 64
    %v11111 = vpop.permute.xlu0 %11110
    %11112 = vrot.lane.b32.xlu0 %v11067, 64
    %v11113 = vpop.permute.xlu0 %11112
    %11114 = vrot.lane.b32.xlu0 %v11068, 64
    %v11115 = vpop.permute.xlu0 %11114
    %11116 = vrot.lane.b32.xlu0 %v11069, 64
    %v11117 = vpop.permute.xlu0 %11116
    %v11134 = vmul.bf16 %v10655, %v11087
    %v11135 = vmul.bf16 %v10657, %v11089
    %v11136 = vmul.bf16 %v10659, %v11091
    %v11137 = vmul.bf16 %v10661, %v11093
    %v11138 = vmul.bf16 %v10663, %v11095
    %v11139 = vmul.bf16 %v10665, %v11097
    %v11140 = vmul.bf16 %v10667, %v11099
    %v11141 = vmul.bf16 %v10669, %v11101
    %v11142 = vmul.bf16 %v10671, %v11103
    %v11143 = vmul.bf16 %v10673, %v11105
    %v11144 = vmul.bf16 %v10675, %v11107
    %v11145 = vmul.bf16 %v10677, %v11109
    %v11146 = vmul.bf16 %v10679, %v11111
    %v11147 = vmul.bf16 %v10681, %v11113
    %v11148 = vmul.bf16 %v10683, %v11115
    %v11149 = vmul.bf16 %v10685, %v11117
    %v11150 = vld [vmem:[%s4] sm:$0xf]
    %v11151 = vld [vmem:[%s4 + $0x4] sm:$0xf]
    %v11152 = vld [vmem:[%s4 + $0x8] sm:$0xf]
    %v11153 = vld [vmem:[%s4 + $0xc] sm:$0xf]
    %v11154 = vld [vmem:[%s5] sm:$0x1]
    %v11156 = vlaneseq
    %v11157 = vshrl.u32 %v11156, 7
    %v11158 = vsub.s32 0, %v11157
    %v11159 = vrot.slane %v11154, %v11158
    %11177 = vrot.lane.b32.xlu0 %v11134, 32
    %v11178 = vpop.permute.xlu0 %11177
    %11179 = vrot.lane.b32.xlu0 %v11135, 32
    %v11180 = vpop.permute.xlu0 %11179
    %11181 = vrot.lane.b32.xlu0 %v11136, 32
    %v11182 = vpop.permute.xlu0 %11181
    %11183 = vrot.lane.b32.xlu0 %v11137, 32
    %v11184 = vpop.permute.xlu0 %11183
    %11185 = vrot.lane.b32.xlu0 %v11138, 32
    %v11186 = vpop.permute.xlu0 %11185
    %11187 = vrot.lane.b32.xlu0 %v11139, 32
    %v11188 = vpop.permute.xlu0 %11187
    %11189 = vrot.lane.b32.xlu0 %v11140, 32
    %v11190 = vpop.permute.xlu0 %11189
    %11191 = vrot.lane.b32.xlu0 %v11141, 32
    %v11192 = vpop.permute.xlu0 %11191
    %11193 = vrot.lane.b32.xlu0 %v11142, 32
    %v11194 = vpop.permute.xlu0 %11193
    %11195 = vrot.lane.b32.xlu0 %v11143, 32
    %v11196 = vpop.permute.xlu0 %11195
    %11197 = vrot.lane.b32.xlu0 %v11144, 32
    %v11198 = vpop.permute.xlu0 %11197
    %11199 = vrot.lane.b32.xlu0 %v11145, 32
    %v11200 = vpop.permute.xlu0 %11199
    %11201 = vrot.lane.b32.xlu0 %v11146, 32
    %v11202 = vpop.permute.xlu0 %11201
    %11203 = vrot.lane.b32.xlu0 %v11147, 32
    %v11204 = vpop.permute.xlu0 %11203
    %11205 = vrot.lane.b32.xlu0 %v11148, 32
    %v11206 = vpop.permute.xlu0 %11205
    %11207 = vrot.lane.b32.xlu0 %v11149, 32
    %v11208 = vpop.permute.xlu0 %11207
    %v11213 = vunpack.c.l.b16 %v11150
    %v11214 = vunpack.c.l.b16 %v11151
    %v11215 = vunpack.c.l.b16 %v11152
    %v11216 = vunpack.c.l.b16 %v11153
    %v11217 = vpack.c.b16 %v11214, %v11213
    %v11218 = vpack.c.b16 %v11216, %v11215
    %v11222 = vsel %vm3739, %v11178, 0
    %v11225 = vsel %vm3739, %v11180, 0
    %v11228 = vsel %vm3739, %v11182, 0
    %v11231 = vsel %vm3739, %v11184, 0
    %v11234 = vsel %vm3739, %v11186, 0
    %v11237 = vsel %vm3739, %v11188, 0
    %v11240 = vsel %vm3739, %v11190, 0
    %v11243 = vsel %vm3739, %v11192, 0
    %v11246 = vsel %vm3739, %v11194, 0
    %v11249 = vsel %vm3739, %v11196, 0
    %v11252 = vsel %vm3739, %v11198, 0
    %v11255 = vsel %vm3739, %v11200, 0
    %v11258 = vsel %vm3739, %v11202, 0
    %v11261 = vsel %vm3739, %v11204, 0
    %v11264 = vsel %vm3739, %v11206, 0
    %v11267 = vsel %vm3739, %v11208, 0
    %11269 = vmatprep.subr.bf16.mxu0 0
    %11270 = vmatpush1.bf16.msra.mxu0 0
    %11271 = vmatprep.subr.bf16.mxu0 0
    %11272 = vmatpush1.bf16.msra.mxu0 0
    %11273 = vmatprep.subr.bf16.mxu0 0
    %11274 = vmatpush1.bf16.msra.mxu0 0
    %11275 = vmatprep.subr.bf16.mxu0 0
    %11276 = vmatpush1.bf16.msra.mxu0 0
    %11277 = vmatprep.subr.bf16.mxu0 0
    %11278 = vmatpush1.bf16.msra.mxu0 0
    %11279 = vmatprep.subr.bf16.mxu0 0
    %11280 = vmatpush1.bf16.msra.mxu0 0
    %11281 = vmatprep.subr.bf16.mxu0 0
    %11282 = vmatpush1.bf16.msra.mxu0 %v11218
    %11283 = vmatprep.subr.bf16.mxu0 0
    %11284 = vmatpush1.bf16.msra.mxu0 %v11217
    %11285 = vmatprep.subr.bf16.mxu0 0
    %11286 = vmatpush2.bf16.msra.mxu0 0
    %11287 = vmatprep.subr.bf16.mxu0 0
    %11288 = vmatpush2.bf16.msra.mxu0 0
    %11289 = vmatprep.subr.bf16.mxu0 0
    %11290 = vmatpush2.bf16.msra.mxu0 0
    %11291 = vmatprep.subr.bf16.mxu0 0
    %11292 = vmatpush2.bf16.msra.mxu0 0
    %11293 = vmatprep.subr.bf16.mxu0 0
    %11294 = vmatpush2.bf16.msra.mxu0 0
    %11295 = vmatprep.subr.bf16.mxu0 0
    %11296 = vmatpush2.bf16.msra.mxu0 0
    %11297 = vmatprep.subr.bf16.mxu0 0
    %11298 = vmatpush2.bf16.msra.mxu0 0
    %11299 = vmatprep.subr.bf16.mxu0 0
    %11300 = vmatpush2.bf16.msra.mxu0 0
    %11301 = vmatprep.mubr.bf16.mxu0 0
    %11302 = vmatmul.mubr.bf16.gmra.mxu0 %v11222
    %v11303 = vpop.f32.mrf.mxu0
    %v11304 = vadd.f32 %v11159, %v11303
    %v11305 = vpop.f32.mrf.mxu0
    %v11306 = vpop.f32.mrf.mxu0
    %v11307 = vadd.f32 %v11159, %v11306
    %v11308 = vpop.f32.mrf.mxu0
    %11309 = vmatprep.mubr.bf16.mxu0 0
    %11310 = vmatmul.mubr.bf16.gmra.mxu0 %v11225
    %v11311 = vpop.f32.mrf.mxu0
    %v11312 = vadd.f32 %v11159, %v11311
    %v11313 = vpop.f32.mrf.mxu0
    %v11314 = vpop.f32.mrf.mxu0
    %v11315 = vadd.f32 %v11159, %v11314
    %v11316 = vpop.f32.mrf.mxu0
    %11317 = vmatprep.mubr.bf16.mxu0 0
    %11318 = vmatmul.mubr.bf16.gmra.mxu0 %v11228
    %v11319 = vpop.f32.mrf.mxu0
    %v11320 = vadd.f32 %v11159, %v11319
    %v11321 = vpop.f32.mrf.mxu0
    %v11322 = vpop.f32.mrf.mxu0
    %v11323 = vadd.f32 %v11159, %v11322
    %v11324 = vpop.f32.mrf.mxu0
    %11325 = vmatprep.mubr.bf16.mxu0 0
    %11326 = vmatmul.mubr.bf16.gmra.mxu0 %v11231
    %v11327 = vpop.f32.mrf.mxu0
    %v11328 = vadd.f32 %v11159, %v11327
    %v11329 = vpop.f32.mrf.mxu0
    %v11330 = vpop.f32.mrf.mxu0
    %v11331 = vadd.f32 %v11159, %v11330
    %v11332 = vpop.f32.mrf.mxu0
    %11333 = vmatprep.mubr.bf16.mxu0 0
    %11334 = vmatmul.mubr.bf16.gmra.mxu0 %v11234
    %v11335 = vpop.f32.mrf.mxu0
    %v11336 = vadd.f32 %v11159, %v11335
    %v11337 = vpop.f32.mrf.mxu0
    %v11338 = vpop.f32.mrf.mxu0
    %v11339 = vadd.f32 %v11159, %v11338
    %v11340 = vpop.f32.mrf.mxu0
    %11341 = vmatprep.mubr.bf16.mxu0 0
    %11342 = vmatmul.mubr.bf16.gmra.mxu0 %v11237
    %v11343 = vpop.f32.mrf.mxu0
    %v11344 = vadd.f32 %v11159, %v11343
    %v11345 = vpop.f32.mrf.mxu0
    %v11346 = vpop.f32.mrf.mxu0
    %v11347 = vadd.f32 %v11159, %v11346
    %v11348 = vpop.f32.mrf.mxu0
    %11349 = vmatprep.mubr.bf16.mxu0 0
    %11350 = vmatmul.mubr.bf16.gmra.mxu0 %v11240
    %v11351 = vpop.f32.mrf.mxu0
    %v11352 = vadd.f32 %v11159, %v11351
    %v11353 = vpop.f32.mrf.mxu0
    %v11354 = vpop.f32.mrf.mxu0
    %v11355 = vadd.f32 %v11159, %v11354
    %v11356 = vpop.f32.mrf.mxu0
    %11357 = vmatprep.mubr.bf16.mxu0 0
    %11358 = vmatmul.mubr.bf16.gmra.mxu0 %v11243
    %v11359 = vpop.f32.mrf.mxu0
    %v11360 = vadd.f32 %v11159, %v11359
    %v11361 = vpop.f32.mrf.mxu0
    %v11362 = vpop.f32.mrf.mxu0
    %v11363 = vadd.f32 %v11159, %v11362
    %v11364 = vpop.f32.mrf.mxu0
    %11365 = vmatprep.mubr.bf16.mxu0 0
    %11366 = vmatmul.mubr.bf16.gmra.mxu0 %v11246
    %v11367 = vpop.f32.mrf.mxu0
    %v11368 = vadd.f32 %v11159, %v11367
    %v11369 = vpop.f32.mrf.mxu0
    %v11370 = vpop.f32.mrf.mxu0
    %v11371 = vadd.f32 %v11159, %v11370
    %v11372 = vpop.f32.mrf.mxu0
    %11373 = vmatprep.mubr.bf16.mxu0 0
    %11374 = vmatmul.mubr.bf16.gmra.mxu0 %v11249
    %v11375 = vpop.f32.mrf.mxu0
    %v11376 = vadd.f32 %v11159, %v11375
    %v11377 = vpop.f32.mrf.mxu0
    %v11378 = vpop.f32.mrf.mxu0
    %v11379 = vadd.f32 %v11159, %v11378
    %v11380 = vpop.f32.mrf.mxu0
    %11381 = vmatprep.mubr.bf16.mxu0 0
    %11382 = vmatmul.mubr.bf16.gmra.mxu0 %v11252
    %v11383 = vpop.f32.mrf.mxu0
    %v11384 = vadd.f32 %v11159, %v11383
    %v11385 = vpop.f32.mrf.mxu0
    %v11386 = vpop.f32.mrf.mxu0
    %v11387 = vadd.f32 %v11159, %v11386
    %v11388 = vpop.f32.mrf.mxu0
    %11389 = vmatprep.mubr.bf16.mxu0 0
    %11390 = vmatmul.mubr.bf16.gmra.mxu0 %v11255
    %v11391 = vpop.f32.mrf.mxu0
    %v11392 = vadd.f32 %v11159, %v11391
    %v11393 = vpop.f32.mrf.mxu0
    %v11394 = vpop.f32.mrf.mxu0
    %v11395 = vadd.f32 %v11159, %v11394
    %v11396 = vpop.f32.mrf.mxu0
    %11397 = vmatprep.mubr.bf16.mxu0 0
    %11398 = vmatmul.mubr.bf16.gmra.mxu0 %v11258
    %v11399 = vpop.f32.mrf.mxu0
    %v11400 = vadd.f32 %v11159, %v11399
    %v11401 = vpop.f32.mrf.mxu0
    %v11402 = vpop.f32.mrf.mxu0
    %v11403 = vadd.f32 %v11159, %v11402
    %v11404 = vpop.f32.mrf.mxu0
    %11405 = vmatprep.mubr.bf16.mxu0 0
    %11406 = vmatmul.mubr.bf16.gmra.mxu0 %v11261
    %v11407 = vpop.f32.mrf.mxu0
    %v11408 = vadd.f32 %v11159, %v11407
    %v11409 = vpop.f32.mrf.mxu0
    %v11410 = vpop.f32.mrf.mxu0
    %v11411 = vadd.f32 %v11159, %v11410
    %v11412 = vpop.f32.mrf.mxu0
    %11413 = vmatprep.mubr.bf16.mxu0 0
    %11414 = vmatmul.mubr.bf16.gmra.mxu0 %v11264
    %v11415 = vpop.f32.mrf.mxu0
    %v11416 = vadd.f32 %v11159, %v11415
    %v11417 = vpop.f32.mrf.mxu0
    %v11418 = vpop.f32.mrf.mxu0
    %v11419 = vadd.f32 %v11159, %v11418
    %v11420 = vpop.f32.mrf.mxu0
    %11421 = vmatprep.mubr.bf16.mxu0 0
    %11422 = vmatmul.mubr.bf16.gmra.mxu0 %v11267
    %v11423 = vpop.f32.mrf.mxu0
    %v11424 = vadd.f32 %v11159, %v11423
    %v11425 = vpop.f32.mrf.mxu0
    %v11426 = vpop.f32.mrf.mxu0
    %v11427 = vadd.f32 %v11159, %v11426
    %v11428 = vpop.f32.mrf.mxu0
    %11429 = vdwg.mxu0
    %11430 = vst [vmem:[#allocation3] sm:$0xff] %v11304
    %11431 = vst [vmem:[#allocation3 + $0x8] sm:$0xff] %v11307
    %11432 = vst [vmem:[#allocation3 + $0x10] sm:$0xff] %v11312
    %11433 = vst [vmem:[#allocation3 + $0x18] sm:$0xff] %v11315
    %11434 = vst [vmem:[#allocation3 + $0x20] sm:$0xff] %v11320
    %11435 = vst [vmem:[#allocation3 + $0x28] sm:$0xff] %v11323
    %11436 = vst [vmem:[#allocation3 + $0x30] sm:$0xff] %v11328
    %11437 = vst [vmem:[#allocation3 + $0x38] sm:$0xff] %v11331
    %11438 = vst [vmem:[#allocation3 + $0x40] sm:$0xff] %v11336
    %11439 = vst [vmem:[#allocation3 + $0x48] sm:$0xff] %v11339
    %11440 = vst [vmem:[#allocation3 + $0x50] sm:$0xff] %v11344
    %11441 = vst [vmem:[#allocation3 + $0x58] sm:$0xff] %v11347
    %11442 = vst [vmem:[#allocation3 + $0x60] sm:$0xff] %v11352
    %11443 = vst [vmem:[#allocation3 + $0x68] sm:$0xff] %v11355
    %11444 = vst [vmem:[#allocation3 + $0x70] sm:$0xff] %v11360
    %11445 = vst [vmem:[#allocation3 + $0x78] sm:$0xff] %v11363
    %11446 = vst [vmem:[#allocation3 + $0x80] sm:$0xff] %v11368
    %11447 = vst [vmem:[#allocation3 + $0x88] sm:$0xff] %v11371
    %11448 = vst [vmem:[#allocation3 + $0x90] sm:$0xff] %v11376
    %11449 = vst [vmem:[#allocation3 + $0x98] sm:$0xff] %v11379
    %11450 = vst [vmem:[#allocation3 + $0xa0] sm:$0xff] %v11384
    %11451 = vst [vmem:[#allocation3 + $0xa8] sm:$0xff] %v11387
    %11452 = vst [vmem:[#allocation3 + $0xb0] sm:$0xff] %v11392
    %11453 = vst [vmem:[#allocation3 + $0xb8] sm:$0xff] %v11395
    %11454 = vst [vmem:[#allocation3 + $0xc0] sm:$0xff] %v11400
    %11455 = vst [vmem:[#allocation3 + $0xc8] sm:$0xff] %v11403
    %11456 = vst [vmem:[#allocation3 + $0xd0] sm:$0xff] %v11408
    %11457 = vst [vmem:[#allocation3 + $0xd8] sm:$0xff] %v11411
    %11458 = vst [vmem:[#allocation3 + $0xe0] sm:$0xff] %v11416
    %11459 = vst [vmem:[#allocation3 + $0xe8] sm:$0xff] %v11419
    %11460 = vst [vmem:[#allocation3 + $0xf0] sm:$0xff] %v11424
    %11461 = vst [vmem:[#allocation3 + $0xf8] sm:$0xff] %v11427
    // Predicated region
    $region26: #{tpu_custom_call.1} parent=1 // pred_check
      _
    $region27: #{tpu_custom_call.1} parent=1 // pred_check_branch
      %11463 = sbr.rel (0) target = $region29
    $region28: #{tpu_custom_call.1} parent=1 // pred_region
      %s11465 = ssub.s32 4096, 4096
      %11466 = vsyncadd [#allocation4], %s11465
      %s11467 = sshll.u32 [#allocation3], 4
      %s11468 = int_to_ptr.vmem [resolvable:$true] %s11467
      %11473 = dma.vmem_to_hbm [thread:$0]  %s11468, 4096, %s6, [#allocation4], 128, 128, 8
    $region29: #{tpu_custom_call.1} parent=1 // pred_fallthru
      _
    // Predicated region
    $region30: #{tpu_custom_call.1} parent=1 // pred_check
      _
    $region31: #{tpu_custom_call.1} parent=1 // pred_check_branch
      %11475 = sbr.rel (0) target = $region33
    $region32: #{tpu_custom_call.1} parent=1 // pred_region
      %11476 = dma.done [#allocation4], 4096
    $region33: #{tpu_custom_call.1} parent=1 // pred_fallthru
      _
    %11477 = vsyncpa [#allocation4], 1

</llo_original>
